<compile_context>
chip_gen: v5e
topology: v5e:2x2
jax: 0.10.0
libtpu: 0.0.40
codegen_flags: <defaults>
</compile_context>

<pallas_src>
import jax
import jax.numpy as jnp
from jax.experimental import pallas as pl
from jax.experimental.pallas import tpu as pltpu


def _cdiv(a, b):
    return -(-a // b)


def _round_up(a, b):
    return _cdiv(a, b) * b


def write_unit_kernel(mem_stack_ref, ctrl_prev_ref, ctrl_last_ref, retrieved_ref,
                      cat_w_ref, mem_w_ref, bias_ref, attn_w_ref, gate_w_ref,
                      gate_b_ref, out_ref):
    tb, M, D = mem_stack_ref.shape
    f32 = jnp.float32

    mem_stack = mem_stack_ref[...]                 # [tb, M, D]  stacked memories
    ctrl_prev = ctrl_prev_ref[...]                 # [tb, M, D]  stacked controls[:-1]
    ctrl_last = ctrl_last_ref[...].astype(f32)     # [tb, D]     controls[-1]
    retrieved = retrieved_ref[...]                 # [tb, D]

    prev_mem = mem_stack[:, M - 1, :]              # memories[-1]
    prev_mem_f32 = prev_mem.astype(f32)

    # concat = Linear_2D->D(cat([retrieved, prev_mem], 1)): split the [2D, D] weight
    # into two [D, D] halves so no lane-axis concatenation is needed; f32 MXU accum.
    w_r = cat_w_ref[:D, :]
    w_m = cat_w_ref[D:, :]
    concat = (jnp.dot(retrieved, w_r, preferred_element_type=f32)
              + jnp.dot(prev_mem, w_m, preferred_element_type=f32))      # [tb, D]

    # ---- self-attention over the M previous steps ----
    # Fold the D->1 attn weight into controls[-1]: VPU multiply + lane reduce, not an
    # N=1 MXU matmul.  The attn bias is dropped: softmax is shift-invariant.
    v = ctrl_last * attn_w_ref[...]                                      # [tb, D] f32
    logits = jnp.sum(v[:, None, :] * ctrl_prev.astype(f32), axis=-1)     # [tb, M]

    m_max = jnp.max(logits, axis=1, keepdims=True)
    e = jnp.exp(logits - m_max)
    p = e / jnp.sum(e, axis=1, keepdims=True)                            # exact softmax

    # attn_mem[b, d] = sum_m p[b, m] * mem_stack[b, m, d]
    # Unrolled VPU multiply-adds over the (tiny, static) M axis — overlaps with the
    # DxD MXU matmuls instead of issuing 1-useful-row MXU passes + a relayout squeeze.
    attn_mem = p[:, 0:1] * mem_stack[:, 0, :].astype(f32)
    for m in range(1, M):
        attn_mem = attn_mem + p[:, m:m + 1] * mem_stack[:, m, :].astype(f32)

    # next_mem = mem(attn_mem) + concat, with cat_b + mem_b pre-folded into bias_ref.
    next_mem = (jnp.dot(attn_mem.astype(mem_w_ref.dtype), mem_w_ref[...],
                        preferred_element_type=f32)
                + bias_ref[...] + concat)                                # [tb, D]

    # ---- memory gate ----
    # Another D->1 projection as VPU multiply + lane reduce; scalar bias from SMEM.
    g_logit = (jnp.sum(ctrl_last * gate_w_ref[...], axis=-1, keepdims=True)
               + gate_b_ref[0])                                          # [tb, 1]
    gate = jax.nn.sigmoid(g_logit)

    out_ref[...] = (gate * prev_mem_f32 + (1.0 - gate) * next_mem).astype(out_ref.dtype)


def write_unit_pallas(memories_stack, ctrl_prev_stack, control_last, retrieved,
                      params, *, tb=None, stream_dtype=None, vmem_limit_bytes=None):
    """memories_stack, ctrl_prev_stack: [B, M, D]; control_last, retrieved: [B, D]."""
    B, M, D = memories_stack.shape
    cat_w, cat_b, attn_w, attn_b, mem_w, mem_b, gate_w, gate_b = params
    del attn_b  # softmax shift-invariance: no numeric effect, drop the input entirely

    # Optional bf16 streaming path (recommended at production D): the big [B, M, D]
    # streams and DxD weights carry HBM traffic; kernel VPU math stays f32.
    if stream_dtype is not None:
        memories_stack = memories_stack.astype(stream_dtype)
        ctrl_prev_stack = ctrl_prev_stack.astype(stream_dtype)
        control_last = control_last.astype(stream_dtype)
        retrieved = retrieved.astype(stream_dtype)
        cat_w = cat_w.astype(stream_dtype)
        mem_w = mem_w.astype(stream_dtype)

    sub = 16 if jnp.dtype(memories_stack.dtype).itemsize == 2 else 8

    # Batch tile: as large as the batch allows, capped at 256 (v6e/v7x MXU rows;
    # pass tb=128 on v5e to match its 128x128 MXU).  For large batches this gives
    # >= 2 grid steps so dimension_semantics="parallel" can shard over both v7x TCs.
    if tb is None:
        b_aligned = _round_up(B, sub)
        n_tiles = _cdiv(b_aligned, 256)
        tb = _round_up(_cdiv(b_aligned, n_tiles), sub)

    Bp = _round_up(B, tb)
    if Bp != B:
        pad = Bp - B
        memories_stack = jnp.pad(memories_stack, ((0, pad), (0, 0), (0, 0)))
        ctrl_prev_stack = jnp.pad(ctrl_prev_stack, ((0, pad), (0, 0), (0, 0)))
        control_last = jnp.pad(control_last, ((0, pad), (0, 0)))
        retrieved = jnp.pad(retrieved, ((0, pad), (0, 0)))

    # Fold cat_b + mem_b into one [1, D] bias; attn/gate weights stay f32 (VPU path).
    bias = (cat_b + mem_b).astype(jnp.float32).reshape(1, D)
    attn_w = attn_w.astype(jnp.float32).reshape(1, D)
    gate_w = gate_w.astype(jnp.float32).reshape(1, D)
    gate_b = gate_b.astype(jnp.float32).reshape(1)          # lone scalar -> SMEM

    grid = (Bp // tb,)
    bmd_spec = pl.BlockSpec((tb, M, D), lambda i: (i, 0, 0))
    bd_spec = pl.BlockSpec((tb, D), lambda i: (i, 0))

    def const(shape):
        # Weights/biases: constant block index -> stay VMEM-resident across batch tiles.
        return pl.BlockSpec(shape, lambda i: (0, 0))

    smem_spec = pl.BlockSpec(memory_space=pltpu.MemorySpace.SMEM)

    if vmem_limit_bytes is None:
        # Footprint of one pipeline stage (streams + output + resident weights),
        # doubled for double buffering, with 1.5x headroom; capped for v7x's 64 MiB.
        s_item = jnp.dtype(memories_stack.dtype).itemsize
        w_item = jnp.dtype(cat_w.dtype).itemsize
        per_buf = ((2 * tb * M * D + 2 * tb * D) * s_item          # 4 input streams
                   + tb * D * 4                                    # output tile
                   + 3 * D * D * w_item + 3 * D * 4)               # weights + vectors
        est = 2 * per_buf
        vmem_limit_bytes = min(64 * 1024 * 1024,
                               max(32 * 1024 * 1024, int(est * 3 // 2)))

    out = pl.pallas_call(
        write_unit_kernel,
        out_shape=jax.ShapeDtypeStruct((Bp, D), jnp.float32),
        grid_spec=pltpu.PrefetchScalarGridSpec(
            num_scalar_prefetch=0,
            grid=grid,
            in_specs=[
                bmd_spec,             # stacked memories      [B, M, D]
                bmd_spec,             # stacked controls[:-1] [B, M, D]
                bd_spec,              # controls[-1]          [B, D]
                bd_spec,              # retrieved             [B, D]
                const((2 * D, D)),    # concat weight (in, out)
                const((D, D)),        # mem weight    (in, out)
                const((1, D)),        # folded bias (cat_b + mem_b)
                const((1, D)),        # attn weight (torch [1, D] layout)
                const((1, D)),        # gate weight (torch [1, D] layout)
                smem_spec,            # gate bias scalar (SMEM)
            ],
            out_specs=bd_spec,
        ),
        compiler_params=pltpu.CompilerParams(
            dimension_semantics=("parallel",),   # shard batch tiles across TCs (v7x)
            vmem_limit_bytes=vmem_limit_bytes),
    )(memories_stack, ctrl_prev_stack, control_last, retrieved,
      cat_w, mem_w, bias, attn_w, gate_w, gate_b)
    return out[:B]


def xavier_uniform(key, fan_in, fan_out, shape=None):
    bound = jnp.sqrt(6.0 / (fan_in + fan_out))
    if shape is None:
        shape = (fan_in, fan_out)      # stored [in, out] so kernel computes x @ W
    return jax.random.uniform(key, shape, jnp.float32, minval=-bound, maxval=bound)


def init_write_unit_params(key, dim):
    k1, k2, k3, k4 = jax.random.split(key, 4)
    cat_w = xavier_uniform(k1, 2 * dim, dim)                  # [2D, D]
    cat_b = jnp.zeros((1, dim), jnp.float32)
    attn_w = xavier_uniform(k2, dim, 1, shape=(1, dim))       # torch Linear(D,1).weight layout
    attn_b = jnp.zeros((1, 1), jnp.float32)
    mem_w = xavier_uniform(k3, dim, dim)                      # [D, D]
    mem_b = jnp.zeros((1, dim), jnp.float32)
    gate_w = xavier_uniform(k4, dim, 1, shape=(1, dim))       # torch Linear(D,1).weight layout
    gate_b = jnp.zeros((1, 1), jnp.float32)
    return cat_w, cat_b, attn_w, attn_b, mem_w, mem_b, gate_w, gate_b


def write_unit_reference(memories, retrieved, controls, params):
    """Pure-JAX mirror of the PyTorch WriteUnit (self_attention=True, memory_gate=True)."""
    cat_w, cat_b, attn_w, attn_b, mem_w, mem_b, gate_w, gate_b = params
    prev_mem = memories[-1]                                               # [B, D]
    concat = jnp.concatenate([retrieved, prev_mem], axis=1) @ cat_w + cat_b
    next_mem = concat
    # self attention
    controls_cat = jnp.stack(controls[:-1], axis=2)                       # [B, D, M]
    attn = controls[-1][:, :, None] * controls_cat                        # [B, D, M]
    attn_p = jnp.transpose(attn, (0, 2, 1))                               # [B, M, D]
    logits = attn_p @ attn_w[0] + attn_b[0, 0]                            # [B, M]
    p = jax.nn.softmax(logits, axis=1)                                    # [B, M]
    memories_cat = jnp.stack(memories, axis=2)                            # [B, D, M]
    attn_mem = jnp.sum(p[:, None, :] * memories_cat, axis=2)              # [B, D]
    next_mem = attn_mem @ mem_w + mem_b + concat
    # memory gate
    gate = jax.nn.sigmoid(controls[-1] @ gate_w[0] + gate_b[0, 0])[:, None]
    next_mem = gate * prev_mem + (1.0 - gate) * next_mem
    return next_mem


if __name__ == "__main__":
    # batch, dim (lane-dense 128), number of previous reasoning steps
    B, D, M = 16, 128, 4

    key = jax.random.PRNGKey(0)
    k_mem, k_ctrl, k_ret, k_par = jax.random.split(key, 4)

    # memories has length M; controls has length M+1 (controls[:-1] aligns with memories).
    memories = [jax.random.normal(jax.random.fold_in(k_mem, t), (B, D), jnp.float32)
                for t in range(M)]
    controls = [jax.random.normal(jax.random.fold_in(k_ctrl, t), (B, D), jnp.float32)
                for t in range(M + 1)]
    retrieved = jax.random.normal(k_ret, (B, D), jnp.float32)
    params = init_write_unit_params(k_par, D)

    # Stack directly in the kernel's [B, M, D] layout (D lane-dense, no transpose pass).
    memories_stack = jnp.stack(memories, axis=1)         # [B, M, D]
    ctrl_prev_stack = jnp.stack(controls[:-1], axis=1)   # [B, M, D]

    ref = write_unit_reference(memories, retrieved, controls, params)

    # f32 path: exact softmax division -> tight check against the reference.
    out = write_unit_pallas(memories_stack, ctrl_prev_stack, controls[-1], retrieved,
                            params)
    out = jax.block_until_ready(out)
    assert out.shape == (B, D)
    assert jnp.allclose(out, ref, atol=1e-3, rtol=1e-3), "f32 mismatch vs reference"

    # bf16 streaming path (production-D recommendation): bf16 HBM streams / DxD weights,
    # f32 MXU accumulation and f32 VPU math -> expect ~1e-2 level error vs f32 reference.
    out_bf16 = write_unit_pallas(memories_stack, ctrl_prev_stack, controls[-1], retrieved,
                                 params, stream_dtype=jnp.bfloat16)
    out_bf16 = jax.block_until_ready(out_bf16)
    assert jnp.allclose(out_bf16, ref, atol=5e-2, rtol=5e-2), "bf16 mismatch vs reference"

    print("KERNEL_OK")
</pallas_src>

<mosaic_0001>
module attributes {stable_mosaic.version = 11 : i64} {
  func.func @write_unit_kernel(%arg0: i32, %arg1: memref<16x4x128xf32, #tpu.memory_space<vmem>>, %arg2: memref<16x4x128xf32, #tpu.memory_space<vmem>>, %arg3: memref<16x128xf32, #tpu.memory_space<vmem>>, %arg4: memref<16x128xf32, #tpu.memory_space<vmem>>, %arg5: memref<256x128xf32, #tpu.memory_space<vmem>>, %arg6: memref<128x128xf32, #tpu.memory_space<vmem>>, %arg7: memref<1x128xf32, #tpu.memory_space<vmem>>, %arg8: memref<1x128xf32, #tpu.memory_space<vmem>>, %arg9: memref<1x128xf32, #tpu.memory_space<vmem>>, %arg10: memref<1xf32, #tpu.memory_space<smem>>, %arg11: memref<16x128xf32, #tpu.memory_space<vmem>>) attributes {dimension_semantics = [#tpu.dimension_semantics<parallel>], iteration_bounds = array<i64: 1>, scalar_prefetch = 0 : i64, scratch_operands = 0 : i64, tpu.core_type = #tpu.core_type<tc>, window_params = [{transform_indices = @transform_0, window_bounds = array<i64: 16, 4, 128>}, {transform_indices = @transform_1, window_bounds = array<i64: 16, 4, 128>}, {transform_indices = @transform_2, window_bounds = array<i64: 16, 128>}, {transform_indices = @transform_3, window_bounds = array<i64: 16, 128>}, {pipeline_mode = #tpu.pipeline_mode<synchronous>, transform_indices = @transform_4, window_bounds = array<i64: 256, 128>}, {pipeline_mode = #tpu.pipeline_mode<synchronous>, transform_indices = @transform_5, window_bounds = array<i64: 128, 128>}, {pipeline_mode = #tpu.pipeline_mode<synchronous>, transform_indices = @transform_6, window_bounds = array<i64: 1, 128>}, {pipeline_mode = #tpu.pipeline_mode<synchronous>, transform_indices = @transform_7, window_bounds = array<i64: 1, 128>}, {pipeline_mode = #tpu.pipeline_mode<synchronous>, transform_indices = @transform_8, window_bounds = array<i64: 1, 128>}, {transform_indices = @transform_9, window_bounds = array<i64: 1>}, {transform_indices = @transform_10, window_bounds = array<i64: 16, 128>}]} {
    %c0 = arith.constant 0 : index
    %c0_0 = arith.constant 0 : index
    %c0_1 = arith.constant 0 : index
    %0 = vector.load %arg1[%c0, %c0_0, %c0_1] : memref<16x4x128xf32, #tpu.memory_space<vmem>>, vector<16x4x128xf32>
    %c0_2 = arith.constant 0 : index
    %c0_3 = arith.constant 0 : index
    %c0_4 = arith.constant 0 : index
    %1 = vector.load %arg2[%c0_2, %c0_3, %c0_4] : memref<16x4x128xf32, #tpu.memory_space<vmem>>, vector<16x4x128xf32>
    %c0_5 = arith.constant 0 : index
    %c0_6 = arith.constant 0 : index
    %2 = vector.load %arg3[%c0_5, %c0_6] : memref<16x128xf32, #tpu.memory_space<vmem>>, vector<16x128xf32>
    %c0_7 = arith.constant 0 : index
    %c0_8 = arith.constant 0 : index
    %3 = vector.load %arg4[%c0_7, %c0_8] : memref<16x128xf32, #tpu.memory_space<vmem>>, vector<16x128xf32>
    %4 = vector.extract_strided_slice %0 {offsets = [0, 3, 0], sizes = [16, 1, 128], strides = [1, 1, 1]} : vector<16x4x128xf32> to vector<16x1x128xf32>
    %5 = vector.shape_cast %4 : vector<16x1x128xf32> to vector<16x128xf32>
    %c0_9 = arith.constant 0 : index
    %c0_10 = arith.constant 0 : index
    %6 = vector.load %arg5[%c0_9, %c0_10] : memref<256x128xf32, #tpu.memory_space<vmem>>, vector<128x128xf32>
    %c128 = arith.constant 128 : index
    %c0_11 = arith.constant 0 : index
    %7 = vector.load %arg5[%c128, %c0_11] : memref<256x128xf32, #tpu.memory_space<vmem>>, vector<128x128xf32>
    %cst = arith.constant dense<0.000000e+00> : vector<16x128xf32>
    %8 = tpu.matmul %3, %6, %cst {dimension_numbers = #tpu.dot_dimension_numbers<[1], [0], [0], [1], [0, 0, 1, 1], [], []>} : vector<16x128xf32>, vector<128x128xf32>, vector<16x128xf32> -> vector<16x128xf32>
    %cst_12 = arith.constant dense<0.000000e+00> : vector<16x128xf32>
    %9 = tpu.matmul %5, %7, %cst_12 {dimension_numbers = #tpu.dot_dimension_numbers<[1], [0], [0], [1], [0, 0, 1, 1], [], []>} : vector<16x128xf32>, vector<128x128xf32>, vector<16x128xf32> -> vector<16x128xf32>
    %10 = arith.addf %8, %9 : vector<16x128xf32>
    %c0_13 = arith.constant 0 : index
    %c0_14 = arith.constant 0 : index
    %11 = vector.load %arg8[%c0_13, %c0_14] : memref<1x128xf32, #tpu.memory_space<vmem>>, vector<1x128xf32>
    %12 = vector.broadcast %11 : vector<1x128xf32> to vector<16x128xf32>
    %13 = arith.mulf %2, %12 : vector<16x128xf32>
    %14 = vector.shape_cast %13 : vector<16x128xf32> to vector<16x1x128xf32>
    %15 = vector.broadcast %14 : vector<16x1x128xf32> to vector<16x4x128xf32>
    %16 = arith.mulf %15, %1 : vector<16x4x128xf32>
    %cst_15 = arith.constant dense<0.000000e+00> : vector<16x4xf32>
    %17 = vector.multi_reduction <add>, %16, %cst_15 [2] : vector<16x4x128xf32> to vector<16x4xf32>
    %cst_16 = arith.constant dense<0xFF800000> : vector<16xf32>
    %18 = vector.multi_reduction <maximumf>, %17, %cst_16 [1] : vector<16x4xf32> to vector<16xf32>
    %19 = vector.shape_cast %18 : vector<16xf32> to vector<16x1xf32>
    %20 = vector.broadcast %19 : vector<16x1xf32> to vector<16x4xf32>
    %21 = arith.subf %17, %20 : vector<16x4xf32>
    %22 = math.exp %21 : vector<16x4xf32>
    %cst_17 = arith.constant dense<0.000000e+00> : vector<16xf32>
    %23 = vector.multi_reduction <add>, %22, %cst_17 [1] : vector<16x4xf32> to vector<16xf32>
    %24 = vector.shape_cast %23 : vector<16xf32> to vector<16x1xf32>
    %25 = vector.broadcast %24 : vector<16x1xf32> to vector<16x4xf32>
    %26 = arith.divf %22, %25 : vector<16x4xf32>
    %27 = vector.extract_strided_slice %26 {offsets = [0, 0], sizes = [16, 1], strides = [1, 1]} : vector<16x4xf32> to vector<16x1xf32>
    %28 = vector.extract_strided_slice %0 {offsets = [0, 0, 0], sizes = [16, 1, 128], strides = [1, 1, 1]} : vector<16x4x128xf32> to vector<16x1x128xf32>
    %29 = vector.shape_cast %28 : vector<16x1x128xf32> to vector<16x128xf32>
    %30 = vector.broadcast %27 : vector<16x1xf32> to vector<16x128xf32>
    %31 = arith.mulf %30, %29 : vector<16x128xf32>
    %32 = vector.extract_strided_slice %26 {offsets = [0, 1], sizes = [16, 1], strides = [1, 1]} : vector<16x4xf32> to vector<16x1xf32>
    %33 = vector.extract_strided_slice %0 {offsets = [0, 1, 0], sizes = [16, 1, 128], strides = [1, 1, 1]} : vector<16x4x128xf32> to vector<16x1x128xf32>
    %34 = vector.shape_cast %33 : vector<16x1x128xf32> to vector<16x128xf32>
    %35 = vector.broadcast %32 : vector<16x1xf32> to vector<16x128xf32>
    %36 = arith.mulf %35, %34 : vector<16x128xf32>
    %37 = arith.addf %31, %36 : vector<16x128xf32>
    %38 = vector.extract_strided_slice %26 {offsets = [0, 2], sizes = [16, 1], strides = [1, 1]} : vector<16x4xf32> to vector<16x1xf32>
    %39 = vector.extract_strided_slice %0 {offsets = [0, 2, 0], sizes = [16, 1, 128], strides = [1, 1, 1]} : vector<16x4x128xf32> to vector<16x1x128xf32>
    %40 = vector.shape_cast %39 : vector<16x1x128xf32> to vector<16x128xf32>
    %41 = vector.broadcast %38 : vector<16x1xf32> to vector<16x128xf32>
    %42 = arith.mulf %41, %40 : vector<16x128xf32>
    %43 = arith.addf %37, %42 : vector<16x128xf32>
    %44 = vector.extract_strided_slice %26 {offsets = [0, 3], sizes = [16, 1], strides = [1, 1]} : vector<16x4xf32> to vector<16x1xf32>
    %45 = vector.extract_strided_slice %0 {offsets = [0, 3, 0], sizes = [16, 1, 128], strides = [1, 1, 1]} : vector<16x4x128xf32> to vector<16x1x128xf32>
    %46 = vector.shape_cast %45 : vector<16x1x128xf32> to vector<16x128xf32>
    %47 = vector.broadcast %44 : vector<16x1xf32> to vector<16x128xf32>
    %48 = arith.mulf %47, %46 : vector<16x128xf32>
    %49 = arith.addf %43, %48 : vector<16x128xf32>
    %c0_18 = arith.constant 0 : index
    %c0_19 = arith.constant 0 : index
    %50 = vector.load %arg6[%c0_18, %c0_19] : memref<128x128xf32, #tpu.memory_space<vmem>>, vector<128x128xf32>
    %cst_20 = arith.constant dense<0.000000e+00> : vector<16x128xf32>
    %51 = tpu.matmul %49, %50, %cst_20 {dimension_numbers = #tpu.dot_dimension_numbers<[1], [0], [0], [1], [0, 0, 1, 1], [], []>} : vector<16x128xf32>, vector<128x128xf32>, vector<16x128xf32> -> vector<16x128xf32>
    %c0_21 = arith.constant 0 : index
    %c0_22 = arith.constant 0 : index
    %52 = vector.load %arg7[%c0_21, %c0_22] : memref<1x128xf32, #tpu.memory_space<vmem>>, vector<1x128xf32>
    %53 = vector.broadcast %52 : vector<1x128xf32> to vector<16x128xf32>
    %54 = arith.addf %51, %53 : vector<16x128xf32>
    %55 = arith.addf %54, %10 : vector<16x128xf32>
    %c0_23 = arith.constant 0 : index
    %c0_24 = arith.constant 0 : index
    %56 = vector.load %arg9[%c0_23, %c0_24] : memref<1x128xf32, #tpu.memory_space<vmem>>, vector<1x128xf32>
    %57 = vector.broadcast %56 : vector<1x128xf32> to vector<16x128xf32>
    %58 = arith.mulf %2, %57 : vector<16x128xf32>
    %cst_25 = arith.constant dense<0.000000e+00> : vector<16xf32>
    %59 = vector.multi_reduction <add>, %58, %cst_25 [1] : vector<16x128xf32> to vector<16xf32>
    %60 = vector.shape_cast %59 : vector<16xf32> to vector<16x1xf32>
    %c0_26 = arith.constant 0 : index
    %61 = memref.load %arg10[%c0_26] : memref<1xf32, #tpu.memory_space<smem>>
    %62 = vector.broadcast %61 : f32 to vector<16x1xf32>
    %63 = arith.addf %60, %62 : vector<16x1xf32>
    %64 = arith.negf %63 : vector<16x1xf32>
    %65 = math.exp %64 : vector<16x1xf32>
    %cst_27 = arith.constant 1.000000e+00 : f32
    %66 = vector.broadcast %cst_27 : f32 to vector<16x1xf32>
    %67 = arith.addf %66, %65 : vector<16x1xf32>
    %68 = arith.divf %66, %67 : vector<16x1xf32>
    %69 = vector.broadcast %68 : vector<16x1xf32> to vector<16x128xf32>
    %70 = arith.mulf %69, %5 : vector<16x128xf32>
    %cst_28 = arith.constant 1.000000e+00 : f32
    %71 = vector.broadcast %cst_28 : f32 to vector<16x1xf32>
    %72 = arith.subf %71, %68 : vector<16x1xf32>
    %73 = vector.broadcast %72 : vector<16x1xf32> to vector<16x128xf32>
    %74 = arith.mulf %73, %55 : vector<16x128xf32>
    %75 = arith.addf %70, %74 : vector<16x128xf32>
    %c0_29 = arith.constant 0 : index
    %c0_30 = arith.constant 0 : index
    %76 = vector.load %arg11[%c0_29, %c0_30] : memref<16x128xf32, #tpu.memory_space<vmem>>, vector<16x128xf32>
    tpu.vector_store %arg11[%c0_29, %c0_30], %75 {strides = array<i32>} : memref<16x128xf32, #tpu.memory_space<vmem>>, vector<16x128xf32>,
    return
  }
  func.func @transform_0(%arg0: i32) -> (i32, i32, i32) {
    %c0_i32 = arith.constant 0 : i32
    %c0_i32_0 = arith.constant 0 : i32
    %c0_i32_1 = arith.constant 0 : i32
    return %arg0, %c0_i32, %c0_i32_0 : i32, i32, i32
  }
  func.func @transform_1(%arg0: i32) -> (i32, i32, i32) {
    %c0_i32 = arith.constant 0 : i32
    %c0_i32_0 = arith.constant 0 : i32
    %c0_i32_1 = arith.constant 0 : i32
    return %arg0, %c0_i32, %c0_i32_0 : i32, i32, i32
  }
  func.func @transform_2(%arg0: i32) -> (i32, i32) {
    %c0_i32 = arith.constant 0 : i32
    %c0_i32_0 = arith.constant 0 : i32
    return %arg0, %c0_i32 : i32, i32
  }
  func.func @transform_3(%arg0: i32) -> (i32, i32) {
    %c0_i32 = arith.constant 0 : i32
    %c0_i32_0 = arith.constant 0 : i32
    return %arg0, %c0_i32 : i32, i32
  }
  func.func @transform_4(%arg0: i32) -> (i32, i32) {
    %c0_i32 = arith.constant 0 : i32
    %c0_i32_0 = arith.constant 0 : i32
    %c0_i32_1 = arith.constant 0 : i32
    return %c0_i32, %c0_i32_0 : i32, i32
  }
  func.func @transform_5(%arg0: i32) -> (i32, i32) {
    %c0_i32 = arith.constant 0 : i32
    %c0_i32_0 = arith.constant 0 : i32
    %c0_i32_1 = arith.constant 0 : i32
    return %c0_i32, %c0_i32_0 : i32, i32
  }
  func.func @transform_6(%arg0: i32) -> (i32, i32) {
    %c0_i32 = arith.constant 0 : i32
    %c0_i32_0 = arith.constant 0 : i32
    %c0_i32_1 = arith.constant 0 : i32
    return %c0_i32, %c0_i32_0 : i32, i32
  }
  func.func @transform_7(%arg0: i32) -> (i32, i32) {
    %c0_i32 = arith.constant 0 : i32
    %c0_i32_0 = arith.constant 0 : i32
    %c0_i32_1 = arith.constant 0 : i32
    return %c0_i32, %c0_i32_0 : i32, i32
  }
  func.func @transform_8(%arg0: i32) -> (i32, i32) {
    %c0_i32 = arith.constant 0 : i32
    %c0_i32_0 = arith.constant 0 : i32
    %c0_i32_1 = arith.constant 0 : i32
    return %c0_i32, %c0_i32_0 : i32, i32
  }
  func.func @transform_9(%arg0: i32) -> i32 {
    %c0_i32 = arith.constant 0 : i32
    %c0_i32_0 = arith.constant 0 : i32
    return %c0_i32 : i32
  }
  func.func @transform_10(%arg0: i32) -> (i32, i32) {
    %c0_i32 = arith.constant 0 : i32
    %c0_i32_0 = arith.constant 0 : i32
    return %arg0, %c0_i32 : i32, i32
  }
}

</mosaic_0001>

<llo_original>
// kernel: tpu_custom_call.1
$region0: #{tpu_custom_call.1}
  #allocation0 [shape = 'u32[]', space=smem, size = 0x4, offset = 0x4, fixed_abs, tag = 'smem constant byte address 0x4 - core index']
  #allocation1 [shape = 'u32[72,128]{1,0:T(1,128)}', space=vmem, size = 0x9000, scoped, tag = 'internal scratch']
  #allocation2 [shape = 'f32[1]{0:T(128)S(6)}', space=smem, size = 0x200, scoped, tag = 'scoped memory for tpu_custom_call.1']
  %s0 = inlined_call_operand.hbm [shape: f32[16,4,128], index: 0, kind: input, shape index: {}]
  %s1 = inlined_call_operand.hbm [shape: f32[16,4,128], index: 1, kind: input, shape index: {}]
  %s2 = inlined_call_operand.hbm [shape: f32[16,128], index: 2, kind: input, shape index: {}]
  %s3 = inlined_call_operand.hbm [shape: f32[16,128], index: 3, kind: input, shape index: {}]
  %s4 = inlined_call_operand.hbm [shape: f32[256,128], index: 4, kind: input, shape index: {}]
  %s5 = inlined_call_operand.hbm [shape: f32[128,128], index: 5, kind: input, shape index: {}]
  %s6 = inlined_call_operand.vmem [shape: f32[1,128], index: 6, kind: input, shape index: {}]
  %s7 = inlined_call_operand.vmem [shape: f32[1,128], index: 7, kind: input, shape index: {}]
  %s8 = inlined_call_operand.vmem [shape: f32[1,128], index: 8, kind: input, shape index: {}]
  %s9 = inlined_call_operand.<no memory space> [shape: f32[1], index: 9, kind: input, shape index: {}]
  %s10 = inlined_call_operand.hbm [shape: f32[16,128], index: 10, kind: output, shape index: {}]
  %s11 = sld [smem:[#allocation0]]
  $region74: #{tpu_custom_call.1} parent=0
    _
  %s13 = ssub.s32 1, %s11
  %s14 = scalar_select 0, %s13, %s11
  %15 = sst [smem:[#allocation2]] %s9
  $region1: #{tpu_custom_call.1} parent=0
    #allocation3 [shape = 'u8[32768]{0}', space=vmem, size = 0x8000, scoped, tag = 'input window, operand 0, single buffered']
    #allocation4 [shape = 's32[1]{0}', space=sflag, size = 0x4, scoped, tag = 'scoped memory for tpu_custom_call.1']
    #allocation5 [shape = 's32[1]{0}', space=sflag, size = 0x4, scoped, tag = 'scoped memory for tpu_custom_call.1']
    #allocation6 [shape = 'u8[32768]{0}', space=vmem, size = 0x8000, scoped, tag = 'input window, operand 1, single buffered']
    #allocation7 [shape = 's32[1]{0}', space=sflag, size = 0x4, scoped, tag = 'scoped memory for tpu_custom_call.1']
    #allocation8 [shape = 'u8[8192]{0}', space=vmem, size = 0x2000, scoped, tag = 'input window, operand 2, single buffered']
    #allocation9 [shape = 'u8[8192]{0}', space=vmem, size = 0x2000, scoped, tag = 'input window, operand 3, single buffered']
    #allocation10 [shape = 's32[1]{0}', space=sflag, size = 0x4, scoped, tag = 'scoped memory for tpu_custom_call.1']
    #allocation11 [shape = 'u8[131072]{0}', space=vmem, size = 0x20000, scoped, tag = 'input window, operand 4, single buffered']
    #allocation12 [shape = 'u8[65536]{0}', space=vmem, size = 0x10000, scoped, tag = 'input window, operand 5, single buffered']
    #allocation13 [shape = 's32[1]{0}', space=sflag, size = 0x4, scoped, tag = 'scoped memory for tpu_custom_call.1']
    #allocation14 [shape = 'u8[8192]{0}', space=vmem, size = 0x2000, scoped, tag = 'output window, operand 0, single buffered']
    %16 = vsyncpa [#allocation4], 0
    %17 = vsyncpa [#allocation7], 0
    %18 = vsyncpa [#allocation10], 0
    %19 = vsyncpa [#allocation13], 0
    %20 = vsyncpa [#allocation5], 0
    // Predicated region
    $region2: #{tpu_custom_call.1} parent=1 // pred_check
      _
    $region3: #{tpu_custom_call.1} parent=1 // pred_check_branch
      %22 = sbr.rel (0) target = $region5
    $region4: #{tpu_custom_call.1} parent=1 // pred_region
      %24 = vsyncadd [#allocation4], 0
      %s25 = sshll.u32 %s0, 4
      %s26 = int_to_ptr.hbm [resolvable:$true] %s25
      %s27 = sshll.u32 [#allocation3], 4
      %s28 = int_to_ptr.vmem [resolvable:$true] %s27
      %33 = dma.hbm_to_vmem [thread:$0]  %s26, 1024, %s28, [#allocation4], 64, 64, 4
    $region5: #{tpu_custom_call.1} parent=1 // pred_fallthru
      _
    // Predicated region
    $region6: #{tpu_custom_call.1} parent=1 // pred_check
      _
    $region7: #{tpu_custom_call.1} parent=1 // pred_check_branch
      %35 = sbr.rel (0) target = $region9
    $region8: #{tpu_custom_call.1} parent=1 // pred_region
      %37 = vsyncadd [#allocation7], 0
      %s38 = sshll.u32 %s1, 4
      %s39 = int_to_ptr.hbm [resolvable:$true] %s38
      %s40 = sshll.u32 [#allocation6], 4
      %s41 = int_to_ptr.vmem [resolvable:$true] %s40
      %46 = dma.hbm_to_vmem [thread:$0]  %s39, 1024, %s41, [#allocation7], 64, 64, 4
    $region9: #{tpu_custom_call.1} parent=1 // pred_fallthru
      _
    // Predicated region
    $region10: #{tpu_custom_call.1} parent=1 // pred_check
      _
    $region11: #{tpu_custom_call.1} parent=1 // pred_check_branch
      %48 = sbr.rel (0) target = $region13
    $region12: #{tpu_custom_call.1} parent=1 // pred_region
      %50 = vsyncadd [#allocation7], 0
      %s51 = sshll.u32 %s2, 4
      %s52 = int_to_ptr.hbm [resolvable:$true] %s51
      %s53 = sshll.u32 [#allocation8], 4
      %s54 = int_to_ptr.vmem [resolvable:$true] %s53
      %59 = dma.hbm_to_vmem [thread:$0]  %s52, 256, %s54, [#allocation7], 128, 128, 8
    $region13: #{tpu_custom_call.1} parent=1 // pred_fallthru
      _
    // Predicated region
    $region14: #{tpu_custom_call.1} parent=1 // pred_check
      _
    $region15: #{tpu_custom_call.1} parent=1 // pred_check_branch
      %61 = sbr.rel (0) target = $region17
    $region16: #{tpu_custom_call.1} parent=1 // pred_region
      %63 = vsyncadd [#allocation10], 0
      %s64 = sshll.u32 %s3, 4
      %s65 = int_to_ptr.hbm [resolvable:$true] %s64
      %s66 = sshll.u32 [#allocation9], 4
      %s67 = int_to_ptr.vmem [resolvable:$true] %s66
      %72 = dma.hbm_to_vmem [thread:$0]  %s65, 256, %s67, [#allocation10], 128, 128, 8
    $region17: #{tpu_custom_call.1} parent=1 // pred_fallthru
      _
    // Predicated region
    $region18: #{tpu_custom_call.1} parent=1 // pred_check
      _
    $region19: #{tpu_custom_call.1} parent=1 // pred_check_branch
      %74 = sbr.rel (0) target = $region21
    $region20: #{tpu_custom_call.1} parent=1 // pred_region
      %76 = vsyncadd [#allocation10], 0
      %s77 = sshll.u32 %s4, 4
      %s78 = int_to_ptr.hbm [resolvable:$true] %s77
      %s79 = sshll.u32 [#allocation11], 4
      %s80 = int_to_ptr.vmem [resolvable:$true] %s79
      %85 = dma.hbm_to_vmem [thread:$0]  %s78, 4096, %s80, [#allocation10], 128, 128, 8
    $region21: #{tpu_custom_call.1} parent=1 // pred_fallthru
      _
    // Predicated region
    $region22: #{tpu_custom_call.1} parent=1 // pred_check
      _
    $region23: #{tpu_custom_call.1} parent=1 // pred_check_branch
      %87 = sbr.rel (0) target = $region25
    $region24: #{tpu_custom_call.1} parent=1 // pred_region
      %89 = vsyncadd [#allocation13], 0
      %s90 = sshll.u32 %s5, 4
      %s91 = int_to_ptr.hbm [resolvable:$true] %s90
      %s92 = sshll.u32 [#allocation12], 4
      %s93 = int_to_ptr.vmem [resolvable:$true] %s92
      %98 = dma.hbm_to_vmem [thread:$0]  %s91, 2048, %s93, [#allocation13], 128, 128, 8
    $region25: #{tpu_custom_call.1} parent=1 // pred_fallthru
      _
    // Predicated region
    $region26: #{tpu_custom_call.1} parent=1 // pred_check
      _
    $region27: #{tpu_custom_call.1} parent=1 // pred_check_branch
      %100 = sbr.rel (0) target = $region29
    $region28: #{tpu_custom_call.1} parent=1 // pred_region
      _
    $region29: #{tpu_custom_call.1} parent=1 // pred_fallthru
      _
    // Predicated region
    $region30: #{tpu_custom_call.1} parent=1 // pred_check
      _
    $region31: #{tpu_custom_call.1} parent=1 // pred_check_branch
      %102 = sbr.rel (0) target = $region33
    $region32: #{tpu_custom_call.1} parent=1 // pred_region
      _
    $region33: #{tpu_custom_call.1} parent=1 // pred_fallthru
      _
    // Predicated region
    $region34: #{tpu_custom_call.1} parent=1 // pred_check
      _
    $region35: #{tpu_custom_call.1} parent=1 // pred_check_branch
      %104 = sbr.rel (0) target = $region37
    $region36: #{tpu_custom_call.1} parent=1 // pred_region
      _
    $region37: #{tpu_custom_call.1} parent=1 // pred_fallthru
      _
    // Predicated region
    $region38: #{tpu_custom_call.1} parent=1 // pred_check
      _
    $region39: #{tpu_custom_call.1} parent=1 // pred_check_branch
      %106 = sbr.rel (0) target = $region41
    $region40: #{tpu_custom_call.1} parent=1 // pred_region
      _
    $region41: #{tpu_custom_call.1} parent=1 // pred_fallthru
      _
    // Predicated region
    $region42: #{tpu_custom_call.1} parent=1 // pred_check
      _
    $region43: #{tpu_custom_call.1} parent=1 // pred_check_branch
      %108 = sbr.rel (0) target = $region45
    $region44: #{tpu_custom_call.1} parent=1 // pred_region
      %110 = dma.done [#allocation4], 1024
    $region45: #{tpu_custom_call.1} parent=1 // pred_fallthru
      _
    // Predicated region
    $region46: #{tpu_custom_call.1} parent=1 // pred_check
      _
    $region47: #{tpu_custom_call.1} parent=1 // pred_check_branch
      %112 = sbr.rel (0) target = $region49
    $region48: #{tpu_custom_call.1} parent=1 // pred_region
      %114 = dma.done [#allocation7], 1024
    $region49: #{tpu_custom_call.1} parent=1 // pred_fallthru
      _
    // Predicated region
    $region50: #{tpu_custom_call.1} parent=1 // pred_check
      _
    $region51: #{tpu_custom_call.1} parent=1 // pred_check_branch
      %116 = sbr.rel (0) target = $region53
    $region52: #{tpu_custom_call.1} parent=1 // pred_region
      %118 = dma.done [#allocation7], 256
    $region53: #{tpu_custom_call.1} parent=1 // pred_fallthru
      _
    // Predicated region
    $region54: #{tpu_custom_call.1} parent=1 // pred_check
      _
    $region55: #{tpu_custom_call.1} parent=1 // pred_check_branch
      %120 = sbr.rel (0) target = $region57
    $region56: #{tpu_custom_call.1} parent=1 // pred_region
      %122 = dma.done [#allocation10], 256
    $region57: #{tpu_custom_call.1} parent=1 // pred_fallthru
      _
    // Predicated region
    $region58: #{tpu_custom_call.1} parent=1 // pred_check
      _
    $region59: #{tpu_custom_call.1} parent=1 // pred_check_branch
      %124 = sbr.rel (0) target = $region61
    $region60: #{tpu_custom_call.1} parent=1 // pred_region
      %126 = dma.done [#allocation10], 4096
    $region61: #{tpu_custom_call.1} parent=1 // pred_fallthru
      _
    // Predicated region
    $region62: #{tpu_custom_call.1} parent=1 // pred_check
      _
    $region63: #{tpu_custom_call.1} parent=1 // pred_check_branch
      %128 = sbr.rel (0) target = $region65
    $region64: #{tpu_custom_call.1} parent=1 // pred_region
      %130 = dma.done [#allocation13], 2048
    $region65: #{tpu_custom_call.1} parent=1 // pred_fallthru
      _
    %v131 = vld [vmem:[#allocation3] sm:$0xf]
    %v132 = vld [vmem:[#allocation3 + $0x4] sm:$0xf]
    %v133 = vld [vmem:[#allocation3 + $0x8] sm:$0xf]
    %v134 = vld [vmem:[#allocation3 + $0xc] sm:$0xf]
    %v135 = vld [vmem:[#allocation3 + $0x10] sm:$0xf]
    %v136 = vld [vmem:[#allocation3 + $0x14] sm:$0xf]
    %v137 = vld [vmem:[#allocation3 + $0x18] sm:$0xf]
    %v138 = vld [vmem:[#allocation3 + $0x1c] sm:$0xf]
    %v139 = vld [vmem:[#allocation3 + $0x20] sm:$0xf]
    %v140 = vld [vmem:[#allocation3 + $0x24] sm:$0xf]
    %v141 = vld [vmem:[#allocation3 + $0x28] sm:$0xf]
    %v142 = vld [vmem:[#allocation3 + $0x2c] sm:$0xf]
    %v143 = vld [vmem:[#allocation3 + $0x30] sm:$0xf]
    %v144 = vld [vmem:[#allocation3 + $0x34] sm:$0xf]
    %v145 = vld [vmem:[#allocation3 + $0x38] sm:$0xf]
    %v146 = vld [vmem:[#allocation3 + $0x3c] sm:$0xf]
    %v147 = vld [vmem:[#allocation6] sm:$0xf]
    %v148 = vld [vmem:[#allocation6 + $0x4] sm:$0xf]
    %v149 = vld [vmem:[#allocation6 + $0x8] sm:$0xf]
    %v150 = vld [vmem:[#allocation6 + $0xc] sm:$0xf]
    %v151 = vld [vmem:[#allocation6 + $0x10] sm:$0xf]
    %v152 = vld [vmem:[#allocation6 + $0x14] sm:$0xf]
    %v153 = vld [vmem:[#allocation6 + $0x18] sm:$0xf]
    %v154 = vld [vmem:[#allocation6 + $0x1c] sm:$0xf]
    %v155 = vld [vmem:[#allocation6 + $0x20] sm:$0xf]
    %v156 = vld [vmem:[#allocation6 + $0x24] sm:$0xf]
    %v157 = vld [vmem:[#allocation6 + $0x28] sm:$0xf]
    %v158 = vld [vmem:[#allocation6 + $0x2c] sm:$0xf]
    %v159 = vld [vmem:[#allocation6 + $0x30] sm:$0xf]
    %v160 = vld [vmem:[#allocation6 + $0x34] sm:$0xf]
    %v161 = vld [vmem:[#allocation6 + $0x38] sm:$0xf]
    %v162 = vld [vmem:[#allocation6 + $0x3c] sm:$0xf]
    %v163 = vld [vmem:[#allocation8] sm:$0xff]
    %v164 = vld [vmem:[#allocation8 + $0x8] sm:$0xff]
    %v165 = vld [vmem:[#allocation9] sm:$0xff]
    %v166 = vld [vmem:[#allocation9 + $0x8] sm:$0xff]
    %v167 = vld [vmem:[#allocation11] sm:$0xff]
    %v168 = vld [vmem:[#allocation11 + $0x8] sm:$0xff]
    %v169 = vld [vmem:[#allocation11 + $0x10] sm:$0xff]
    %v170 = vld [vmem:[#allocation11 + $0x18] sm:$0xff]
    %v171 = vld [vmem:[#allocation11 + $0x20] sm:$0xff]
    %v172 = vld [vmem:[#allocation11 + $0x28] sm:$0xff]
    %v173 = vld [vmem:[#allocation11 + $0x30] sm:$0xff]
    %v174 = vld [vmem:[#allocation11 + $0x38] sm:$0xff]
    %v175 = vld [vmem:[#allocation11 + $0x40] sm:$0xff]
    %v176 = vld [vmem:[#allocation11 + $0x48] sm:$0xff]
    %v177 = vld [vmem:[#allocation11 + $0x50] sm:$0xff]
    %v178 = vld [vmem:[#allocation11 + $0x58] sm:$0xff]
    %v179 = vld [vmem:[#allocation11 + $0x60] sm:$0xff]
    %v180 = vld [vmem:[#allocation11 + $0x68] sm:$0xff]
    %v181 = vld [vmem:[#allocation11 + $0x70] sm:$0xff]
    %v182 = vld [vmem:[#allocation11 + $0x78] sm:$0xff]
    %v183 = vld [vmem:[#allocation11 + $0x80] sm:$0xff]
    %v184 = vld [vmem:[#allocation11 + $0x88] sm:$0xff]
    %v185 = vld [vmem:[#allocation11 + $0x90] sm:$0xff]
    %v186 = vld [vmem:[#allocation11 + $0x98] sm:$0xff]
    %v187 = vld [vmem:[#allocation11 + $0xa0] sm:$0xff]
    %v188 = vld [vmem:[#allocation11 + $0xa8] sm:$0xff]
    %v189 = vld [vmem:[#allocation11 + $0xb0] sm:$0xff]
    %v190 = vld [vmem:[#allocation11 + $0xb8] sm:$0xff]
    %v191 = vld [vmem:[#allocation11 + $0xc0] sm:$0xff]
    %v192 = vld [vmem:[#allocation11 + $0xc8] sm:$0xff]
    %v193 = vld [vmem:[#allocation11 + $0xd0] sm:$0xff]
    %v194 = vld [vmem:[#allocation11 + $0xd8] sm:$0xff]
    %v195 = vld [vmem:[#allocation11 + $0xe0] sm:$0xff]
    %v196 = vld [vmem:[#allocation11 + $0xe8] sm:$0xff]
    %v197 = vld [vmem:[#allocation11 + $0xf0] sm:$0xff]
    %v198 = vld [vmem:[#allocation11 + $0xf8] sm:$0xff]
    %v215 = vrot.slane %v131, 3
    %v216 = vrot.slane %v132, 2
    %vm217 = vcmask 1041409
    %v218 = vsel %vm217, %v216, %v215
    %v219 = vrot.slane %v133, 1
    %vm220 = vcmask 1042434
    %v221 = vsel %vm220, %v219, %v218
    %vm222 = vcmask 1043459
    %v223 = vsel %vm222, %v134, %v221
    %v224 = vrot.slane %v135, 7
    %vm225 = vcmask 1044484
    %v226 = vsel %vm225, %v224, %v223
    %v227 = vrot.slane %v136, 6
    %vm228 = vcmask 1045509
    %v229 = vsel %vm228, %v227, %v226
    %v230 = vrot.slane %v137, 5
    %vm231 = vcmask 1046534
    %v232 = vsel %vm231, %v230, %v229
    %v233 = vrot.slane %v138, 4
    %vm234 = vcmask 1047559
    %v235 = vsel %vm234, %v233, %v232
    %v236 = vrot.slane %v139, 3
    %v237 = vrot.slane %v140, 2
    %v238 = vsel %vm217, %v237, %v236
    %v239 = vrot.slane %v141, 1
    %v240 = vsel %vm220, %v239, %v238
    %v241 = vsel %vm222, %v142, %v240
    %v242 = vrot.slane %v143, 7
    %v243 = vsel %vm225, %v242, %v241
    %v244 = vrot.slane %v144, 6
    %v245 = vsel %vm228, %v244, %v243
    %v246 = vrot.slane %v145, 5
    %v247 = vsel %vm231, %v246, %v245
    %v248 = vrot.slane %v146, 4
    %v249 = vsel %vm234, %v248, %v247
    %252 = vmatpush.msra.mxu0 %v198
    %253 = vmatpush.msra.mxu0 %v197
    %254 = vmatpush.msra.mxu0 %v196
    %255 = vmatpush.msra.mxu0 %v195
    %256 = vmatpush.msra.mxu0 %v194
    %257 = vmatpush.msra.mxu0 %v193
    %258 = vmatpush.msra.mxu0 %v192
    %259 = vmatpush.msra.mxu0 %v191
    %260 = vmatpush.msra.mxu0 %v190
    %261 = vmatpush.msra.mxu0 %v189
    %262 = vmatpush.msra.mxu0 %v188
    %263 = vmatpush.msra.mxu0 %v187
    %264 = vmatpush.msra.mxu0 %v186
    %265 = vmatpush.msra.mxu0 %v185
    %266 = vmatpush.msra.mxu0 %v184
    %267 = vmatpush.msra.mxu0 %v183
    %268 = vmatmul.f32.gmra.mxu0 %v235
    %v269 = vpop.f32.mrf.mxu0
    %v270 = vadd.f32 0.0, %v269
    %271 = vmatmul.f32.gmra.mxu0 %v249
    %v272 = vpop.f32.mrf.mxu0
    %v273 = vadd.f32 0.0, %v272
    %274 = vdwg.mxu0
    %275 = vmatpush.msra.mxu0 %v182
    %276 = vmatpush.msra.mxu0 %v181
    %277 = vmatpush.msra.mxu0 %v180
    %278 = vmatpush.msra.mxu0 %v179
    %279 = vmatpush.msra.mxu0 %v178
    %280 = vmatpush.msra.mxu0 %v177
    %281 = vmatpush.msra.mxu0 %v176
    %282 = vmatpush.msra.mxu0 %v175
    %283 = vmatpush.msra.mxu0 %v174
    %284 = vmatpush.msra.mxu0 %v173
    %285 = vmatpush.msra.mxu0 %v172
    %286 = vmatpush.msra.mxu0 %v171
    %287 = vmatpush.msra.mxu0 %v170
    %288 = vmatpush.msra.mxu0 %v169
    %289 = vmatpush.msra.mxu0 %v168
    %290 = vmatpush.msra.mxu0 %v167
    %291 = vmatmul.f32.gmra.mxu0 %v165
    %v292 = vpop.f32.mrf.mxu0
    %v293 = vadd.f32 %v270, %v292
    %294 = vmatmul.f32.gmra.mxu0 %v166
    %v295 = vpop.f32.mrf.mxu0
    %v296 = vadd.f32 %v273, %v295
    %297 = vdwg.mxu0
    %v298 = vld [vmem:[%s7] sm:$0x1]
    %v300 = vperm.slane %v298, 0
    %v302 = vmul.f32 %v163, %v300
    %v303 = vmul.f32 %v164, %v300
    %v306 = vrot.slane %v302, 1
    %v307 = vrot.slane %v302, 2
    %v308 = vrot.slane %v302, 3
    %v309 = vrot.slane %v302, 4
    %v310 = vrot.slane %v302, 5
    %v311 = vrot.slane %v302, 6
    %v312 = vrot.slane %v302, 7
    %v313 = vrot.slane %v303, 1
    %v314 = vrot.slane %v303, 2
    %v315 = vrot.slane %v303, 3
    %v316 = vrot.slane %v303, 4
    %v317 = vrot.slane %v303, 5
    %v318 = vrot.slane %v303, 6
    %v319 = vrot.slane %v303, 7
    %v320 = vperm.slane %v302, 0
    %v321 = vperm.slane %v306, 0
    %v322 = vperm.slane %v307, 0
    %v323 = vperm.slane %v308, 0
    %v324 = vperm.slane %v309, 0
    %v325 = vperm.slane %v310, 0
    %v326 = vperm.slane %v311, 0
    %v327 = vperm.slane %v312, 0
    %v328 = vperm.slane %v303, 0
    %v329 = vperm.slane %v313, 0
    %v330 = vperm.slane %v314, 0
    %v331 = vperm.slane %v315, 0
    %v332 = vperm.slane %v316, 0
    %v333 = vperm.slane %v317, 0
    %v334 = vperm.slane %v318, 0
    %v335 = vperm.slane %v319, 0
    %v352 = vmul.f32 %v320, %v147
    %v353 = vmul.f32 %v321, %v148
    %v354 = vmul.f32 %v322, %v149
    %v355 = vmul.f32 %v323, %v150
    %v356 = vmul.f32 %v324, %v151
    %v357 = vmul.f32 %v325, %v152
    %v358 = vmul.f32 %v326, %v153
    %v359 = vmul.f32 %v327, %v154
    %v360 = vmul.f32 %v328, %v155
    %v361 = vmul.f32 %v329, %v156
    %v362 = vmul.f32 %v330, %v157
    %v363 = vmul.f32 %v331, %v158
    %v364 = vmul.f32 %v332, %v159
    %v365 = vmul.f32 %v333, %v160
    %v366 = vmul.f32 %v334, %v161
    %v367 = vmul.f32 %v335, %v162
    %vm368 = vcmask 1043456
    %v369 = vsel %vm368, %v352, 0.0
    %370 = vadd.xlane.f32.xlu0 %v369
    %v371 = vpop.xlane.xlu0 %370
    %v372 = vsel %vm368, %v353, 0.0
    %373 = vadd.xlane.f32.xlu0 %v372
    %v374 = vpop.xlane.xlu0 %373
    %v375 = vsel %vm368, %v354, 0.0
    %376 = vadd.xlane.f32.xlu0 %v375
    %v377 = vpop.xlane.xlu0 %376
    %v378 = vsel %vm368, %v355, 0.0
    %379 = vadd.xlane.f32.xlu0 %v378
    %v380 = vpop.xlane.xlu0 %379
    %v381 = vsel %vm368, %v356, 0.0
    %382 = vadd.xlane.f32.xlu0 %v381
    %v383 = vpop.xlane.xlu0 %382
    %v384 = vsel %vm368, %v357, 0.0
    %385 = vadd.xlane.f32.xlu0 %v384
    %v386 = vpop.xlane.xlu0 %385
    %v387 = vsel %vm368, %v358, 0.0
    %388 = vadd.xlane.f32.xlu0 %v387
    %v389 = vpop.xlane.xlu0 %388
    %v390 = vsel %vm368, %v359, 0.0
    %391 = vadd.xlane.f32.xlu0 %v390
    %v392 = vpop.xlane.xlu0 %391
    %v393 = vsel %vm368, %v360, 0.0
    %394 = vadd.xlane.f32.xlu0 %v393
    %v395 = vpop.xlane.xlu0 %394
    %v396 = vsel %vm368, %v361, 0.0
    %397 = vadd.xlane.f32.xlu0 %v396
    %v398 = vpop.xlane.xlu0 %397
    %v399 = vsel %vm368, %v362, 0.0
    %400 = vadd.xlane.f32.xlu0 %v399
    %v401 = vpop.xlane.xlu0 %400
    %v402 = vsel %vm368, %v363, 0.0
    %403 = vadd.xlane.f32.xlu0 %v402
    %v404 = vpop.xlane.xlu0 %403
    %v405 = vsel %vm368, %v364, 0.0
    %406 = vadd.xlane.f32.xlu0 %v405
    %v407 = vpop.xlane.xlu0 %406
    %v408 = vsel %vm368, %v365, 0.0
    %409 = vadd.xlane.f32.xlu0 %v408
    %v410 = vpop.xlane.xlu0 %409
    %v411 = vsel %vm368, %v366, 0.0
    %412 = vadd.xlane.f32.xlu0 %v411
    %v413 = vpop.xlane.xlu0 %412
    %v414 = vsel %vm368, %v367, 0.0
    %415 = vadd.xlane.f32.xlu0 %v414
    %v416 = vpop.xlane.xlu0 %415
    %v433 = vlaneseq
    %v434 = vand.u32 %v433, 127
    %v435 = vperm.slane %v371, %v434
    %v436 = vperm.slane %v374, %v434
    %v437 = vperm.slane %v377, %v434
    %v438 = vperm.slane %v380, %v434
    %v439 = vperm.slane %v383, %v434
    %v440 = vperm.slane %v386, %v434
    %v441 = vperm.slane %v389, %v434
    %v442 = vperm.slane %v392, %v434
    %v443 = vperm.slane %v395, %v434
    %v444 = vperm.slane %v398, %v434
    %v445 = vperm.slane %v401, %v434
    %v446 = vperm.slane %v404, %v434
    %v447 = vperm.slane %v407, %v434
    %v448 = vperm.slane %v410, %v434
    %v449 = vperm.slane %v413, %v434
    %v450 = vperm.slane %v416, %v434
    %v451 = vsel %vm217, %v436, %v435
    %v452 = vsel %vm220, %v437, %v451
    %v453 = vsel %vm222, %v438, %v452
    %v454 = vsel %vm225, %v439, %v453
    %v455 = vsel %vm228, %v440, %v454
    %v456 = vsel %vm231, %v441, %v455
    %v457 = vsel %vm234, %v442, %v456
    %v458 = vsel %vm217, %v444, %v443
    %v459 = vsel %vm220, %v445, %v458
    %v460 = vsel %vm222, %v446, %v459
    %v461 = vsel %vm225, %v447, %v460
    %v462 = vsel %vm228, %v448, %v461
    %v463 = vsel %vm231, %v449, %v462
    %v464 = vsel %vm234, %v450, %v463
    %vm467 = vcmask 31744
    %v468 = vsel %vm467, %v457, -inf
    %469 = vmax.xlane.f32.xlu0 %v468
    %v470 = vpop.xlane.xlu0 %469
    %v471 = vsel %vm467, %v464, -inf
    %472 = vmax.xlane.f32.xlu0 %v471
    %v473 = vpop.xlane.xlu0 %472
    %v476 = vperm.slane %v470, 0
    %v477 = vperm.slane %v470, 1
    %v478 = vperm.slane %v470, 2
    %v479 = vperm.slane %v470, 3
    %v480 = vperm.slane %v470, 4
    %v481 = vperm.slane %v470, 5
    %v482 = vperm.slane %v470, 6
    %v483 = vperm.slane %v470, 7
    %v484 = vperm.slane %v473, 0
    %v485 = vperm.slane %v473, 1
    %v486 = vperm.slane %v473, 2
    %v487 = vperm.slane %v473, 3
    %v488 = vperm.slane %v473, 4
    %v489 = vperm.slane %v473, 5
    %v490 = vperm.slane %v473, 6
    %v491 = vperm.slane %v473, 7
    %v508 = vsub.f32 %v371, %v476
    %v509 = vsub.f32 %v374, %v477
    %v510 = vsub.f32 %v377, %v478
    %v511 = vsub.f32 %v380, %v479
    %v512 = vsub.f32 %v383, %v480
    %v513 = vsub.f32 %v386, %v481
    %v514 = vsub.f32 %v389, %v482
    %v515 = vsub.f32 %v392, %v483
    %v516 = vsub.f32 %v395, %v484
    %v517 = vsub.f32 %v398, %v485
    %v518 = vsub.f32 %v401, %v486
    %v519 = vsub.f32 %v404, %v487
    %v520 = vsub.f32 %v407, %v488
    %v521 = vsub.f32 %v410, %v489
    %v522 = vsub.f32 %v413, %v490
    %v523 = vsub.f32 %v416, %v491
    %v524 = vmul.f32 %v508, 1.442695
    %v525 = vpow.pop %v524
    %v526 = vmul.f32 %v509, 1.442695
    %v527 = vpow.pop %v526
    %v528 = vmul.f32 %v510, 1.442695
    %v529 = vpow.pop %v528
    %v530 = vmul.f32 %v511, 1.442695
    %v531 = vpow.pop %v530
    %v532 = vmul.f32 %v512, 1.442695
    %v533 = vpow.pop %v532
    %v534 = vmul.f32 %v513, 1.442695
    %v535 = vpow.pop %v534
    %v536 = vmul.f32 %v514, 1.442695
    %v537 = vpow.pop %v536
    %v538 = vmul.f32 %v515, 1.442695
    %v539 = vpow.pop %v538
    %v540 = vmul.f32 %v516, 1.442695
    %v541 = vpow.pop %v540
    %v542 = vmul.f32 %v517, 1.442695
    %v543 = vpow.pop %v542
    %v544 = vmul.f32 %v518, 1.442695
    %v545 = vpow.pop %v544
    %v546 = vmul.f32 %v519, 1.442695
    %v547 = vpow.pop %v546
    %v548 = vmul.f32 %v520, 1.442695
    %v549 = vpow.pop %v548
    %v550 = vmul.f32 %v521, 1.442695
    %v551 = vpow.pop %v550
    %v552 = vmul.f32 %v522, 1.442695
    %v553 = vpow.pop %v552
    %v554 = vmul.f32 %v523, 1.442695
    %v555 = vpow.pop %v554
    %572 = vset.pattern.permute.xlu0 0
    %573 = vperm.xlu0 %572, %v525
    %v574 = vpop.permute.xlu0 %573
    %575 = vset.pattern.permute.xlu0 0
    %576 = vperm.xlu0 %575, %v527
    %v577 = vpop.permute.xlu0 %576
    %578 = vset.pattern.permute.xlu0 0
    %579 = vperm.xlu0 %578, %v529
    %v580 = vpop.permute.xlu0 %579
    %581 = vset.pattern.permute.xlu0 0
    %582 = vperm.xlu0 %581, %v531
    %v583 = vpop.permute.xlu0 %582
    %584 = vset.pattern.permute.xlu0 0
    %585 = vperm.xlu0 %584, %v533
    %v586 = vpop.permute.xlu0 %585
    %587 = vset.pattern.permute.xlu0 0
    %588 = vperm.xlu0 %587, %v535
    %v589 = vpop.permute.xlu0 %588
    %590 = vset.pattern.permute.xlu0 0
    %591 = vperm.xlu0 %590, %v537
    %v592 = vpop.permute.xlu0 %591
    %593 = vset.pattern.permute.xlu0 0
    %594 = vperm.xlu0 %593, %v539
    %v595 = vpop.permute.xlu0 %594
    %596 = vset.pattern.permute.xlu0 0
    %597 = vperm.xlu0 %596, %v541
    %v598 = vpop.permute.xlu0 %597
    %599 = vset.pattern.permute.xlu0 0
    %600 = vperm.xlu0 %599, %v543
    %v601 = vpop.permute.xlu0 %600
    %602 = vset.pattern.permute.xlu0 0
    %603 = vperm.xlu0 %602, %v545
    %v604 = vpop.permute.xlu0 %603
    %605 = vset.pattern.permute.xlu0 0
    %606 = vperm.xlu0 %605, %v547
    %v607 = vpop.permute.xlu0 %606
    %608 = vset.pattern.permute.xlu0 0
    %609 = vperm.xlu0 %608, %v549
    %v610 = vpop.permute.xlu0 %609
    %611 = vset.pattern.permute.xlu0 0
    %612 = vperm.xlu0 %611, %v551
    %v613 = vpop.permute.xlu0 %612
    %614 = vset.pattern.permute.xlu0 0
    %615 = vperm.xlu0 %614, %v553
    %v616 = vpop.permute.xlu0 %615
    %617 = vset.pattern.permute.xlu0 0
    %618 = vperm.xlu0 %617, %v555
    %v619 = vpop.permute.xlu0 %618
    %v620 = vperm.slane %v574, %v434
    %v621 = vperm.slane %v577, %v434
    %v622 = vperm.slane %v580, %v434
    %v623 = vperm.slane %v583, %v434
    %v624 = vperm.slane %v586, %v434
    %v625 = vperm.slane %v589, %v434
    %v626 = vperm.slane %v592, %v434
    %v627 = vperm.slane %v595, %v434
    %v628 = vperm.slane %v598, %v434
    %v629 = vperm.slane %v601, %v434
    %v630 = vperm.slane %v604, %v434
    %v631 = vperm.slane %v607, %v434
    %v632 = vperm.slane %v610, %v434
    %v633 = vperm.slane %v613, %v434
    %v634 = vperm.slane %v616, %v434
    %v635 = vperm.slane %v619, %v434
    %v636 = vsel %vm217, %v621, %v620
    %v637 = vsel %vm220, %v622, %v636
    %v638 = vsel %vm222, %v623, %v637
    %v639 = vsel %vm225, %v624, %v638
    %v640 = vsel %vm228, %v625, %v639
    %v641 = vsel %vm231, %v626, %v640
    %v642 = vsel %vm234, %v627, %v641
    %v643 = vsel %vm217, %v629, %v628
    %v644 = vsel %vm220, %v630, %v643
    %v645 = vsel %vm222, %v631, %v644
    %v646 = vsel %vm225, %v632, %v645
    %v647 = vsel %vm228, %v633, %v646
    %v648 = vsel %vm231, %v634, %v647
    %v649 = vsel %vm234, %v635, %v648
    %v652 = vsel %vm467, %v642, 0.0
    %653 = vadd.xlane.f32.xlu0 %v652
    %v654 = vpop.xlane.xlu0 %653
    %v655 = vsel %vm467, %v649, 0.0
    %656 = vadd.xlane.f32.xlu0 %v655
    %v657 = vpop.xlane.xlu0 %656
    %v660 = vperm.slane %v654, 0
    %v661 = vperm.slane %v654, 1
    %v662 = vperm.slane %v654, 2
    %v663 = vperm.slane %v654, 3
    %v664 = vperm.slane %v654, 4
    %v665 = vperm.slane %v654, 5
    %v666 = vperm.slane %v654, 6
    %v667 = vperm.slane %v654, 7
    %v668 = vperm.slane %v657, 0
    %v669 = vperm.slane %v657, 1
    %v670 = vperm.slane %v657, 2
    %v671 = vperm.slane %v657, 3
    %v672 = vperm.slane %v657, 4
    %v673 = vperm.slane %v657, 5
    %v674 = vperm.slane %v657, 6
    %v675 = vperm.slane %v657, 7
    %v692 = vrcp.pop %v660
    %v693 = vmul.f32 %v660, %v692
    %v694 = vsub.f32 1.0, %v693
    %v695 = vmul.f32 %v692, %v694
    %v696 = vadd.f32 %v692, %v695
    %vm697 = vweird.f32 %v660
    %vm698 = vweird.f32 %v692
    %vm699 = vmor %vm697, %vm698
    %v700 = vsel %vm699, %v692, %v696
    %v701 = vand.u32 2147483647, %v660
    %vm702 = vcmp.eq.f32.partialorder %v701, 8.507059e+37
    %v703 = vand.u32 %v660, 2147483648
    %v704 = vor.u32 1.1754944e-38, %v703
    %v705 = vsel %vm702, %v704, %v700
    %v706 = vmul.f32 %v525, %v705
    %v707 = vrcp.pop %v661
    %v708 = vmul.f32 %v661, %v707
    %v709 = vsub.f32 1.0, %v708
    %v710 = vmul.f32 %v707, %v709
    %v711 = vadd.f32 %v707, %v710
    %vm712 = vweird.f32 %v661
    %vm713 = vweird.f32 %v707
    %vm714 = vmor %vm712, %vm713
    %v715 = vsel %vm714, %v707, %v711
    %v716 = vand.u32 2147483647, %v661
    %vm717 = vcmp.eq.f32.partialorder %v716, 8.507059e+37
    %v718 = vand.u32 %v661, 2147483648
    %v719 = vor.u32 1.1754944e-38, %v718
    %v720 = vsel %vm717, %v719, %v715
    %v721 = vmul.f32 %v527, %v720
    %v722 = vrcp.pop %v662
    %v723 = vmul.f32 %v662, %v722
    %v724 = vsub.f32 1.0, %v723
    %v725 = vmul.f32 %v722, %v724
    %v726 = vadd.f32 %v722, %v725
    %vm727 = vweird.f32 %v662
    %vm728 = vweird.f32 %v722
    %vm729 = vmor %vm727, %vm728
    %v730 = vsel %vm729, %v722, %v726
    %v731 = vand.u32 2147483647, %v662
    %vm732 = vcmp.eq.f32.partialorder %v731, 8.507059e+37
    %v733 = vand.u32 %v662, 2147483648
    %v734 = vor.u32 1.1754944e-38, %v733
    %v735 = vsel %vm732, %v734, %v730
    %v736 = vmul.f32 %v529, %v735
    %v737 = vrcp.pop %v663
    %v738 = vmul.f32 %v663, %v737
    %v739 = vsub.f32 1.0, %v738
    %v740 = vmul.f32 %v737, %v739
    %v741 = vadd.f32 %v737, %v740
    %vm742 = vweird.f32 %v663
    %vm743 = vweird.f32 %v737
    %vm744 = vmor %vm742, %vm743
    %v745 = vsel %vm744, %v737, %v741
    %v746 = vand.u32 2147483647, %v663
    %vm747 = vcmp.eq.f32.partialorder %v746, 8.507059e+37
    %v748 = vand.u32 %v663, 2147483648
    %v749 = vor.u32 1.1754944e-38, %v748
    %v750 = vsel %vm747, %v749, %v745
    %v751 = vmul.f32 %v531, %v750
    %v752 = vrcp.pop %v664
    %v753 = vmul.f32 %v664, %v752
    %v754 = vsub.f32 1.0, %v753
    %v755 = vmul.f32 %v752, %v754
    %v756 = vadd.f32 %v752, %v755
    %vm757 = vweird.f32 %v664
    %vm758 = vweird.f32 %v752
    %vm759 = vmor %vm757, %vm758
    %v760 = vsel %vm759, %v752, %v756
    %v761 = vand.u32 2147483647, %v664
    %vm762 = vcmp.eq.f32.partialorder %v761, 8.507059e+37
    %v763 = vand.u32 %v664, 2147483648
    %v764 = vor.u32 1.1754944e-38, %v763
    %v765 = vsel %vm762, %v764, %v760
    %v766 = vmul.f32 %v533, %v765
    %v767 = vrcp.pop %v665
    %v768 = vmul.f32 %v665, %v767
    %v769 = vsub.f32 1.0, %v768
    %v770 = vmul.f32 %v767, %v769
    %v771 = vadd.f32 %v767, %v770
    %vm772 = vweird.f32 %v665
    %vm773 = vweird.f32 %v767
    %vm774 = vmor %vm772, %vm773
    %v775 = vsel %vm774, %v767, %v771
    %v776 = vand.u32 2147483647, %v665
    %vm777 = vcmp.eq.f32.partialorder %v776, 8.507059e+37
    %v778 = vand.u32 %v665, 2147483648
    %v779 = vor.u32 1.1754944e-38, %v778
    %v780 = vsel %vm777, %v779, %v775
    %v781 = vmul.f32 %v535, %v780
    %v782 = vrcp.pop %v666
    %v783 = vmul.f32 %v666, %v782
    %v784 = vsub.f32 1.0, %v783
    %v785 = vmul.f32 %v782, %v784
    %v786 = vadd.f32 %v782, %v785
    %vm787 = vweird.f32 %v666
    %vm788 = vweird.f32 %v782
    %vm789 = vmor %vm787, %vm788
    %v790 = vsel %vm789, %v782, %v786
    %v791 = vand.u32 2147483647, %v666
    %vm792 = vcmp.eq.f32.partialorder %v791, 8.507059e+37
    %v793 = vand.u32 %v666, 2147483648
    %v794 = vor.u32 1.1754944e-38, %v793
    %v795 = vsel %vm792, %v794, %v790
    %v796 = vmul.f32 %v537, %v795
    %v797 = vrcp.pop %v667
    %v798 = vmul.f32 %v667, %v797
    %v799 = vsub.f32 1.0, %v798
    %v800 = vmul.f32 %v797, %v799
    %v801 = vadd.f32 %v797, %v800
    %vm802 = vweird.f32 %v667
    %vm803 = vweird.f32 %v797
    %vm804 = vmor %vm802, %vm803
    %v805 = vsel %vm804, %v797, %v801
    %v806 = vand.u32 2147483647, %v667
    %vm807 = vcmp.eq.f32.partialorder %v806, 8.507059e+37
    %v808 = vand.u32 %v667, 2147483648
    %v809 = vor.u32 1.1754944e-38, %v808
    %v810 = vsel %vm807, %v809, %v805
    %v811 = vmul.f32 %v539, %v810
    %v812 = vrcp.pop %v668
    %v813 = vmul.f32 %v668, %v812
    %v814 = vsub.f32 1.0, %v813
    %v815 = vmul.f32 %v812, %v814
    %v816 = vadd.f32 %v812, %v815
    %vm817 = vweird.f32 %v668
    %vm818 = vweird.f32 %v812
    %vm819 = vmor %vm817, %vm818
    %v820 = vsel %vm819, %v812, %v816
    %v821 = vand.u32 2147483647, %v668
    %vm822 = vcmp.eq.f32.partialorder %v821, 8.507059e+37
    %v823 = vand.u32 %v668, 2147483648
    %v824 = vor.u32 1.1754944e-38, %v823
    %v825 = vsel %vm822, %v824, %v820
    %v826 = vmul.f32 %v541, %v825
    %v827 = vrcp.pop %v669
    %v828 = vmul.f32 %v669, %v827
    %v829 = vsub.f32 1.0, %v828
    %v830 = vmul.f32 %v827, %v829
    %v831 = vadd.f32 %v827, %v830
    %vm832 = vweird.f32 %v669
    %vm833 = vweird.f32 %v827
    %vm834 = vmor %vm832, %vm833
    %v835 = vsel %vm834, %v827, %v831
    %v836 = vand.u32 2147483647, %v669
    %vm837 = vcmp.eq.f32.partialorder %v836, 8.507059e+37
    %v838 = vand.u32 %v669, 2147483648
    %v839 = vor.u32 1.1754944e-38, %v838
    %v840 = vsel %vm837, %v839, %v835
    %v841 = vmul.f32 %v543, %v840
    %v842 = vrcp.pop %v670
    %v843 = vmul.f32 %v670, %v842
    %v844 = vsub.f32 1.0, %v843
    %v845 = vmul.f32 %v842, %v844
    %v846 = vadd.f32 %v842, %v845
    %vm847 = vweird.f32 %v670
    %vm848 = vweird.f32 %v842
    %vm849 = vmor %vm847, %vm848
    %v850 = vsel %vm849, %v842, %v846
    %v851 = vand.u32 2147483647, %v670
    %vm852 = vcmp.eq.f32.partialorder %v851, 8.507059e+37
    %v853 = vand.u32 %v670, 2147483648
    %v854 = vor.u32 1.1754944e-38, %v853
    %v855 = vsel %vm852, %v854, %v850
    %v856 = vmul.f32 %v545, %v855
    %v857 = vrcp.pop %v671
    %v858 = vmul.f32 %v671, %v857
    %v859 = vsub.f32 1.0, %v858
    %v860 = vmul.f32 %v857, %v859
    %v861 = vadd.f32 %v857, %v860
    %vm862 = vweird.f32 %v671
    %vm863 = vweird.f32 %v857
    %vm864 = vmor %vm862, %vm863
    %v865 = vsel %vm864, %v857, %v861
    %v866 = vand.u32 2147483647, %v671
    %vm867 = vcmp.eq.f32.partialorder %v866, 8.507059e+37
    %v868 = vand.u32 %v671, 2147483648
    %v869 = vor.u32 1.1754944e-38, %v868
    %v870 = vsel %vm867, %v869, %v865
    %v871 = vmul.f32 %v547, %v870
    %v872 = vrcp.pop %v672
    %v873 = vmul.f32 %v672, %v872
    %v874 = vsub.f32 1.0, %v873
    %v875 = vmul.f32 %v872, %v874
    %v876 = vadd.f32 %v872, %v875
    %vm877 = vweird.f32 %v672
    %vm878 = vweird.f32 %v872
    %vm879 = vmor %vm877, %vm878
    %v880 = vsel %vm879, %v872, %v876
    %v881 = vand.u32 2147483647, %v672
    %vm882 = vcmp.eq.f32.partialorder %v881, 8.507059e+37
    %v883 = vand.u32 %v672, 2147483648
    %v884 = vor.u32 1.1754944e-38, %v883
    %v885 = vsel %vm882, %v884, %v880
    %v886 = vmul.f32 %v549, %v885
    %v887 = vrcp.pop %v673
    %v888 = vmul.f32 %v673, %v887
    %v889 = vsub.f32 1.0, %v888
    %v890 = vmul.f32 %v887, %v889
    %v891 = vadd.f32 %v887, %v890
    %vm892 = vweird.f32 %v673
    %vm893 = vweird.f32 %v887
    %vm894 = vmor %vm892, %vm893
    %v895 = vsel %vm894, %v887, %v891
    %v896 = vand.u32 2147483647, %v673
    %vm897 = vcmp.eq.f32.partialorder %v896, 8.507059e+37
    %v898 = vand.u32 %v673, 2147483648
    %v899 = vor.u32 1.1754944e-38, %v898
    %v900 = vsel %vm897, %v899, %v895
    %v901 = vmul.f32 %v551, %v900
    %v902 = vrcp.pop %v674
    %v903 = vmul.f32 %v674, %v902
    %v904 = vsub.f32 1.0, %v903
    %v905 = vmul.f32 %v902, %v904
    %v906 = vadd.f32 %v902, %v905
    %vm907 = vweird.f32 %v674
    %vm908 = vweird.f32 %v902
    %vm909 = vmor %vm907, %vm908
    %v910 = vsel %vm909, %v902, %v906
    %v911 = vand.u32 2147483647, %v674
    %vm912 = vcmp.eq.f32.partialorder %v911, 8.507059e+37
    %v913 = vand.u32 %v674, 2147483648
    %v914 = vor.u32 1.1754944e-38, %v913
    %v915 = vsel %vm912, %v914, %v910
    %v916 = vmul.f32 %v553, %v915
    %v917 = vrcp.pop %v675
    %v918 = vmul.f32 %v675, %v917
    %v919 = vsub.f32 1.0, %v918
    %v920 = vmul.f32 %v917, %v919
    %v921 = vadd.f32 %v917, %v920
    %vm922 = vweird.f32 %v675
    %vm923 = vweird.f32 %v917
    %vm924 = vmor %vm922, %vm923
    %v925 = vsel %vm924, %v917, %v921
    %v926 = vand.u32 2147483647, %v675
    %vm927 = vcmp.eq.f32.partialorder %v926, 8.507059e+37
    %v928 = vand.u32 %v675, 2147483648
    %v929 = vor.u32 1.1754944e-38, %v928
    %v930 = vsel %vm927, %v929, %v925
    %v931 = vmul.f32 %v555, %v930
    %v932 = vperm.slane %v706, 0
    %v933 = vperm.slane %v721, 0
    %v934 = vperm.slane %v736, 0
    %v935 = vperm.slane %v751, 0
    %v936 = vperm.slane %v766, 0
    %v937 = vperm.slane %v781, 0
    %v938 = vperm.slane %v796, 0
    %v939 = vperm.slane %v811, 0
    %v940 = vperm.slane %v826, 0
    %v941 = vperm.slane %v841, 0
    %v942 = vperm.slane %v856, 0
    %v943 = vperm.slane %v871, 0
    %v944 = vperm.slane %v886, 0
    %v945 = vperm.slane %v901, 0
    %v946 = vperm.slane %v916, 0
    %v947 = vperm.slane %v931, 0
    %v948 = vperm.slane %v131, 0
    %v949 = vlaneseq
    %v950 = vshrl.u32 %v949, 7
    %952 = vset.pattern.permute.xlu0 %v950
    %953 = vperm.xlu0 %952, %v948
    %v954 = vpop.permute.xlu0 %953
    %v955 = vlaneseq
    %v956 = vshrl.u32 %v955, 7
    %v957 = vadd.s32 %v956, 8
    %958 = vset.pattern.permute.xlu0 %v957
    %959 = vperm.xlu0 %958, %v948
    %v960 = vpop.permute.xlu0 %959
    %v961 = vlaneseq
    %v962 = vshrl.u32 %v961, 7
    %v963 = vadd.s32 %v962, 16
    %964 = vset.pattern.permute.xlu0 %v963
    %965 = vperm.xlu0 %964, %v948
    %v966 = vpop.permute.xlu0 %965
    %v967 = vlaneseq
    %v968 = vshrl.u32 %v967, 7
    %v969 = vadd.s32 %v968, 24
    %970 = vset.pattern.permute.xlu0 %v969
    %971 = vperm.xlu0 %970, %v948
    %v972 = vpop.permute.xlu0 %971
    %v973 = vlaneseq
    %v974 = vshrl.u32 %v973, 7
    %v975 = vadd.s32 %v974, 32
    %976 = vset.pattern.permute.xlu0 %v975
    %977 = vperm.xlu0 %976, %v948
    %v978 = vpop.permute.xlu0 %977
    %v979 = vlaneseq
    %v980 = vshrl.u32 %v979, 7
    %v981 = vadd.s32 %v980, 40
    %982 = vset.pattern.permute.xlu0 %v981
    %983 = vperm.xlu0 %982, %v948
    %v984 = vpop.permute.xlu0 %983
    %v985 = vlaneseq
    %v986 = vshrl.u32 %v985, 7
    %v987 = vadd.s32 %v986, 48
    %988 = vset.pattern.permute.xlu0 %v987
    %989 = vperm.xlu0 %988, %v948
    %v990 = vpop.permute.xlu0 %989
    %v991 = vlaneseq
    %v992 = vshrl.u32 %v991, 7
    %v993 = vadd.s32 %v992, 56
    %994 = vset.pattern.permute.xlu0 %v993
    %995 = vperm.xlu0 %994, %v948
    %v996 = vpop.permute.xlu0 %995
    %v997 = vlaneseq
    %v998 = vshrl.u32 %v997, 7
    %v999 = vadd.s32 %v998, 64
    %1000 = vset.pattern.permute.xlu0 %v999
    %1001 = vperm.xlu0 %1000, %v948
    %v1002 = vpop.permute.xlu0 %1001
    %v1003 = vlaneseq
    %v1004 = vshrl.u32 %v1003, 7
    %v1005 = vadd.s32 %v1004, 72
    %1006 = vset.pattern.permute.xlu0 %v1005
    %1007 = vperm.xlu0 %1006, %v948
    %v1008 = vpop.permute.xlu0 %1007
    %v1009 = vlaneseq
    %v1010 = vshrl.u32 %v1009, 7
    %v1011 = vadd.s32 %v1010, 80
    %1012 = vset.pattern.permute.xlu0 %v1011
    %1013 = vperm.xlu0 %1012, %v948
    %v1014 = vpop.permute.xlu0 %1013
    %v1015 = vlaneseq
    %v1016 = vshrl.u32 %v1015, 7
    %v1017 = vadd.s32 %v1016, 88
    %1018 = vset.pattern.permute.xlu0 %v1017
    %1019 = vperm.xlu0 %1018, %v948
    %v1020 = vpop.permute.xlu0 %1019
    %v1021 = vlaneseq
    %v1022 = vshrl.u32 %v1021, 7
    %v1023 = vadd.s32 %v1022, 96
    %1024 = vset.pattern.permute.xlu0 %v1023
    %1025 = vperm.xlu0 %1024, %v948
    %v1026 = vpop.permute.xlu0 %1025
    %v1027 = vlaneseq
    %v1028 = vshrl.u32 %v1027, 7
    %v1029 = vadd.s32 %v1028, 104
    %1030 = vset.pattern.permute.xlu0 %v1029
    %1031 = vperm.xlu0 %1030, %v948
    %v1032 = vpop.permute.xlu0 %1031
    %v1033 = vlaneseq
    %v1034 = vshrl.u32 %v1033, 7
    %v1035 = vadd.s32 %v1034, 112
    %1036 = vset.pattern.permute.xlu0 %v1035
    %1037 = vperm.xlu0 %1036, %v948
    %v1038 = vpop.permute.xlu0 %1037
    %v1039 = vlaneseq
    %v1040 = vshrl.u32 %v1039, 7
    %v1041 = vadd.s32 %v1040, 120
    %1042 = vset.pattern.permute.xlu0 %v1041
    %1043 = vperm.xlu0 %1042, %v948
    %v1044 = vpop.permute.xlu0 %1043
    %v1045 = vperm.slane %v132, 0
    %v1046 = vlaneseq
    %v1047 = vshrl.u32 %v1046, 7
    %1049 = vset.pattern.permute.xlu0 %v1047
    %1050 = vperm.xlu0 %1049, %v1045
    %v1051 = vpop.permute.xlu0 %1050
    %v1052 = vlaneseq
    %v1053 = vshrl.u32 %v1052, 7
    %v1054 = vadd.s32 %v1053, 8
    %1055 = vset.pattern.permute.xlu0 %v1054
    %1056 = vperm.xlu0 %1055, %v1045
    %v1057 = vpop.permute.xlu0 %1056
    %v1058 = vlaneseq
    %v1059 = vshrl.u32 %v1058, 7
    %v1060 = vadd.s32 %v1059, 16
    %1061 = vset.pattern.permute.xlu0 %v1060
    %1062 = vperm.xlu0 %1061, %v1045
    %v1063 = vpop.permute.xlu0 %1062
    %v1064 = vlaneseq
    %v1065 = vshrl.u32 %v1064, 7
    %v1066 = vadd.s32 %v1065, 24
    %1067 = vset.pattern.permute.xlu0 %v1066
    %1068 = vperm.xlu0 %1067, %v1045
    %v1069 = vpop.permute.xlu0 %1068
    %v1070 = vlaneseq
    %v1071 = vshrl.u32 %v1070, 7
    %v1072 = vadd.s32 %v1071, 32
    %1073 = vset.pattern.permute.xlu0 %v1072
    %1074 = vperm.xlu0 %1073, %v1045
    %v1075 = vpop.permute.xlu0 %1074
    %v1076 = vlaneseq
    %v1077 = vshrl.u32 %v1076, 7
    %v1078 = vadd.s32 %v1077, 40
    %1079 = vset.pattern.permute.xlu0 %v1078
    %1080 = vperm.xlu0 %1079, %v1045
    %v1081 = vpop.permute.xlu0 %1080
    %v1082 = vlaneseq
    %v1083 = vshrl.u32 %v1082, 7
    %v1084 = vadd.s32 %v1083, 48
    %1085 = vset.pattern.permute.xlu0 %v1084
    %1086 = vperm.xlu0 %1085, %v1045
    %v1087 = vpop.permute.xlu0 %1086
    %v1088 = vlaneseq
    %v1089 = vshrl.u32 %v1088, 7
    %v1090 = vadd.s32 %v1089, 56
    %1091 = vset.pattern.permute.xlu0 %v1090
    %1092 = vperm.xlu0 %1091, %v1045
    %v1093 = vpop.permute.xlu0 %1092
    %v1094 = vlaneseq
    %v1095 = vshrl.u32 %v1094, 7
    %v1096 = vadd.s32 %v1095, 64
    %1097 = vset.pattern.permute.xlu0 %v1096
    %1098 = vperm.xlu0 %1097, %v1045
    %v1099 = vpop.permute.xlu0 %1098
    %v1100 = vlaneseq
    %v1101 = vshrl.u32 %v1100, 7
    %v1102 = vadd.s32 %v1101, 72
    %1103 = vset.pattern.permute.xlu0 %v1102
    %1104 = vperm.xlu0 %1103, %v1045
    %v1105 = vpop.permute.xlu0 %1104
    %v1106 = vlaneseq
    %v1107 = vshrl.u32 %v1106, 7
    %v1108 = vadd.s32 %v1107, 80
    %1109 = vset.pattern.permute.xlu0 %v1108
    %1110 = vperm.xlu0 %1109, %v1045
    %v1111 = vpop.permute.xlu0 %1110
    %v1112 = vlaneseq
    %v1113 = vshrl.u32 %v1112, 7
    %v1114 = vadd.s32 %v1113, 88
    %1115 = vset.pattern.permute.xlu0 %v1114
    %1116 = vperm.xlu0 %1115, %v1045
    %v1117 = vpop.permute.xlu0 %1116
    %v1118 = vlaneseq
    %v1119 = vshrl.u32 %v1118, 7
    %v1120 = vadd.s32 %v1119, 96
    %1121 = vset.pattern.permute.xlu0 %v1120
    %1122 = vperm.xlu0 %1121, %v1045
    %v1123 = vpop.permute.xlu0 %1122
    %v1124 = vlaneseq
    %v1125 = vshrl.u32 %v1124, 7
    %v1126 = vadd.s32 %v1125, 104
    %1127 = vset.pattern.permute.xlu0 %v1126
    %1128 = vperm.xlu0 %1127, %v1045
    %v1129 = vpop.permute.xlu0 %1128
    %v1130 = vlaneseq
    %v1131 = vshrl.u32 %v1130, 7
    %v1132 = vadd.s32 %v1131, 112
    %1133 = vset.pattern.permute.xlu0 %v1132
    %1134 = vperm.xlu0 %1133, %v1045
    %v1135 = vpop.permute.xlu0 %1134
    %v1136 = vlaneseq
    %v1137 = vshrl.u32 %v1136, 7
    %v1138 = vadd.s32 %v1137, 120
    %1139 = vset.pattern.permute.xlu0 %v1138
    %1140 = vperm.xlu0 %1139, %v1045
    %v1141 = vpop.permute.xlu0 %1140
    %v1142 = vperm.slane %v133, 0
    %v1143 = vlaneseq
    %v1144 = vshrl.u32 %v1143, 7
    %1146 = vset.pattern.permute.xlu0 %v1144
    %1147 = vperm.xlu0 %1146, %v1142
    %v1148 = vpop.permute.xlu0 %1147
    %v1149 = vlaneseq
    %v1150 = vshrl.u32 %v1149, 7
    %v1151 = vadd.s32 %v1150, 8
    %1152 = vset.pattern.permute.xlu0 %v1151
    %1153 = vperm.xlu0 %1152, %v1142
    %v1154 = vpop.permute.xlu0 %1153
    %v1155 = vlaneseq
    %v1156 = vshrl.u32 %v1155, 7
    %v1157 = vadd.s32 %v1156, 16
    %1158 = vset.pattern.permute.xlu0 %v1157
    %1159 = vperm.xlu0 %1158, %v1142
    %v1160 = vpop.permute.xlu0 %1159
    %v1161 = vlaneseq
    %v1162 = vshrl.u32 %v1161, 7
    %v1163 = vadd.s32 %v1162, 24
    %1164 = vset.pattern.permute.xlu0 %v1163
    %1165 = vperm.xlu0 %1164, %v1142
    %v1166 = vpop.permute.xlu0 %1165
    %v1167 = vlaneseq
    %v1168 = vshrl.u32 %v1167, 7
    %v1169 = vadd.s32 %v1168, 32
    %1170 = vset.pattern.permute.xlu0 %v1169
    %1171 = vperm.xlu0 %1170, %v1142
    %v1172 = vpop.permute.xlu0 %1171
    %v1173 = vlaneseq
    %v1174 = vshrl.u32 %v1173, 7
    %v1175 = vadd.s32 %v1174, 40
    %1176 = vset.pattern.permute.xlu0 %v1175
    %1177 = vperm.xlu0 %1176, %v1142
    %v1178 = vpop.permute.xlu0 %1177
    %v1179 = vlaneseq
    %v1180 = vshrl.u32 %v1179, 7
    %v1181 = vadd.s32 %v1180, 48
    %1182 = vset.pattern.permute.xlu0 %v1181
    %1183 = vperm.xlu0 %1182, %v1142
    %v1184 = vpop.permute.xlu0 %1183
    %v1185 = vlaneseq
    %v1186 = vshrl.u32 %v1185, 7
    %v1187 = vadd.s32 %v1186, 56
    %1188 = vset.pattern.permute.xlu0 %v1187
    %1189 = vperm.xlu0 %1188, %v1142
    %v1190 = vpop.permute.xlu0 %1189
    %v1191 = vlaneseq
    %v1192 = vshrl.u32 %v1191, 7
    %v1193 = vadd.s32 %v1192, 64
    %1194 = vset.pattern.permute.xlu0 %v1193
    %1195 = vperm.xlu0 %1194, %v1142
    %v1196 = vpop.permute.xlu0 %1195
    %v1197 = vlaneseq
    %v1198 = vshrl.u32 %v1197, 7
    %v1199 = vadd.s32 %v1198, 72
    %1200 = vset.pattern.permute.xlu0 %v1199
    %1201 = vperm.xlu0 %1200, %v1142
    %v1202 = vpop.permute.xlu0 %1201
    %v1203 = vlaneseq
    %v1204 = vshrl.u32 %v1203, 7
    %v1205 = vadd.s32 %v1204, 80
    %1206 = vset.pattern.permute.xlu0 %v1205
    %1207 = vperm.xlu0 %1206, %v1142
    %v1208 = vpop.permute.xlu0 %1207
    %v1209 = vlaneseq
    %v1210 = vshrl.u32 %v1209, 7
    %v1211 = vadd.s32 %v1210, 88
    %1212 = vset.pattern.permute.xlu0 %v1211
    %1213 = vperm.xlu0 %1212, %v1142
    %v1214 = vpop.permute.xlu0 %1213
    %v1215 = vlaneseq
    %v1216 = vshrl.u32 %v1215, 7
    %v1217 = vadd.s32 %v1216, 96
    %1218 = vset.pattern.permute.xlu0 %v1217
    %1219 = vperm.xlu0 %1218, %v1142
    %v1220 = vpop.permute.xlu0 %1219
    %v1221 = vlaneseq
    %v1222 = vshrl.u32 %v1221, 7
    %v1223 = vadd.s32 %v1222, 104
    %1224 = vset.pattern.permute.xlu0 %v1223
    %1225 = vperm.xlu0 %1224, %v1142
    %v1226 = vpop.permute.xlu0 %1225
    %v1227 = vlaneseq
    %v1228 = vshrl.u32 %v1227, 7
    %v1229 = vadd.s32 %v1228, 112
    %1230 = vset.pattern.permute.xlu0 %v1229
    %1231 = vperm.xlu0 %1230, %v1142
    %v1232 = vpop.permute.xlu0 %1231
    %v1233 = vlaneseq
    %v1234 = vshrl.u32 %v1233, 7
    %v1235 = vadd.s32 %v1234, 120
    %1236 = vset.pattern.permute.xlu0 %v1235
    %1237 = vperm.xlu0 %1236, %v1142
    %v1238 = vpop.permute.xlu0 %1237
    %v1239 = vperm.slane %v134, 0
    %v1240 = vlaneseq
    %v1241 = vshrl.u32 %v1240, 7
    %1243 = vset.pattern.permute.xlu0 %v1241
    %1244 = vperm.xlu0 %1243, %v1239
    %v1245 = vpop.permute.xlu0 %1244
    %v1246 = vlaneseq
    %v1247 = vshrl.u32 %v1246, 7
    %v1248 = vadd.s32 %v1247, 8
    %1249 = vset.pattern.permute.xlu0 %v1248
    %1250 = vperm.xlu0 %1249, %v1239
    %v1251 = vpop.permute.xlu0 %1250
    %v1252 = vlaneseq
    %v1253 = vshrl.u32 %v1252, 7
    %v1254 = vadd.s32 %v1253, 16
    %1255 = vset.pattern.permute.xlu0 %v1254
    %1256 = vperm.xlu0 %1255, %v1239
    %v1257 = vpop.permute.xlu0 %1256
    %v1258 = vlaneseq
    %v1259 = vshrl.u32 %v1258, 7
    %v1260 = vadd.s32 %v1259, 24
    %1261 = vset.pattern.permute.xlu0 %v1260
    %1262 = vperm.xlu0 %1261, %v1239
    %v1263 = vpop.permute.xlu0 %1262
    %v1264 = vlaneseq
    %v1265 = vshrl.u32 %v1264, 7
    %v1266 = vadd.s32 %v1265, 32
    %1267 = vset.pattern.permute.xlu0 %v1266
    %1268 = vperm.xlu0 %1267, %v1239
    %v1269 = vpop.permute.xlu0 %1268
    %v1270 = vlaneseq
    %v1271 = vshrl.u32 %v1270, 7
    %v1272 = vadd.s32 %v1271, 40
    %1273 = vset.pattern.permute.xlu0 %v1272
    %1274 = vperm.xlu0 %1273, %v1239
    %v1275 = vpop.permute.xlu0 %1274
    %v1276 = vlaneseq
    %v1277 = vshrl.u32 %v1276, 7
    %v1278 = vadd.s32 %v1277, 48
    %1279 = vset.pattern.permute.xlu0 %v1278
    %1280 = vperm.xlu0 %1279, %v1239
    %v1281 = vpop.permute.xlu0 %1280
    %v1282 = vlaneseq
    %v1283 = vshrl.u32 %v1282, 7
    %v1284 = vadd.s32 %v1283, 56
    %1285 = vset.pattern.permute.xlu0 %v1284
    %1286 = vperm.xlu0 %1285, %v1239
    %v1287 = vpop.permute.xlu0 %1286
    %v1288 = vlaneseq
    %v1289 = vshrl.u32 %v1288, 7
    %v1290 = vadd.s32 %v1289, 64
    %1291 = vset.pattern.permute.xlu0 %v1290
    %1292 = vperm.xlu0 %1291, %v1239
    %v1293 = vpop.permute.xlu0 %1292
    %v1294 = vlaneseq
    %v1295 = vshrl.u32 %v1294, 7
    %v1296 = vadd.s32 %v1295, 72
    %1297 = vset.pattern.permute.xlu0 %v1296
    %1298 = vperm.xlu0 %1297, %v1239
    %v1299 = vpop.permute.xlu0 %1298
    %v1300 = vlaneseq
    %v1301 = vshrl.u32 %v1300, 7
    %v1302 = vadd.s32 %v1301, 80
    %1303 = vset.pattern.permute.xlu0 %v1302
    %1304 = vperm.xlu0 %1303, %v1239
    %v1305 = vpop.permute.xlu0 %1304
    %v1306 = vlaneseq
    %v1307 = vshrl.u32 %v1306, 7
    %v1308 = vadd.s32 %v1307, 88
    %1309 = vset.pattern.permute.xlu0 %v1308
    %1310 = vperm.xlu0 %1309, %v1239
    %v1311 = vpop.permute.xlu0 %1310
    %v1312 = vlaneseq
    %v1313 = vshrl.u32 %v1312, 7
    %v1314 = vadd.s32 %v1313, 96
    %1315 = vset.pattern.permute.xlu0 %v1314
    %1316 = vperm.xlu0 %1315, %v1239
    %v1317 = vpop.permute.xlu0 %1316
    %v1318 = vlaneseq
    %v1319 = vshrl.u32 %v1318, 7
    %v1320 = vadd.s32 %v1319, 104
    %1321 = vset.pattern.permute.xlu0 %v1320
    %1322 = vperm.xlu0 %1321, %v1239
    %v1323 = vpop.permute.xlu0 %1322
    %v1324 = vlaneseq
    %v1325 = vshrl.u32 %v1324, 7
    %v1326 = vadd.s32 %v1325, 112
    %1327 = vset.pattern.permute.xlu0 %v1326
    %1328 = vperm.xlu0 %1327, %v1239
    %v1329 = vpop.permute.xlu0 %1328
    %v1330 = vlaneseq
    %v1331 = vshrl.u32 %v1330, 7
    %v1332 = vadd.s32 %v1331, 120
    %1333 = vset.pattern.permute.xlu0 %v1332
    %1334 = vperm.xlu0 %1333, %v1239
    %v1335 = vpop.permute.xlu0 %1334
    %v1336 = vperm.slane %v135, 0
    %v1337 = vlaneseq
    %v1338 = vshrl.u32 %v1337, 7
    %1340 = vset.pattern.permute.xlu0 %v1338
    %1341 = vperm.xlu0 %1340, %v1336
    %v1342 = vpop.permute.xlu0 %1341
    %v1343 = vlaneseq
    %v1344 = vshrl.u32 %v1343, 7
    %v1345 = vadd.s32 %v1344, 8
    %1346 = vset.pattern.permute.xlu0 %v1345
    %1347 = vperm.xlu0 %1346, %v1336
    %v1348 = vpop.permute.xlu0 %1347
    %v1349 = vlaneseq
    %v1350 = vshrl.u32 %v1349, 7
    %v1351 = vadd.s32 %v1350, 16
    %1352 = vset.pattern.permute.xlu0 %v1351
    %1353 = vperm.xlu0 %1352, %v1336
    %v1354 = vpop.permute.xlu0 %1353
    %v1355 = vlaneseq
    %v1356 = vshrl.u32 %v1355, 7
    %v1357 = vadd.s32 %v1356, 24
    %1358 = vset.pattern.permute.xlu0 %v1357
    %1359 = vperm.xlu0 %1358, %v1336
    %v1360 = vpop.permute.xlu0 %1359
    %v1361 = vlaneseq
    %v1362 = vshrl.u32 %v1361, 7
    %v1363 = vadd.s32 %v1362, 32
    %1364 = vset.pattern.permute.xlu0 %v1363
    %1365 = vperm.xlu0 %1364, %v1336
    %v1366 = vpop.permute.xlu0 %1365
    %v1367 = vlaneseq
    %v1368 = vshrl.u32 %v1367, 7
    %v1369 = vadd.s32 %v1368, 40
    %1370 = vset.pattern.permute.xlu0 %v1369
    %1371 = vperm.xlu0 %1370, %v1336
    %v1372 = vpop.permute.xlu0 %1371
    %v1373 = vlaneseq
    %v1374 = vshrl.u32 %v1373, 7
    %v1375 = vadd.s32 %v1374, 48
    %1376 = vset.pattern.permute.xlu0 %v1375
    %1377 = vperm.xlu0 %1376, %v1336
    %v1378 = vpop.permute.xlu0 %1377
    %v1379 = vlaneseq
    %v1380 = vshrl.u32 %v1379, 7
    %v1381 = vadd.s32 %v1380, 56
    %1382 = vset.pattern.permute.xlu0 %v1381
    %1383 = vperm.xlu0 %1382, %v1336
    %v1384 = vpop.permute.xlu0 %1383
    %v1385 = vlaneseq
    %v1386 = vshrl.u32 %v1385, 7
    %v1387 = vadd.s32 %v1386, 64
    %1388 = vset.pattern.permute.xlu0 %v1387
    %1389 = vperm.xlu0 %1388, %v1336
    %v1390 = vpop.permute.xlu0 %1389
    %v1391 = vlaneseq
    %v1392 = vshrl.u32 %v1391, 7
    %v1393 = vadd.s32 %v1392, 72
    %1394 = vset.pattern.permute.xlu0 %v1393
    %1395 = vperm.xlu0 %1394, %v1336
    %v1396 = vpop.permute.xlu0 %1395
    %v1397 = vlaneseq
    %v1398 = vshrl.u32 %v1397, 7
    %v1399 = vadd.s32 %v1398, 80
    %1400 = vset.pattern.permute.xlu0 %v1399
    %1401 = vperm.xlu0 %1400, %v1336
    %v1402 = vpop.permute.xlu0 %1401
    %v1403 = vlaneseq
    %v1404 = vshrl.u32 %v1403, 7
    %v1405 = vadd.s32 %v1404, 88
    %1406 = vset.pattern.permute.xlu0 %v1405
    %1407 = vperm.xlu0 %1406, %v1336
    %v1408 = vpop.permute.xlu0 %1407
    %v1409 = vlaneseq
    %v1410 = vshrl.u32 %v1409, 7
    %v1411 = vadd.s32 %v1410, 96
    %1412 = vset.pattern.permute.xlu0 %v1411
    %1413 = vperm.xlu0 %1412, %v1336
    %v1414 = vpop.permute.xlu0 %1413
    %v1415 = vlaneseq
    %v1416 = vshrl.u32 %v1415, 7
    %v1417 = vadd.s32 %v1416, 104
    %1418 = vset.pattern.permute.xlu0 %v1417
    %1419 = vperm.xlu0 %1418, %v1336
    %v1420 = vpop.permute.xlu0 %1419
    %v1421 = vlaneseq
    %v1422 = vshrl.u32 %v1421, 7
    %v1423 = vadd.s32 %v1422, 112
    %1424 = vset.pattern.permute.xlu0 %v1423
    %1425 = vperm.xlu0 %1424, %v1336
    %v1426 = vpop.permute.xlu0 %1425
    %v1427 = vlaneseq
    %v1428 = vshrl.u32 %v1427, 7
    %v1429 = vadd.s32 %v1428, 120
    %1430 = vset.pattern.permute.xlu0 %v1429
    %1431 = vperm.xlu0 %1430, %v1336
    %v1432 = vpop.permute.xlu0 %1431
    %v1433 = vperm.slane %v136, 0
    %v1434 = vlaneseq
    %v1435 = vshrl.u32 %v1434, 7
    %1437 = vset.pattern.permute.xlu0 %v1435
    %1438 = vperm.xlu0 %1437, %v1433
    %v1439 = vpop.permute.xlu0 %1438
    %v1440 = vlaneseq
    %v1441 = vshrl.u32 %v1440, 7
    %v1442 = vadd.s32 %v1441, 8
    %1443 = vset.pattern.permute.xlu0 %v1442
    %1444 = vperm.xlu0 %1443, %v1433
    %v1445 = vpop.permute.xlu0 %1444
    %v1446 = vlaneseq
    %v1447 = vshrl.u32 %v1446, 7
    %v1448 = vadd.s32 %v1447, 16
    %1449 = vset.pattern.permute.xlu0 %v1448
    %1450 = vperm.xlu0 %1449, %v1433
    %v1451 = vpop.permute.xlu0 %1450
    %v1452 = vlaneseq
    %v1453 = vshrl.u32 %v1452, 7
    %v1454 = vadd.s32 %v1453, 24
    %1455 = vset.pattern.permute.xlu0 %v1454
    %1456 = vperm.xlu0 %1455, %v1433
    %v1457 = vpop.permute.xlu0 %1456
    %v1458 = vlaneseq
    %v1459 = vshrl.u32 %v1458, 7
    %v1460 = vadd.s32 %v1459, 32
    %1461 = vset.pattern.permute.xlu0 %v1460
    %1462 = vperm.xlu0 %1461, %v1433
    %v1463 = vpop.permute.xlu0 %1462
    %v1464 = vlaneseq
    %v1465 = vshrl.u32 %v1464, 7
    %v1466 = vadd.s32 %v1465, 40
    %1467 = vset.pattern.permute.xlu0 %v1466
    %1468 = vperm.xlu0 %1467, %v1433
    %v1469 = vpop.permute.xlu0 %1468
    %v1470 = vlaneseq
    %v1471 = vshrl.u32 %v1470, 7
    %v1472 = vadd.s32 %v1471, 48
    %1473 = vset.pattern.permute.xlu0 %v1472
    %1474 = vperm.xlu0 %1473, %v1433
    %v1475 = vpop.permute.xlu0 %1474
    %v1476 = vlaneseq
    %v1477 = vshrl.u32 %v1476, 7
    %v1478 = vadd.s32 %v1477, 56
    %1479 = vset.pattern.permute.xlu0 %v1478
    %1480 = vperm.xlu0 %1479, %v1433
    %v1481 = vpop.permute.xlu0 %1480
    %v1482 = vlaneseq
    %v1483 = vshrl.u32 %v1482, 7
    %v1484 = vadd.s32 %v1483, 64
    %1485 = vset.pattern.permute.xlu0 %v1484
    %1486 = vperm.xlu0 %1485, %v1433
    %v1487 = vpop.permute.xlu0 %1486
    %v1488 = vlaneseq
    %v1489 = vshrl.u32 %v1488, 7
    %v1490 = vadd.s32 %v1489, 72
    %1491 = vset.pattern.permute.xlu0 %v1490
    %1492 = vperm.xlu0 %1491, %v1433
    %v1493 = vpop.permute.xlu0 %1492
    %v1494 = vlaneseq
    %v1495 = vshrl.u32 %v1494, 7
    %v1496 = vadd.s32 %v1495, 80
    %1497 = vset.pattern.permute.xlu0 %v1496
    %1498 = vperm.xlu0 %1497, %v1433
    %v1499 = vpop.permute.xlu0 %1498
    %v1500 = vlaneseq
    %v1501 = vshrl.u32 %v1500, 7
    %v1502 = vadd.s32 %v1501, 88
    %1503 = vset.pattern.permute.xlu0 %v1502
    %1504 = vperm.xlu0 %1503, %v1433
    %v1505 = vpop.permute.xlu0 %1504
    %v1506 = vlaneseq
    %v1507 = vshrl.u32 %v1506, 7
    %v1508 = vadd.s32 %v1507, 96
    %1509 = vset.pattern.permute.xlu0 %v1508
    %1510 = vperm.xlu0 %1509, %v1433
    %v1511 = vpop.permute.xlu0 %1510
    %v1512 = vlaneseq
    %v1513 = vshrl.u32 %v1512, 7
    %v1514 = vadd.s32 %v1513, 104
    %1515 = vset.pattern.permute.xlu0 %v1514
    %1516 = vperm.xlu0 %1515, %v1433
    %v1517 = vpop.permute.xlu0 %1516
    %v1518 = vlaneseq
    %v1519 = vshrl.u32 %v1518, 7
    %v1520 = vadd.s32 %v1519, 112
    %1521 = vset.pattern.permute.xlu0 %v1520
    %1522 = vperm.xlu0 %1521, %v1433
    %v1523 = vpop.permute.xlu0 %1522
    %v1524 = vlaneseq
    %v1525 = vshrl.u32 %v1524, 7
    %v1526 = vadd.s32 %v1525, 120
    %1527 = vset.pattern.permute.xlu0 %v1526
    %1528 = vperm.xlu0 %1527, %v1433
    %v1529 = vpop.permute.xlu0 %1528
    %v1530 = vperm.slane %v137, 0
    %v1531 = vlaneseq
    %v1532 = vshrl.u32 %v1531, 7
    %1534 = vset.pattern.permute.xlu0 %v1532
    %1535 = vperm.xlu0 %1534, %v1530
    %v1536 = vpop.permute.xlu0 %1535
    %v1537 = vlaneseq
    %v1538 = vshrl.u32 %v1537, 7
    %v1539 = vadd.s32 %v1538, 8
    %1540 = vset.pattern.permute.xlu0 %v1539
    %1541 = vperm.xlu0 %1540, %v1530
    %v1542 = vpop.permute.xlu0 %1541
    %v1543 = vlaneseq
    %v1544 = vshrl.u32 %v1543, 7
    %v1545 = vadd.s32 %v1544, 16
    %1546 = vset.pattern.permute.xlu0 %v1545
    %1547 = vperm.xlu0 %1546, %v1530
    %v1548 = vpop.permute.xlu0 %1547
    %v1549 = vlaneseq
    %v1550 = vshrl.u32 %v1549, 7
    %v1551 = vadd.s32 %v1550, 24
    %1552 = vset.pattern.permute.xlu0 %v1551
    %1553 = vperm.xlu0 %1552, %v1530
    %v1554 = vpop.permute.xlu0 %1553
    %v1555 = vlaneseq
    %v1556 = vshrl.u32 %v1555, 7
    %v1557 = vadd.s32 %v1556, 32
    %1558 = vset.pattern.permute.xlu0 %v1557
    %1559 = vperm.xlu0 %1558, %v1530
    %v1560 = vpop.permute.xlu0 %1559
    %v1561 = vlaneseq
    %v1562 = vshrl.u32 %v1561, 7
    %v1563 = vadd.s32 %v1562, 40
    %1564 = vset.pattern.permute.xlu0 %v1563
    %1565 = vperm.xlu0 %1564, %v1530
    %v1566 = vpop.permute.xlu0 %1565
    %v1567 = vlaneseq
    %v1568 = vshrl.u32 %v1567, 7
    %v1569 = vadd.s32 %v1568, 48
    %1570 = vset.pattern.permute.xlu0 %v1569
    %1571 = vperm.xlu0 %1570, %v1530
    %v1572 = vpop.permute.xlu0 %1571
    %v1573 = vlaneseq
    %v1574 = vshrl.u32 %v1573, 7
    %v1575 = vadd.s32 %v1574, 56
    %1576 = vset.pattern.permute.xlu0 %v1575
    %1577 = vperm.xlu0 %1576, %v1530
    %v1578 = vpop.permute.xlu0 %1577
    %v1579 = vlaneseq
    %v1580 = vshrl.u32 %v1579, 7
    %v1581 = vadd.s32 %v1580, 64
    %1582 = vset.pattern.permute.xlu0 %v1581
    %1583 = vperm.xlu0 %1582, %v1530
    %v1584 = vpop.permute.xlu0 %1583
    %v1585 = vlaneseq
    %v1586 = vshrl.u32 %v1585, 7
    %v1587 = vadd.s32 %v1586, 72
    %1588 = vset.pattern.permute.xlu0 %v1587
    %1589 = vperm.xlu0 %1588, %v1530
    %v1590 = vpop.permute.xlu0 %1589
    %v1591 = vlaneseq
    %v1592 = vshrl.u32 %v1591, 7
    %v1593 = vadd.s32 %v1592, 80
    %1594 = vset.pattern.permute.xlu0 %v1593
    %1595 = vperm.xlu0 %1594, %v1530
    %v1596 = vpop.permute.xlu0 %1595
    %v1597 = vlaneseq
    %v1598 = vshrl.u32 %v1597, 7
    %v1599 = vadd.s32 %v1598, 88
    %1600 = vset.pattern.permute.xlu0 %v1599
    %1601 = vperm.xlu0 %1600, %v1530
    %v1602 = vpop.permute.xlu0 %1601
    %v1603 = vlaneseq
    %v1604 = vshrl.u32 %v1603, 7
    %v1605 = vadd.s32 %v1604, 96
    %1606 = vset.pattern.permute.xlu0 %v1605
    %1607 = vperm.xlu0 %1606, %v1530
    %v1608 = vpop.permute.xlu0 %1607
    %v1609 = vlaneseq
    %v1610 = vshrl.u32 %v1609, 7
    %v1611 = vadd.s32 %v1610, 104
    %1612 = vset.pattern.permute.xlu0 %v1611
    %1613 = vperm.xlu0 %1612, %v1530
    %v1614 = vpop.permute.xlu0 %1613
    %v1615 = vlaneseq
    %v1616 = vshrl.u32 %v1615, 7
    %v1617 = vadd.s32 %v1616, 112
    %1618 = vset.pattern.permute.xlu0 %v1617
    %1619 = vperm.xlu0 %1618, %v1530
    %v1620 = vpop.permute.xlu0 %1619
    %v1621 = vlaneseq
    %v1622 = vshrl.u32 %v1621, 7
    %v1623 = vadd.s32 %v1622, 120
    %1624 = vset.pattern.permute.xlu0 %v1623
    %1625 = vperm.xlu0 %1624, %v1530
    %v1626 = vpop.permute.xlu0 %1625
    %v1627 = vperm.slane %v138, 0
    %v1628 = vlaneseq
    %v1629 = vshrl.u32 %v1628, 7
    %1631 = vset.pattern.permute.xlu0 %v1629
    %1632 = vperm.xlu0 %1631, %v1627
    %v1633 = vpop.permute.xlu0 %1632
    %v1634 = vlaneseq
    %v1635 = vshrl.u32 %v1634, 7
    %v1636 = vadd.s32 %v1635, 8
    %1637 = vset.pattern.permute.xlu0 %v1636
    %1638 = vperm.xlu0 %1637, %v1627
    %v1639 = vpop.permute.xlu0 %1638
    %v1640 = vlaneseq
    %v1641 = vshrl.u32 %v1640, 7
    %v1642 = vadd.s32 %v1641, 16
    %1643 = vset.pattern.permute.xlu0 %v1642
    %1644 = vperm.xlu0 %1643, %v1627
    %v1645 = vpop.permute.xlu0 %1644
    %v1646 = vlaneseq
    %v1647 = vshrl.u32 %v1646, 7
    %v1648 = vadd.s32 %v1647, 24
    %1649 = vset.pattern.permute.xlu0 %v1648
    %1650 = vperm.xlu0 %1649, %v1627
    %v1651 = vpop.permute.xlu0 %1650
    %v1652 = vlaneseq
    %v1653 = vshrl.u32 %v1652, 7
    %v1654 = vadd.s32 %v1653, 32
    %1655 = vset.pattern.permute.xlu0 %v1654
    %1656 = vperm.xlu0 %1655, %v1627
    %v1657 = vpop.permute.xlu0 %1656
    %v1658 = vlaneseq
    %v1659 = vshrl.u32 %v1658, 7
    %v1660 = vadd.s32 %v1659, 40
    %1661 = vset.pattern.permute.xlu0 %v1660
    %1662 = vperm.xlu0 %1661, %v1627
    %v1663 = vpop.permute.xlu0 %1662
    %v1664 = vlaneseq
    %v1665 = vshrl.u32 %v1664, 7
    %v1666 = vadd.s32 %v1665, 48
    %1667 = vset.pattern.permute.xlu0 %v1666
    %1668 = vperm.xlu0 %1667, %v1627
    %v1669 = vpop.permute.xlu0 %1668
    %v1670 = vlaneseq
    %v1671 = vshrl.u32 %v1670, 7
    %v1672 = vadd.s32 %v1671, 56
    %1673 = vset.pattern.permute.xlu0 %v1672
    %1674 = vperm.xlu0 %1673, %v1627
    %v1675 = vpop.permute.xlu0 %1674
    %v1676 = vlaneseq
    %v1677 = vshrl.u32 %v1676, 7
    %v1678 = vadd.s32 %v1677, 64
    %1679 = vset.pattern.permute.xlu0 %v1678
    %1680 = vperm.xlu0 %1679, %v1627
    %v1681 = vpop.permute.xlu0 %1680
    %v1682 = vlaneseq
    %v1683 = vshrl.u32 %v1682, 7
    %v1684 = vadd.s32 %v1683, 72
    %1685 = vset.pattern.permute.xlu0 %v1684
    %1686 = vperm.xlu0 %1685, %v1627
    %v1687 = vpop.permute.xlu0 %1686
    %v1688 = vlaneseq
    %v1689 = vshrl.u32 %v1688, 7
    %v1690 = vadd.s32 %v1689, 80
    %1691 = vset.pattern.permute.xlu0 %v1690
    %1692 = vperm.xlu0 %1691, %v1627
    %v1693 = vpop.permute.xlu0 %1692
    %v1694 = vlaneseq
    %v1695 = vshrl.u32 %v1694, 7
    %v1696 = vadd.s32 %v1695, 88
    %1697 = vset.pattern.permute.xlu0 %v1696
    %1698 = vperm.xlu0 %1697, %v1627
    %v1699 = vpop.permute.xlu0 %1698
    %v1700 = vlaneseq
    %v1701 = vshrl.u32 %v1700, 7
    %v1702 = vadd.s32 %v1701, 96
    %1703 = vset.pattern.permute.xlu0 %v1702
    %1704 = vperm.xlu0 %1703, %v1627
    %v1705 = vpop.permute.xlu0 %1704
    %v1706 = vlaneseq
    %v1707 = vshrl.u32 %v1706, 7
    %v1708 = vadd.s32 %v1707, 104
    %1709 = vset.pattern.permute.xlu0 %v1708
    %1710 = vperm.xlu0 %1709, %v1627
    %v1711 = vpop.permute.xlu0 %1710
    %v1712 = vlaneseq
    %v1713 = vshrl.u32 %v1712, 7
    %v1714 = vadd.s32 %v1713, 112
    %1715 = vset.pattern.permute.xlu0 %v1714
    %1716 = vperm.xlu0 %1715, %v1627
    %v1717 = vpop.permute.xlu0 %1716
    %v1718 = vlaneseq
    %v1719 = vshrl.u32 %v1718, 7
    %v1720 = vadd.s32 %v1719, 120
    %1721 = vset.pattern.permute.xlu0 %v1720
    %1722 = vperm.xlu0 %1721, %v1627
    %v1723 = vpop.permute.xlu0 %1722
    %v1724 = vperm.slane %v139, 0
    %v1725 = vlaneseq
    %v1726 = vshrl.u32 %v1725, 7
    %1728 = vset.pattern.permute.xlu0 %v1726
    %1729 = vperm.xlu0 %1728, %v1724
    %v1730 = vpop.permute.xlu0 %1729
    %v1731 = vlaneseq
    %v1732 = vshrl.u32 %v1731, 7
    %v1733 = vadd.s32 %v1732, 8
    %1734 = vset.pattern.permute.xlu0 %v1733
    %1735 = vperm.xlu0 %1734, %v1724
    %v1736 = vpop.permute.xlu0 %1735
    %v1737 = vlaneseq
    %v1738 = vshrl.u32 %v1737, 7
    %v1739 = vadd.s32 %v1738, 16
    %1740 = vset.pattern.permute.xlu0 %v1739
    %1741 = vperm.xlu0 %1740, %v1724
    %v1742 = vpop.permute.xlu0 %1741
    %v1743 = vlaneseq
    %v1744 = vshrl.u32 %v1743, 7
    %v1745 = vadd.s32 %v1744, 24
    %1746 = vset.pattern.permute.xlu0 %v1745
    %1747 = vperm.xlu0 %1746, %v1724
    %v1748 = vpop.permute.xlu0 %1747
    %v1749 = vlaneseq
    %v1750 = vshrl.u32 %v1749, 7
    %v1751 = vadd.s32 %v1750, 32
    %1752 = vset.pattern.permute.xlu0 %v1751
    %1753 = vperm.xlu0 %1752, %v1724
    %v1754 = vpop.permute.xlu0 %1753
    %v1755 = vlaneseq
    %v1756 = vshrl.u32 %v1755, 7
    %v1757 = vadd.s32 %v1756, 40
    %1758 = vset.pattern.permute.xlu0 %v1757
    %1759 = vperm.xlu0 %1758, %v1724
    %v1760 = vpop.permute.xlu0 %1759
    %v1761 = vlaneseq
    %v1762 = vshrl.u32 %v1761, 7
    %v1763 = vadd.s32 %v1762, 48
    %1764 = vset.pattern.permute.xlu0 %v1763
    %1765 = vperm.xlu0 %1764, %v1724
    %v1766 = vpop.permute.xlu0 %1765
    %v1767 = vlaneseq
    %v1768 = vshrl.u32 %v1767, 7
    %v1769 = vadd.s32 %v1768, 56
    %1770 = vset.pattern.permute.xlu0 %v1769
    %1771 = vperm.xlu0 %1770, %v1724
    %v1772 = vpop.permute.xlu0 %1771
    %v1773 = vlaneseq
    %v1774 = vshrl.u32 %v1773, 7
    %v1775 = vadd.s32 %v1774, 64
    %1776 = vset.pattern.permute.xlu0 %v1775
    %1777 = vperm.xlu0 %1776, %v1724
    %v1778 = vpop.permute.xlu0 %1777
    %v1779 = vlaneseq
    %v1780 = vshrl.u32 %v1779, 7
    %v1781 = vadd.s32 %v1780, 72
    %1782 = vset.pattern.permute.xlu0 %v1781
    %1783 = vperm.xlu0 %1782, %v1724
    %v1784 = vpop.permute.xlu0 %1783
    %v1785 = vlaneseq
    %v1786 = vshrl.u32 %v1785, 7
    %v1787 = vadd.s32 %v1786, 80
    %1788 = vset.pattern.permute.xlu0 %v1787
    %1789 = vperm.xlu0 %1788, %v1724
    %v1790 = vpop.permute.xlu0 %1789
    %v1791 = vlaneseq
    %v1792 = vshrl.u32 %v1791, 7
    %v1793 = vadd.s32 %v1792, 88
    %1794 = vset.pattern.permute.xlu0 %v1793
    %1795 = vperm.xlu0 %1794, %v1724
    %v1796 = vpop.permute.xlu0 %1795
    %v1797 = vlaneseq
    %v1798 = vshrl.u32 %v1797, 7
    %v1799 = vadd.s32 %v1798, 96
    %1800 = vset.pattern.permute.xlu0 %v1799
    %1801 = vperm.xlu0 %1800, %v1724
    %v1802 = vpop.permute.xlu0 %1801
    %v1803 = vlaneseq
    %v1804 = vshrl.u32 %v1803, 7
    %v1805 = vadd.s32 %v1804, 104
    %1806 = vset.pattern.permute.xlu0 %v1805
    %1807 = vperm.xlu0 %1806, %v1724
    %v1808 = vpop.permute.xlu0 %1807
    %v1809 = vlaneseq
    %v1810 = vshrl.u32 %v1809, 7
    %v1811 = vadd.s32 %v1810, 112
    %1812 = vset.pattern.permute.xlu0 %v1811
    %1813 = vperm.xlu0 %1812, %v1724
    %v1814 = vpop.permute.xlu0 %1813
    %v1815 = vlaneseq
    %v1816 = vshrl.u32 %v1815, 7
    %v1817 = vadd.s32 %v1816, 120
    %1818 = vset.pattern.permute.xlu0 %v1817
    %1819 = vperm.xlu0 %1818, %v1724
    %v1820 = vpop.permute.xlu0 %1819
    %v1821 = vperm.slane %v140, 0
    %v1822 = vlaneseq
    %v1823 = vshrl.u32 %v1822, 7
    %1825 = vset.pattern.permute.xlu0 %v1823
    %1826 = vperm.xlu0 %1825, %v1821
    %v1827 = vpop.permute.xlu0 %1826
    %v1828 = vlaneseq
    %v1829 = vshrl.u32 %v1828, 7
    %v1830 = vadd.s32 %v1829, 8
    %1831 = vset.pattern.permute.xlu0 %v1830
    %1832 = vperm.xlu0 %1831, %v1821
    %v1833 = vpop.permute.xlu0 %1832
    %v1834 = vlaneseq
    %v1835 = vshrl.u32 %v1834, 7
    %v1836 = vadd.s32 %v1835, 16
    %1837 = vset.pattern.permute.xlu0 %v1836
    %1838 = vperm.xlu0 %1837, %v1821
    %v1839 = vpop.permute.xlu0 %1838
    %v1840 = vlaneseq
    %v1841 = vshrl.u32 %v1840, 7
    %v1842 = vadd.s32 %v1841, 24
    %1843 = vset.pattern.permute.xlu0 %v1842
    %1844 = vperm.xlu0 %1843, %v1821
    %v1845 = vpop.permute.xlu0 %1844
    %v1846 = vlaneseq
    %v1847 = vshrl.u32 %v1846, 7
    %v1848 = vadd.s32 %v1847, 32
    %1849 = vset.pattern.permute.xlu0 %v1848
    %1850 = vperm.xlu0 %1849, %v1821
    %v1851 = vpop.permute.xlu0 %1850
    %v1852 = vlaneseq
    %v1853 = vshrl.u32 %v1852, 7
    %v1854 = vadd.s32 %v1853, 40
    %1855 = vset.pattern.permute.xlu0 %v1854
    %1856 = vperm.xlu0 %1855, %v1821
    %v1857 = vpop.permute.xlu0 %1856
    %v1858 = vlaneseq
    %v1859 = vshrl.u32 %v1858, 7
    %v1860 = vadd.s32 %v1859, 48
    %1861 = vset.pattern.permute.xlu0 %v1860
    %1862 = vperm.xlu0 %1861, %v1821
    %v1863 = vpop.permute.xlu0 %1862
    %v1864 = vlaneseq
    %v1865 = vshrl.u32 %v1864, 7
    %v1866 = vadd.s32 %v1865, 56
    %1867 = vset.pattern.permute.xlu0 %v1866
    %1868 = vperm.xlu0 %1867, %v1821
    %v1869 = vpop.permute.xlu0 %1868
    %v1870 = vlaneseq
    %v1871 = vshrl.u32 %v1870, 7
    %v1872 = vadd.s32 %v1871, 64
    %1873 = vset.pattern.permute.xlu0 %v1872
    %1874 = vperm.xlu0 %1873, %v1821
    %v1875 = vpop.permute.xlu0 %1874
    %v1876 = vlaneseq
    %v1877 = vshrl.u32 %v1876, 7
    %v1878 = vadd.s32 %v1877, 72
    %1879 = vset.pattern.permute.xlu0 %v1878
    %1880 = vperm.xlu0 %1879, %v1821
    %v1881 = vpop.permute.xlu0 %1880
    %v1882 = vlaneseq
    %v1883 = vshrl.u32 %v1882, 7
    %v1884 = vadd.s32 %v1883, 80
    %1885 = vset.pattern.permute.xlu0 %v1884
    %1886 = vperm.xlu0 %1885, %v1821
    %v1887 = vpop.permute.xlu0 %1886
    %v1888 = vlaneseq
    %v1889 = vshrl.u32 %v1888, 7
    %v1890 = vadd.s32 %v1889, 88
    %1891 = vset.pattern.permute.xlu0 %v1890
    %1892 = vperm.xlu0 %1891, %v1821
    %v1893 = vpop.permute.xlu0 %1892
    %v1894 = vlaneseq
    %v1895 = vshrl.u32 %v1894, 7
    %v1896 = vadd.s32 %v1895, 96
    %1897 = vset.pattern.permute.xlu0 %v1896
    %1898 = vperm.xlu0 %1897, %v1821
    %v1899 = vpop.permute.xlu0 %1898
    %v1900 = vlaneseq
    %v1901 = vshrl.u32 %v1900, 7
    %v1902 = vadd.s32 %v1901, 104
    %1903 = vset.pattern.permute.xlu0 %v1902
    %1904 = vperm.xlu0 %1903, %v1821
    %v1905 = vpop.permute.xlu0 %1904
    %v1906 = vlaneseq
    %v1907 = vshrl.u32 %v1906, 7
    %v1908 = vadd.s32 %v1907, 112
    %1909 = vset.pattern.permute.xlu0 %v1908
    %1910 = vperm.xlu0 %1909, %v1821
    %v1911 = vpop.permute.xlu0 %1910
    %v1912 = vlaneseq
    %v1913 = vshrl.u32 %v1912, 7
    %v1914 = vadd.s32 %v1913, 120
    %1915 = vset.pattern.permute.xlu0 %v1914
    %1916 = vperm.xlu0 %1915, %v1821
    %v1917 = vpop.permute.xlu0 %1916
    %v1918 = vperm.slane %v141, 0
    %v1919 = vlaneseq
    %v1920 = vshrl.u32 %v1919, 7
    %1922 = vset.pattern.permute.xlu0 %v1920
    %1923 = vperm.xlu0 %1922, %v1918
    %v1924 = vpop.permute.xlu0 %1923
    %v1925 = vlaneseq
    %v1926 = vshrl.u32 %v1925, 7
    %v1927 = vadd.s32 %v1926, 8
    %1928 = vset.pattern.permute.xlu0 %v1927
    %1929 = vperm.xlu0 %1928, %v1918
    %v1930 = vpop.permute.xlu0 %1929
    %v1931 = vlaneseq
    %v1932 = vshrl.u32 %v1931, 7
    %v1933 = vadd.s32 %v1932, 16
    %1934 = vset.pattern.permute.xlu0 %v1933
    %1935 = vperm.xlu0 %1934, %v1918
    %v1936 = vpop.permute.xlu0 %1935
    %v1937 = vlaneseq
    %v1938 = vshrl.u32 %v1937, 7
    %v1939 = vadd.s32 %v1938, 24
    %1940 = vset.pattern.permute.xlu0 %v1939
    %1941 = vperm.xlu0 %1940, %v1918
    %v1942 = vpop.permute.xlu0 %1941
    %v1943 = vlaneseq
    %v1944 = vshrl.u32 %v1943, 7
    %v1945 = vadd.s32 %v1944, 32
    %1946 = vset.pattern.permute.xlu0 %v1945
    %1947 = vperm.xlu0 %1946, %v1918
    %v1948 = vpop.permute.xlu0 %1947
    %v1949 = vlaneseq
    %v1950 = vshrl.u32 %v1949, 7
    %v1951 = vadd.s32 %v1950, 40
    %1952 = vset.pattern.permute.xlu0 %v1951
    %1953 = vperm.xlu0 %1952, %v1918
    %v1954 = vpop.permute.xlu0 %1953
    %v1955 = vlaneseq
    %v1956 = vshrl.u32 %v1955, 7
    %v1957 = vadd.s32 %v1956, 48
    %1958 = vset.pattern.permute.xlu0 %v1957
    %1959 = vperm.xlu0 %1958, %v1918
    %v1960 = vpop.permute.xlu0 %1959
    %v1961 = vlaneseq
    %v1962 = vshrl.u32 %v1961, 7
    %v1963 = vadd.s32 %v1962, 56
    %1964 = vset.pattern.permute.xlu0 %v1963
    %1965 = vperm.xlu0 %1964, %v1918
    %v1966 = vpop.permute.xlu0 %1965
    %v1967 = vlaneseq
    %v1968 = vshrl.u32 %v1967, 7
    %v1969 = vadd.s32 %v1968, 64
    %1970 = vset.pattern.permute.xlu0 %v1969
    %1971 = vperm.xlu0 %1970, %v1918
    %v1972 = vpop.permute.xlu0 %1971
    %v1973 = vlaneseq
    %v1974 = vshrl.u32 %v1973, 7
    %v1975 = vadd.s32 %v1974, 72
    %1976 = vset.pattern.permute.xlu0 %v1975
    %1977 = vperm.xlu0 %1976, %v1918
    %v1978 = vpop.permute.xlu0 %1977
    %v1979 = vlaneseq
    %v1980 = vshrl.u32 %v1979, 7
    %v1981 = vadd.s32 %v1980, 80
    %1982 = vset.pattern.permute.xlu0 %v1981
    %1983 = vperm.xlu0 %1982, %v1918
    %v1984 = vpop.permute.xlu0 %1983
    %v1985 = vlaneseq
    %v1986 = vshrl.u32 %v1985, 7
    %v1987 = vadd.s32 %v1986, 88
    %1988 = vset.pattern.permute.xlu0 %v1987
    %1989 = vperm.xlu0 %1988, %v1918
    %v1990 = vpop.permute.xlu0 %1989
    %v1991 = vlaneseq
    %v1992 = vshrl.u32 %v1991, 7
    %v1993 = vadd.s32 %v1992, 96
    %1994 = vset.pattern.permute.xlu0 %v1993
    %1995 = vperm.xlu0 %1994, %v1918
    %v1996 = vpop.permute.xlu0 %1995
    %v1997 = vlaneseq
    %v1998 = vshrl.u32 %v1997, 7
    %v1999 = vadd.s32 %v1998, 104
    %2000 = vset.pattern.permute.xlu0 %v1999
    %2001 = vperm.xlu0 %2000, %v1918
    %v2002 = vpop.permute.xlu0 %2001
    %v2003 = vlaneseq
    %v2004 = vshrl.u32 %v2003, 7
    %v2005 = vadd.s32 %v2004, 112
    %2006 = vset.pattern.permute.xlu0 %v2005
    %2007 = vperm.xlu0 %2006, %v1918
    %v2008 = vpop.permute.xlu0 %2007
    %v2009 = vlaneseq
    %v2010 = vshrl.u32 %v2009, 7
    %v2011 = vadd.s32 %v2010, 120
    %2012 = vset.pattern.permute.xlu0 %v2011
    %2013 = vperm.xlu0 %2012, %v1918
    %v2014 = vpop.permute.xlu0 %2013
    %v2015 = vperm.slane %v142, 0
    %v2016 = vlaneseq
    %v2017 = vshrl.u32 %v2016, 7
    %2019 = vset.pattern.permute.xlu0 %v2017
    %2020 = vperm.xlu0 %2019, %v2015
    %v2021 = vpop.permute.xlu0 %2020
    %v2022 = vlaneseq
    %v2023 = vshrl.u32 %v2022, 7
    %v2024 = vadd.s32 %v2023, 8
    %2025 = vset.pattern.permute.xlu0 %v2024
    %2026 = vperm.xlu0 %2025, %v2015
    %v2027 = vpop.permute.xlu0 %2026
    %v2028 = vlaneseq
    %v2029 = vshrl.u32 %v2028, 7
    %v2030 = vadd.s32 %v2029, 16
    %2031 = vset.pattern.permute.xlu0 %v2030
    %2032 = vperm.xlu0 %2031, %v2015
    %v2033 = vpop.permute.xlu0 %2032
    %v2034 = vlaneseq
    %v2035 = vshrl.u32 %v2034, 7
    %v2036 = vadd.s32 %v2035, 24
    %2037 = vset.pattern.permute.xlu0 %v2036
    %2038 = vperm.xlu0 %2037, %v2015
    %v2039 = vpop.permute.xlu0 %2038
    %v2040 = vlaneseq
    %v2041 = vshrl.u32 %v2040, 7
    %v2042 = vadd.s32 %v2041, 32
    %2043 = vset.pattern.permute.xlu0 %v2042
    %2044 = vperm.xlu0 %2043, %v2015
    %v2045 = vpop.permute.xlu0 %2044
    %v2046 = vlaneseq
    %v2047 = vshrl.u32 %v2046, 7
    %v2048 = vadd.s32 %v2047, 40
    %2049 = vset.pattern.permute.xlu0 %v2048
    %2050 = vperm.xlu0 %2049, %v2015
    %v2051 = vpop.permute.xlu0 %2050
    %v2052 = vlaneseq
    %v2053 = vshrl.u32 %v2052, 7
    %v2054 = vadd.s32 %v2053, 48
    %2055 = vset.pattern.permute.xlu0 %v2054
    %2056 = vperm.xlu0 %2055, %v2015
    %v2057 = vpop.permute.xlu0 %2056
    %v2058 = vlaneseq
    %v2059 = vshrl.u32 %v2058, 7
    %v2060 = vadd.s32 %v2059, 56
    %2061 = vset.pattern.permute.xlu0 %v2060
    %2062 = vperm.xlu0 %2061, %v2015
    %v2063 = vpop.permute.xlu0 %2062
    %v2064 = vlaneseq
    %v2065 = vshrl.u32 %v2064, 7
    %v2066 = vadd.s32 %v2065, 64
    %2067 = vset.pattern.permute.xlu0 %v2066
    %2068 = vperm.xlu0 %2067, %v2015
    %v2069 = vpop.permute.xlu0 %2068
    %v2070 = vlaneseq
    %v2071 = vshrl.u32 %v2070, 7
    %v2072 = vadd.s32 %v2071, 72
    %2073 = vset.pattern.permute.xlu0 %v2072
    %2074 = vperm.xlu0 %2073, %v2015
    %v2075 = vpop.permute.xlu0 %2074
    %v2076 = vlaneseq
    %v2077 = vshrl.u32 %v2076, 7
    %v2078 = vadd.s32 %v2077, 80
    %2079 = vset.pattern.permute.xlu0 %v2078
    %2080 = vperm.xlu0 %2079, %v2015
    %v2081 = vpop.permute.xlu0 %2080
    %v2082 = vlaneseq
    %v2083 = vshrl.u32 %v2082, 7
    %v2084 = vadd.s32 %v2083, 88
    %2085 = vset.pattern.permute.xlu0 %v2084
    %2086 = vperm.xlu0 %2085, %v2015
    %v2087 = vpop.permute.xlu0 %2086
    %v2088 = vlaneseq
    %v2089 = vshrl.u32 %v2088, 7
    %v2090 = vadd.s32 %v2089, 96
    %2091 = vset.pattern.permute.xlu0 %v2090
    %2092 = vperm.xlu0 %2091, %v2015
    %v2093 = vpop.permute.xlu0 %2092
    %v2094 = vlaneseq
    %v2095 = vshrl.u32 %v2094, 7
    %v2096 = vadd.s32 %v2095, 104
    %2097 = vset.pattern.permute.xlu0 %v2096
    %2098 = vperm.xlu0 %2097, %v2015
    %v2099 = vpop.permute.xlu0 %2098
    %v2100 = vlaneseq
    %v2101 = vshrl.u32 %v2100, 7
    %v2102 = vadd.s32 %v2101, 112
    %2103 = vset.pattern.permute.xlu0 %v2102
    %2104 = vperm.xlu0 %2103, %v2015
    %v2105 = vpop.permute.xlu0 %2104
    %v2106 = vlaneseq
    %v2107 = vshrl.u32 %v2106, 7
    %v2108 = vadd.s32 %v2107, 120
    %2109 = vset.pattern.permute.xlu0 %v2108
    %2110 = vperm.xlu0 %2109, %v2015
    %v2111 = vpop.permute.xlu0 %2110
    %v2112 = vperm.slane %v143, 0
    %v2113 = vlaneseq
    %v2114 = vshrl.u32 %v2113, 7
    %2116 = vset.pattern.permute.xlu0 %v2114
    %2117 = vperm.xlu0 %2116, %v2112
    %v2118 = vpop.permute.xlu0 %2117
    %v2119 = vlaneseq
    %v2120 = vshrl.u32 %v2119, 7
    %v2121 = vadd.s32 %v2120, 8
    %2122 = vset.pattern.permute.xlu0 %v2121
    %2123 = vperm.xlu0 %2122, %v2112
    %v2124 = vpop.permute.xlu0 %2123
    %v2125 = vlaneseq
    %v2126 = vshrl.u32 %v2125, 7
    %v2127 = vadd.s32 %v2126, 16
    %2128 = vset.pattern.permute.xlu0 %v2127
    %2129 = vperm.xlu0 %2128, %v2112
    %v2130 = vpop.permute.xlu0 %2129
    %v2131 = vlaneseq
    %v2132 = vshrl.u32 %v2131, 7
    %v2133 = vadd.s32 %v2132, 24
    %2134 = vset.pattern.permute.xlu0 %v2133
    %2135 = vperm.xlu0 %2134, %v2112
    %v2136 = vpop.permute.xlu0 %2135
    %v2137 = vlaneseq
    %v2138 = vshrl.u32 %v2137, 7
    %v2139 = vadd.s32 %v2138, 32
    %2140 = vset.pattern.permute.xlu0 %v2139
    %2141 = vperm.xlu0 %2140, %v2112
    %v2142 = vpop.permute.xlu0 %2141
    %v2143 = vlaneseq
    %v2144 = vshrl.u32 %v2143, 7
    %v2145 = vadd.s32 %v2144, 40
    %2146 = vset.pattern.permute.xlu0 %v2145
    %2147 = vperm.xlu0 %2146, %v2112
    %v2148 = vpop.permute.xlu0 %2147
    %v2149 = vlaneseq
    %v2150 = vshrl.u32 %v2149, 7
    %v2151 = vadd.s32 %v2150, 48
    %2152 = vset.pattern.permute.xlu0 %v2151
    %2153 = vperm.xlu0 %2152, %v2112
    %v2154 = vpop.permute.xlu0 %2153
    %v2155 = vlaneseq
    %v2156 = vshrl.u32 %v2155, 7
    %v2157 = vadd.s32 %v2156, 56
    %2158 = vset.pattern.permute.xlu0 %v2157
    %2159 = vperm.xlu0 %2158, %v2112
    %v2160 = vpop.permute.xlu0 %2159
    %v2161 = vlaneseq
    %v2162 = vshrl.u32 %v2161, 7
    %v2163 = vadd.s32 %v2162, 64
    %2164 = vset.pattern.permute.xlu0 %v2163
    %2165 = vperm.xlu0 %2164, %v2112
    %v2166 = vpop.permute.xlu0 %2165
    %v2167 = vlaneseq
    %v2168 = vshrl.u32 %v2167, 7
    %v2169 = vadd.s32 %v2168, 72
    %2170 = vset.pattern.permute.xlu0 %v2169
    %2171 = vperm.xlu0 %2170, %v2112
    %v2172 = vpop.permute.xlu0 %2171
    %v2173 = vlaneseq
    %v2174 = vshrl.u32 %v2173, 7
    %v2175 = vadd.s32 %v2174, 80
    %2176 = vset.pattern.permute.xlu0 %v2175
    %2177 = vperm.xlu0 %2176, %v2112
    %v2178 = vpop.permute.xlu0 %2177
    %v2179 = vlaneseq
    %v2180 = vshrl.u32 %v2179, 7
    %v2181 = vadd.s32 %v2180, 88
    %2182 = vset.pattern.permute.xlu0 %v2181
    %2183 = vperm.xlu0 %2182, %v2112
    %v2184 = vpop.permute.xlu0 %2183
    %v2185 = vlaneseq
    %v2186 = vshrl.u32 %v2185, 7
    %v2187 = vadd.s32 %v2186, 96
    %2188 = vset.pattern.permute.xlu0 %v2187
    %2189 = vperm.xlu0 %2188, %v2112
    %v2190 = vpop.permute.xlu0 %2189
    %v2191 = vlaneseq
    %v2192 = vshrl.u32 %v2191, 7
    %v2193 = vadd.s32 %v2192, 104
    %2194 = vset.pattern.permute.xlu0 %v2193
    %2195 = vperm.xlu0 %2194, %v2112
    %v2196 = vpop.permute.xlu0 %2195
    %v2197 = vlaneseq
    %v2198 = vshrl.u32 %v2197, 7
    %v2199 = vadd.s32 %v2198, 112
    %2200 = vset.pattern.permute.xlu0 %v2199
    %2201 = vperm.xlu0 %2200, %v2112
    %v2202 = vpop.permute.xlu0 %2201
    %v2203 = vlaneseq
    %v2204 = vshrl.u32 %v2203, 7
    %v2205 = vadd.s32 %v2204, 120
    %2206 = vset.pattern.permute.xlu0 %v2205
    %2207 = vperm.xlu0 %2206, %v2112
    %v2208 = vpop.permute.xlu0 %2207
    %v2209 = vperm.slane %v144, 0
    %v2210 = vlaneseq
    %v2211 = vshrl.u32 %v2210, 7
    %2213 = vset.pattern.permute.xlu0 %v2211
    %2214 = vperm.xlu0 %2213, %v2209
    %v2215 = vpop.permute.xlu0 %2214
    %v2216 = vlaneseq
    %v2217 = vshrl.u32 %v2216, 7
    %v2218 = vadd.s32 %v2217, 8
    %2219 = vset.pattern.permute.xlu0 %v2218
    %2220 = vperm.xlu0 %2219, %v2209
    %v2221 = vpop.permute.xlu0 %2220
    %v2222 = vlaneseq
    %v2223 = vshrl.u32 %v2222, 7
    %v2224 = vadd.s32 %v2223, 16
    %2225 = vset.pattern.permute.xlu0 %v2224
    %2226 = vperm.xlu0 %2225, %v2209
    %v2227 = vpop.permute.xlu0 %2226
    %v2228 = vlaneseq
    %v2229 = vshrl.u32 %v2228, 7
    %v2230 = vadd.s32 %v2229, 24
    %2231 = vset.pattern.permute.xlu0 %v2230
    %2232 = vperm.xlu0 %2231, %v2209
    %v2233 = vpop.permute.xlu0 %2232
    %v2234 = vlaneseq
    %v2235 = vshrl.u32 %v2234, 7
    %v2236 = vadd.s32 %v2235, 32
    %2237 = vset.pattern.permute.xlu0 %v2236
    %2238 = vperm.xlu0 %2237, %v2209
    %v2239 = vpop.permute.xlu0 %2238
    %v2240 = vlaneseq
    %v2241 = vshrl.u32 %v2240, 7
    %v2242 = vadd.s32 %v2241, 40
    %2243 = vset.pattern.permute.xlu0 %v2242
    %2244 = vperm.xlu0 %2243, %v2209
    %v2245 = vpop.permute.xlu0 %2244
    %v2246 = vlaneseq
    %v2247 = vshrl.u32 %v2246, 7
    %v2248 = vadd.s32 %v2247, 48
    %2249 = vset.pattern.permute.xlu0 %v2248
    %2250 = vperm.xlu0 %2249, %v2209
    %v2251 = vpop.permute.xlu0 %2250
    %v2252 = vlaneseq
    %v2253 = vshrl.u32 %v2252, 7
    %v2254 = vadd.s32 %v2253, 56
    %2255 = vset.pattern.permute.xlu0 %v2254
    %2256 = vperm.xlu0 %2255, %v2209
    %v2257 = vpop.permute.xlu0 %2256
    %v2258 = vlaneseq
    %v2259 = vshrl.u32 %v2258, 7
    %v2260 = vadd.s32 %v2259, 64
    %2261 = vset.pattern.permute.xlu0 %v2260
    %2262 = vperm.xlu0 %2261, %v2209
    %v2263 = vpop.permute.xlu0 %2262
    %v2264 = vlaneseq
    %v2265 = vshrl.u32 %v2264, 7
    %v2266 = vadd.s32 %v2265, 72
    %2267 = vset.pattern.permute.xlu0 %v2266
    %2268 = vperm.xlu0 %2267, %v2209
    %v2269 = vpop.permute.xlu0 %2268
    %v2270 = vlaneseq
    %v2271 = vshrl.u32 %v2270, 7
    %v2272 = vadd.s32 %v2271, 80
    %2273 = vset.pattern.permute.xlu0 %v2272
    %2274 = vperm.xlu0 %2273, %v2209
    %v2275 = vpop.permute.xlu0 %2274
    %v2276 = vlaneseq
    %v2277 = vshrl.u32 %v2276, 7
    %v2278 = vadd.s32 %v2277, 88
    %2279 = vset.pattern.permute.xlu0 %v2278
    %2280 = vperm.xlu0 %2279, %v2209
    %v2281 = vpop.permute.xlu0 %2280
    %v2282 = vlaneseq
    %v2283 = vshrl.u32 %v2282, 7
    %v2284 = vadd.s32 %v2283, 96
    %2285 = vset.pattern.permute.xlu0 %v2284
    %2286 = vperm.xlu0 %2285, %v2209
    %v2287 = vpop.permute.xlu0 %2286
    %v2288 = vlaneseq
    %v2289 = vshrl.u32 %v2288, 7
    %v2290 = vadd.s32 %v2289, 104
    %2291 = vset.pattern.permute.xlu0 %v2290
    %2292 = vperm.xlu0 %2291, %v2209
    %v2293 = vpop.permute.xlu0 %2292
    %v2294 = vlaneseq
    %v2295 = vshrl.u32 %v2294, 7
    %v2296 = vadd.s32 %v2295, 112
    %2297 = vset.pattern.permute.xlu0 %v2296
    %2298 = vperm.xlu0 %2297, %v2209
    %v2299 = vpop.permute.xlu0 %2298
    %v2300 = vlaneseq
    %v2301 = vshrl.u32 %v2300, 7
    %v2302 = vadd.s32 %v2301, 120
    %2303 = vset.pattern.permute.xlu0 %v2302
    %2304 = vperm.xlu0 %2303, %v2209
    %v2305 = vpop.permute.xlu0 %2304
    %v2306 = vperm.slane %v145, 0
    %v2307 = vlaneseq
    %v2308 = vshrl.u32 %v2307, 7
    %2310 = vset.pattern.permute.xlu0 %v2308
    %2311 = vperm.xlu0 %2310, %v2306
    %v2312 = vpop.permute.xlu0 %2311
    %v2313 = vlaneseq
    %v2314 = vshrl.u32 %v2313, 7
    %v2315 = vadd.s32 %v2314, 8
    %2316 = vset.pattern.permute.xlu0 %v2315
    %2317 = vperm.xlu0 %2316, %v2306
    %v2318 = vpop.permute.xlu0 %2317
    %v2319 = vlaneseq
    %v2320 = vshrl.u32 %v2319, 7
    %v2321 = vadd.s32 %v2320, 16
    %2322 = vset.pattern.permute.xlu0 %v2321
    %2323 = vperm.xlu0 %2322, %v2306
    %v2324 = vpop.permute.xlu0 %2323
    %v2325 = vlaneseq
    %v2326 = vshrl.u32 %v2325, 7
    %v2327 = vadd.s32 %v2326, 24
    %2328 = vset.pattern.permute.xlu0 %v2327
    %2329 = vperm.xlu0 %2328, %v2306
    %v2330 = vpop.permute.xlu0 %2329
    %v2331 = vlaneseq
    %v2332 = vshrl.u32 %v2331, 7
    %v2333 = vadd.s32 %v2332, 32
    %2334 = vset.pattern.permute.xlu0 %v2333
    %2335 = vperm.xlu0 %2334, %v2306
    %v2336 = vpop.permute.xlu0 %2335
    %v2337 = vlaneseq
    %v2338 = vshrl.u32 %v2337, 7
    %v2339 = vadd.s32 %v2338, 40
    %2340 = vset.pattern.permute.xlu0 %v2339
    %2341 = vperm.xlu0 %2340, %v2306
    %v2342 = vpop.permute.xlu0 %2341
    %v2343 = vlaneseq
    %v2344 = vshrl.u32 %v2343, 7
    %v2345 = vadd.s32 %v2344, 48
    %2346 = vset.pattern.permute.xlu0 %v2345
    %2347 = vperm.xlu0 %2346, %v2306
    %v2348 = vpop.permute.xlu0 %2347
    %v2349 = vlaneseq
    %v2350 = vshrl.u32 %v2349, 7
    %v2351 = vadd.s32 %v2350, 56
    %2352 = vset.pattern.permute.xlu0 %v2351
    %2353 = vperm.xlu0 %2352, %v2306
    %v2354 = vpop.permute.xlu0 %2353
    %v2355 = vlaneseq
    %v2356 = vshrl.u32 %v2355, 7
    %v2357 = vadd.s32 %v2356, 64
    %2358 = vset.pattern.permute.xlu0 %v2357
    %2359 = vperm.xlu0 %2358, %v2306
    %v2360 = vpop.permute.xlu0 %2359
    %v2361 = vlaneseq
    %v2362 = vshrl.u32 %v2361, 7
    %v2363 = vadd.s32 %v2362, 72
    %2364 = vset.pattern.permute.xlu0 %v2363
    %2365 = vperm.xlu0 %2364, %v2306
    %v2366 = vpop.permute.xlu0 %2365
    %v2367 = vlaneseq
    %v2368 = vshrl.u32 %v2367, 7
    %v2369 = vadd.s32 %v2368, 80
    %2370 = vset.pattern.permute.xlu0 %v2369
    %2371 = vperm.xlu0 %2370, %v2306
    %v2372 = vpop.permute.xlu0 %2371
    %v2373 = vlaneseq
    %v2374 = vshrl.u32 %v2373, 7
    %v2375 = vadd.s32 %v2374, 88
    %2376 = vset.pattern.permute.xlu0 %v2375
    %2377 = vperm.xlu0 %2376, %v2306
    %v2378 = vpop.permute.xlu0 %2377
    %v2379 = vlaneseq
    %v2380 = vshrl.u32 %v2379, 7
    %v2381 = vadd.s32 %v2380, 96
    %2382 = vset.pattern.permute.xlu0 %v2381
    %2383 = vperm.xlu0 %2382, %v2306
    %v2384 = vpop.permute.xlu0 %2383
    %v2385 = vlaneseq
    %v2386 = vshrl.u32 %v2385, 7
    %v2387 = vadd.s32 %v2386, 104
    %2388 = vset.pattern.permute.xlu0 %v2387
    %2389 = vperm.xlu0 %2388, %v2306
    %v2390 = vpop.permute.xlu0 %2389
    %v2391 = vlaneseq
    %v2392 = vshrl.u32 %v2391, 7
    %v2393 = vadd.s32 %v2392, 112
    %2394 = vset.pattern.permute.xlu0 %v2393
    %2395 = vperm.xlu0 %2394, %v2306
    %v2396 = vpop.permute.xlu0 %2395
    %v2397 = vlaneseq
    %v2398 = vshrl.u32 %v2397, 7
    %v2399 = vadd.s32 %v2398, 120
    %2400 = vset.pattern.permute.xlu0 %v2399
    %2401 = vperm.xlu0 %2400, %v2306
    %v2402 = vpop.permute.xlu0 %2401
    %v2403 = vperm.slane %v146, 0
    %v2404 = vlaneseq
    %v2405 = vshrl.u32 %v2404, 7
    %2407 = vset.pattern.permute.xlu0 %v2405
    %2408 = vperm.xlu0 %2407, %v2403
    %v2409 = vpop.permute.xlu0 %2408
    %v2410 = vlaneseq
    %v2411 = vshrl.u32 %v2410, 7
    %v2412 = vadd.s32 %v2411, 8
    %2413 = vset.pattern.permute.xlu0 %v2412
    %2414 = vperm.xlu0 %2413, %v2403
    %v2415 = vpop.permute.xlu0 %2414
    %v2416 = vlaneseq
    %v2417 = vshrl.u32 %v2416, 7
    %v2418 = vadd.s32 %v2417, 16
    %2419 = vset.pattern.permute.xlu0 %v2418
    %2420 = vperm.xlu0 %2419, %v2403
    %v2421 = vpop.permute.xlu0 %2420
    %v2422 = vlaneseq
    %v2423 = vshrl.u32 %v2422, 7
    %v2424 = vadd.s32 %v2423, 24
    %2425 = vset.pattern.permute.xlu0 %v2424
    %2426 = vperm.xlu0 %2425, %v2403
    %v2427 = vpop.permute.xlu0 %2426
    %v2428 = vlaneseq
    %v2429 = vshrl.u32 %v2428, 7
    %v2430 = vadd.s32 %v2429, 32
    %2431 = vset.pattern.permute.xlu0 %v2430
    %2432 = vperm.xlu0 %2431, %v2403
    %v2433 = vpop.permute.xlu0 %2432
    %v2434 = vlaneseq
    %v2435 = vshrl.u32 %v2434, 7
    %v2436 = vadd.s32 %v2435, 40
    %2437 = vset.pattern.permute.xlu0 %v2436
    %2438 = vperm.xlu0 %2437, %v2403
    %v2439 = vpop.permute.xlu0 %2438
    %v2440 = vlaneseq
    %v2441 = vshrl.u32 %v2440, 7
    %v2442 = vadd.s32 %v2441, 48
    %2443 = vset.pattern.permute.xlu0 %v2442
    %2444 = vperm.xlu0 %2443, %v2403
    %v2445 = vpop.permute.xlu0 %2444
    %v2446 = vlaneseq
    %v2447 = vshrl.u32 %v2446, 7
    %v2448 = vadd.s32 %v2447, 56
    %2449 = vset.pattern.permute.xlu0 %v2448
    %2450 = vperm.xlu0 %2449, %v2403
    %v2451 = vpop.permute.xlu0 %2450
    %v2452 = vlaneseq
    %v2453 = vshrl.u32 %v2452, 7
    %v2454 = vadd.s32 %v2453, 64
    %2455 = vset.pattern.permute.xlu0 %v2454
    %2456 = vperm.xlu0 %2455, %v2403
    %v2457 = vpop.permute.xlu0 %2456
    %v2458 = vlaneseq
    %v2459 = vshrl.u32 %v2458, 7
    %v2460 = vadd.s32 %v2459, 72
    %2461 = vset.pattern.permute.xlu0 %v2460
    %2462 = vperm.xlu0 %2461, %v2403
    %v2463 = vpop.permute.xlu0 %2462
    %v2464 = vlaneseq
    %v2465 = vshrl.u32 %v2464, 7
    %v2466 = vadd.s32 %v2465, 80
    %2467 = vset.pattern.permute.xlu0 %v2466
    %2468 = vperm.xlu0 %2467, %v2403
    %v2469 = vpop.permute.xlu0 %2468
    %v2470 = vlaneseq
    %v2471 = vshrl.u32 %v2470, 7
    %v2472 = vadd.s32 %v2471, 88
    %2473 = vset.pattern.permute.xlu0 %v2472
    %2474 = vperm.xlu0 %2473, %v2403
    %v2475 = vpop.permute.xlu0 %2474
    %v2476 = vlaneseq
    %v2477 = vshrl.u32 %v2476, 7
    %v2478 = vadd.s32 %v2477, 96
    %2479 = vset.pattern.permute.xlu0 %v2478
    %2480 = vperm.xlu0 %2479, %v2403
    %v2481 = vpop.permute.xlu0 %2480
    %v2482 = vlaneseq
    %v2483 = vshrl.u32 %v2482, 7
    %v2484 = vadd.s32 %v2483, 104
    %2485 = vset.pattern.permute.xlu0 %v2484
    %2486 = vperm.xlu0 %2485, %v2403
    %v2487 = vpop.permute.xlu0 %2486
    %v2488 = vlaneseq
    %v2489 = vshrl.u32 %v2488, 7
    %v2490 = vadd.s32 %v2489, 112
    %2491 = vset.pattern.permute.xlu0 %v2490
    %2492 = vperm.xlu0 %2491, %v2403
    %v2493 = vpop.permute.xlu0 %2492
    %v2494 = vlaneseq
    %v2495 = vshrl.u32 %v2494, 7
    %v2496 = vadd.s32 %v2495, 120
    %2497 = vset.pattern.permute.xlu0 %v2496
    %2498 = vperm.xlu0 %2497, %v2403
    %v2499 = vpop.permute.xlu0 %2498
    %v2756 = vmul.f32 %v932, %v954
    %v2757 = vmul.f32 %v932, %v960
    %v2758 = vmul.f32 %v932, %v966
    %v2759 = vmul.f32 %v932, %v972
    %v2760 = vmul.f32 %v932, %v978
    %v2761 = vmul.f32 %v932, %v984
    %v2762 = vmul.f32 %v932, %v990
    %v2763 = vmul.f32 %v932, %v996
    %v2764 = vmul.f32 %v932, %v1002
    %v2765 = vmul.f32 %v932, %v1008
    %v2766 = vmul.f32 %v932, %v1014
    %v2767 = vmul.f32 %v932, %v1020
    %v2768 = vmul.f32 %v932, %v1026
    %v2769 = vmul.f32 %v932, %v1032
    %v2770 = vmul.f32 %v932, %v1038
    %v2771 = vmul.f32 %v932, %v1044
    %v2772 = vmul.f32 %v933, %v1051
    %v2773 = vmul.f32 %v933, %v1057
    %v2774 = vmul.f32 %v933, %v1063
    %v2775 = vmul.f32 %v933, %v1069
    %v2776 = vmul.f32 %v933, %v1075
    %v2777 = vmul.f32 %v933, %v1081
    %v2778 = vmul.f32 %v933, %v1087
    %v2779 = vmul.f32 %v933, %v1093
    %v2780 = vmul.f32 %v933, %v1099
    %v2781 = vmul.f32 %v933, %v1105
    %v2782 = vmul.f32 %v933, %v1111
    %v2783 = vmul.f32 %v933, %v1117
    %v2784 = vmul.f32 %v933, %v1123
    %v2785 = vmul.f32 %v933, %v1129
    %v2786 = vmul.f32 %v933, %v1135
    %v2787 = vmul.f32 %v933, %v1141
    %v2788 = vmul.f32 %v934, %v1148
    %v2789 = vmul.f32 %v934, %v1154
    %v2790 = vmul.f32 %v934, %v1160
    %v2791 = vmul.f32 %v934, %v1166
    %v2792 = vmul.f32 %v934, %v1172
    %v2793 = vmul.f32 %v934, %v1178
    %v2794 = vmul.f32 %v934, %v1184
    %v2795 = vmul.f32 %v934, %v1190
    %v2796 = vmul.f32 %v934, %v1196
    %v2797 = vmul.f32 %v934, %v1202
    %v2798 = vmul.f32 %v934, %v1208
    %v2799 = vmul.f32 %v934, %v1214
    %v2800 = vmul.f32 %v934, %v1220
    %v2801 = vmul.f32 %v934, %v1226
    %v2802 = vmul.f32 %v934, %v1232
    %v2803 = vmul.f32 %v934, %v1238
    %v2804 = vmul.f32 %v935, %v1245
    %v2805 = vmul.f32 %v935, %v1251
    %v2806 = vmul.f32 %v935, %v1257
    %v2807 = vmul.f32 %v935, %v1263
    %v2808 = vmul.f32 %v935, %v1269
    %v2809 = vmul.f32 %v935, %v1275
    %v2810 = vmul.f32 %v935, %v1281
    %v2811 = vmul.f32 %v935, %v1287
    %v2812 = vmul.f32 %v935, %v1293
    %v2813 = vmul.f32 %v935, %v1299
    %v2814 = vmul.f32 %v935, %v1305
    %v2815 = vmul.f32 %v935, %v1311
    %v2816 = vmul.f32 %v935, %v1317
    %v2817 = vmul.f32 %v935, %v1323
    %v2818 = vmul.f32 %v935, %v1329
    %v2819 = vmul.f32 %v935, %v1335
    %v2820 = vmul.f32 %v936, %v1342
    %v2821 = vmul.f32 %v936, %v1348
    %v2822 = vmul.f32 %v936, %v1354
    %v2823 = vmul.f32 %v936, %v1360
    %v2824 = vmul.f32 %v936, %v1366
    %v2825 = vmul.f32 %v936, %v1372
    %v2826 = vmul.f32 %v936, %v1378
    %v2827 = vmul.f32 %v936, %v1384
    %v2828 = vmul.f32 %v936, %v1390
    %v2829 = vmul.f32 %v936, %v1396
    %v2830 = vmul.f32 %v936, %v1402
    %v2831 = vmul.f32 %v936, %v1408
    %v2832 = vmul.f32 %v936, %v1414
    %v2833 = vmul.f32 %v936, %v1420
    %v2834 = vmul.f32 %v936, %v1426
    %v2835 = vmul.f32 %v936, %v1432
    %v2836 = vmul.f32 %v937, %v1439
    %v2837 = vmul.f32 %v937, %v1445
    %v2838 = vmul.f32 %v937, %v1451
    %v2839 = vmul.f32 %v937, %v1457
    %v2840 = vmul.f32 %v937, %v1463
    %v2841 = vmul.f32 %v937, %v1469
    %v2842 = vmul.f32 %v937, %v1475
    %v2843 = vmul.f32 %v937, %v1481
    %v2844 = vmul.f32 %v937, %v1487
    %v2845 = vmul.f32 %v937, %v1493
    %v2846 = vmul.f32 %v937, %v1499
    %v2847 = vmul.f32 %v937, %v1505
    %v2848 = vmul.f32 %v937, %v1511
    %v2849 = vmul.f32 %v937, %v1517
    %v2850 = vmul.f32 %v937, %v1523
    %v2851 = vmul.f32 %v937, %v1529
    %v2852 = vmul.f32 %v938, %v1536
    %v2853 = vmul.f32 %v938, %v1542
    %v2854 = vmul.f32 %v938, %v1548
    %v2855 = vmul.f32 %v938, %v1554
    %v2856 = vmul.f32 %v938, %v1560
    %v2857 = vmul.f32 %v938, %v1566
    %v2858 = vmul.f32 %v938, %v1572
    %v2859 = vmul.f32 %v938, %v1578
    %v2860 = vmul.f32 %v938, %v1584
    %v2861 = vmul.f32 %v938, %v1590
    %v2862 = vmul.f32 %v938, %v1596
    %v2863 = vmul.f32 %v938, %v1602
    %v2864 = vmul.f32 %v938, %v1608
    %v2865 = vmul.f32 %v938, %v1614
    %v2866 = vmul.f32 %v938, %v1620
    %v2867 = vmul.f32 %v938, %v1626
    %v2868 = vmul.f32 %v939, %v1633
    %v2869 = vmul.f32 %v939, %v1639
    %v2870 = vmul.f32 %v939, %v1645
    %v2871 = vmul.f32 %v939, %v1651
    %v2872 = vmul.f32 %v939, %v1657
    %v2873 = vmul.f32 %v939, %v1663
    %v2874 = vmul.f32 %v939, %v1669
    %v2875 = vmul.f32 %v939, %v1675
    %v2876 = vmul.f32 %v939, %v1681
    %v2877 = vmul.f32 %v939, %v1687
    %v2878 = vmul.f32 %v939, %v1693
    %v2879 = vmul.f32 %v939, %v1699
    %v2880 = vmul.f32 %v939, %v1705
    %v2881 = vmul.f32 %v939, %v1711
    %v2882 = vmul.f32 %v939, %v1717
    %v2883 = vmul.f32 %v939, %v1723
    %v2884 = vmul.f32 %v940, %v1730
    %v2885 = vmul.f32 %v940, %v1736
    %v2886 = vmul.f32 %v940, %v1742
    %v2887 = vmul.f32 %v940, %v1748
    %v2888 = vmul.f32 %v940, %v1754
    %v2889 = vmul.f32 %v940, %v1760
    %v2890 = vmul.f32 %v940, %v1766
    %v2891 = vmul.f32 %v940, %v1772
    %v2892 = vmul.f32 %v940, %v1778
    %v2893 = vmul.f32 %v940, %v1784
    %v2894 = vmul.f32 %v940, %v1790
    %v2895 = vmul.f32 %v940, %v1796
    %v2896 = vmul.f32 %v940, %v1802
    %v2897 = vmul.f32 %v940, %v1808
    %v2898 = vmul.f32 %v940, %v1814
    %v2899 = vmul.f32 %v940, %v1820
    %v2900 = vmul.f32 %v941, %v1827
    %v2901 = vmul.f32 %v941, %v1833
    %v2902 = vmul.f32 %v941, %v1839
    %v2903 = vmul.f32 %v941, %v1845
    %v2904 = vmul.f32 %v941, %v1851
    %v2905 = vmul.f32 %v941, %v1857
    %v2906 = vmul.f32 %v941, %v1863
    %v2907 = vmul.f32 %v941, %v1869
    %v2908 = vmul.f32 %v941, %v1875
    %v2909 = vmul.f32 %v941, %v1881
    %v2910 = vmul.f32 %v941, %v1887
    %v2911 = vmul.f32 %v941, %v1893
    %v2912 = vmul.f32 %v941, %v1899
    %v2913 = vmul.f32 %v941, %v1905
    %v2914 = vmul.f32 %v941, %v1911
    %v2915 = vmul.f32 %v941, %v1917
    %v2916 = vmul.f32 %v942, %v1924
    %v2917 = vmul.f32 %v942, %v1930
    %v2918 = vmul.f32 %v942, %v1936
    %v2919 = vmul.f32 %v942, %v1942
    %v2920 = vmul.f32 %v942, %v1948
    %v2921 = vmul.f32 %v942, %v1954
    %v2922 = vmul.f32 %v942, %v1960
    %v2923 = vmul.f32 %v942, %v1966
    %v2924 = vmul.f32 %v942, %v1972
    %v2925 = vmul.f32 %v942, %v1978
    %v2926 = vmul.f32 %v942, %v1984
    %v2927 = vmul.f32 %v942, %v1990
    %v2928 = vmul.f32 %v942, %v1996
    %v2929 = vmul.f32 %v942, %v2002
    %v2930 = vmul.f32 %v942, %v2008
    %v2931 = vmul.f32 %v942, %v2014
    %v2932 = vmul.f32 %v943, %v2021
    %v2933 = vmul.f32 %v943, %v2027
    %v2934 = vmul.f32 %v943, %v2033
    %v2935 = vmul.f32 %v943, %v2039
    %v2936 = vmul.f32 %v943, %v2045
    %v2937 = vmul.f32 %v943, %v2051
    %v2938 = vmul.f32 %v943, %v2057
    %v2939 = vmul.f32 %v943, %v2063
    %v2940 = vmul.f32 %v943, %v2069
    %v2941 = vmul.f32 %v943, %v2075
    %v2942 = vmul.f32 %v943, %v2081
    %v2943 = vmul.f32 %v943, %v2087
    %v2944 = vmul.f32 %v943, %v2093
    %v2945 = vmul.f32 %v943, %v2099
    %v2946 = vmul.f32 %v943, %v2105
    %v2947 = vmul.f32 %v943, %v2111
    %v2948 = vmul.f32 %v944, %v2118
    %v2949 = vmul.f32 %v944, %v2124
    %v2950 = vmul.f32 %v944, %v2130
    %v2951 = vmul.f32 %v944, %v2136
    %v2952 = vmul.f32 %v944, %v2142
    %v2953 = vmul.f32 %v944, %v2148
    %v2954 = vmul.f32 %v944, %v2154
    %v2955 = vmul.f32 %v944, %v2160
    %v2956 = vmul.f32 %v944, %v2166
    %v2957 = vmul.f32 %v944, %v2172
    %v2958 = vmul.f32 %v944, %v2178
    %v2959 = vmul.f32 %v944, %v2184
    %v2960 = vmul.f32 %v944, %v2190
    %v2961 = vmul.f32 %v944, %v2196
    %v2962 = vmul.f32 %v944, %v2202
    %v2963 = vmul.f32 %v944, %v2208
    %v2964 = vmul.f32 %v945, %v2215
    %v2965 = vmul.f32 %v945, %v2221
    %v2966 = vmul.f32 %v945, %v2227
    %v2967 = vmul.f32 %v945, %v2233
    %v2968 = vmul.f32 %v945, %v2239
    %v2969 = vmul.f32 %v945, %v2245
    %v2970 = vmul.f32 %v945, %v2251
    %v2971 = vmul.f32 %v945, %v2257
    %v2972 = vmul.f32 %v945, %v2263
    %v2973 = vmul.f32 %v945, %v2269
    %v2974 = vmul.f32 %v945, %v2275
    %v2975 = vmul.f32 %v945, %v2281
    %v2976 = vmul.f32 %v945, %v2287
    %v2977 = vmul.f32 %v945, %v2293
    %v2978 = vmul.f32 %v945, %v2299
    %v2979 = vmul.f32 %v945, %v2305
    %v2980 = vmul.f32 %v946, %v2312
    %v2981 = vmul.f32 %v946, %v2318
    %v2982 = vmul.f32 %v946, %v2324
    %v2983 = vmul.f32 %v946, %v2330
    %v2984 = vmul.f32 %v946, %v2336
    %v2985 = vmul.f32 %v946, %v2342
    %v2986 = vmul.f32 %v946, %v2348
    %v2987 = vmul.f32 %v946, %v2354
    %v2988 = vmul.f32 %v946, %v2360
    %v2989 = vmul.f32 %v946, %v2366
    %v2990 = vmul.f32 %v946, %v2372
    %v2991 = vmul.f32 %v946, %v2378
    %v2992 = vmul.f32 %v946, %v2384
    %v2993 = vmul.f32 %v946, %v2390
    %v2994 = vmul.f32 %v946, %v2396
    %v2995 = vmul.f32 %v946, %v2402
    %v2996 = vmul.f32 %v947, %v2409
    %v2997 = vmul.f32 %v947, %v2415
    %v2998 = vmul.f32 %v947, %v2421
    %v2999 = vmul.f32 %v947, %v2427
    %v3000 = vmul.f32 %v947, %v2433
    %v3001 = vmul.f32 %v947, %v2439
    %v3002 = vmul.f32 %v947, %v2445
    %v3003 = vmul.f32 %v947, %v2451
    %v3004 = vmul.f32 %v947, %v2457
    %v3005 = vmul.f32 %v947, %v2463
    %v3006 = vmul.f32 %v947, %v2469
    %v3007 = vmul.f32 %v947, %v2475
    %v3008 = vmul.f32 %v947, %v2481
    %v3009 = vmul.f32 %v947, %v2487
    %v3010 = vmul.f32 %v947, %v2493
    %v3011 = vmul.f32 %v947, %v2499
    %v3012 = vperm.slane %v706, 1
    %v3013 = vperm.slane %v721, 1
    %v3014 = vperm.slane %v736, 1
    %v3015 = vperm.slane %v751, 1
    %v3016 = vperm.slane %v766, 1
    %v3017 = vperm.slane %v781, 1
    %v3018 = vperm.slane %v796, 1
    %v3019 = vperm.slane %v811, 1
    %v3020 = vperm.slane %v826, 1
    %v3021 = vperm.slane %v841, 1
    %v3022 = vperm.slane %v856, 1
    %v3023 = vperm.slane %v871, 1
    %v3024 = vperm.slane %v886, 1
    %v3025 = vperm.slane %v901, 1
    %v3026 = vperm.slane %v916, 1
    %v3027 = vperm.slane %v931, 1
    %v3028 = vperm.slane %v131, 1
    %v3029 = vlaneseq
    %v3030 = vshrl.u32 %v3029, 7
    %3032 = vset.pattern.permute.xlu0 %v3030
    %3033 = vperm.xlu0 %3032, %v3028
    %v3034 = vpop.permute.xlu0 %3033
    %v3035 = vlaneseq
    %v3036 = vshrl.u32 %v3035, 7
    %v3037 = vadd.s32 %v3036, 8
    %3038 = vset.pattern.permute.xlu0 %v3037
    %3039 = vperm.xlu0 %3038, %v3028
    %v3040 = vpop.permute.xlu0 %3039
    %v3041 = vlaneseq
    %v3042 = vshrl.u32 %v3041, 7
    %v3043 = vadd.s32 %v3042, 16
    %3044 = vset.pattern.permute.xlu0 %v3043
    %3045 = vperm.xlu0 %3044, %v3028
    %v3046 = vpop.permute.xlu0 %3045
    %v3047 = vlaneseq
    %v3048 = vshrl.u32 %v3047, 7
    %v3049 = vadd.s32 %v3048, 24
    %3050 = vset.pattern.permute.xlu0 %v3049
    %3051 = vperm.xlu0 %3050, %v3028
    %v3052 = vpop.permute.xlu0 %3051
    %v3053 = vlaneseq
    %v3054 = vshrl.u32 %v3053, 7
    %v3055 = vadd.s32 %v3054, 32
    %3056 = vset.pattern.permute.xlu0 %v3055
    %3057 = vperm.xlu0 %3056, %v3028
    %v3058 = vpop.permute.xlu0 %3057
    %v3059 = vlaneseq
    %v3060 = vshrl.u32 %v3059, 7
    %v3061 = vadd.s32 %v3060, 40
    %3062 = vset.pattern.permute.xlu0 %v3061
    %3063 = vperm.xlu0 %3062, %v3028
    %v3064 = vpop.permute.xlu0 %3063
    %v3065 = vlaneseq
    %v3066 = vshrl.u32 %v3065, 7
    %v3067 = vadd.s32 %v3066, 48
    %3068 = vset.pattern.permute.xlu0 %v3067
    %3069 = vperm.xlu0 %3068, %v3028
    %v3070 = vpop.permute.xlu0 %3069
    %v3071 = vlaneseq
    %v3072 = vshrl.u32 %v3071, 7
    %v3073 = vadd.s32 %v3072, 56
    %3074 = vset.pattern.permute.xlu0 %v3073
    %3075 = vperm.xlu0 %3074, %v3028
    %v3076 = vpop.permute.xlu0 %3075
    %v3077 = vlaneseq
    %v3078 = vshrl.u32 %v3077, 7
    %v3079 = vadd.s32 %v3078, 64
    %3080 = vset.pattern.permute.xlu0 %v3079
    %3081 = vperm.xlu0 %3080, %v3028
    %v3082 = vpop.permute.xlu0 %3081
    %v3083 = vlaneseq
    %v3084 = vshrl.u32 %v3083, 7
    %v3085 = vadd.s32 %v3084, 72
    %3086 = vset.pattern.permute.xlu0 %v3085
    %3087 = vperm.xlu0 %3086, %v3028
    %v3088 = vpop.permute.xlu0 %3087
    %v3089 = vlaneseq
    %v3090 = vshrl.u32 %v3089, 7
    %v3091 = vadd.s32 %v3090, 80
    %3092 = vset.pattern.permute.xlu0 %v3091
    %3093 = vperm.xlu0 %3092, %v3028
    %v3094 = vpop.permute.xlu0 %3093
    %v3095 = vlaneseq
    %v3096 = vshrl.u32 %v3095, 7
    %v3097 = vadd.s32 %v3096, 88
    %3098 = vset.pattern.permute.xlu0 %v3097
    %3099 = vperm.xlu0 %3098, %v3028
    %v3100 = vpop.permute.xlu0 %3099
    %v3101 = vlaneseq
    %v3102 = vshrl.u32 %v3101, 7
    %v3103 = vadd.s32 %v3102, 96
    %3104 = vset.pattern.permute.xlu0 %v3103
    %3105 = vperm.xlu0 %3104, %v3028
    %v3106 = vpop.permute.xlu0 %3105
    %v3107 = vlaneseq
    %v3108 = vshrl.u32 %v3107, 7
    %v3109 = vadd.s32 %v3108, 104
    %3110 = vset.pattern.permute.xlu0 %v3109
    %3111 = vperm.xlu0 %3110, %v3028
    %v3112 = vpop.permute.xlu0 %3111
    %v3113 = vlaneseq
    %v3114 = vshrl.u32 %v3113, 7
    %v3115 = vadd.s32 %v3114, 112
    %3116 = vset.pattern.permute.xlu0 %v3115
    %3117 = vperm.xlu0 %3116, %v3028
    %v3118 = vpop.permute.xlu0 %3117
    %v3119 = vlaneseq
    %v3120 = vshrl.u32 %v3119, 7
    %v3121 = vadd.s32 %v3120, 120
    %3122 = vset.pattern.permute.xlu0 %v3121
    %3123 = vperm.xlu0 %3122, %v3028
    %v3124 = vpop.permute.xlu0 %3123
    %v3125 = vperm.slane %v132, 1
    %v3126 = vlaneseq
    %v3127 = vshrl.u32 %v3126, 7
    %3129 = vset.pattern.permute.xlu0 %v3127
    %3130 = vperm.xlu0 %3129, %v3125
    %v3131 = vpop.permute.xlu0 %3130
    %v3132 = vlaneseq
    %v3133 = vshrl.u32 %v3132, 7
    %v3134 = vadd.s32 %v3133, 8
    %3135 = vset.pattern.permute.xlu0 %v3134
    %3136 = vperm.xlu0 %3135, %v3125
    %v3137 = vpop.permute.xlu0 %3136
    %v3138 = vlaneseq
    %v3139 = vshrl.u32 %v3138, 7
    %v3140 = vadd.s32 %v3139, 16
    %3141 = vset.pattern.permute.xlu0 %v3140
    %3142 = vperm.xlu0 %3141, %v3125
    %v3143 = vpop.permute.xlu0 %3142
    %v3144 = vlaneseq
    %v3145 = vshrl.u32 %v3144, 7
    %v3146 = vadd.s32 %v3145, 24
    %3147 = vset.pattern.permute.xlu0 %v3146
    %3148 = vperm.xlu0 %3147, %v3125
    %v3149 = vpop.permute.xlu0 %3148
    %v3150 = vlaneseq
    %v3151 = vshrl.u32 %v3150, 7
    %v3152 = vadd.s32 %v3151, 32
    %3153 = vset.pattern.permute.xlu0 %v3152
    %3154 = vperm.xlu0 %3153, %v3125
    %v3155 = vpop.permute.xlu0 %3154
    %v3156 = vlaneseq
    %v3157 = vshrl.u32 %v3156, 7
    %v3158 = vadd.s32 %v3157, 40
    %3159 = vset.pattern.permute.xlu0 %v3158
    %3160 = vperm.xlu0 %3159, %v3125
    %v3161 = vpop.permute.xlu0 %3160
    %v3162 = vlaneseq
    %v3163 = vshrl.u32 %v3162, 7
    %v3164 = vadd.s32 %v3163, 48
    %3165 = vset.pattern.permute.xlu0 %v3164
    %3166 = vperm.xlu0 %3165, %v3125
    %v3167 = vpop.permute.xlu0 %3166
    %v3168 = vlaneseq
    %v3169 = vshrl.u32 %v3168, 7
    %v3170 = vadd.s32 %v3169, 56
    %3171 = vset.pattern.permute.xlu0 %v3170
    %3172 = vperm.xlu0 %3171, %v3125
    %v3173 = vpop.permute.xlu0 %3172
    %v3174 = vlaneseq
    %v3175 = vshrl.u32 %v3174, 7
    %v3176 = vadd.s32 %v3175, 64
    %3177 = vset.pattern.permute.xlu0 %v3176
    %3178 = vperm.xlu0 %3177, %v3125
    %v3179 = vpop.permute.xlu0 %3178
    %v3180 = vlaneseq
    %v3181 = vshrl.u32 %v3180, 7
    %v3182 = vadd.s32 %v3181, 72
    %3183 = vset.pattern.permute.xlu0 %v3182
    %3184 = vperm.xlu0 %3183, %v3125
    %v3185 = vpop.permute.xlu0 %3184
    %v3186 = vlaneseq
    %v3187 = vshrl.u32 %v3186, 7
    %v3188 = vadd.s32 %v3187, 80
    %3189 = vset.pattern.permute.xlu0 %v3188
    %3190 = vperm.xlu0 %3189, %v3125
    %v3191 = vpop.permute.xlu0 %3190
    %v3192 = vlaneseq
    %v3193 = vshrl.u32 %v3192, 7
    %v3194 = vadd.s32 %v3193, 88
    %3195 = vset.pattern.permute.xlu0 %v3194
    %3196 = vperm.xlu0 %3195, %v3125
    %v3197 = vpop.permute.xlu0 %3196
    %v3198 = vlaneseq
    %v3199 = vshrl.u32 %v3198, 7
    %v3200 = vadd.s32 %v3199, 96
    %3201 = vset.pattern.permute.xlu0 %v3200
    %3202 = vperm.xlu0 %3201, %v3125
    %v3203 = vpop.permute.xlu0 %3202
    %v3204 = vlaneseq
    %v3205 = vshrl.u32 %v3204, 7
    %v3206 = vadd.s32 %v3205, 104
    %3207 = vset.pattern.permute.xlu0 %v3206
    %3208 = vperm.xlu0 %3207, %v3125
    %v3209 = vpop.permute.xlu0 %3208
    %v3210 = vlaneseq
    %v3211 = vshrl.u32 %v3210, 7
    %v3212 = vadd.s32 %v3211, 112
    %3213 = vset.pattern.permute.xlu0 %v3212
    %3214 = vperm.xlu0 %3213, %v3125
    %v3215 = vpop.permute.xlu0 %3214
    %v3216 = vlaneseq
    %v3217 = vshrl.u32 %v3216, 7
    %v3218 = vadd.s32 %v3217, 120
    %3219 = vset.pattern.permute.xlu0 %v3218
    %3220 = vperm.xlu0 %3219, %v3125
    %v3221 = vpop.permute.xlu0 %3220
    %v3222 = vperm.slane %v133, 1
    %v3223 = vlaneseq
    %v3224 = vshrl.u32 %v3223, 7
    %3226 = vset.pattern.permute.xlu0 %v3224
    %3227 = vperm.xlu0 %3226, %v3222
    %v3228 = vpop.permute.xlu0 %3227
    %v3229 = vlaneseq
    %v3230 = vshrl.u32 %v3229, 7
    %v3231 = vadd.s32 %v3230, 8
    %3232 = vset.pattern.permute.xlu0 %v3231
    %3233 = vperm.xlu0 %3232, %v3222
    %v3234 = vpop.permute.xlu0 %3233
    %v3235 = vlaneseq
    %v3236 = vshrl.u32 %v3235, 7
    %v3237 = vadd.s32 %v3236, 16
    %3238 = vset.pattern.permute.xlu0 %v3237
    %3239 = vperm.xlu0 %3238, %v3222
    %v3240 = vpop.permute.xlu0 %3239
    %v3241 = vlaneseq
    %v3242 = vshrl.u32 %v3241, 7
    %v3243 = vadd.s32 %v3242, 24
    %3244 = vset.pattern.permute.xlu0 %v3243
    %3245 = vperm.xlu0 %3244, %v3222
    %v3246 = vpop.permute.xlu0 %3245
    %v3247 = vlaneseq
    %v3248 = vshrl.u32 %v3247, 7
    %v3249 = vadd.s32 %v3248, 32
    %3250 = vset.pattern.permute.xlu0 %v3249
    %3251 = vperm.xlu0 %3250, %v3222
    %v3252 = vpop.permute.xlu0 %3251
    %v3253 = vlaneseq
    %v3254 = vshrl.u32 %v3253, 7
    %v3255 = vadd.s32 %v3254, 40
    %3256 = vset.pattern.permute.xlu0 %v3255
    %3257 = vperm.xlu0 %3256, %v3222
    %v3258 = vpop.permute.xlu0 %3257
    %v3259 = vlaneseq
    %v3260 = vshrl.u32 %v3259, 7
    %v3261 = vadd.s32 %v3260, 48
    %3262 = vset.pattern.permute.xlu0 %v3261
    %3263 = vperm.xlu0 %3262, %v3222
    %v3264 = vpop.permute.xlu0 %3263
    %v3265 = vlaneseq
    %v3266 = vshrl.u32 %v3265, 7
    %v3267 = vadd.s32 %v3266, 56
    %3268 = vset.pattern.permute.xlu0 %v3267
    %3269 = vperm.xlu0 %3268, %v3222
    %v3270 = vpop.permute.xlu0 %3269
    %v3271 = vlaneseq
    %v3272 = vshrl.u32 %v3271, 7
    %v3273 = vadd.s32 %v3272, 64
    %3274 = vset.pattern.permute.xlu0 %v3273
    %3275 = vperm.xlu0 %3274, %v3222
    %v3276 = vpop.permute.xlu0 %3275
    %v3277 = vlaneseq
    %v3278 = vshrl.u32 %v3277, 7
    %v3279 = vadd.s32 %v3278, 72
    %3280 = vset.pattern.permute.xlu0 %v3279
    %3281 = vperm.xlu0 %3280, %v3222
    %v3282 = vpop.permute.xlu0 %3281
    %v3283 = vlaneseq
    %v3284 = vshrl.u32 %v3283, 7
    %v3285 = vadd.s32 %v3284, 80
    %3286 = vset.pattern.permute.xlu0 %v3285
    %3287 = vperm.xlu0 %3286, %v3222
    %v3288 = vpop.permute.xlu0 %3287
    %v3289 = vlaneseq
    %v3290 = vshrl.u32 %v3289, 7
    %v3291 = vadd.s32 %v3290, 88
    %3292 = vset.pattern.permute.xlu0 %v3291
    %3293 = vperm.xlu0 %3292, %v3222
    %v3294 = vpop.permute.xlu0 %3293
    %v3295 = vlaneseq
    %v3296 = vshrl.u32 %v3295, 7
    %v3297 = vadd.s32 %v3296, 96
    %3298 = vset.pattern.permute.xlu0 %v3297
    %3299 = vperm.xlu0 %3298, %v3222
    %v3300 = vpop.permute.xlu0 %3299
    %v3301 = vlaneseq
    %v3302 = vshrl.u32 %v3301, 7
    %v3303 = vadd.s32 %v3302, 104
    %3304 = vset.pattern.permute.xlu0 %v3303
    %3305 = vperm.xlu0 %3304, %v3222
    %v3306 = vpop.permute.xlu0 %3305
    %v3307 = vlaneseq
    %v3308 = vshrl.u32 %v3307, 7
    %v3309 = vadd.s32 %v3308, 112
    %3310 = vset.pattern.permute.xlu0 %v3309
    %3311 = vperm.xlu0 %3310, %v3222
    %v3312 = vpop.permute.xlu0 %3311
    %v3313 = vlaneseq
    %v3314 = vshrl.u32 %v3313, 7
    %v3315 = vadd.s32 %v3314, 120
    %3316 = vset.pattern.permute.xlu0 %v3315
    %3317 = vperm.xlu0 %3316, %v3222
    %v3318 = vpop.permute.xlu0 %3317
    %v3319 = vperm.slane %v134, 1
    %v3320 = vlaneseq
    %v3321 = vshrl.u32 %v3320, 7
    %3323 = vset.pattern.permute.xlu0 %v3321
    %3324 = vperm.xlu0 %3323, %v3319
    %v3325 = vpop.permute.xlu0 %3324
    %v3326 = vlaneseq
    %v3327 = vshrl.u32 %v3326, 7
    %v3328 = vadd.s32 %v3327, 8
    %3329 = vset.pattern.permute.xlu0 %v3328
    %3330 = vperm.xlu0 %3329, %v3319
    %v3331 = vpop.permute.xlu0 %3330
    %v3332 = vlaneseq
    %v3333 = vshrl.u32 %v3332, 7
    %v3334 = vadd.s32 %v3333, 16
    %3335 = vset.pattern.permute.xlu0 %v3334
    %3336 = vperm.xlu0 %3335, %v3319
    %v3337 = vpop.permute.xlu0 %3336
    %v3338 = vlaneseq
    %v3339 = vshrl.u32 %v3338, 7
    %v3340 = vadd.s32 %v3339, 24
    %3341 = vset.pattern.permute.xlu0 %v3340
    %3342 = vperm.xlu0 %3341, %v3319
    %v3343 = vpop.permute.xlu0 %3342
    %v3344 = vlaneseq
    %v3345 = vshrl.u32 %v3344, 7
    %v3346 = vadd.s32 %v3345, 32
    %3347 = vset.pattern.permute.xlu0 %v3346
    %3348 = vperm.xlu0 %3347, %v3319
    %v3349 = vpop.permute.xlu0 %3348
    %v3350 = vlaneseq
    %v3351 = vshrl.u32 %v3350, 7
    %v3352 = vadd.s32 %v3351, 40
    %3353 = vset.pattern.permute.xlu0 %v3352
    %3354 = vperm.xlu0 %3353, %v3319
    %v3355 = vpop.permute.xlu0 %3354
    %v3356 = vlaneseq
    %v3357 = vshrl.u32 %v3356, 7
    %v3358 = vadd.s32 %v3357, 48
    %3359 = vset.pattern.permute.xlu0 %v3358
    %3360 = vperm.xlu0 %3359, %v3319
    %v3361 = vpop.permute.xlu0 %3360
    %v3362 = vlaneseq
    %v3363 = vshrl.u32 %v3362, 7
    %v3364 = vadd.s32 %v3363, 56
    %3365 = vset.pattern.permute.xlu0 %v3364
    %3366 = vperm.xlu0 %3365, %v3319
    %v3367 = vpop.permute.xlu0 %3366
    %v3368 = vlaneseq
    %v3369 = vshrl.u32 %v3368, 7
    %v3370 = vadd.s32 %v3369, 64
    %3371 = vset.pattern.permute.xlu0 %v3370
    %3372 = vperm.xlu0 %3371, %v3319
    %v3373 = vpop.permute.xlu0 %3372
    %v3374 = vlaneseq
    %v3375 = vshrl.u32 %v3374, 7
    %v3376 = vadd.s32 %v3375, 72
    %3377 = vset.pattern.permute.xlu0 %v3376
    %3378 = vperm.xlu0 %3377, %v3319
    %v3379 = vpop.permute.xlu0 %3378
    %v3380 = vlaneseq
    %v3381 = vshrl.u32 %v3380, 7
    %v3382 = vadd.s32 %v3381, 80
    %3383 = vset.pattern.permute.xlu0 %v3382
    %3384 = vperm.xlu0 %3383, %v3319
    %v3385 = vpop.permute.xlu0 %3384
    %v3386 = vlaneseq
    %v3387 = vshrl.u32 %v3386, 7
    %v3388 = vadd.s32 %v3387, 88
    %3389 = vset.pattern.permute.xlu0 %v3388
    %3390 = vperm.xlu0 %3389, %v3319
    %v3391 = vpop.permute.xlu0 %3390
    %v3392 = vlaneseq
    %v3393 = vshrl.u32 %v3392, 7
    %v3394 = vadd.s32 %v3393, 96
    %3395 = vset.pattern.permute.xlu0 %v3394
    %3396 = vperm.xlu0 %3395, %v3319
    %v3397 = vpop.permute.xlu0 %3396
    %v3398 = vlaneseq
    %v3399 = vshrl.u32 %v3398, 7
    %v3400 = vadd.s32 %v3399, 104
    %3401 = vset.pattern.permute.xlu0 %v3400
    %3402 = vperm.xlu0 %3401, %v3319
    %v3403 = vpop.permute.xlu0 %3402
    %v3404 = vlaneseq
    %v3405 = vshrl.u32 %v3404, 7
    %v3406 = vadd.s32 %v3405, 112
    %3407 = vset.pattern.permute.xlu0 %v3406
    %3408 = vperm.xlu0 %3407, %v3319
    %v3409 = vpop.permute.xlu0 %3408
    %v3410 = vlaneseq
    %v3411 = vshrl.u32 %v3410, 7
    %v3412 = vadd.s32 %v3411, 120
    %3413 = vset.pattern.permute.xlu0 %v3412
    %3414 = vperm.xlu0 %3413, %v3319
    %v3415 = vpop.permute.xlu0 %3414
    %v3416 = vperm.slane %v135, 1
    %v3417 = vlaneseq
    %v3418 = vshrl.u32 %v3417, 7
    %3420 = vset.pattern.permute.xlu0 %v3418
    %3421 = vperm.xlu0 %3420, %v3416
    %v3422 = vpop.permute.xlu0 %3421
    %v3423 = vlaneseq
    %v3424 = vshrl.u32 %v3423, 7
    %v3425 = vadd.s32 %v3424, 8
    %3426 = vset.pattern.permute.xlu0 %v3425
    %3427 = vperm.xlu0 %3426, %v3416
    %v3428 = vpop.permute.xlu0 %3427
    %v3429 = vlaneseq
    %v3430 = vshrl.u32 %v3429, 7
    %v3431 = vadd.s32 %v3430, 16
    %3432 = vset.pattern.permute.xlu0 %v3431
    %3433 = vperm.xlu0 %3432, %v3416
    %v3434 = vpop.permute.xlu0 %3433
    %v3435 = vlaneseq
    %v3436 = vshrl.u32 %v3435, 7
    %v3437 = vadd.s32 %v3436, 24
    %3438 = vset.pattern.permute.xlu0 %v3437
    %3439 = vperm.xlu0 %3438, %v3416
    %v3440 = vpop.permute.xlu0 %3439
    %v3441 = vlaneseq
    %v3442 = vshrl.u32 %v3441, 7
    %v3443 = vadd.s32 %v3442, 32
    %3444 = vset.pattern.permute.xlu0 %v3443
    %3445 = vperm.xlu0 %3444, %v3416
    %v3446 = vpop.permute.xlu0 %3445
    %v3447 = vlaneseq
    %v3448 = vshrl.u32 %v3447, 7
    %v3449 = vadd.s32 %v3448, 40
    %3450 = vset.pattern.permute.xlu0 %v3449
    %3451 = vperm.xlu0 %3450, %v3416
    %v3452 = vpop.permute.xlu0 %3451
    %v3453 = vlaneseq
    %v3454 = vshrl.u32 %v3453, 7
    %v3455 = vadd.s32 %v3454, 48
    %3456 = vset.pattern.permute.xlu0 %v3455
    %3457 = vperm.xlu0 %3456, %v3416
    %v3458 = vpop.permute.xlu0 %3457
    %v3459 = vlaneseq
    %v3460 = vshrl.u32 %v3459, 7
    %v3461 = vadd.s32 %v3460, 56
    %3462 = vset.pattern.permute.xlu0 %v3461
    %3463 = vperm.xlu0 %3462, %v3416
    %v3464 = vpop.permute.xlu0 %3463
    %v3465 = vlaneseq
    %v3466 = vshrl.u32 %v3465, 7
    %v3467 = vadd.s32 %v3466, 64
    %3468 = vset.pattern.permute.xlu0 %v3467
    %3469 = vperm.xlu0 %3468, %v3416
    %v3470 = vpop.permute.xlu0 %3469
    %v3471 = vlaneseq
    %v3472 = vshrl.u32 %v3471, 7
    %v3473 = vadd.s32 %v3472, 72
    %3474 = vset.pattern.permute.xlu0 %v3473
    %3475 = vperm.xlu0 %3474, %v3416
    %v3476 = vpop.permute.xlu0 %3475
    %v3477 = vlaneseq
    %v3478 = vshrl.u32 %v3477, 7
    %v3479 = vadd.s32 %v3478, 80
    %3480 = vset.pattern.permute.xlu0 %v3479
    %3481 = vperm.xlu0 %3480, %v3416
    %v3482 = vpop.permute.xlu0 %3481
    %v3483 = vlaneseq
    %v3484 = vshrl.u32 %v3483, 7
    %v3485 = vadd.s32 %v3484, 88
    %3486 = vset.pattern.permute.xlu0 %v3485
    %3487 = vperm.xlu0 %3486, %v3416
    %v3488 = vpop.permute.xlu0 %3487
    %v3489 = vlaneseq
    %v3490 = vshrl.u32 %v3489, 7
    %v3491 = vadd.s32 %v3490, 96
    %3492 = vset.pattern.permute.xlu0 %v3491
    %3493 = vperm.xlu0 %3492, %v3416
    %v3494 = vpop.permute.xlu0 %3493
    %v3495 = vlaneseq
    %v3496 = vshrl.u32 %v3495, 7
    %v3497 = vadd.s32 %v3496, 104
    %3498 = vset.pattern.permute.xlu0 %v3497
    %3499 = vperm.xlu0 %3498, %v3416
    %v3500 = vpop.permute.xlu0 %3499
    %v3501 = vlaneseq
    %v3502 = vshrl.u32 %v3501, 7
    %v3503 = vadd.s32 %v3502, 112
    %3504 = vset.pattern.permute.xlu0 %v3503
    %3505 = vperm.xlu0 %3504, %v3416
    %v3506 = vpop.permute.xlu0 %3505
    %v3507 = vlaneseq
    %v3508 = vshrl.u32 %v3507, 7
    %v3509 = vadd.s32 %v3508, 120
    %3510 = vset.pattern.permute.xlu0 %v3509
    %3511 = vperm.xlu0 %3510, %v3416
    %v3512 = vpop.permute.xlu0 %3511
    %v3513 = vperm.slane %v136, 1
    %v3514 = vlaneseq
    %v3515 = vshrl.u32 %v3514, 7
    %3517 = vset.pattern.permute.xlu0 %v3515
    %3518 = vperm.xlu0 %3517, %v3513
    %v3519 = vpop.permute.xlu0 %3518
    %v3520 = vlaneseq
    %v3521 = vshrl.u32 %v3520, 7
    %v3522 = vadd.s32 %v3521, 8
    %3523 = vset.pattern.permute.xlu0 %v3522
    %3524 = vperm.xlu0 %3523, %v3513
    %v3525 = vpop.permute.xlu0 %3524
    %v3526 = vlaneseq
    %v3527 = vshrl.u32 %v3526, 7
    %v3528 = vadd.s32 %v3527, 16
    %3529 = vset.pattern.permute.xlu0 %v3528
    %3530 = vperm.xlu0 %3529, %v3513
    %v3531 = vpop.permute.xlu0 %3530
    %v3532 = vlaneseq
    %v3533 = vshrl.u32 %v3532, 7
    %v3534 = vadd.s32 %v3533, 24
    %3535 = vset.pattern.permute.xlu0 %v3534
    %3536 = vperm.xlu0 %3535, %v3513
    %v3537 = vpop.permute.xlu0 %3536
    %v3538 = vlaneseq
    %v3539 = vshrl.u32 %v3538, 7
    %v3540 = vadd.s32 %v3539, 32
    %3541 = vset.pattern.permute.xlu0 %v3540
    %3542 = vperm.xlu0 %3541, %v3513
    %v3543 = vpop.permute.xlu0 %3542
    %v3544 = vlaneseq
    %v3545 = vshrl.u32 %v3544, 7
    %v3546 = vadd.s32 %v3545, 40
    %3547 = vset.pattern.permute.xlu0 %v3546
    %3548 = vperm.xlu0 %3547, %v3513
    %v3549 = vpop.permute.xlu0 %3548
    %v3550 = vlaneseq
    %v3551 = vshrl.u32 %v3550, 7
    %v3552 = vadd.s32 %v3551, 48
    %3553 = vset.pattern.permute.xlu0 %v3552
    %3554 = vperm.xlu0 %3553, %v3513
    %v3555 = vpop.permute.xlu0 %3554
    %v3556 = vlaneseq
    %v3557 = vshrl.u32 %v3556, 7
    %v3558 = vadd.s32 %v3557, 56
    %3559 = vset.pattern.permute.xlu0 %v3558
    %3560 = vperm.xlu0 %3559, %v3513
    %v3561 = vpop.permute.xlu0 %3560
    %v3562 = vlaneseq
    %v3563 = vshrl.u32 %v3562, 7
    %v3564 = vadd.s32 %v3563, 64
    %3565 = vset.pattern.permute.xlu0 %v3564
    %3566 = vperm.xlu0 %3565, %v3513
    %v3567 = vpop.permute.xlu0 %3566
    %v3568 = vlaneseq
    %v3569 = vshrl.u32 %v3568, 7
    %v3570 = vadd.s32 %v3569, 72
    %3571 = vset.pattern.permute.xlu0 %v3570
    %3572 = vperm.xlu0 %3571, %v3513
    %v3573 = vpop.permute.xlu0 %3572
    %v3574 = vlaneseq
    %v3575 = vshrl.u32 %v3574, 7
    %v3576 = vadd.s32 %v3575, 80
    %3577 = vset.pattern.permute.xlu0 %v3576
    %3578 = vperm.xlu0 %3577, %v3513
    %v3579 = vpop.permute.xlu0 %3578
    %v3580 = vlaneseq
    %v3581 = vshrl.u32 %v3580, 7
    %v3582 = vadd.s32 %v3581, 88
    %3583 = vset.pattern.permute.xlu0 %v3582
    %3584 = vperm.xlu0 %3583, %v3513
    %v3585 = vpop.permute.xlu0 %3584
    %v3586 = vlaneseq
    %v3587 = vshrl.u32 %v3586, 7
    %v3588 = vadd.s32 %v3587, 96
    %3589 = vset.pattern.permute.xlu0 %v3588
    %3590 = vperm.xlu0 %3589, %v3513
    %v3591 = vpop.permute.xlu0 %3590
    %v3592 = vlaneseq
    %v3593 = vshrl.u32 %v3592, 7
    %v3594 = vadd.s32 %v3593, 104
    %3595 = vset.pattern.permute.xlu0 %v3594
    %3596 = vperm.xlu0 %3595, %v3513
    %v3597 = vpop.permute.xlu0 %3596
    %v3598 = vlaneseq
    %v3599 = vshrl.u32 %v3598, 7
    %v3600 = vadd.s32 %v3599, 112
    %3601 = vset.pattern.permute.xlu0 %v3600
    %3602 = vperm.xlu0 %3601, %v3513
    %v3603 = vpop.permute.xlu0 %3602
    %v3604 = vlaneseq
    %v3605 = vshrl.u32 %v3604, 7
    %v3606 = vadd.s32 %v3605, 120
    %3607 = vset.pattern.permute.xlu0 %v3606
    %3608 = vperm.xlu0 %3607, %v3513
    %v3609 = vpop.permute.xlu0 %3608
    %v3610 = vperm.slane %v137, 1
    %v3611 = vlaneseq
    %v3612 = vshrl.u32 %v3611, 7
    %3614 = vset.pattern.permute.xlu0 %v3612
    %3615 = vperm.xlu0 %3614, %v3610
    %v3616 = vpop.permute.xlu0 %3615
    %v3617 = vlaneseq
    %v3618 = vshrl.u32 %v3617, 7
    %v3619 = vadd.s32 %v3618, 8
    %3620 = vset.pattern.permute.xlu0 %v3619
    %3621 = vperm.xlu0 %3620, %v3610
    %v3622 = vpop.permute.xlu0 %3621
    %v3623 = vlaneseq
    %v3624 = vshrl.u32 %v3623, 7
    %v3625 = vadd.s32 %v3624, 16
    %3626 = vset.pattern.permute.xlu0 %v3625
    %3627 = vperm.xlu0 %3626, %v3610
    %v3628 = vpop.permute.xlu0 %3627
    %v3629 = vlaneseq
    %v3630 = vshrl.u32 %v3629, 7
    %v3631 = vadd.s32 %v3630, 24
    %3632 = vset.pattern.permute.xlu0 %v3631
    %3633 = vperm.xlu0 %3632, %v3610
    %v3634 = vpop.permute.xlu0 %3633
    %v3635 = vlaneseq
    %v3636 = vshrl.u32 %v3635, 7
    %v3637 = vadd.s32 %v3636, 32
    %3638 = vset.pattern.permute.xlu0 %v3637
    %3639 = vperm.xlu0 %3638, %v3610
    %v3640 = vpop.permute.xlu0 %3639
    %v3641 = vlaneseq
    %v3642 = vshrl.u32 %v3641, 7
    %v3643 = vadd.s32 %v3642, 40
    %3644 = vset.pattern.permute.xlu0 %v3643
    %3645 = vperm.xlu0 %3644, %v3610
    %v3646 = vpop.permute.xlu0 %3645
    %v3647 = vlaneseq
    %v3648 = vshrl.u32 %v3647, 7
    %v3649 = vadd.s32 %v3648, 48
    %3650 = vset.pattern.permute.xlu0 %v3649
    %3651 = vperm.xlu0 %3650, %v3610
    %v3652 = vpop.permute.xlu0 %3651
    %v3653 = vlaneseq
    %v3654 = vshrl.u32 %v3653, 7
    %v3655 = vadd.s32 %v3654, 56
    %3656 = vset.pattern.permute.xlu0 %v3655
    %3657 = vperm.xlu0 %3656, %v3610
    %v3658 = vpop.permute.xlu0 %3657
    %v3659 = vlaneseq
    %v3660 = vshrl.u32 %v3659, 7
    %v3661 = vadd.s32 %v3660, 64
    %3662 = vset.pattern.permute.xlu0 %v3661
    %3663 = vperm.xlu0 %3662, %v3610
    %v3664 = vpop.permute.xlu0 %3663
    %v3665 = vlaneseq
    %v3666 = vshrl.u32 %v3665, 7
    %v3667 = vadd.s32 %v3666, 72
    %3668 = vset.pattern.permute.xlu0 %v3667
    %3669 = vperm.xlu0 %3668, %v3610
    %v3670 = vpop.permute.xlu0 %3669
    %v3671 = vlaneseq
    %v3672 = vshrl.u32 %v3671, 7
    %v3673 = vadd.s32 %v3672, 80
    %3674 = vset.pattern.permute.xlu0 %v3673
    %3675 = vperm.xlu0 %3674, %v3610
    %v3676 = vpop.permute.xlu0 %3675
    %v3677 = vlaneseq
    %v3678 = vshrl.u32 %v3677, 7
    %v3679 = vadd.s32 %v3678, 88
    %3680 = vset.pattern.permute.xlu0 %v3679
    %3681 = vperm.xlu0 %3680, %v3610
    %v3682 = vpop.permute.xlu0 %3681
    %v3683 = vlaneseq
    %v3684 = vshrl.u32 %v3683, 7
    %v3685 = vadd.s32 %v3684, 96
    %3686 = vset.pattern.permute.xlu0 %v3685
    %3687 = vperm.xlu0 %3686, %v3610
    %v3688 = vpop.permute.xlu0 %3687
    %v3689 = vlaneseq
    %v3690 = vshrl.u32 %v3689, 7
    %v3691 = vadd.s32 %v3690, 104
    %3692 = vset.pattern.permute.xlu0 %v3691
    %3693 = vperm.xlu0 %3692, %v3610
    %v3694 = vpop.permute.xlu0 %3693
    %v3695 = vlaneseq
    %v3696 = vshrl.u32 %v3695, 7
    %v3697 = vadd.s32 %v3696, 112
    %3698 = vset.pattern.permute.xlu0 %v3697
    %3699 = vperm.xlu0 %3698, %v3610
    %v3700 = vpop.permute.xlu0 %3699
    %v3701 = vlaneseq
    %v3702 = vshrl.u32 %v3701, 7
    %v3703 = vadd.s32 %v3702, 120
    %3704 = vset.pattern.permute.xlu0 %v3703
    %3705 = vperm.xlu0 %3704, %v3610
    %v3706 = vpop.permute.xlu0 %3705
    %v3707 = vperm.slane %v138, 1
    %v3708 = vlaneseq
    %v3709 = vshrl.u32 %v3708, 7
    %3711 = vset.pattern.permute.xlu0 %v3709
    %3712 = vperm.xlu0 %3711, %v3707
    %v3713 = vpop.permute.xlu0 %3712
    %v3714 = vlaneseq
    %v3715 = vshrl.u32 %v3714, 7
    %v3716 = vadd.s32 %v3715, 8
    %3717 = vset.pattern.permute.xlu0 %v3716
    %3718 = vperm.xlu0 %3717, %v3707
    %v3719 = vpop.permute.xlu0 %3718
    %v3720 = vlaneseq
    %v3721 = vshrl.u32 %v3720, 7
    %v3722 = vadd.s32 %v3721, 16
    %3723 = vset.pattern.permute.xlu0 %v3722
    %3724 = vperm.xlu0 %3723, %v3707
    %v3725 = vpop.permute.xlu0 %3724
    %v3726 = vlaneseq
    %v3727 = vshrl.u32 %v3726, 7
    %v3728 = vadd.s32 %v3727, 24
    %3729 = vset.pattern.permute.xlu0 %v3728
    %3730 = vperm.xlu0 %3729, %v3707
    %v3731 = vpop.permute.xlu0 %3730
    %v3732 = vlaneseq
    %v3733 = vshrl.u32 %v3732, 7
    %v3734 = vadd.s32 %v3733, 32
    %3735 = vset.pattern.permute.xlu0 %v3734
    %3736 = vperm.xlu0 %3735, %v3707
    %v3737 = vpop.permute.xlu0 %3736
    %v3738 = vlaneseq
    %v3739 = vshrl.u32 %v3738, 7
    %v3740 = vadd.s32 %v3739, 40
    %3741 = vset.pattern.permute.xlu0 %v3740
    %3742 = vperm.xlu0 %3741, %v3707
    %v3743 = vpop.permute.xlu0 %3742
    %v3744 = vlaneseq
    %v3745 = vshrl.u32 %v3744, 7
    %v3746 = vadd.s32 %v3745, 48
    %3747 = vset.pattern.permute.xlu0 %v3746
    %3748 = vperm.xlu0 %3747, %v3707
    %v3749 = vpop.permute.xlu0 %3748
    %v3750 = vlaneseq
    %v3751 = vshrl.u32 %v3750, 7
    %v3752 = vadd.s32 %v3751, 56
    %3753 = vset.pattern.permute.xlu0 %v3752
    %3754 = vperm.xlu0 %3753, %v3707
    %v3755 = vpop.permute.xlu0 %3754
    %v3756 = vlaneseq
    %v3757 = vshrl.u32 %v3756, 7
    %v3758 = vadd.s32 %v3757, 64
    %3759 = vset.pattern.permute.xlu0 %v3758
    %3760 = vperm.xlu0 %3759, %v3707
    %v3761 = vpop.permute.xlu0 %3760
    %v3762 = vlaneseq
    %v3763 = vshrl.u32 %v3762, 7
    %v3764 = vadd.s32 %v3763, 72
    %3765 = vset.pattern.permute.xlu0 %v3764
    %3766 = vperm.xlu0 %3765, %v3707
    %v3767 = vpop.permute.xlu0 %3766
    %v3768 = vlaneseq
    %v3769 = vshrl.u32 %v3768, 7
    %v3770 = vadd.s32 %v3769, 80
    %3771 = vset.pattern.permute.xlu0 %v3770
    %3772 = vperm.xlu0 %3771, %v3707
    %v3773 = vpop.permute.xlu0 %3772
    %v3774 = vlaneseq
    %v3775 = vshrl.u32 %v3774, 7
    %v3776 = vadd.s32 %v3775, 88
    %3777 = vset.pattern.permute.xlu0 %v3776
    %3778 = vperm.xlu0 %3777, %v3707
    %v3779 = vpop.permute.xlu0 %3778
    %v3780 = vlaneseq
    %v3781 = vshrl.u32 %v3780, 7
    %v3782 = vadd.s32 %v3781, 96
    %3783 = vset.pattern.permute.xlu0 %v3782
    %3784 = vperm.xlu0 %3783, %v3707
    %v3785 = vpop.permute.xlu0 %3784
    %v3786 = vlaneseq
    %v3787 = vshrl.u32 %v3786, 7
    %v3788 = vadd.s32 %v3787, 104
    %3789 = vset.pattern.permute.xlu0 %v3788
    %3790 = vperm.xlu0 %3789, %v3707
    %v3791 = vpop.permute.xlu0 %3790
    %v3792 = vlaneseq
    %v3793 = vshrl.u32 %v3792, 7
    %v3794 = vadd.s32 %v3793, 112
    %3795 = vset.pattern.permute.xlu0 %v3794
    %3796 = vperm.xlu0 %3795, %v3707
    %v3797 = vpop.permute.xlu0 %3796
    %v3798 = vlaneseq
    %v3799 = vshrl.u32 %v3798, 7
    %v3800 = vadd.s32 %v3799, 120
    %3801 = vset.pattern.permute.xlu0 %v3800
    %3802 = vperm.xlu0 %3801, %v3707
    %v3803 = vpop.permute.xlu0 %3802
    %v3804 = vperm.slane %v139, 1
    %v3805 = vlaneseq
    %v3806 = vshrl.u32 %v3805, 7
    %3808 = vset.pattern.permute.xlu0 %v3806
    %3809 = vperm.xlu0 %3808, %v3804
    %v3810 = vpop.permute.xlu0 %3809
    %v3811 = vlaneseq
    %v3812 = vshrl.u32 %v3811, 7
    %v3813 = vadd.s32 %v3812, 8
    %3814 = vset.pattern.permute.xlu0 %v3813
    %3815 = vperm.xlu0 %3814, %v3804
    %v3816 = vpop.permute.xlu0 %3815
    %v3817 = vlaneseq
    %v3818 = vshrl.u32 %v3817, 7
    %v3819 = vadd.s32 %v3818, 16
    %3820 = vset.pattern.permute.xlu0 %v3819
    %3821 = vperm.xlu0 %3820, %v3804
    %v3822 = vpop.permute.xlu0 %3821
    %v3823 = vlaneseq
    %v3824 = vshrl.u32 %v3823, 7
    %v3825 = vadd.s32 %v3824, 24
    %3826 = vset.pattern.permute.xlu0 %v3825
    %3827 = vperm.xlu0 %3826, %v3804
    %v3828 = vpop.permute.xlu0 %3827
    %v3829 = vlaneseq
    %v3830 = vshrl.u32 %v3829, 7
    %v3831 = vadd.s32 %v3830, 32
    %3832 = vset.pattern.permute.xlu0 %v3831
    %3833 = vperm.xlu0 %3832, %v3804
    %v3834 = vpop.permute.xlu0 %3833
    %v3835 = vlaneseq
    %v3836 = vshrl.u32 %v3835, 7
    %v3837 = vadd.s32 %v3836, 40
    %3838 = vset.pattern.permute.xlu0 %v3837
    %3839 = vperm.xlu0 %3838, %v3804
    %v3840 = vpop.permute.xlu0 %3839
    %v3841 = vlaneseq
    %v3842 = vshrl.u32 %v3841, 7
    %v3843 = vadd.s32 %v3842, 48
    %3844 = vset.pattern.permute.xlu0 %v3843
    %3845 = vperm.xlu0 %3844, %v3804
    %v3846 = vpop.permute.xlu0 %3845
    %v3847 = vlaneseq
    %v3848 = vshrl.u32 %v3847, 7
    %v3849 = vadd.s32 %v3848, 56
    %3850 = vset.pattern.permute.xlu0 %v3849
    %3851 = vperm.xlu0 %3850, %v3804
    %v3852 = vpop.permute.xlu0 %3851
    %v3853 = vlaneseq
    %v3854 = vshrl.u32 %v3853, 7
    %v3855 = vadd.s32 %v3854, 64
    %3856 = vset.pattern.permute.xlu0 %v3855
    %3857 = vperm.xlu0 %3856, %v3804
    %v3858 = vpop.permute.xlu0 %3857
    %v3859 = vlaneseq
    %v3860 = vshrl.u32 %v3859, 7
    %v3861 = vadd.s32 %v3860, 72
    %3862 = vset.pattern.permute.xlu0 %v3861
    %3863 = vperm.xlu0 %3862, %v3804
    %v3864 = vpop.permute.xlu0 %3863
    %v3865 = vlaneseq
    %v3866 = vshrl.u32 %v3865, 7
    %v3867 = vadd.s32 %v3866, 80
    %3868 = vset.pattern.permute.xlu0 %v3867
    %3869 = vperm.xlu0 %3868, %v3804
    %v3870 = vpop.permute.xlu0 %3869
    %v3871 = vlaneseq
    %v3872 = vshrl.u32 %v3871, 7
    %v3873 = vadd.s32 %v3872, 88
    %3874 = vset.pattern.permute.xlu0 %v3873
    %3875 = vperm.xlu0 %3874, %v3804
    %v3876 = vpop.permute.xlu0 %3875
    %v3877 = vlaneseq
    %v3878 = vshrl.u32 %v3877, 7
    %v3879 = vadd.s32 %v3878, 96
    %3880 = vset.pattern.permute.xlu0 %v3879
    %3881 = vperm.xlu0 %3880, %v3804
    %v3882 = vpop.permute.xlu0 %3881
    %v3883 = vlaneseq
    %v3884 = vshrl.u32 %v3883, 7
    %v3885 = vadd.s32 %v3884, 104
    %3886 = vset.pattern.permute.xlu0 %v3885
    %3887 = vperm.xlu0 %3886, %v3804
    %v3888 = vpop.permute.xlu0 %3887
    %v3889 = vlaneseq
    %v3890 = vshrl.u32 %v3889, 7
    %v3891 = vadd.s32 %v3890, 112
    %3892 = vset.pattern.permute.xlu0 %v3891
    %3893 = vperm.xlu0 %3892, %v3804
    %v3894 = vpop.permute.xlu0 %3893
    %v3895 = vlaneseq
    %v3896 = vshrl.u32 %v3895, 7
    %v3897 = vadd.s32 %v3896, 120
    %3898 = vset.pattern.permute.xlu0 %v3897
    %3899 = vperm.xlu0 %3898, %v3804
    %v3900 = vpop.permute.xlu0 %3899
    %v3901 = vperm.slane %v140, 1
    %v3902 = vlaneseq
    %v3903 = vshrl.u32 %v3902, 7
    %3905 = vset.pattern.permute.xlu0 %v3903
    %3906 = vperm.xlu0 %3905, %v3901
    %v3907 = vpop.permute.xlu0 %3906
    %v3908 = vlaneseq
    %v3909 = vshrl.u32 %v3908, 7
    %v3910 = vadd.s32 %v3909, 8
    %3911 = vset.pattern.permute.xlu0 %v3910
    %3912 = vperm.xlu0 %3911, %v3901
    %v3913 = vpop.permute.xlu0 %3912
    %v3914 = vlaneseq
    %v3915 = vshrl.u32 %v3914, 7
    %v3916 = vadd.s32 %v3915, 16
    %3917 = vset.pattern.permute.xlu0 %v3916
    %3918 = vperm.xlu0 %3917, %v3901
    %v3919 = vpop.permute.xlu0 %3918
    %v3920 = vlaneseq
    %v3921 = vshrl.u32 %v3920, 7
    %v3922 = vadd.s32 %v3921, 24
    %3923 = vset.pattern.permute.xlu0 %v3922
    %3924 = vperm.xlu0 %3923, %v3901
    %v3925 = vpop.permute.xlu0 %3924
    %v3926 = vlaneseq
    %v3927 = vshrl.u32 %v3926, 7
    %v3928 = vadd.s32 %v3927, 32
    %3929 = vset.pattern.permute.xlu0 %v3928
    %3930 = vperm.xlu0 %3929, %v3901
    %v3931 = vpop.permute.xlu0 %3930
    %v3932 = vlaneseq
    %v3933 = vshrl.u32 %v3932, 7
    %v3934 = vadd.s32 %v3933, 40
    %3935 = vset.pattern.permute.xlu0 %v3934
    %3936 = vperm.xlu0 %3935, %v3901
    %v3937 = vpop.permute.xlu0 %3936
    %v3938 = vlaneseq
    %v3939 = vshrl.u32 %v3938, 7
    %v3940 = vadd.s32 %v3939, 48
    %3941 = vset.pattern.permute.xlu0 %v3940
    %3942 = vperm.xlu0 %3941, %v3901
    %v3943 = vpop.permute.xlu0 %3942
    %v3944 = vlaneseq
    %v3945 = vshrl.u32 %v3944, 7
    %v3946 = vadd.s32 %v3945, 56
    %3947 = vset.pattern.permute.xlu0 %v3946
    %3948 = vperm.xlu0 %3947, %v3901
    %v3949 = vpop.permute.xlu0 %3948
    %v3950 = vlaneseq
    %v3951 = vshrl.u32 %v3950, 7
    %v3952 = vadd.s32 %v3951, 64
    %3953 = vset.pattern.permute.xlu0 %v3952
    %3954 = vperm.xlu0 %3953, %v3901
    %v3955 = vpop.permute.xlu0 %3954
    %v3956 = vlaneseq
    %v3957 = vshrl.u32 %v3956, 7
    %v3958 = vadd.s32 %v3957, 72
    %3959 = vset.pattern.permute.xlu0 %v3958
    %3960 = vperm.xlu0 %3959, %v3901
    %v3961 = vpop.permute.xlu0 %3960
    %v3962 = vlaneseq
    %v3963 = vshrl.u32 %v3962, 7
    %v3964 = vadd.s32 %v3963, 80
    %3965 = vset.pattern.permute.xlu0 %v3964
    %3966 = vperm.xlu0 %3965, %v3901
    %v3967 = vpop.permute.xlu0 %3966
    %v3968 = vlaneseq
    %v3969 = vshrl.u32 %v3968, 7
    %v3970 = vadd.s32 %v3969, 88
    %3971 = vset.pattern.permute.xlu0 %v3970
    %3972 = vperm.xlu0 %3971, %v3901
    %v3973 = vpop.permute.xlu0 %3972
    %v3974 = vlaneseq
    %v3975 = vshrl.u32 %v3974, 7
    %v3976 = vadd.s32 %v3975, 96
    %3977 = vset.pattern.permute.xlu0 %v3976
    %3978 = vperm.xlu0 %3977, %v3901
    %v3979 = vpop.permute.xlu0 %3978
    %v3980 = vlaneseq
    %v3981 = vshrl.u32 %v3980, 7
    %v3982 = vadd.s32 %v3981, 104
    %3983 = vset.pattern.permute.xlu0 %v3982
    %3984 = vperm.xlu0 %3983, %v3901
    %v3985 = vpop.permute.xlu0 %3984
    %v3986 = vlaneseq
    %v3987 = vshrl.u32 %v3986, 7
    %v3988 = vadd.s32 %v3987, 112
    %3989 = vset.pattern.permute.xlu0 %v3988
    %3990 = vperm.xlu0 %3989, %v3901
    %v3991 = vpop.permute.xlu0 %3990
    %v3992 = vlaneseq
    %v3993 = vshrl.u32 %v3992, 7
    %v3994 = vadd.s32 %v3993, 120
    %3995 = vset.pattern.permute.xlu0 %v3994
    %3996 = vperm.xlu0 %3995, %v3901
    %v3997 = vpop.permute.xlu0 %3996
    %v3998 = vperm.slane %v141, 1
    %v3999 = vlaneseq
    %v4000 = vshrl.u32 %v3999, 7
    %4002 = vset.pattern.permute.xlu0 %v4000
    %4003 = vperm.xlu0 %4002, %v3998
    %v4004 = vpop.permute.xlu0 %4003
    %v4005 = vlaneseq
    %v4006 = vshrl.u32 %v4005, 7
    %v4007 = vadd.s32 %v4006, 8
    %4008 = vset.pattern.permute.xlu0 %v4007
    %4009 = vperm.xlu0 %4008, %v3998
    %v4010 = vpop.permute.xlu0 %4009
    %v4011 = vlaneseq
    %v4012 = vshrl.u32 %v4011, 7
    %v4013 = vadd.s32 %v4012, 16
    %4014 = vset.pattern.permute.xlu0 %v4013
    %4015 = vperm.xlu0 %4014, %v3998
    %v4016 = vpop.permute.xlu0 %4015
    %v4017 = vlaneseq
    %v4018 = vshrl.u32 %v4017, 7
    %v4019 = vadd.s32 %v4018, 24
    %4020 = vset.pattern.permute.xlu0 %v4019
    %4021 = vperm.xlu0 %4020, %v3998
    %v4022 = vpop.permute.xlu0 %4021
    %v4023 = vlaneseq
    %v4024 = vshrl.u32 %v4023, 7
    %v4025 = vadd.s32 %v4024, 32
    %4026 = vset.pattern.permute.xlu0 %v4025
    %4027 = vperm.xlu0 %4026, %v3998
    %v4028 = vpop.permute.xlu0 %4027
    %v4029 = vlaneseq
    %v4030 = vshrl.u32 %v4029, 7
    %v4031 = vadd.s32 %v4030, 40
    %4032 = vset.pattern.permute.xlu0 %v4031
    %4033 = vperm.xlu0 %4032, %v3998
    %v4034 = vpop.permute.xlu0 %4033
    %v4035 = vlaneseq
    %v4036 = vshrl.u32 %v4035, 7
    %v4037 = vadd.s32 %v4036, 48
    %4038 = vset.pattern.permute.xlu0 %v4037
    %4039 = vperm.xlu0 %4038, %v3998
    %v4040 = vpop.permute.xlu0 %4039
    %v4041 = vlaneseq
    %v4042 = vshrl.u32 %v4041, 7
    %v4043 = vadd.s32 %v4042, 56
    %4044 = vset.pattern.permute.xlu0 %v4043
    %4045 = vperm.xlu0 %4044, %v3998
    %v4046 = vpop.permute.xlu0 %4045
    %v4047 = vlaneseq
    %v4048 = vshrl.u32 %v4047, 7
    %v4049 = vadd.s32 %v4048, 64
    %4050 = vset.pattern.permute.xlu0 %v4049
    %4051 = vperm.xlu0 %4050, %v3998
    %v4052 = vpop.permute.xlu0 %4051
    %v4053 = vlaneseq
    %v4054 = vshrl.u32 %v4053, 7
    %v4055 = vadd.s32 %v4054, 72
    %4056 = vset.pattern.permute.xlu0 %v4055
    %4057 = vperm.xlu0 %4056, %v3998
    %v4058 = vpop.permute.xlu0 %4057
    %v4059 = vlaneseq
    %v4060 = vshrl.u32 %v4059, 7
    %v4061 = vadd.s32 %v4060, 80
    %4062 = vset.pattern.permute.xlu0 %v4061
    %4063 = vperm.xlu0 %4062, %v3998
    %v4064 = vpop.permute.xlu0 %4063
    %v4065 = vlaneseq
    %v4066 = vshrl.u32 %v4065, 7
    %v4067 = vadd.s32 %v4066, 88
    %4068 = vset.pattern.permute.xlu0 %v4067
    %4069 = vperm.xlu0 %4068, %v3998
    %v4070 = vpop.permute.xlu0 %4069
    %v4071 = vlaneseq
    %v4072 = vshrl.u32 %v4071, 7
    %v4073 = vadd.s32 %v4072, 96
    %4074 = vset.pattern.permute.xlu0 %v4073
    %4075 = vperm.xlu0 %4074, %v3998
    %v4076 = vpop.permute.xlu0 %4075
    %v4077 = vlaneseq
    %v4078 = vshrl.u32 %v4077, 7
    %v4079 = vadd.s32 %v4078, 104
    %4080 = vset.pattern.permute.xlu0 %v4079
    %4081 = vperm.xlu0 %4080, %v3998
    %v4082 = vpop.permute.xlu0 %4081
    %v4083 = vlaneseq
    %v4084 = vshrl.u32 %v4083, 7
    %v4085 = vadd.s32 %v4084, 112
    %4086 = vset.pattern.permute.xlu0 %v4085
    %4087 = vperm.xlu0 %4086, %v3998
    %v4088 = vpop.permute.xlu0 %4087
    %v4089 = vlaneseq
    %v4090 = vshrl.u32 %v4089, 7
    %v4091 = vadd.s32 %v4090, 120
    %4092 = vset.pattern.permute.xlu0 %v4091
    %4093 = vperm.xlu0 %4092, %v3998
    %v4094 = vpop.permute.xlu0 %4093
    %v4095 = vperm.slane %v142, 1
    %v4096 = vlaneseq
    %v4097 = vshrl.u32 %v4096, 7
    %4099 = vset.pattern.permute.xlu0 %v4097
    %4100 = vperm.xlu0 %4099, %v4095
    %v4101 = vpop.permute.xlu0 %4100
    %v4102 = vlaneseq
    %v4103 = vshrl.u32 %v4102, 7
    %v4104 = vadd.s32 %v4103, 8
    %4105 = vset.pattern.permute.xlu0 %v4104
    %4106 = vperm.xlu0 %4105, %v4095
    %v4107 = vpop.permute.xlu0 %4106
    %v4108 = vlaneseq
    %v4109 = vshrl.u32 %v4108, 7
    %v4110 = vadd.s32 %v4109, 16
    %4111 = vset.pattern.permute.xlu0 %v4110
    %4112 = vperm.xlu0 %4111, %v4095
    %v4113 = vpop.permute.xlu0 %4112
    %v4114 = vlaneseq
    %v4115 = vshrl.u32 %v4114, 7
    %v4116 = vadd.s32 %v4115, 24
    %4117 = vset.pattern.permute.xlu0 %v4116
    %4118 = vperm.xlu0 %4117, %v4095
    %v4119 = vpop.permute.xlu0 %4118
    %v4120 = vlaneseq
    %v4121 = vshrl.u32 %v4120, 7
    %v4122 = vadd.s32 %v4121, 32
    %4123 = vset.pattern.permute.xlu0 %v4122
    %4124 = vperm.xlu0 %4123, %v4095
    %v4125 = vpop.permute.xlu0 %4124
    %v4126 = vlaneseq
    %v4127 = vshrl.u32 %v4126, 7
    %v4128 = vadd.s32 %v4127, 40
    %4129 = vset.pattern.permute.xlu0 %v4128
    %4130 = vperm.xlu0 %4129, %v4095
    %v4131 = vpop.permute.xlu0 %4130
    %v4132 = vlaneseq
    %v4133 = vshrl.u32 %v4132, 7
    %v4134 = vadd.s32 %v4133, 48
    %4135 = vset.pattern.permute.xlu0 %v4134
    %4136 = vperm.xlu0 %4135, %v4095
    %v4137 = vpop.permute.xlu0 %4136
    %v4138 = vlaneseq
    %v4139 = vshrl.u32 %v4138, 7
    %v4140 = vadd.s32 %v4139, 56
    %4141 = vset.pattern.permute.xlu0 %v4140
    %4142 = vperm.xlu0 %4141, %v4095
    %v4143 = vpop.permute.xlu0 %4142
    %v4144 = vlaneseq
    %v4145 = vshrl.u32 %v4144, 7
    %v4146 = vadd.s32 %v4145, 64
    %4147 = vset.pattern.permute.xlu0 %v4146
    %4148 = vperm.xlu0 %4147, %v4095
    %v4149 = vpop.permute.xlu0 %4148
    %v4150 = vlaneseq
    %v4151 = vshrl.u32 %v4150, 7
    %v4152 = vadd.s32 %v4151, 72
    %4153 = vset.pattern.permute.xlu0 %v4152
    %4154 = vperm.xlu0 %4153, %v4095
    %v4155 = vpop.permute.xlu0 %4154
    %v4156 = vlaneseq
    %v4157 = vshrl.u32 %v4156, 7
    %v4158 = vadd.s32 %v4157, 80
    %4159 = vset.pattern.permute.xlu0 %v4158
    %4160 = vperm.xlu0 %4159, %v4095
    %v4161 = vpop.permute.xlu0 %4160
    %v4162 = vlaneseq
    %v4163 = vshrl.u32 %v4162, 7
    %v4164 = vadd.s32 %v4163, 88
    %4165 = vset.pattern.permute.xlu0 %v4164
    %4166 = vperm.xlu0 %4165, %v4095
    %v4167 = vpop.permute.xlu0 %4166
    %v4168 = vlaneseq
    %v4169 = vshrl.u32 %v4168, 7
    %v4170 = vadd.s32 %v4169, 96
    %4171 = vset.pattern.permute.xlu0 %v4170
    %4172 = vperm.xlu0 %4171, %v4095
    %v4173 = vpop.permute.xlu0 %4172
    %v4174 = vlaneseq
    %v4175 = vshrl.u32 %v4174, 7
    %v4176 = vadd.s32 %v4175, 104
    %4177 = vset.pattern.permute.xlu0 %v4176
    %4178 = vperm.xlu0 %4177, %v4095
    %v4179 = vpop.permute.xlu0 %4178
    %v4180 = vlaneseq
    %v4181 = vshrl.u32 %v4180, 7
    %v4182 = vadd.s32 %v4181, 112
    %4183 = vset.pattern.permute.xlu0 %v4182
    %4184 = vperm.xlu0 %4183, %v4095
    %v4185 = vpop.permute.xlu0 %4184
    %v4186 = vlaneseq
    %v4187 = vshrl.u32 %v4186, 7
    %v4188 = vadd.s32 %v4187, 120
    %4189 = vset.pattern.permute.xlu0 %v4188
    %4190 = vperm.xlu0 %4189, %v4095
    %v4191 = vpop.permute.xlu0 %4190
    %v4192 = vperm.slane %v143, 1
    %v4193 = vlaneseq
    %v4194 = vshrl.u32 %v4193, 7
    %4196 = vset.pattern.permute.xlu0 %v4194
    %4197 = vperm.xlu0 %4196, %v4192
    %v4198 = vpop.permute.xlu0 %4197
    %v4199 = vlaneseq
    %v4200 = vshrl.u32 %v4199, 7
    %v4201 = vadd.s32 %v4200, 8
    %4202 = vset.pattern.permute.xlu0 %v4201
    %4203 = vperm.xlu0 %4202, %v4192
    %v4204 = vpop.permute.xlu0 %4203
    %v4205 = vlaneseq
    %v4206 = vshrl.u32 %v4205, 7
    %v4207 = vadd.s32 %v4206, 16
    %4208 = vset.pattern.permute.xlu0 %v4207
    %4209 = vperm.xlu0 %4208, %v4192
    %v4210 = vpop.permute.xlu0 %4209
    %v4211 = vlaneseq
    %v4212 = vshrl.u32 %v4211, 7
    %v4213 = vadd.s32 %v4212, 24
    %4214 = vset.pattern.permute.xlu0 %v4213
    %4215 = vperm.xlu0 %4214, %v4192
    %v4216 = vpop.permute.xlu0 %4215
    %v4217 = vlaneseq
    %v4218 = vshrl.u32 %v4217, 7
    %v4219 = vadd.s32 %v4218, 32
    %4220 = vset.pattern.permute.xlu0 %v4219
    %4221 = vperm.xlu0 %4220, %v4192
    %v4222 = vpop.permute.xlu0 %4221
    %v4223 = vlaneseq
    %v4224 = vshrl.u32 %v4223, 7
    %v4225 = vadd.s32 %v4224, 40
    %4226 = vset.pattern.permute.xlu0 %v4225
    %4227 = vperm.xlu0 %4226, %v4192
    %v4228 = vpop.permute.xlu0 %4227
    %v4229 = vlaneseq
    %v4230 = vshrl.u32 %v4229, 7
    %v4231 = vadd.s32 %v4230, 48
    %4232 = vset.pattern.permute.xlu0 %v4231
    %4233 = vperm.xlu0 %4232, %v4192
    %v4234 = vpop.permute.xlu0 %4233
    %v4235 = vlaneseq
    %v4236 = vshrl.u32 %v4235, 7
    %v4237 = vadd.s32 %v4236, 56
    %4238 = vset.pattern.permute.xlu0 %v4237
    %4239 = vperm.xlu0 %4238, %v4192
    %v4240 = vpop.permute.xlu0 %4239
    %v4241 = vlaneseq
    %v4242 = vshrl.u32 %v4241, 7
    %v4243 = vadd.s32 %v4242, 64
    %4244 = vset.pattern.permute.xlu0 %v4243
    %4245 = vperm.xlu0 %4244, %v4192
    %v4246 = vpop.permute.xlu0 %4245
    %v4247 = vlaneseq
    %v4248 = vshrl.u32 %v4247, 7
    %v4249 = vadd.s32 %v4248, 72
    %4250 = vset.pattern.permute.xlu0 %v4249
    %4251 = vperm.xlu0 %4250, %v4192
    %v4252 = vpop.permute.xlu0 %4251
    %v4253 = vlaneseq
    %v4254 = vshrl.u32 %v4253, 7
    %v4255 = vadd.s32 %v4254, 80
    %4256 = vset.pattern.permute.xlu0 %v4255
    %4257 = vperm.xlu0 %4256, %v4192
    %v4258 = vpop.permute.xlu0 %4257
    %v4259 = vlaneseq
    %v4260 = vshrl.u32 %v4259, 7
    %v4261 = vadd.s32 %v4260, 88
    %4262 = vset.pattern.permute.xlu0 %v4261
    %4263 = vperm.xlu0 %4262, %v4192
    %v4264 = vpop.permute.xlu0 %4263
    %v4265 = vlaneseq
    %v4266 = vshrl.u32 %v4265, 7
    %v4267 = vadd.s32 %v4266, 96
    %4268 = vset.pattern.permute.xlu0 %v4267
    %4269 = vperm.xlu0 %4268, %v4192
    %v4270 = vpop.permute.xlu0 %4269
    %v4271 = vlaneseq
    %v4272 = vshrl.u32 %v4271, 7
    %v4273 = vadd.s32 %v4272, 104
    %4274 = vset.pattern.permute.xlu0 %v4273
    %4275 = vperm.xlu0 %4274, %v4192
    %v4276 = vpop.permute.xlu0 %4275
    %v4277 = vlaneseq
    %v4278 = vshrl.u32 %v4277, 7
    %v4279 = vadd.s32 %v4278, 112
    %4280 = vset.pattern.permute.xlu0 %v4279
    %4281 = vperm.xlu0 %4280, %v4192
    %v4282 = vpop.permute.xlu0 %4281
    %v4283 = vlaneseq
    %v4284 = vshrl.u32 %v4283, 7
    %v4285 = vadd.s32 %v4284, 120
    %4286 = vset.pattern.permute.xlu0 %v4285
    %4287 = vperm.xlu0 %4286, %v4192
    %v4288 = vpop.permute.xlu0 %4287
    %v4289 = vperm.slane %v144, 1
    %v4290 = vlaneseq
    %v4291 = vshrl.u32 %v4290, 7
    %4293 = vset.pattern.permute.xlu0 %v4291
    %4294 = vperm.xlu0 %4293, %v4289
    %v4295 = vpop.permute.xlu0 %4294
    %v4296 = vlaneseq
    %v4297 = vshrl.u32 %v4296, 7
    %v4298 = vadd.s32 %v4297, 8
    %4299 = vset.pattern.permute.xlu0 %v4298
    %4300 = vperm.xlu0 %4299, %v4289
    %v4301 = vpop.permute.xlu0 %4300
    %v4302 = vlaneseq
    %v4303 = vshrl.u32 %v4302, 7
    %v4304 = vadd.s32 %v4303, 16
    %4305 = vset.pattern.permute.xlu0 %v4304
    %4306 = vperm.xlu0 %4305, %v4289
    %v4307 = vpop.permute.xlu0 %4306
    %v4308 = vlaneseq
    %v4309 = vshrl.u32 %v4308, 7
    %v4310 = vadd.s32 %v4309, 24
    %4311 = vset.pattern.permute.xlu0 %v4310
    %4312 = vperm.xlu0 %4311, %v4289
    %v4313 = vpop.permute.xlu0 %4312
    %v4314 = vlaneseq
    %v4315 = vshrl.u32 %v4314, 7
    %v4316 = vadd.s32 %v4315, 32
    %4317 = vset.pattern.permute.xlu0 %v4316
    %4318 = vperm.xlu0 %4317, %v4289
    %v4319 = vpop.permute.xlu0 %4318
    %v4320 = vlaneseq
    %v4321 = vshrl.u32 %v4320, 7
    %v4322 = vadd.s32 %v4321, 40
    %4323 = vset.pattern.permute.xlu0 %v4322
    %4324 = vperm.xlu0 %4323, %v4289
    %v4325 = vpop.permute.xlu0 %4324
    %v4326 = vlaneseq
    %v4327 = vshrl.u32 %v4326, 7
    %v4328 = vadd.s32 %v4327, 48
    %4329 = vset.pattern.permute.xlu0 %v4328
    %4330 = vperm.xlu0 %4329, %v4289
    %v4331 = vpop.permute.xlu0 %4330
    %v4332 = vlaneseq
    %v4333 = vshrl.u32 %v4332, 7
    %v4334 = vadd.s32 %v4333, 56
    %4335 = vset.pattern.permute.xlu0 %v4334
    %4336 = vperm.xlu0 %4335, %v4289
    %v4337 = vpop.permute.xlu0 %4336
    %v4338 = vlaneseq
    %v4339 = vshrl.u32 %v4338, 7
    %v4340 = vadd.s32 %v4339, 64
    %4341 = vset.pattern.permute.xlu0 %v4340
    %4342 = vperm.xlu0 %4341, %v4289
    %v4343 = vpop.permute.xlu0 %4342
    %v4344 = vlaneseq
    %v4345 = vshrl.u32 %v4344, 7
    %v4346 = vadd.s32 %v4345, 72
    %4347 = vset.pattern.permute.xlu0 %v4346
    %4348 = vperm.xlu0 %4347, %v4289
    %v4349 = vpop.permute.xlu0 %4348
    %v4350 = vlaneseq
    %v4351 = vshrl.u32 %v4350, 7
    %v4352 = vadd.s32 %v4351, 80
    %4353 = vset.pattern.permute.xlu0 %v4352
    %4354 = vperm.xlu0 %4353, %v4289
    %v4355 = vpop.permute.xlu0 %4354
    %v4356 = vlaneseq
    %v4357 = vshrl.u32 %v4356, 7
    %v4358 = vadd.s32 %v4357, 88
    %4359 = vset.pattern.permute.xlu0 %v4358
    %4360 = vperm.xlu0 %4359, %v4289
    %v4361 = vpop.permute.xlu0 %4360
    %v4362 = vlaneseq
    %v4363 = vshrl.u32 %v4362, 7
    %v4364 = vadd.s32 %v4363, 96
    %4365 = vset.pattern.permute.xlu0 %v4364
    %4366 = vperm.xlu0 %4365, %v4289
    %v4367 = vpop.permute.xlu0 %4366
    %v4368 = vlaneseq
    %v4369 = vshrl.u32 %v4368, 7
    %v4370 = vadd.s32 %v4369, 104
    %4371 = vset.pattern.permute.xlu0 %v4370
    %4372 = vperm.xlu0 %4371, %v4289
    %v4373 = vpop.permute.xlu0 %4372
    %v4374 = vlaneseq
    %v4375 = vshrl.u32 %v4374, 7
    %v4376 = vadd.s32 %v4375, 112
    %4377 = vset.pattern.permute.xlu0 %v4376
    %4378 = vperm.xlu0 %4377, %v4289
    %v4379 = vpop.permute.xlu0 %4378
    %v4380 = vlaneseq
    %v4381 = vshrl.u32 %v4380, 7
    %v4382 = vadd.s32 %v4381, 120
    %4383 = vset.pattern.permute.xlu0 %v4382
    %4384 = vperm.xlu0 %4383, %v4289
    %v4385 = vpop.permute.xlu0 %4384
    %v4386 = vperm.slane %v145, 1
    %v4387 = vlaneseq
    %v4388 = vshrl.u32 %v4387, 7
    %4390 = vset.pattern.permute.xlu0 %v4388
    %4391 = vperm.xlu0 %4390, %v4386
    %v4392 = vpop.permute.xlu0 %4391
    %v4393 = vlaneseq
    %v4394 = vshrl.u32 %v4393, 7
    %v4395 = vadd.s32 %v4394, 8
    %4396 = vset.pattern.permute.xlu0 %v4395
    %4397 = vperm.xlu0 %4396, %v4386
    %v4398 = vpop.permute.xlu0 %4397
    %v4399 = vlaneseq
    %v4400 = vshrl.u32 %v4399, 7
    %v4401 = vadd.s32 %v4400, 16
    %4402 = vset.pattern.permute.xlu0 %v4401
    %4403 = vperm.xlu0 %4402, %v4386
    %v4404 = vpop.permute.xlu0 %4403
    %v4405 = vlaneseq
    %v4406 = vshrl.u32 %v4405, 7
    %v4407 = vadd.s32 %v4406, 24
    %4408 = vset.pattern.permute.xlu0 %v4407
    %4409 = vperm.xlu0 %4408, %v4386
    %v4410 = vpop.permute.xlu0 %4409
    %v4411 = vlaneseq
    %v4412 = vshrl.u32 %v4411, 7
    %v4413 = vadd.s32 %v4412, 32
    %4414 = vset.pattern.permute.xlu0 %v4413
    %4415 = vperm.xlu0 %4414, %v4386
    %v4416 = vpop.permute.xlu0 %4415
    %v4417 = vlaneseq
    %v4418 = vshrl.u32 %v4417, 7
    %v4419 = vadd.s32 %v4418, 40
    %4420 = vset.pattern.permute.xlu0 %v4419
    %4421 = vperm.xlu0 %4420, %v4386
    %v4422 = vpop.permute.xlu0 %4421
    %v4423 = vlaneseq
    %v4424 = vshrl.u32 %v4423, 7
    %v4425 = vadd.s32 %v4424, 48
    %4426 = vset.pattern.permute.xlu0 %v4425
    %4427 = vperm.xlu0 %4426, %v4386
    %v4428 = vpop.permute.xlu0 %4427
    %v4429 = vlaneseq
    %v4430 = vshrl.u32 %v4429, 7
    %v4431 = vadd.s32 %v4430, 56
    %4432 = vset.pattern.permute.xlu0 %v4431
    %4433 = vperm.xlu0 %4432, %v4386
    %v4434 = vpop.permute.xlu0 %4433
    %v4435 = vlaneseq
    %v4436 = vshrl.u32 %v4435, 7
    %v4437 = vadd.s32 %v4436, 64
    %4438 = vset.pattern.permute.xlu0 %v4437
    %4439 = vperm.xlu0 %4438, %v4386
    %v4440 = vpop.permute.xlu0 %4439
    %v4441 = vlaneseq
    %v4442 = vshrl.u32 %v4441, 7
    %v4443 = vadd.s32 %v4442, 72
    %4444 = vset.pattern.permute.xlu0 %v4443
    %4445 = vperm.xlu0 %4444, %v4386
    %v4446 = vpop.permute.xlu0 %4445
    %v4447 = vlaneseq
    %v4448 = vshrl.u32 %v4447, 7
    %v4449 = vadd.s32 %v4448, 80
    %4450 = vset.pattern.permute.xlu0 %v4449
    %4451 = vperm.xlu0 %4450, %v4386
    %v4452 = vpop.permute.xlu0 %4451
    %v4453 = vlaneseq
    %v4454 = vshrl.u32 %v4453, 7
    %v4455 = vadd.s32 %v4454, 88
    %4456 = vset.pattern.permute.xlu0 %v4455
    %4457 = vperm.xlu0 %4456, %v4386
    %v4458 = vpop.permute.xlu0 %4457
    %v4459 = vlaneseq
    %v4460 = vshrl.u32 %v4459, 7
    %v4461 = vadd.s32 %v4460, 96
    %4462 = vset.pattern.permute.xlu0 %v4461
    %4463 = vperm.xlu0 %4462, %v4386
    %v4464 = vpop.permute.xlu0 %4463
    %v4465 = vlaneseq
    %v4466 = vshrl.u32 %v4465, 7
    %v4467 = vadd.s32 %v4466, 104
    %4468 = vset.pattern.permute.xlu0 %v4467
    %4469 = vperm.xlu0 %4468, %v4386
    %v4470 = vpop.permute.xlu0 %4469
    %v4471 = vlaneseq
    %v4472 = vshrl.u32 %v4471, 7
    %v4473 = vadd.s32 %v4472, 112
    %4474 = vset.pattern.permute.xlu0 %v4473
    %4475 = vperm.xlu0 %4474, %v4386
    %v4476 = vpop.permute.xlu0 %4475
    %v4477 = vlaneseq
    %v4478 = vshrl.u32 %v4477, 7
    %v4479 = vadd.s32 %v4478, 120
    %4480 = vset.pattern.permute.xlu0 %v4479
    %4481 = vperm.xlu0 %4480, %v4386
    %v4482 = vpop.permute.xlu0 %4481
    %v4483 = vperm.slane %v146, 1
    %v4484 = vlaneseq
    %v4485 = vshrl.u32 %v4484, 7
    %4487 = vset.pattern.permute.xlu0 %v4485
    %4488 = vperm.xlu0 %4487, %v4483
    %v4489 = vpop.permute.xlu0 %4488
    %v4490 = vlaneseq
    %v4491 = vshrl.u32 %v4490, 7
    %v4492 = vadd.s32 %v4491, 8
    %4493 = vset.pattern.permute.xlu0 %v4492
    %4494 = vperm.xlu0 %4493, %v4483
    %v4495 = vpop.permute.xlu0 %4494
    %v4496 = vlaneseq
    %v4497 = vshrl.u32 %v4496, 7
    %v4498 = vadd.s32 %v4497, 16
    %4499 = vset.pattern.permute.xlu0 %v4498
    %4500 = vperm.xlu0 %4499, %v4483
    %v4501 = vpop.permute.xlu0 %4500
    %v4502 = vlaneseq
    %v4503 = vshrl.u32 %v4502, 7
    %v4504 = vadd.s32 %v4503, 24
    %4505 = vset.pattern.permute.xlu0 %v4504
    %4506 = vperm.xlu0 %4505, %v4483
    %v4507 = vpop.permute.xlu0 %4506
    %v4508 = vlaneseq
    %v4509 = vshrl.u32 %v4508, 7
    %v4510 = vadd.s32 %v4509, 32
    %4511 = vset.pattern.permute.xlu0 %v4510
    %4512 = vperm.xlu0 %4511, %v4483
    %v4513 = vpop.permute.xlu0 %4512
    %v4514 = vlaneseq
    %v4515 = vshrl.u32 %v4514, 7
    %v4516 = vadd.s32 %v4515, 40
    %4517 = vset.pattern.permute.xlu0 %v4516
    %4518 = vperm.xlu0 %4517, %v4483
    %v4519 = vpop.permute.xlu0 %4518
    %v4520 = vlaneseq
    %v4521 = vshrl.u32 %v4520, 7
    %v4522 = vadd.s32 %v4521, 48
    %4523 = vset.pattern.permute.xlu0 %v4522
    %4524 = vperm.xlu0 %4523, %v4483
    %v4525 = vpop.permute.xlu0 %4524
    %v4526 = vlaneseq
    %v4527 = vshrl.u32 %v4526, 7
    %v4528 = vadd.s32 %v4527, 56
    %4529 = vset.pattern.permute.xlu0 %v4528
    %4530 = vperm.xlu0 %4529, %v4483
    %v4531 = vpop.permute.xlu0 %4530
    %v4532 = vlaneseq
    %v4533 = vshrl.u32 %v4532, 7
    %v4534 = vadd.s32 %v4533, 64
    %4535 = vset.pattern.permute.xlu0 %v4534
    %4536 = vperm.xlu0 %4535, %v4483
    %v4537 = vpop.permute.xlu0 %4536
    %v4538 = vlaneseq
    %v4539 = vshrl.u32 %v4538, 7
    %v4540 = vadd.s32 %v4539, 72
    %4541 = vset.pattern.permute.xlu0 %v4540
    %4542 = vperm.xlu0 %4541, %v4483
    %v4543 = vpop.permute.xlu0 %4542
    %v4544 = vlaneseq
    %v4545 = vshrl.u32 %v4544, 7
    %v4546 = vadd.s32 %v4545, 80
    %4547 = vset.pattern.permute.xlu0 %v4546
    %4548 = vperm.xlu0 %4547, %v4483
    %v4549 = vpop.permute.xlu0 %4548
    %v4550 = vlaneseq
    %v4551 = vshrl.u32 %v4550, 7
    %v4552 = vadd.s32 %v4551, 88
    %4553 = vset.pattern.permute.xlu0 %v4552
    %4554 = vperm.xlu0 %4553, %v4483
    %v4555 = vpop.permute.xlu0 %4554
    %v4556 = vlaneseq
    %v4557 = vshrl.u32 %v4556, 7
    %v4558 = vadd.s32 %v4557, 96
    %4559 = vset.pattern.permute.xlu0 %v4558
    %4560 = vperm.xlu0 %4559, %v4483
    %v4561 = vpop.permute.xlu0 %4560
    %v4562 = vlaneseq
    %v4563 = vshrl.u32 %v4562, 7
    %v4564 = vadd.s32 %v4563, 104
    %4565 = vset.pattern.permute.xlu0 %v4564
    %4566 = vperm.xlu0 %4565, %v4483
    %v4567 = vpop.permute.xlu0 %4566
    %v4568 = vlaneseq
    %v4569 = vshrl.u32 %v4568, 7
    %v4570 = vadd.s32 %v4569, 112
    %4571 = vset.pattern.permute.xlu0 %v4570
    %4572 = vperm.xlu0 %4571, %v4483
    %v4573 = vpop.permute.xlu0 %4572
    %v4574 = vlaneseq
    %v4575 = vshrl.u32 %v4574, 7
    %v4576 = vadd.s32 %v4575, 120
    %4577 = vset.pattern.permute.xlu0 %v4576
    %4578 = vperm.xlu0 %4577, %v4483
    %v4579 = vpop.permute.xlu0 %4578
    %v4836 = vmul.f32 %v3012, %v3034
    %v4837 = vmul.f32 %v3012, %v3040
    %v4838 = vmul.f32 %v3012, %v3046
    %v4839 = vmul.f32 %v3012, %v3052
    %v4840 = vmul.f32 %v3012, %v3058
    %v4841 = vmul.f32 %v3012, %v3064
    %v4842 = vmul.f32 %v3012, %v3070
    %v4843 = vmul.f32 %v3012, %v3076
    %v4844 = vmul.f32 %v3012, %v3082
    %v4845 = vmul.f32 %v3012, %v3088
    %v4846 = vmul.f32 %v3012, %v3094
    %v4847 = vmul.f32 %v3012, %v3100
    %v4848 = vmul.f32 %v3012, %v3106
    %v4849 = vmul.f32 %v3012, %v3112
    %v4850 = vmul.f32 %v3012, %v3118
    %v4851 = vmul.f32 %v3012, %v3124
    %v4852 = vmul.f32 %v3013, %v3131
    %v4853 = vmul.f32 %v3013, %v3137
    %v4854 = vmul.f32 %v3013, %v3143
    %v4855 = vmul.f32 %v3013, %v3149
    %v4856 = vmul.f32 %v3013, %v3155
    %v4857 = vmul.f32 %v3013, %v3161
    %v4858 = vmul.f32 %v3013, %v3167
    %v4859 = vmul.f32 %v3013, %v3173
    %v4860 = vmul.f32 %v3013, %v3179
    %v4861 = vmul.f32 %v3013, %v3185
    %v4862 = vmul.f32 %v3013, %v3191
    %v4863 = vmul.f32 %v3013, %v3197
    %v4864 = vmul.f32 %v3013, %v3203
    %v4865 = vmul.f32 %v3013, %v3209
    %v4866 = vmul.f32 %v3013, %v3215
    %v4867 = vmul.f32 %v3013, %v3221
    %v4868 = vmul.f32 %v3014, %v3228
    %v4869 = vmul.f32 %v3014, %v3234
    %v4870 = vmul.f32 %v3014, %v3240
    %v4871 = vmul.f32 %v3014, %v3246
    %v4872 = vmul.f32 %v3014, %v3252
    %v4873 = vmul.f32 %v3014, %v3258
    %v4874 = vmul.f32 %v3014, %v3264
    %v4875 = vmul.f32 %v3014, %v3270
    %v4876 = vmul.f32 %v3014, %v3276
    %v4877 = vmul.f32 %v3014, %v3282
    %v4878 = vmul.f32 %v3014, %v3288
    %v4879 = vmul.f32 %v3014, %v3294
    %v4880 = vmul.f32 %v3014, %v3300
    %v4881 = vmul.f32 %v3014, %v3306
    %v4882 = vmul.f32 %v3014, %v3312
    %v4883 = vmul.f32 %v3014, %v3318
    %v4884 = vmul.f32 %v3015, %v3325
    %v4885 = vmul.f32 %v3015, %v3331
    %v4886 = vmul.f32 %v3015, %v3337
    %v4887 = vmul.f32 %v3015, %v3343
    %v4888 = vmul.f32 %v3015, %v3349
    %v4889 = vmul.f32 %v3015, %v3355
    %v4890 = vmul.f32 %v3015, %v3361
    %v4891 = vmul.f32 %v3015, %v3367
    %v4892 = vmul.f32 %v3015, %v3373
    %v4893 = vmul.f32 %v3015, %v3379
    %v4894 = vmul.f32 %v3015, %v3385
    %v4895 = vmul.f32 %v3015, %v3391
    %v4896 = vmul.f32 %v3015, %v3397
    %v4897 = vmul.f32 %v3015, %v3403
    %v4898 = vmul.f32 %v3015, %v3409
    %v4899 = vmul.f32 %v3015, %v3415
    %v4900 = vmul.f32 %v3016, %v3422
    %v4901 = vmul.f32 %v3016, %v3428
    %v4902 = vmul.f32 %v3016, %v3434
    %v4903 = vmul.f32 %v3016, %v3440
    %v4904 = vmul.f32 %v3016, %v3446
    %v4905 = vmul.f32 %v3016, %v3452
    %v4906 = vmul.f32 %v3016, %v3458
    %v4907 = vmul.f32 %v3016, %v3464
    %v4908 = vmul.f32 %v3016, %v3470
    %v4909 = vmul.f32 %v3016, %v3476
    %v4910 = vmul.f32 %v3016, %v3482
    %v4911 = vmul.f32 %v3016, %v3488
    %v4912 = vmul.f32 %v3016, %v3494
    %v4913 = vmul.f32 %v3016, %v3500
    %v4914 = vmul.f32 %v3016, %v3506
    %v4915 = vmul.f32 %v3016, %v3512
    %v4916 = vmul.f32 %v3017, %v3519
    %v4917 = vmul.f32 %v3017, %v3525
    %v4918 = vmul.f32 %v3017, %v3531
    %v4919 = vmul.f32 %v3017, %v3537
    %v4920 = vmul.f32 %v3017, %v3543
    %v4921 = vmul.f32 %v3017, %v3549
    %v4922 = vmul.f32 %v3017, %v3555
    %v4923 = vmul.f32 %v3017, %v3561
    %v4924 = vmul.f32 %v3017, %v3567
    %v4925 = vmul.f32 %v3017, %v3573
    %v4926 = vmul.f32 %v3017, %v3579
    %v4927 = vmul.f32 %v3017, %v3585
    %v4928 = vmul.f32 %v3017, %v3591
    %v4929 = vmul.f32 %v3017, %v3597
    %v4930 = vmul.f32 %v3017, %v3603
    %v4931 = vmul.f32 %v3017, %v3609
    %v4932 = vmul.f32 %v3018, %v3616
    %v4933 = vmul.f32 %v3018, %v3622
    %v4934 = vmul.f32 %v3018, %v3628
    %v4935 = vmul.f32 %v3018, %v3634
    %v4936 = vmul.f32 %v3018, %v3640
    %v4937 = vmul.f32 %v3018, %v3646
    %v4938 = vmul.f32 %v3018, %v3652
    %v4939 = vmul.f32 %v3018, %v3658
    %v4940 = vmul.f32 %v3018, %v3664
    %v4941 = vmul.f32 %v3018, %v3670
    %v4942 = vmul.f32 %v3018, %v3676
    %v4943 = vmul.f32 %v3018, %v3682
    %v4944 = vmul.f32 %v3018, %v3688
    %v4945 = vmul.f32 %v3018, %v3694
    %v4946 = vmul.f32 %v3018, %v3700
    %v4947 = vmul.f32 %v3018, %v3706
    %v4948 = vmul.f32 %v3019, %v3713
    %v4949 = vmul.f32 %v3019, %v3719
    %v4950 = vmul.f32 %v3019, %v3725
    %v4951 = vmul.f32 %v3019, %v3731
    %v4952 = vmul.f32 %v3019, %v3737
    %v4953 = vmul.f32 %v3019, %v3743
    %v4954 = vmul.f32 %v3019, %v3749
    %v4955 = vmul.f32 %v3019, %v3755
    %v4956 = vmul.f32 %v3019, %v3761
    %v4957 = vmul.f32 %v3019, %v3767
    %v4958 = vmul.f32 %v3019, %v3773
    %v4959 = vmul.f32 %v3019, %v3779
    %v4960 = vmul.f32 %v3019, %v3785
    %v4961 = vmul.f32 %v3019, %v3791
    %v4962 = vmul.f32 %v3019, %v3797
    %v4963 = vmul.f32 %v3019, %v3803
    %v4964 = vmul.f32 %v3020, %v3810
    %v4965 = vmul.f32 %v3020, %v3816
    %v4966 = vmul.f32 %v3020, %v3822
    %v4967 = vmul.f32 %v3020, %v3828
    %v4968 = vmul.f32 %v3020, %v3834
    %v4969 = vmul.f32 %v3020, %v3840
    %v4970 = vmul.f32 %v3020, %v3846
    %v4971 = vmul.f32 %v3020, %v3852
    %v4972 = vmul.f32 %v3020, %v3858
    %v4973 = vmul.f32 %v3020, %v3864
    %v4974 = vmul.f32 %v3020, %v3870
    %v4975 = vmul.f32 %v3020, %v3876
    %v4976 = vmul.f32 %v3020, %v3882
    %v4977 = vmul.f32 %v3020, %v3888
    %v4978 = vmul.f32 %v3020, %v3894
    %v4979 = vmul.f32 %v3020, %v3900
    %v4980 = vmul.f32 %v3021, %v3907
    %v4981 = vmul.f32 %v3021, %v3913
    %v4982 = vmul.f32 %v3021, %v3919
    %v4983 = vmul.f32 %v3021, %v3925
    %v4984 = vmul.f32 %v3021, %v3931
    %v4985 = vmul.f32 %v3021, %v3937
    %v4986 = vmul.f32 %v3021, %v3943
    %v4987 = vmul.f32 %v3021, %v3949
    %v4988 = vmul.f32 %v3021, %v3955
    %v4989 = vmul.f32 %v3021, %v3961
    %v4990 = vmul.f32 %v3021, %v3967
    %v4991 = vmul.f32 %v3021, %v3973
    %v4992 = vmul.f32 %v3021, %v3979
    %v4993 = vmul.f32 %v3021, %v3985
    %v4994 = vmul.f32 %v3021, %v3991
    %v4995 = vmul.f32 %v3021, %v3997
    %v4996 = vmul.f32 %v3022, %v4004
    %v4997 = vmul.f32 %v3022, %v4010
    %v4998 = vmul.f32 %v3022, %v4016
    %v4999 = vmul.f32 %v3022, %v4022
    %v5000 = vmul.f32 %v3022, %v4028
    %v5001 = vmul.f32 %v3022, %v4034
    %v5002 = vmul.f32 %v3022, %v4040
    %v5003 = vmul.f32 %v3022, %v4046
    %v5004 = vmul.f32 %v3022, %v4052
    %v5005 = vmul.f32 %v3022, %v4058
    %v5006 = vmul.f32 %v3022, %v4064
    %v5007 = vmul.f32 %v3022, %v4070
    %v5008 = vmul.f32 %v3022, %v4076
    %v5009 = vmul.f32 %v3022, %v4082
    %v5010 = vmul.f32 %v3022, %v4088
    %v5011 = vmul.f32 %v3022, %v4094
    %v5012 = vmul.f32 %v3023, %v4101
    %v5013 = vmul.f32 %v3023, %v4107
    %v5014 = vmul.f32 %v3023, %v4113
    %v5015 = vmul.f32 %v3023, %v4119
    %v5016 = vmul.f32 %v3023, %v4125
    %v5017 = vmul.f32 %v3023, %v4131
    %v5018 = vmul.f32 %v3023, %v4137
    %v5019 = vmul.f32 %v3023, %v4143
    %v5020 = vmul.f32 %v3023, %v4149
    %v5021 = vmul.f32 %v3023, %v4155
    %v5022 = vmul.f32 %v3023, %v4161
    %v5023 = vmul.f32 %v3023, %v4167
    %v5024 = vmul.f32 %v3023, %v4173
    %v5025 = vmul.f32 %v3023, %v4179
    %v5026 = vmul.f32 %v3023, %v4185
    %v5027 = vmul.f32 %v3023, %v4191
    %v5028 = vmul.f32 %v3024, %v4198
    %v5029 = vmul.f32 %v3024, %v4204
    %v5030 = vmul.f32 %v3024, %v4210
    %v5031 = vmul.f32 %v3024, %v4216
    %v5032 = vmul.f32 %v3024, %v4222
    %v5033 = vmul.f32 %v3024, %v4228
    %v5034 = vmul.f32 %v3024, %v4234
    %v5035 = vmul.f32 %v3024, %v4240
    %v5036 = vmul.f32 %v3024, %v4246
    %v5037 = vmul.f32 %v3024, %v4252
    %v5038 = vmul.f32 %v3024, %v4258
    %v5039 = vmul.f32 %v3024, %v4264
    %v5040 = vmul.f32 %v3024, %v4270
    %v5041 = vmul.f32 %v3024, %v4276
    %v5042 = vmul.f32 %v3024, %v4282
    %v5043 = vmul.f32 %v3024, %v4288
    %v5044 = vmul.f32 %v3025, %v4295
    %v5045 = vmul.f32 %v3025, %v4301
    %v5046 = vmul.f32 %v3025, %v4307
    %v5047 = vmul.f32 %v3025, %v4313
    %v5048 = vmul.f32 %v3025, %v4319
    %v5049 = vmul.f32 %v3025, %v4325
    %v5050 = vmul.f32 %v3025, %v4331
    %v5051 = vmul.f32 %v3025, %v4337
    %v5052 = vmul.f32 %v3025, %v4343
    %v5053 = vmul.f32 %v3025, %v4349
    %v5054 = vmul.f32 %v3025, %v4355
    %v5055 = vmul.f32 %v3025, %v4361
    %v5056 = vmul.f32 %v3025, %v4367
    %v5057 = vmul.f32 %v3025, %v4373
    %v5058 = vmul.f32 %v3025, %v4379
    %v5059 = vmul.f32 %v3025, %v4385
    %v5060 = vmul.f32 %v3026, %v4392
    %v5061 = vmul.f32 %v3026, %v4398
    %v5062 = vmul.f32 %v3026, %v4404
    %v5063 = vmul.f32 %v3026, %v4410
    %v5064 = vmul.f32 %v3026, %v4416
    %v5065 = vmul.f32 %v3026, %v4422
    %v5066 = vmul.f32 %v3026, %v4428
    %v5067 = vmul.f32 %v3026, %v4434
    %v5068 = vmul.f32 %v3026, %v4440
    %v5069 = vmul.f32 %v3026, %v4446
    %v5070 = vmul.f32 %v3026, %v4452
    %v5071 = vmul.f32 %v3026, %v4458
    %v5072 = vmul.f32 %v3026, %v4464
    %v5073 = vmul.f32 %v3026, %v4470
    %v5074 = vmul.f32 %v3026, %v4476
    %v5075 = vmul.f32 %v3026, %v4482
    %v5076 = vmul.f32 %v3027, %v4489
    %v5077 = vmul.f32 %v3027, %v4495
    %v5078 = vmul.f32 %v3027, %v4501
    %v5079 = vmul.f32 %v3027, %v4507
    %v5080 = vmul.f32 %v3027, %v4513
    %v5081 = vmul.f32 %v3027, %v4519
    %v5082 = vmul.f32 %v3027, %v4525
    %v5083 = vmul.f32 %v3027, %v4531
    %v5084 = vmul.f32 %v3027, %v4537
    %v5085 = vmul.f32 %v3027, %v4543
    %v5086 = vmul.f32 %v3027, %v4549
    %v5087 = vmul.f32 %v3027, %v4555
    %v5088 = vmul.f32 %v3027, %v4561
    %v5089 = vmul.f32 %v3027, %v4567
    %v5090 = vmul.f32 %v3027, %v4573
    %v5091 = vmul.f32 %v3027, %v4579
    %v5092 = vadd.f32 %v2756, %v4836
    %v5093 = vadd.f32 %v2757, %v4837
    %v5094 = vadd.f32 %v2758, %v4838
    %v5095 = vadd.f32 %v2759, %v4839
    %v5096 = vadd.f32 %v2760, %v4840
    %v5097 = vadd.f32 %v2761, %v4841
    %v5098 = vadd.f32 %v2762, %v4842
    %v5099 = vadd.f32 %v2763, %v4843
    %v5100 = vadd.f32 %v2764, %v4844
    %v5101 = vadd.f32 %v2765, %v4845
    %v5102 = vadd.f32 %v2766, %v4846
    %v5103 = vadd.f32 %v2767, %v4847
    %v5104 = vadd.f32 %v2768, %v4848
    %v5105 = vadd.f32 %v2769, %v4849
    %v5106 = vadd.f32 %v2770, %v4850
    %v5107 = vadd.f32 %v2771, %v4851
    %v5108 = vadd.f32 %v2772, %v4852
    %v5109 = vadd.f32 %v2773, %v4853
    %v5110 = vadd.f32 %v2774, %v4854
    %v5111 = vadd.f32 %v2775, %v4855
    %v5112 = vadd.f32 %v2776, %v4856
    %v5113 = vadd.f32 %v2777, %v4857
    %v5114 = vadd.f32 %v2778, %v4858
    %v5115 = vadd.f32 %v2779, %v4859
    %v5116 = vadd.f32 %v2780, %v4860
    %v5117 = vadd.f32 %v2781, %v4861
    %v5118 = vadd.f32 %v2782, %v4862
    %v5119 = vadd.f32 %v2783, %v4863
    %v5120 = vadd.f32 %v2784, %v4864
    %v5121 = vadd.f32 %v2785, %v4865
    %v5122 = vadd.f32 %v2786, %v4866
    %v5123 = vadd.f32 %v2787, %v4867
    %v5124 = vadd.f32 %v2788, %v4868
    %v5125 = vadd.f32 %v2789, %v4869
    %v5126 = vadd.f32 %v2790, %v4870
    %v5127 = vadd.f32 %v2791, %v4871
    %v5128 = vadd.f32 %v2792, %v4872
    %v5129 = vadd.f32 %v2793, %v4873
    %v5130 = vadd.f32 %v2794, %v4874
    %v5131 = vadd.f32 %v2795, %v4875
    %v5132 = vadd.f32 %v2796, %v4876
    %v5133 = vadd.f32 %v2797, %v4877
    %v5134 = vadd.f32 %v2798, %v4878
    %v5135 = vadd.f32 %v2799, %v4879
    %v5136 = vadd.f32 %v2800, %v4880
    %v5137 = vadd.f32 %v2801, %v4881
    %v5138 = vadd.f32 %v2802, %v4882
    %v5139 = vadd.f32 %v2803, %v4883
    %v5140 = vadd.f32 %v2804, %v4884
    %v5141 = vadd.f32 %v2805, %v4885
    %v5142 = vadd.f32 %v2806, %v4886
    %v5143 = vadd.f32 %v2807, %v4887
    %v5144 = vadd.f32 %v2808, %v4888
    %v5145 = vadd.f32 %v2809, %v4889
    %v5146 = vadd.f32 %v2810, %v4890
    %v5147 = vadd.f32 %v2811, %v4891
    %v5148 = vadd.f32 %v2812, %v4892
    %v5149 = vadd.f32 %v2813, %v4893
    %v5150 = vadd.f32 %v2814, %v4894
    %v5151 = vadd.f32 %v2815, %v4895
    %v5152 = vadd.f32 %v2816, %v4896
    %v5153 = vadd.f32 %v2817, %v4897
    %v5154 = vadd.f32 %v2818, %v4898
    %v5155 = vadd.f32 %v2819, %v4899
    %v5156 = vadd.f32 %v2820, %v4900
    %v5157 = vadd.f32 %v2821, %v4901
    %v5158 = vadd.f32 %v2822, %v4902
    %v5159 = vadd.f32 %v2823, %v4903
    %v5160 = vadd.f32 %v2824, %v4904
    %v5161 = vadd.f32 %v2825, %v4905
    %v5162 = vadd.f32 %v2826, %v4906
    %v5163 = vadd.f32 %v2827, %v4907
    %v5164 = vadd.f32 %v2828, %v4908
    %v5165 = vadd.f32 %v2829, %v4909
    %v5166 = vadd.f32 %v2830, %v4910
    %v5167 = vadd.f32 %v2831, %v4911
    %v5168 = vadd.f32 %v2832, %v4912
    %v5169 = vadd.f32 %v2833, %v4913
    %v5170 = vadd.f32 %v2834, %v4914
    %v5171 = vadd.f32 %v2835, %v4915
    %v5172 = vadd.f32 %v2836, %v4916
    %v5173 = vadd.f32 %v2837, %v4917
    %v5174 = vadd.f32 %v2838, %v4918
    %v5175 = vadd.f32 %v2839, %v4919
    %v5176 = vadd.f32 %v2840, %v4920
    %v5177 = vadd.f32 %v2841, %v4921
    %v5178 = vadd.f32 %v2842, %v4922
    %v5179 = vadd.f32 %v2843, %v4923
    %v5180 = vadd.f32 %v2844, %v4924
    %v5181 = vadd.f32 %v2845, %v4925
    %v5182 = vadd.f32 %v2846, %v4926
    %v5183 = vadd.f32 %v2847, %v4927
    %v5184 = vadd.f32 %v2848, %v4928
    %v5185 = vadd.f32 %v2849, %v4929
    %v5186 = vadd.f32 %v2850, %v4930
    %v5187 = vadd.f32 %v2851, %v4931
    %v5188 = vadd.f32 %v2852, %v4932
    %v5189 = vadd.f32 %v2853, %v4933
    %v5190 = vadd.f32 %v2854, %v4934
    %v5191 = vadd.f32 %v2855, %v4935
    %v5192 = vadd.f32 %v2856, %v4936
    %v5193 = vadd.f32 %v2857, %v4937
    %v5194 = vadd.f32 %v2858, %v4938
    %v5195 = vadd.f32 %v2859, %v4939
    %v5196 = vadd.f32 %v2860, %v4940
    %v5197 = vadd.f32 %v2861, %v4941
    %v5198 = vadd.f32 %v2862, %v4942
    %v5199 = vadd.f32 %v2863, %v4943
    %v5200 = vadd.f32 %v2864, %v4944
    %v5201 = vadd.f32 %v2865, %v4945
    %v5202 = vadd.f32 %v2866, %v4946
    %v5203 = vadd.f32 %v2867, %v4947
    %v5204 = vadd.f32 %v2868, %v4948
    %v5205 = vadd.f32 %v2869, %v4949
    %v5206 = vadd.f32 %v2870, %v4950
    %v5207 = vadd.f32 %v2871, %v4951
    %v5208 = vadd.f32 %v2872, %v4952
    %v5209 = vadd.f32 %v2873, %v4953
    %v5210 = vadd.f32 %v2874, %v4954
    %v5211 = vadd.f32 %v2875, %v4955
    %v5212 = vadd.f32 %v2876, %v4956
    %v5213 = vadd.f32 %v2877, %v4957
    %v5214 = vadd.f32 %v2878, %v4958
    %v5215 = vadd.f32 %v2879, %v4959
    %v5216 = vadd.f32 %v2880, %v4960
    %v5217 = vadd.f32 %v2881, %v4961
    %v5218 = vadd.f32 %v2882, %v4962
    %v5219 = vadd.f32 %v2883, %v4963
    %v5220 = vadd.f32 %v2884, %v4964
    %v5221 = vadd.f32 %v2885, %v4965
    %v5222 = vadd.f32 %v2886, %v4966
    %v5223 = vadd.f32 %v2887, %v4967
    %v5224 = vadd.f32 %v2888, %v4968
    %v5225 = vadd.f32 %v2889, %v4969
    %v5226 = vadd.f32 %v2890, %v4970
    %v5227 = vadd.f32 %v2891, %v4971
    %v5228 = vadd.f32 %v2892, %v4972
    %v5229 = vadd.f32 %v2893, %v4973
    %v5230 = vadd.f32 %v2894, %v4974
    %v5231 = vadd.f32 %v2895, %v4975
    %v5232 = vadd.f32 %v2896, %v4976
    %v5233 = vadd.f32 %v2897, %v4977
    %v5234 = vadd.f32 %v2898, %v4978
    %v5235 = vadd.f32 %v2899, %v4979
    %v5236 = vadd.f32 %v2900, %v4980
    %v5237 = vadd.f32 %v2901, %v4981
    %v5238 = vadd.f32 %v2902, %v4982
    %v5239 = vadd.f32 %v2903, %v4983
    %v5240 = vadd.f32 %v2904, %v4984
    %v5241 = vadd.f32 %v2905, %v4985
    %v5242 = vadd.f32 %v2906, %v4986
    %v5243 = vadd.f32 %v2907, %v4987
    %v5244 = vadd.f32 %v2908, %v4988
    %v5245 = vadd.f32 %v2909, %v4989
    %v5246 = vadd.f32 %v2910, %v4990
    %v5247 = vadd.f32 %v2911, %v4991
    %v5248 = vadd.f32 %v2912, %v4992
    %v5249 = vadd.f32 %v2913, %v4993
    %v5250 = vadd.f32 %v2914, %v4994
    %v5251 = vadd.f32 %v2915, %v4995
    %v5252 = vadd.f32 %v2916, %v4996
    %v5253 = vadd.f32 %v2917, %v4997
    %v5254 = vadd.f32 %v2918, %v4998
    %v5255 = vadd.f32 %v2919, %v4999
    %v5256 = vadd.f32 %v2920, %v5000
    %v5257 = vadd.f32 %v2921, %v5001
    %v5258 = vadd.f32 %v2922, %v5002
    %v5259 = vadd.f32 %v2923, %v5003
    %v5260 = vadd.f32 %v2924, %v5004
    %v5261 = vadd.f32 %v2925, %v5005
    %v5262 = vadd.f32 %v2926, %v5006
    %v5263 = vadd.f32 %v2927, %v5007
    %v5264 = vadd.f32 %v2928, %v5008
    %v5265 = vadd.f32 %v2929, %v5009
    %v5266 = vadd.f32 %v2930, %v5010
    %v5267 = vadd.f32 %v2931, %v5011
    %v5268 = vadd.f32 %v2932, %v5012
    %v5269 = vadd.f32 %v2933, %v5013
    %v5270 = vadd.f32 %v2934, %v5014
    %v5271 = vadd.f32 %v2935, %v5015
    %v5272 = vadd.f32 %v2936, %v5016
    %v5273 = vadd.f32 %v2937, %v5017
    %v5274 = vadd.f32 %v2938, %v5018
    %v5275 = vadd.f32 %v2939, %v5019
    %v5276 = vadd.f32 %v2940, %v5020
    %v5277 = vadd.f32 %v2941, %v5021
    %v5278 = vadd.f32 %v2942, %v5022
    %v5279 = vadd.f32 %v2943, %v5023
    %v5280 = vadd.f32 %v2944, %v5024
    %v5281 = vadd.f32 %v2945, %v5025
    %v5282 = vadd.f32 %v2946, %v5026
    %v5283 = vadd.f32 %v2947, %v5027
    %v5284 = vadd.f32 %v2948, %v5028
    %v5285 = vadd.f32 %v2949, %v5029
    %v5286 = vadd.f32 %v2950, %v5030
    %v5287 = vadd.f32 %v2951, %v5031
    %v5288 = vadd.f32 %v2952, %v5032
    %v5289 = vadd.f32 %v2953, %v5033
    %v5290 = vadd.f32 %v2954, %v5034
    %v5291 = vadd.f32 %v2955, %v5035
    %v5292 = vadd.f32 %v2956, %v5036
    %v5293 = vadd.f32 %v2957, %v5037
    %v5294 = vadd.f32 %v2958, %v5038
    %v5295 = vadd.f32 %v2959, %v5039
    %v5296 = vadd.f32 %v2960, %v5040
    %v5297 = vadd.f32 %v2961, %v5041
    %v5298 = vadd.f32 %v2962, %v5042
    %v5299 = vadd.f32 %v2963, %v5043
    %v5300 = vadd.f32 %v2964, %v5044
    %v5301 = vadd.f32 %v2965, %v5045
    %v5302 = vadd.f32 %v2966, %v5046
    %v5303 = vadd.f32 %v2967, %v5047
    %v5304 = vadd.f32 %v2968, %v5048
    %v5305 = vadd.f32 %v2969, %v5049
    %v5306 = vadd.f32 %v2970, %v5050
    %v5307 = vadd.f32 %v2971, %v5051
    %v5308 = vadd.f32 %v2972, %v5052
    %v5309 = vadd.f32 %v2973, %v5053
    %v5310 = vadd.f32 %v2974, %v5054
    %v5311 = vadd.f32 %v2975, %v5055
    %v5312 = vadd.f32 %v2976, %v5056
    %v5313 = vadd.f32 %v2977, %v5057
    %v5314 = vadd.f32 %v2978, %v5058
    %v5315 = vadd.f32 %v2979, %v5059
    %v5316 = vadd.f32 %v2980, %v5060
    %v5317 = vadd.f32 %v2981, %v5061
    %v5318 = vadd.f32 %v2982, %v5062
    %v5319 = vadd.f32 %v2983, %v5063
    %v5320 = vadd.f32 %v2984, %v5064
    %v5321 = vadd.f32 %v2985, %v5065
    %v5322 = vadd.f32 %v2986, %v5066
    %v5323 = vadd.f32 %v2987, %v5067
    %v5324 = vadd.f32 %v2988, %v5068
    %v5325 = vadd.f32 %v2989, %v5069
    %v5326 = vadd.f32 %v2990, %v5070
    %v5327 = vadd.f32 %v2991, %v5071
    %v5328 = vadd.f32 %v2992, %v5072
    %v5329 = vadd.f32 %v2993, %v5073
    %v5330 = vadd.f32 %v2994, %v5074
    %v5331 = vadd.f32 %v2995, %v5075
    %v5332 = vadd.f32 %v2996, %v5076
    %v5333 = vadd.f32 %v2997, %v5077
    %v5334 = vadd.f32 %v2998, %v5078
    %v5335 = vadd.f32 %v2999, %v5079
    %v5336 = vadd.f32 %v3000, %v5080
    %v5337 = vadd.f32 %v3001, %v5081
    %v5338 = vadd.f32 %v3002, %v5082
    %v5339 = vadd.f32 %v3003, %v5083
    %v5340 = vadd.f32 %v3004, %v5084
    %v5341 = vadd.f32 %v3005, %v5085
    %v5342 = vadd.f32 %v3006, %v5086
    %v5343 = vadd.f32 %v3007, %v5087
    %v5344 = vadd.f32 %v3008, %v5088
    %v5345 = vadd.f32 %v3009, %v5089
    %v5346 = vadd.f32 %v3010, %v5090
    %v5347 = vadd.f32 %v3011, %v5091
    %v5348 = vperm.slane %v706, 2
    %v5349 = vperm.slane %v721, 2
    %v5350 = vperm.slane %v736, 2
    %v5351 = vperm.slane %v751, 2
    %v5352 = vperm.slane %v766, 2
    %v5353 = vperm.slane %v781, 2
    %v5354 = vperm.slane %v796, 2
    %v5355 = vperm.slane %v811, 2
    %v5356 = vperm.slane %v826, 2
    %v5357 = vperm.slane %v841, 2
    %v5358 = vperm.slane %v856, 2
    %v5359 = vperm.slane %v871, 2
    %v5360 = vperm.slane %v886, 2
    %v5361 = vperm.slane %v901, 2
    %v5362 = vperm.slane %v916, 2
    %v5363 = vperm.slane %v931, 2
    %v5364 = vperm.slane %v131, 2
    %v5365 = vlaneseq
    %v5366 = vshrl.u32 %v5365, 7
    %5368 = vset.pattern.permute.xlu0 %v5366
    %5369 = vperm.xlu0 %5368, %v5364
    %v5370 = vpop.permute.xlu0 %5369
    %v5371 = vlaneseq
    %v5372 = vshrl.u32 %v5371, 7
    %v5373 = vadd.s32 %v5372, 8
    %5374 = vset.pattern.permute.xlu0 %v5373
    %5375 = vperm.xlu0 %5374, %v5364
    %v5376 = vpop.permute.xlu0 %5375
    %v5377 = vlaneseq
    %v5378 = vshrl.u32 %v5377, 7
    %v5379 = vadd.s32 %v5378, 16
    %5380 = vset.pattern.permute.xlu0 %v5379
    %5381 = vperm.xlu0 %5380, %v5364
    %v5382 = vpop.permute.xlu0 %5381
    %v5383 = vlaneseq
    %v5384 = vshrl.u32 %v5383, 7
    %v5385 = vadd.s32 %v5384, 24
    %5386 = vset.pattern.permute.xlu0 %v5385
    %5387 = vperm.xlu0 %5386, %v5364
    %v5388 = vpop.permute.xlu0 %5387
    %v5389 = vlaneseq
    %v5390 = vshrl.u32 %v5389, 7
    %v5391 = vadd.s32 %v5390, 32
    %5392 = vset.pattern.permute.xlu0 %v5391
    %5393 = vperm.xlu0 %5392, %v5364
    %v5394 = vpop.permute.xlu0 %5393
    %v5395 = vlaneseq
    %v5396 = vshrl.u32 %v5395, 7
    %v5397 = vadd.s32 %v5396, 40
    %5398 = vset.pattern.permute.xlu0 %v5397
    %5399 = vperm.xlu0 %5398, %v5364
    %v5400 = vpop.permute.xlu0 %5399
    %v5401 = vlaneseq
    %v5402 = vshrl.u32 %v5401, 7
    %v5403 = vadd.s32 %v5402, 48
    %5404 = vset.pattern.permute.xlu0 %v5403
    %5405 = vperm.xlu0 %5404, %v5364
    %v5406 = vpop.permute.xlu0 %5405
    %v5407 = vlaneseq
    %v5408 = vshrl.u32 %v5407, 7
    %v5409 = vadd.s32 %v5408, 56
    %5410 = vset.pattern.permute.xlu0 %v5409
    %5411 = vperm.xlu0 %5410, %v5364
    %v5412 = vpop.permute.xlu0 %5411
    %v5413 = vlaneseq
    %v5414 = vshrl.u32 %v5413, 7
    %v5415 = vadd.s32 %v5414, 64
    %5416 = vset.pattern.permute.xlu0 %v5415
    %5417 = vperm.xlu0 %5416, %v5364
    %v5418 = vpop.permute.xlu0 %5417
    %v5419 = vlaneseq
    %v5420 = vshrl.u32 %v5419, 7
    %v5421 = vadd.s32 %v5420, 72
    %5422 = vset.pattern.permute.xlu0 %v5421
    %5423 = vperm.xlu0 %5422, %v5364
    %v5424 = vpop.permute.xlu0 %5423
    %v5425 = vlaneseq
    %v5426 = vshrl.u32 %v5425, 7
    %v5427 = vadd.s32 %v5426, 80
    %5428 = vset.pattern.permute.xlu0 %v5427
    %5429 = vperm.xlu0 %5428, %v5364
    %v5430 = vpop.permute.xlu0 %5429
    %v5431 = vlaneseq
    %v5432 = vshrl.u32 %v5431, 7
    %v5433 = vadd.s32 %v5432, 88
    %5434 = vset.pattern.permute.xlu0 %v5433
    %5435 = vperm.xlu0 %5434, %v5364
    %v5436 = vpop.permute.xlu0 %5435
    %v5437 = vlaneseq
    %v5438 = vshrl.u32 %v5437, 7
    %v5439 = vadd.s32 %v5438, 96
    %5440 = vset.pattern.permute.xlu0 %v5439
    %5441 = vperm.xlu0 %5440, %v5364
    %v5442 = vpop.permute.xlu0 %5441
    %v5443 = vlaneseq
    %v5444 = vshrl.u32 %v5443, 7
    %v5445 = vadd.s32 %v5444, 104
    %5446 = vset.pattern.permute.xlu0 %v5445
    %5447 = vperm.xlu0 %5446, %v5364
    %v5448 = vpop.permute.xlu0 %5447
    %v5449 = vlaneseq
    %v5450 = vshrl.u32 %v5449, 7
    %v5451 = vadd.s32 %v5450, 112
    %5452 = vset.pattern.permute.xlu0 %v5451
    %5453 = vperm.xlu0 %5452, %v5364
    %v5454 = vpop.permute.xlu0 %5453
    %v5455 = vlaneseq
    %v5456 = vshrl.u32 %v5455, 7
    %v5457 = vadd.s32 %v5456, 120
    %5458 = vset.pattern.permute.xlu0 %v5457
    %5459 = vperm.xlu0 %5458, %v5364
    %v5460 = vpop.permute.xlu0 %5459
    %v5461 = vperm.slane %v132, 2
    %v5462 = vlaneseq
    %v5463 = vshrl.u32 %v5462, 7
    %5465 = vset.pattern.permute.xlu0 %v5463
    %5466 = vperm.xlu0 %5465, %v5461
    %v5467 = vpop.permute.xlu0 %5466
    %v5468 = vlaneseq
    %v5469 = vshrl.u32 %v5468, 7
    %v5470 = vadd.s32 %v5469, 8
    %5471 = vset.pattern.permute.xlu0 %v5470
    %5472 = vperm.xlu0 %5471, %v5461
    %v5473 = vpop.permute.xlu0 %5472
    %v5474 = vlaneseq
    %v5475 = vshrl.u32 %v5474, 7
    %v5476 = vadd.s32 %v5475, 16
    %5477 = vset.pattern.permute.xlu0 %v5476
    %5478 = vperm.xlu0 %5477, %v5461
    %v5479 = vpop.permute.xlu0 %5478
    %v5480 = vlaneseq
    %v5481 = vshrl.u32 %v5480, 7
    %v5482 = vadd.s32 %v5481, 24
    %5483 = vset.pattern.permute.xlu0 %v5482
    %5484 = vperm.xlu0 %5483, %v5461
    %v5485 = vpop.permute.xlu0 %5484
    %v5486 = vlaneseq
    %v5487 = vshrl.u32 %v5486, 7
    %v5488 = vadd.s32 %v5487, 32
    %5489 = vset.pattern.permute.xlu0 %v5488
    %5490 = vperm.xlu0 %5489, %v5461
    %v5491 = vpop.permute.xlu0 %5490
    %v5492 = vlaneseq
    %v5493 = vshrl.u32 %v5492, 7
    %v5494 = vadd.s32 %v5493, 40
    %5495 = vset.pattern.permute.xlu0 %v5494
    %5496 = vperm.xlu0 %5495, %v5461
    %v5497 = vpop.permute.xlu0 %5496
    %v5498 = vlaneseq
    %v5499 = vshrl.u32 %v5498, 7
    %v5500 = vadd.s32 %v5499, 48
    %5501 = vset.pattern.permute.xlu0 %v5500
    %5502 = vperm.xlu0 %5501, %v5461
    %v5503 = vpop.permute.xlu0 %5502
    %v5504 = vlaneseq
    %v5505 = vshrl.u32 %v5504, 7
    %v5506 = vadd.s32 %v5505, 56
    %5507 = vset.pattern.permute.xlu0 %v5506
    %5508 = vperm.xlu0 %5507, %v5461
    %v5509 = vpop.permute.xlu0 %5508
    %v5510 = vlaneseq
    %v5511 = vshrl.u32 %v5510, 7
    %v5512 = vadd.s32 %v5511, 64
    %5513 = vset.pattern.permute.xlu0 %v5512
    %5514 = vperm.xlu0 %5513, %v5461
    %v5515 = vpop.permute.xlu0 %5514
    %v5516 = vlaneseq
    %v5517 = vshrl.u32 %v5516, 7
    %v5518 = vadd.s32 %v5517, 72
    %5519 = vset.pattern.permute.xlu0 %v5518
    %5520 = vperm.xlu0 %5519, %v5461
    %v5521 = vpop.permute.xlu0 %5520
    %v5522 = vlaneseq
    %v5523 = vshrl.u32 %v5522, 7
    %v5524 = vadd.s32 %v5523, 80
    %5525 = vset.pattern.permute.xlu0 %v5524
    %5526 = vperm.xlu0 %5525, %v5461
    %v5527 = vpop.permute.xlu0 %5526
    %v5528 = vlaneseq
    %v5529 = vshrl.u32 %v5528, 7
    %v5530 = vadd.s32 %v5529, 88
    %5531 = vset.pattern.permute.xlu0 %v5530
    %5532 = vperm.xlu0 %5531, %v5461
    %v5533 = vpop.permute.xlu0 %5532
    %v5534 = vlaneseq
    %v5535 = vshrl.u32 %v5534, 7
    %v5536 = vadd.s32 %v5535, 96
    %5537 = vset.pattern.permute.xlu0 %v5536
    %5538 = vperm.xlu0 %5537, %v5461
    %v5539 = vpop.permute.xlu0 %5538
    %v5540 = vlaneseq
    %v5541 = vshrl.u32 %v5540, 7
    %v5542 = vadd.s32 %v5541, 104
    %5543 = vset.pattern.permute.xlu0 %v5542
    %5544 = vperm.xlu0 %5543, %v5461
    %v5545 = vpop.permute.xlu0 %5544
    %v5546 = vlaneseq
    %v5547 = vshrl.u32 %v5546, 7
    %v5548 = vadd.s32 %v5547, 112
    %5549 = vset.pattern.permute.xlu0 %v5548
    %5550 = vperm.xlu0 %5549, %v5461
    %v5551 = vpop.permute.xlu0 %5550
    %v5552 = vlaneseq
    %v5553 = vshrl.u32 %v5552, 7
    %v5554 = vadd.s32 %v5553, 120
    %5555 = vset.pattern.permute.xlu0 %v5554
    %5556 = vperm.xlu0 %5555, %v5461
    %v5557 = vpop.permute.xlu0 %5556
    %v5558 = vperm.slane %v133, 2
    %v5559 = vlaneseq
    %v5560 = vshrl.u32 %v5559, 7
    %5562 = vset.pattern.permute.xlu0 %v5560
    %5563 = vperm.xlu0 %5562, %v5558
    %v5564 = vpop.permute.xlu0 %5563
    %v5565 = vlaneseq
    %v5566 = vshrl.u32 %v5565, 7
    %v5567 = vadd.s32 %v5566, 8
    %5568 = vset.pattern.permute.xlu0 %v5567
    %5569 = vperm.xlu0 %5568, %v5558
    %v5570 = vpop.permute.xlu0 %5569
    %v5571 = vlaneseq
    %v5572 = vshrl.u32 %v5571, 7
    %v5573 = vadd.s32 %v5572, 16
    %5574 = vset.pattern.permute.xlu0 %v5573
    %5575 = vperm.xlu0 %5574, %v5558
    %v5576 = vpop.permute.xlu0 %5575
    %v5577 = vlaneseq
    %v5578 = vshrl.u32 %v5577, 7
    %v5579 = vadd.s32 %v5578, 24
    %5580 = vset.pattern.permute.xlu0 %v5579
    %5581 = vperm.xlu0 %5580, %v5558
    %v5582 = vpop.permute.xlu0 %5581
    %v5583 = vlaneseq
    %v5584 = vshrl.u32 %v5583, 7
    %v5585 = vadd.s32 %v5584, 32
    %5586 = vset.pattern.permute.xlu0 %v5585
    %5587 = vperm.xlu0 %5586, %v5558
    %v5588 = vpop.permute.xlu0 %5587
    %v5589 = vlaneseq
    %v5590 = vshrl.u32 %v5589, 7
    %v5591 = vadd.s32 %v5590, 40
    %5592 = vset.pattern.permute.xlu0 %v5591
    %5593 = vperm.xlu0 %5592, %v5558
    %v5594 = vpop.permute.xlu0 %5593
    %v5595 = vlaneseq
    %v5596 = vshrl.u32 %v5595, 7
    %v5597 = vadd.s32 %v5596, 48
    %5598 = vset.pattern.permute.xlu0 %v5597
    %5599 = vperm.xlu0 %5598, %v5558
    %v5600 = vpop.permute.xlu0 %5599
    %v5601 = vlaneseq
    %v5602 = vshrl.u32 %v5601, 7
    %v5603 = vadd.s32 %v5602, 56
    %5604 = vset.pattern.permute.xlu0 %v5603
    %5605 = vperm.xlu0 %5604, %v5558
    %v5606 = vpop.permute.xlu0 %5605
    %v5607 = vlaneseq
    %v5608 = vshrl.u32 %v5607, 7
    %v5609 = vadd.s32 %v5608, 64
    %5610 = vset.pattern.permute.xlu0 %v5609
    %5611 = vperm.xlu0 %5610, %v5558
    %v5612 = vpop.permute.xlu0 %5611
    %v5613 = vlaneseq
    %v5614 = vshrl.u32 %v5613, 7
    %v5615 = vadd.s32 %v5614, 72
    %5616 = vset.pattern.permute.xlu0 %v5615
    %5617 = vperm.xlu0 %5616, %v5558
    %v5618 = vpop.permute.xlu0 %5617
    %v5619 = vlaneseq
    %v5620 = vshrl.u32 %v5619, 7
    %v5621 = vadd.s32 %v5620, 80
    %5622 = vset.pattern.permute.xlu0 %v5621
    %5623 = vperm.xlu0 %5622, %v5558
    %v5624 = vpop.permute.xlu0 %5623
    %v5625 = vlaneseq
    %v5626 = vshrl.u32 %v5625, 7
    %v5627 = vadd.s32 %v5626, 88
    %5628 = vset.pattern.permute.xlu0 %v5627
    %5629 = vperm.xlu0 %5628, %v5558
    %v5630 = vpop.permute.xlu0 %5629
    %v5631 = vlaneseq
    %v5632 = vshrl.u32 %v5631, 7
    %v5633 = vadd.s32 %v5632, 96
    %5634 = vset.pattern.permute.xlu0 %v5633
    %5635 = vperm.xlu0 %5634, %v5558
    %v5636 = vpop.permute.xlu0 %5635
    %v5637 = vlaneseq
    %v5638 = vshrl.u32 %v5637, 7
    %v5639 = vadd.s32 %v5638, 104
    %5640 = vset.pattern.permute.xlu0 %v5639
    %5641 = vperm.xlu0 %5640, %v5558
    %v5642 = vpop.permute.xlu0 %5641
    %v5643 = vlaneseq
    %v5644 = vshrl.u32 %v5643, 7
    %v5645 = vadd.s32 %v5644, 112
    %5646 = vset.pattern.permute.xlu0 %v5645
    %5647 = vperm.xlu0 %5646, %v5558
    %v5648 = vpop.permute.xlu0 %5647
    %v5649 = vlaneseq
    %v5650 = vshrl.u32 %v5649, 7
    %v5651 = vadd.s32 %v5650, 120
    %5652 = vset.pattern.permute.xlu0 %v5651
    %5653 = vperm.xlu0 %5652, %v5558
    %v5654 = vpop.permute.xlu0 %5653
    %v5655 = vperm.slane %v134, 2
    %v5656 = vlaneseq
    %v5657 = vshrl.u32 %v5656, 7
    %5659 = vset.pattern.permute.xlu0 %v5657
    %5660 = vperm.xlu0 %5659, %v5655
    %v5661 = vpop.permute.xlu0 %5660
    %v5662 = vlaneseq
    %v5663 = vshrl.u32 %v5662, 7
    %v5664 = vadd.s32 %v5663, 8
    %5665 = vset.pattern.permute.xlu0 %v5664
    %5666 = vperm.xlu0 %5665, %v5655
    %v5667 = vpop.permute.xlu0 %5666
    %v5668 = vlaneseq
    %v5669 = vshrl.u32 %v5668, 7
    %v5670 = vadd.s32 %v5669, 16
    %5671 = vset.pattern.permute.xlu0 %v5670
    %5672 = vperm.xlu0 %5671, %v5655
    %v5673 = vpop.permute.xlu0 %5672
    %v5674 = vlaneseq
    %v5675 = vshrl.u32 %v5674, 7
    %v5676 = vadd.s32 %v5675, 24
    %5677 = vset.pattern.permute.xlu0 %v5676
    %5678 = vperm.xlu0 %5677, %v5655
    %v5679 = vpop.permute.xlu0 %5678
    %v5680 = vlaneseq
    %v5681 = vshrl.u32 %v5680, 7
    %v5682 = vadd.s32 %v5681, 32
    %5683 = vset.pattern.permute.xlu0 %v5682
    %5684 = vperm.xlu0 %5683, %v5655
    %v5685 = vpop.permute.xlu0 %5684
    %v5686 = vlaneseq
    %v5687 = vshrl.u32 %v5686, 7
    %v5688 = vadd.s32 %v5687, 40
    %5689 = vset.pattern.permute.xlu0 %v5688
    %5690 = vperm.xlu0 %5689, %v5655
    %v5691 = vpop.permute.xlu0 %5690
    %v5692 = vlaneseq
    %v5693 = vshrl.u32 %v5692, 7
    %v5694 = vadd.s32 %v5693, 48
    %5695 = vset.pattern.permute.xlu0 %v5694
    %5696 = vperm.xlu0 %5695, %v5655
    %v5697 = vpop.permute.xlu0 %5696
    %v5698 = vlaneseq
    %v5699 = vshrl.u32 %v5698, 7
    %v5700 = vadd.s32 %v5699, 56
    %5701 = vset.pattern.permute.xlu0 %v5700
    %5702 = vperm.xlu0 %5701, %v5655
    %v5703 = vpop.permute.xlu0 %5702
    %v5704 = vlaneseq
    %v5705 = vshrl.u32 %v5704, 7
    %v5706 = vadd.s32 %v5705, 64
    %5707 = vset.pattern.permute.xlu0 %v5706
    %5708 = vperm.xlu0 %5707, %v5655
    %v5709 = vpop.permute.xlu0 %5708
    %v5710 = vlaneseq
    %v5711 = vshrl.u32 %v5710, 7
    %v5712 = vadd.s32 %v5711, 72
    %5713 = vset.pattern.permute.xlu0 %v5712
    %5714 = vperm.xlu0 %5713, %v5655
    %v5715 = vpop.permute.xlu0 %5714
    %v5716 = vlaneseq
    %v5717 = vshrl.u32 %v5716, 7
    %v5718 = vadd.s32 %v5717, 80
    %5719 = vset.pattern.permute.xlu0 %v5718
    %5720 = vperm.xlu0 %5719, %v5655
    %v5721 = vpop.permute.xlu0 %5720
    %v5722 = vlaneseq
    %v5723 = vshrl.u32 %v5722, 7
    %v5724 = vadd.s32 %v5723, 88
    %5725 = vset.pattern.permute.xlu0 %v5724
    %5726 = vperm.xlu0 %5725, %v5655
    %v5727 = vpop.permute.xlu0 %5726
    %v5728 = vlaneseq
    %v5729 = vshrl.u32 %v5728, 7
    %v5730 = vadd.s32 %v5729, 96
    %5731 = vset.pattern.permute.xlu0 %v5730
    %5732 = vperm.xlu0 %5731, %v5655
    %v5733 = vpop.permute.xlu0 %5732
    %v5734 = vlaneseq
    %v5735 = vshrl.u32 %v5734, 7
    %v5736 = vadd.s32 %v5735, 104
    %5737 = vset.pattern.permute.xlu0 %v5736
    %5738 = vperm.xlu0 %5737, %v5655
    %v5739 = vpop.permute.xlu0 %5738
    %v5740 = vlaneseq
    %v5741 = vshrl.u32 %v5740, 7
    %v5742 = vadd.s32 %v5741, 112
    %5743 = vset.pattern.permute.xlu0 %v5742
    %5744 = vperm.xlu0 %5743, %v5655
    %v5745 = vpop.permute.xlu0 %5744
    %v5746 = vlaneseq
    %v5747 = vshrl.u32 %v5746, 7
    %v5748 = vadd.s32 %v5747, 120
    %5749 = vset.pattern.permute.xlu0 %v5748
    %5750 = vperm.xlu0 %5749, %v5655
    %v5751 = vpop.permute.xlu0 %5750
    %v5752 = vperm.slane %v135, 2
    %v5753 = vlaneseq
    %v5754 = vshrl.u32 %v5753, 7
    %5756 = vset.pattern.permute.xlu0 %v5754
    %5757 = vperm.xlu0 %5756, %v5752
    %v5758 = vpop.permute.xlu0 %5757
    %v5759 = vlaneseq
    %v5760 = vshrl.u32 %v5759, 7
    %v5761 = vadd.s32 %v5760, 8
    %5762 = vset.pattern.permute.xlu0 %v5761
    %5763 = vperm.xlu0 %5762, %v5752
    %v5764 = vpop.permute.xlu0 %5763
    %v5765 = vlaneseq
    %v5766 = vshrl.u32 %v5765, 7
    %v5767 = vadd.s32 %v5766, 16
    %5768 = vset.pattern.permute.xlu0 %v5767
    %5769 = vperm.xlu0 %5768, %v5752
    %v5770 = vpop.permute.xlu0 %5769
    %v5771 = vlaneseq
    %v5772 = vshrl.u32 %v5771, 7
    %v5773 = vadd.s32 %v5772, 24
    %5774 = vset.pattern.permute.xlu0 %v5773
    %5775 = vperm.xlu0 %5774, %v5752
    %v5776 = vpop.permute.xlu0 %5775
    %v5777 = vlaneseq
    %v5778 = vshrl.u32 %v5777, 7
    %v5779 = vadd.s32 %v5778, 32
    %5780 = vset.pattern.permute.xlu0 %v5779
    %5781 = vperm.xlu0 %5780, %v5752
    %v5782 = vpop.permute.xlu0 %5781
    %v5783 = vlaneseq
    %v5784 = vshrl.u32 %v5783, 7
    %v5785 = vadd.s32 %v5784, 40
    %5786 = vset.pattern.permute.xlu0 %v5785
    %5787 = vperm.xlu0 %5786, %v5752
    %v5788 = vpop.permute.xlu0 %5787
    %v5789 = vlaneseq
    %v5790 = vshrl.u32 %v5789, 7
    %v5791 = vadd.s32 %v5790, 48
    %5792 = vset.pattern.permute.xlu0 %v5791
    %5793 = vperm.xlu0 %5792, %v5752
    %v5794 = vpop.permute.xlu0 %5793
    %v5795 = vlaneseq
    %v5796 = vshrl.u32 %v5795, 7
    %v5797 = vadd.s32 %v5796, 56
    %5798 = vset.pattern.permute.xlu0 %v5797
    %5799 = vperm.xlu0 %5798, %v5752
    %v5800 = vpop.permute.xlu0 %5799
    %v5801 = vlaneseq
    %v5802 = vshrl.u32 %v5801, 7
    %v5803 = vadd.s32 %v5802, 64
    %5804 = vset.pattern.permute.xlu0 %v5803
    %5805 = vperm.xlu0 %5804, %v5752
    %v5806 = vpop.permute.xlu0 %5805
    %v5807 = vlaneseq
    %v5808 = vshrl.u32 %v5807, 7
    %v5809 = vadd.s32 %v5808, 72
    %5810 = vset.pattern.permute.xlu0 %v5809
    %5811 = vperm.xlu0 %5810, %v5752
    %v5812 = vpop.permute.xlu0 %5811
    %v5813 = vlaneseq
    %v5814 = vshrl.u32 %v5813, 7
    %v5815 = vadd.s32 %v5814, 80
    %5816 = vset.pattern.permute.xlu0 %v5815
    %5817 = vperm.xlu0 %5816, %v5752
    %v5818 = vpop.permute.xlu0 %5817
    %v5819 = vlaneseq
    %v5820 = vshrl.u32 %v5819, 7
    %v5821 = vadd.s32 %v5820, 88
    %5822 = vset.pattern.permute.xlu0 %v5821
    %5823 = vperm.xlu0 %5822, %v5752
    %v5824 = vpop.permute.xlu0 %5823
    %v5825 = vlaneseq
    %v5826 = vshrl.u32 %v5825, 7
    %v5827 = vadd.s32 %v5826, 96
    %5828 = vset.pattern.permute.xlu0 %v5827
    %5829 = vperm.xlu0 %5828, %v5752
    %v5830 = vpop.permute.xlu0 %5829
    %v5831 = vlaneseq
    %v5832 = vshrl.u32 %v5831, 7
    %v5833 = vadd.s32 %v5832, 104
    %5834 = vset.pattern.permute.xlu0 %v5833
    %5835 = vperm.xlu0 %5834, %v5752
    %v5836 = vpop.permute.xlu0 %5835
    %v5837 = vlaneseq
    %v5838 = vshrl.u32 %v5837, 7
    %v5839 = vadd.s32 %v5838, 112
    %5840 = vset.pattern.permute.xlu0 %v5839
    %5841 = vperm.xlu0 %5840, %v5752
    %v5842 = vpop.permute.xlu0 %5841
    %v5843 = vlaneseq
    %v5844 = vshrl.u32 %v5843, 7
    %v5845 = vadd.s32 %v5844, 120
    %5846 = vset.pattern.permute.xlu0 %v5845
    %5847 = vperm.xlu0 %5846, %v5752
    %v5848 = vpop.permute.xlu0 %5847
    %v5849 = vperm.slane %v136, 2
    %v5850 = vlaneseq
    %v5851 = vshrl.u32 %v5850, 7
    %5853 = vset.pattern.permute.xlu0 %v5851
    %5854 = vperm.xlu0 %5853, %v5849
    %v5855 = vpop.permute.xlu0 %5854
    %v5856 = vlaneseq
    %v5857 = vshrl.u32 %v5856, 7
    %v5858 = vadd.s32 %v5857, 8
    %5859 = vset.pattern.permute.xlu0 %v5858
    %5860 = vperm.xlu0 %5859, %v5849
    %v5861 = vpop.permute.xlu0 %5860
    %v5862 = vlaneseq
    %v5863 = vshrl.u32 %v5862, 7
    %v5864 = vadd.s32 %v5863, 16
    %5865 = vset.pattern.permute.xlu0 %v5864
    %5866 = vperm.xlu0 %5865, %v5849
    %v5867 = vpop.permute.xlu0 %5866
    %v5868 = vlaneseq
    %v5869 = vshrl.u32 %v5868, 7
    %v5870 = vadd.s32 %v5869, 24
    %5871 = vset.pattern.permute.xlu0 %v5870
    %5872 = vperm.xlu0 %5871, %v5849
    %v5873 = vpop.permute.xlu0 %5872
    %v5874 = vlaneseq
    %v5875 = vshrl.u32 %v5874, 7
    %v5876 = vadd.s32 %v5875, 32
    %5877 = vset.pattern.permute.xlu0 %v5876
    %5878 = vperm.xlu0 %5877, %v5849
    %v5879 = vpop.permute.xlu0 %5878
    %v5880 = vlaneseq
    %v5881 = vshrl.u32 %v5880, 7
    %v5882 = vadd.s32 %v5881, 40
    %5883 = vset.pattern.permute.xlu0 %v5882
    %5884 = vperm.xlu0 %5883, %v5849
    %v5885 = vpop.permute.xlu0 %5884
    %v5886 = vlaneseq
    %v5887 = vshrl.u32 %v5886, 7
    %v5888 = vadd.s32 %v5887, 48
    %5889 = vset.pattern.permute.xlu0 %v5888
    %5890 = vperm.xlu0 %5889, %v5849
    %v5891 = vpop.permute.xlu0 %5890
    %v5892 = vlaneseq
    %v5893 = vshrl.u32 %v5892, 7
    %v5894 = vadd.s32 %v5893, 56
    %5895 = vset.pattern.permute.xlu0 %v5894
    %5896 = vperm.xlu0 %5895, %v5849
    %v5897 = vpop.permute.xlu0 %5896
    %v5898 = vlaneseq
    %v5899 = vshrl.u32 %v5898, 7
    %v5900 = vadd.s32 %v5899, 64
    %5901 = vset.pattern.permute.xlu0 %v5900
    %5902 = vperm.xlu0 %5901, %v5849
    %v5903 = vpop.permute.xlu0 %5902
    %v5904 = vlaneseq
    %v5905 = vshrl.u32 %v5904, 7
    %v5906 = vadd.s32 %v5905, 72
    %5907 = vset.pattern.permute.xlu0 %v5906
    %5908 = vperm.xlu0 %5907, %v5849
    %v5909 = vpop.permute.xlu0 %5908
    %v5910 = vlaneseq
    %v5911 = vshrl.u32 %v5910, 7
    %v5912 = vadd.s32 %v5911, 80
    %5913 = vset.pattern.permute.xlu0 %v5912
    %5914 = vperm.xlu0 %5913, %v5849
    %v5915 = vpop.permute.xlu0 %5914
    %v5916 = vlaneseq
    %v5917 = vshrl.u32 %v5916, 7
    %v5918 = vadd.s32 %v5917, 88
    %5919 = vset.pattern.permute.xlu0 %v5918
    %5920 = vperm.xlu0 %5919, %v5849
    %v5921 = vpop.permute.xlu0 %5920
    %v5922 = vlaneseq
    %v5923 = vshrl.u32 %v5922, 7
    %v5924 = vadd.s32 %v5923, 96
    %5925 = vset.pattern.permute.xlu0 %v5924
    %5926 = vperm.xlu0 %5925, %v5849
    %v5927 = vpop.permute.xlu0 %5926
    %v5928 = vlaneseq
    %v5929 = vshrl.u32 %v5928, 7
    %v5930 = vadd.s32 %v5929, 104
    %5931 = vset.pattern.permute.xlu0 %v5930
    %5932 = vperm.xlu0 %5931, %v5849
    %v5933 = vpop.permute.xlu0 %5932
    %v5934 = vlaneseq
    %v5935 = vshrl.u32 %v5934, 7
    %v5936 = vadd.s32 %v5935, 112
    %5937 = vset.pattern.permute.xlu0 %v5936
    %5938 = vperm.xlu0 %5937, %v5849
    %v5939 = vpop.permute.xlu0 %5938
    %v5940 = vlaneseq
    %v5941 = vshrl.u32 %v5940, 7
    %v5942 = vadd.s32 %v5941, 120
    %5943 = vset.pattern.permute.xlu0 %v5942
    %5944 = vperm.xlu0 %5943, %v5849
    %v5945 = vpop.permute.xlu0 %5944
    %v5946 = vperm.slane %v137, 2
    %v5947 = vlaneseq
    %v5948 = vshrl.u32 %v5947, 7
    %5950 = vset.pattern.permute.xlu0 %v5948
    %5951 = vperm.xlu0 %5950, %v5946
    %v5952 = vpop.permute.xlu0 %5951
    %v5953 = vlaneseq
    %v5954 = vshrl.u32 %v5953, 7
    %v5955 = vadd.s32 %v5954, 8
    %5956 = vset.pattern.permute.xlu0 %v5955
    %5957 = vperm.xlu0 %5956, %v5946
    %v5958 = vpop.permute.xlu0 %5957
    %v5959 = vlaneseq
    %v5960 = vshrl.u32 %v5959, 7
    %v5961 = vadd.s32 %v5960, 16
    %5962 = vset.pattern.permute.xlu0 %v5961
    %5963 = vperm.xlu0 %5962, %v5946
    %v5964 = vpop.permute.xlu0 %5963
    %v5965 = vlaneseq
    %v5966 = vshrl.u32 %v5965, 7
    %v5967 = vadd.s32 %v5966, 24
    %5968 = vset.pattern.permute.xlu0 %v5967
    %5969 = vperm.xlu0 %5968, %v5946
    %v5970 = vpop.permute.xlu0 %5969
    %v5971 = vlaneseq
    %v5972 = vshrl.u32 %v5971, 7
    %v5973 = vadd.s32 %v5972, 32
    %5974 = vset.pattern.permute.xlu0 %v5973
    %5975 = vperm.xlu0 %5974, %v5946
    %v5976 = vpop.permute.xlu0 %5975
    %v5977 = vlaneseq
    %v5978 = vshrl.u32 %v5977, 7
    %v5979 = vadd.s32 %v5978, 40
    %5980 = vset.pattern.permute.xlu0 %v5979
    %5981 = vperm.xlu0 %5980, %v5946
    %v5982 = vpop.permute.xlu0 %5981
    %v5983 = vlaneseq
    %v5984 = vshrl.u32 %v5983, 7
    %v5985 = vadd.s32 %v5984, 48
    %5986 = vset.pattern.permute.xlu0 %v5985
    %5987 = vperm.xlu0 %5986, %v5946
    %v5988 = vpop.permute.xlu0 %5987
    %v5989 = vlaneseq
    %v5990 = vshrl.u32 %v5989, 7
    %v5991 = vadd.s32 %v5990, 56
    %5992 = vset.pattern.permute.xlu0 %v5991
    %5993 = vperm.xlu0 %5992, %v5946
    %v5994 = vpop.permute.xlu0 %5993
    %v5995 = vlaneseq
    %v5996 = vshrl.u32 %v5995, 7
    %v5997 = vadd.s32 %v5996, 64
    %5998 = vset.pattern.permute.xlu0 %v5997
    %5999 = vperm.xlu0 %5998, %v5946
    %v6000 = vpop.permute.xlu0 %5999
    %v6001 = vlaneseq
    %v6002 = vshrl.u32 %v6001, 7
    %v6003 = vadd.s32 %v6002, 72
    %6004 = vset.pattern.permute.xlu0 %v6003
    %6005 = vperm.xlu0 %6004, %v5946
    %v6006 = vpop.permute.xlu0 %6005
    %v6007 = vlaneseq
    %v6008 = vshrl.u32 %v6007, 7
    %v6009 = vadd.s32 %v6008, 80
    %6010 = vset.pattern.permute.xlu0 %v6009
    %6011 = vperm.xlu0 %6010, %v5946
    %v6012 = vpop.permute.xlu0 %6011
    %v6013 = vlaneseq
    %v6014 = vshrl.u32 %v6013, 7
    %v6015 = vadd.s32 %v6014, 88
    %6016 = vset.pattern.permute.xlu0 %v6015
    %6017 = vperm.xlu0 %6016, %v5946
    %v6018 = vpop.permute.xlu0 %6017
    %v6019 = vlaneseq
    %v6020 = vshrl.u32 %v6019, 7
    %v6021 = vadd.s32 %v6020, 96
    %6022 = vset.pattern.permute.xlu0 %v6021
    %6023 = vperm.xlu0 %6022, %v5946
    %v6024 = vpop.permute.xlu0 %6023
    %v6025 = vlaneseq
    %v6026 = vshrl.u32 %v6025, 7
    %v6027 = vadd.s32 %v6026, 104
    %6028 = vset.pattern.permute.xlu0 %v6027
    %6029 = vperm.xlu0 %6028, %v5946
    %v6030 = vpop.permute.xlu0 %6029
    %v6031 = vlaneseq
    %v6032 = vshrl.u32 %v6031, 7
    %v6033 = vadd.s32 %v6032, 112
    %6034 = vset.pattern.permute.xlu0 %v6033
    %6035 = vperm.xlu0 %6034, %v5946
    %v6036 = vpop.permute.xlu0 %6035
    %v6037 = vlaneseq
    %v6038 = vshrl.u32 %v6037, 7
    %v6039 = vadd.s32 %v6038, 120
    %6040 = vset.pattern.permute.xlu0 %v6039
    %6041 = vperm.xlu0 %6040, %v5946
    %v6042 = vpop.permute.xlu0 %6041
    %v6043 = vperm.slane %v138, 2
    %v6044 = vlaneseq
    %v6045 = vshrl.u32 %v6044, 7
    %6047 = vset.pattern.permute.xlu0 %v6045
    %6048 = vperm.xlu0 %6047, %v6043
    %v6049 = vpop.permute.xlu0 %6048
    %v6050 = vlaneseq
    %v6051 = vshrl.u32 %v6050, 7
    %v6052 = vadd.s32 %v6051, 8
    %6053 = vset.pattern.permute.xlu0 %v6052
    %6054 = vperm.xlu0 %6053, %v6043
    %v6055 = vpop.permute.xlu0 %6054
    %v6056 = vlaneseq
    %v6057 = vshrl.u32 %v6056, 7
    %v6058 = vadd.s32 %v6057, 16
    %6059 = vset.pattern.permute.xlu0 %v6058
    %6060 = vperm.xlu0 %6059, %v6043
    %v6061 = vpop.permute.xlu0 %6060
    %v6062 = vlaneseq
    %v6063 = vshrl.u32 %v6062, 7
    %v6064 = vadd.s32 %v6063, 24
    %6065 = vset.pattern.permute.xlu0 %v6064
    %6066 = vperm.xlu0 %6065, %v6043
    %v6067 = vpop.permute.xlu0 %6066
    %v6068 = vlaneseq
    %v6069 = vshrl.u32 %v6068, 7
    %v6070 = vadd.s32 %v6069, 32
    %6071 = vset.pattern.permute.xlu0 %v6070
    %6072 = vperm.xlu0 %6071, %v6043
    %v6073 = vpop.permute.xlu0 %6072
    %v6074 = vlaneseq
    %v6075 = vshrl.u32 %v6074, 7
    %v6076 = vadd.s32 %v6075, 40
    %6077 = vset.pattern.permute.xlu0 %v6076
    %6078 = vperm.xlu0 %6077, %v6043
    %v6079 = vpop.permute.xlu0 %6078
    %v6080 = vlaneseq
    %v6081 = vshrl.u32 %v6080, 7
    %v6082 = vadd.s32 %v6081, 48
    %6083 = vset.pattern.permute.xlu0 %v6082
    %6084 = vperm.xlu0 %6083, %v6043
    %v6085 = vpop.permute.xlu0 %6084
    %v6086 = vlaneseq
    %v6087 = vshrl.u32 %v6086, 7
    %v6088 = vadd.s32 %v6087, 56
    %6089 = vset.pattern.permute.xlu0 %v6088
    %6090 = vperm.xlu0 %6089, %v6043
    %v6091 = vpop.permute.xlu0 %6090
    %v6092 = vlaneseq
    %v6093 = vshrl.u32 %v6092, 7
    %v6094 = vadd.s32 %v6093, 64
    %6095 = vset.pattern.permute.xlu0 %v6094
    %6096 = vperm.xlu0 %6095, %v6043
    %v6097 = vpop.permute.xlu0 %6096
    %v6098 = vlaneseq
    %v6099 = vshrl.u32 %v6098, 7
    %v6100 = vadd.s32 %v6099, 72
    %6101 = vset.pattern.permute.xlu0 %v6100
    %6102 = vperm.xlu0 %6101, %v6043
    %v6103 = vpop.permute.xlu0 %6102
    %v6104 = vlaneseq
    %v6105 = vshrl.u32 %v6104, 7
    %v6106 = vadd.s32 %v6105, 80
    %6107 = vset.pattern.permute.xlu0 %v6106
    %6108 = vperm.xlu0 %6107, %v6043
    %v6109 = vpop.permute.xlu0 %6108
    %v6110 = vlaneseq
    %v6111 = vshrl.u32 %v6110, 7
    %v6112 = vadd.s32 %v6111, 88
    %6113 = vset.pattern.permute.xlu0 %v6112
    %6114 = vperm.xlu0 %6113, %v6043
    %v6115 = vpop.permute.xlu0 %6114
    %v6116 = vlaneseq
    %v6117 = vshrl.u32 %v6116, 7
    %v6118 = vadd.s32 %v6117, 96
    %6119 = vset.pattern.permute.xlu0 %v6118
    %6120 = vperm.xlu0 %6119, %v6043
    %v6121 = vpop.permute.xlu0 %6120
    %v6122 = vlaneseq
    %v6123 = vshrl.u32 %v6122, 7
    %v6124 = vadd.s32 %v6123, 104
    %6125 = vset.pattern.permute.xlu0 %v6124
    %6126 = vperm.xlu0 %6125, %v6043
    %v6127 = vpop.permute.xlu0 %6126
    %v6128 = vlaneseq
    %v6129 = vshrl.u32 %v6128, 7
    %v6130 = vadd.s32 %v6129, 112
    %6131 = vset.pattern.permute.xlu0 %v6130
    %6132 = vperm.xlu0 %6131, %v6043
    %v6133 = vpop.permute.xlu0 %6132
    %v6134 = vlaneseq
    %v6135 = vshrl.u32 %v6134, 7
    %v6136 = vadd.s32 %v6135, 120
    %6137 = vset.pattern.permute.xlu0 %v6136
    %6138 = vperm.xlu0 %6137, %v6043
    %v6139 = vpop.permute.xlu0 %6138
    %v6140 = vperm.slane %v139, 2
    %v6141 = vlaneseq
    %v6142 = vshrl.u32 %v6141, 7
    %6144 = vset.pattern.permute.xlu0 %v6142
    %6145 = vperm.xlu0 %6144, %v6140
    %v6146 = vpop.permute.xlu0 %6145
    %v6147 = vlaneseq
    %v6148 = vshrl.u32 %v6147, 7
    %v6149 = vadd.s32 %v6148, 8
    %6150 = vset.pattern.permute.xlu0 %v6149
    %6151 = vperm.xlu0 %6150, %v6140
    %v6152 = vpop.permute.xlu0 %6151
    %v6153 = vlaneseq
    %v6154 = vshrl.u32 %v6153, 7
    %v6155 = vadd.s32 %v6154, 16
    %6156 = vset.pattern.permute.xlu0 %v6155
    %6157 = vperm.xlu0 %6156, %v6140
    %v6158 = vpop.permute.xlu0 %6157
    %v6159 = vlaneseq
    %v6160 = vshrl.u32 %v6159, 7
    %v6161 = vadd.s32 %v6160, 24
    %6162 = vset.pattern.permute.xlu0 %v6161
    %6163 = vperm.xlu0 %6162, %v6140
    %v6164 = vpop.permute.xlu0 %6163
    %v6165 = vlaneseq
    %v6166 = vshrl.u32 %v6165, 7
    %v6167 = vadd.s32 %v6166, 32
    %6168 = vset.pattern.permute.xlu0 %v6167
    %6169 = vperm.xlu0 %6168, %v6140
    %v6170 = vpop.permute.xlu0 %6169
    %v6171 = vlaneseq
    %v6172 = vshrl.u32 %v6171, 7
    %v6173 = vadd.s32 %v6172, 40
    %6174 = vset.pattern.permute.xlu0 %v6173
    %6175 = vperm.xlu0 %6174, %v6140
    %v6176 = vpop.permute.xlu0 %6175
    %v6177 = vlaneseq
    %v6178 = vshrl.u32 %v6177, 7
    %v6179 = vadd.s32 %v6178, 48
    %6180 = vset.pattern.permute.xlu0 %v6179
    %6181 = vperm.xlu0 %6180, %v6140
    %v6182 = vpop.permute.xlu0 %6181
    %v6183 = vlaneseq
    %v6184 = vshrl.u32 %v6183, 7
    %v6185 = vadd.s32 %v6184, 56
    %6186 = vset.pattern.permute.xlu0 %v6185
    %6187 = vperm.xlu0 %6186, %v6140
    %v6188 = vpop.permute.xlu0 %6187
    %v6189 = vlaneseq
    %v6190 = vshrl.u32 %v6189, 7
    %v6191 = vadd.s32 %v6190, 64
    %6192 = vset.pattern.permute.xlu0 %v6191
    %6193 = vperm.xlu0 %6192, %v6140
    %v6194 = vpop.permute.xlu0 %6193
    %v6195 = vlaneseq
    %v6196 = vshrl.u32 %v6195, 7
    %v6197 = vadd.s32 %v6196, 72
    %6198 = vset.pattern.permute.xlu0 %v6197
    %6199 = vperm.xlu0 %6198, %v6140
    %v6200 = vpop.permute.xlu0 %6199
    %v6201 = vlaneseq
    %v6202 = vshrl.u32 %v6201, 7
    %v6203 = vadd.s32 %v6202, 80
    %6204 = vset.pattern.permute.xlu0 %v6203
    %6205 = vperm.xlu0 %6204, %v6140
    %v6206 = vpop.permute.xlu0 %6205
    %v6207 = vlaneseq
    %v6208 = vshrl.u32 %v6207, 7
    %v6209 = vadd.s32 %v6208, 88
    %6210 = vset.pattern.permute.xlu0 %v6209
    %6211 = vperm.xlu0 %6210, %v6140
    %v6212 = vpop.permute.xlu0 %6211
    %v6213 = vlaneseq
    %v6214 = vshrl.u32 %v6213, 7
    %v6215 = vadd.s32 %v6214, 96
    %6216 = vset.pattern.permute.xlu0 %v6215
    %6217 = vperm.xlu0 %6216, %v6140
    %v6218 = vpop.permute.xlu0 %6217
    %v6219 = vlaneseq
    %v6220 = vshrl.u32 %v6219, 7
    %v6221 = vadd.s32 %v6220, 104
    %6222 = vset.pattern.permute.xlu0 %v6221
    %6223 = vperm.xlu0 %6222, %v6140
    %v6224 = vpop.permute.xlu0 %6223
    %v6225 = vlaneseq
    %v6226 = vshrl.u32 %v6225, 7
    %v6227 = vadd.s32 %v6226, 112
    %6228 = vset.pattern.permute.xlu0 %v6227
    %6229 = vperm.xlu0 %6228, %v6140
    %v6230 = vpop.permute.xlu0 %6229
    %v6231 = vlaneseq
    %v6232 = vshrl.u32 %v6231, 7
    %v6233 = vadd.s32 %v6232, 120
    %6234 = vset.pattern.permute.xlu0 %v6233
    %6235 = vperm.xlu0 %6234, %v6140
    %v6236 = vpop.permute.xlu0 %6235
    %v6237 = vperm.slane %v140, 2
    %v6238 = vlaneseq
    %v6239 = vshrl.u32 %v6238, 7
    %6241 = vset.pattern.permute.xlu0 %v6239
    %6242 = vperm.xlu0 %6241, %v6237
    %v6243 = vpop.permute.xlu0 %6242
    %v6244 = vlaneseq
    %v6245 = vshrl.u32 %v6244, 7
    %v6246 = vadd.s32 %v6245, 8
    %6247 = vset.pattern.permute.xlu0 %v6246
    %6248 = vperm.xlu0 %6247, %v6237
    %v6249 = vpop.permute.xlu0 %6248
    %v6250 = vlaneseq
    %v6251 = vshrl.u32 %v6250, 7
    %v6252 = vadd.s32 %v6251, 16
    %6253 = vset.pattern.permute.xlu0 %v6252
    %6254 = vperm.xlu0 %6253, %v6237
    %v6255 = vpop.permute.xlu0 %6254
    %v6256 = vlaneseq
    %v6257 = vshrl.u32 %v6256, 7
    %v6258 = vadd.s32 %v6257, 24
    %6259 = vset.pattern.permute.xlu0 %v6258
    %6260 = vperm.xlu0 %6259, %v6237
    %v6261 = vpop.permute.xlu0 %6260
    %v6262 = vlaneseq
    %v6263 = vshrl.u32 %v6262, 7
    %v6264 = vadd.s32 %v6263, 32
    %6265 = vset.pattern.permute.xlu0 %v6264
    %6266 = vperm.xlu0 %6265, %v6237
    %v6267 = vpop.permute.xlu0 %6266
    %v6268 = vlaneseq
    %v6269 = vshrl.u32 %v6268, 7
    %v6270 = vadd.s32 %v6269, 40
    %6271 = vset.pattern.permute.xlu0 %v6270
    %6272 = vperm.xlu0 %6271, %v6237
    %v6273 = vpop.permute.xlu0 %6272
    %v6274 = vlaneseq
    %v6275 = vshrl.u32 %v6274, 7
    %v6276 = vadd.s32 %v6275, 48
    %6277 = vset.pattern.permute.xlu0 %v6276
    %6278 = vperm.xlu0 %6277, %v6237
    %v6279 = vpop.permute.xlu0 %6278
    %v6280 = vlaneseq
    %v6281 = vshrl.u32 %v6280, 7
    %v6282 = vadd.s32 %v6281, 56
    %6283 = vset.pattern.permute.xlu0 %v6282
    %6284 = vperm.xlu0 %6283, %v6237
    %v6285 = vpop.permute.xlu0 %6284
    %v6286 = vlaneseq
    %v6287 = vshrl.u32 %v6286, 7
    %v6288 = vadd.s32 %v6287, 64
    %6289 = vset.pattern.permute.xlu0 %v6288
    %6290 = vperm.xlu0 %6289, %v6237
    %v6291 = vpop.permute.xlu0 %6290
    %v6292 = vlaneseq
    %v6293 = vshrl.u32 %v6292, 7
    %v6294 = vadd.s32 %v6293, 72
    %6295 = vset.pattern.permute.xlu0 %v6294
    %6296 = vperm.xlu0 %6295, %v6237
    %v6297 = vpop.permute.xlu0 %6296
    %v6298 = vlaneseq
    %v6299 = vshrl.u32 %v6298, 7
    %v6300 = vadd.s32 %v6299, 80
    %6301 = vset.pattern.permute.xlu0 %v6300
    %6302 = vperm.xlu0 %6301, %v6237
    %v6303 = vpop.permute.xlu0 %6302
    %v6304 = vlaneseq
    %v6305 = vshrl.u32 %v6304, 7
    %v6306 = vadd.s32 %v6305, 88
    %6307 = vset.pattern.permute.xlu0 %v6306
    %6308 = vperm.xlu0 %6307, %v6237
    %v6309 = vpop.permute.xlu0 %6308
    %v6310 = vlaneseq
    %v6311 = vshrl.u32 %v6310, 7
    %v6312 = vadd.s32 %v6311, 96
    %6313 = vset.pattern.permute.xlu0 %v6312
    %6314 = vperm.xlu0 %6313, %v6237
    %v6315 = vpop.permute.xlu0 %6314
    %v6316 = vlaneseq
    %v6317 = vshrl.u32 %v6316, 7
    %v6318 = vadd.s32 %v6317, 104
    %6319 = vset.pattern.permute.xlu0 %v6318
    %6320 = vperm.xlu0 %6319, %v6237
    %v6321 = vpop.permute.xlu0 %6320
    %v6322 = vlaneseq
    %v6323 = vshrl.u32 %v6322, 7
    %v6324 = vadd.s32 %v6323, 112
    %6325 = vset.pattern.permute.xlu0 %v6324
    %6326 = vperm.xlu0 %6325, %v6237
    %v6327 = vpop.permute.xlu0 %6326
    %v6328 = vlaneseq
    %v6329 = vshrl.u32 %v6328, 7
    %v6330 = vadd.s32 %v6329, 120
    %6331 = vset.pattern.permute.xlu0 %v6330
    %6332 = vperm.xlu0 %6331, %v6237
    %v6333 = vpop.permute.xlu0 %6332
    %v6334 = vperm.slane %v141, 2
    %v6335 = vlaneseq
    %v6336 = vshrl.u32 %v6335, 7
    %6338 = vset.pattern.permute.xlu0 %v6336
    %6339 = vperm.xlu0 %6338, %v6334
    %v6340 = vpop.permute.xlu0 %6339
    %v6341 = vlaneseq
    %v6342 = vshrl.u32 %v6341, 7
    %v6343 = vadd.s32 %v6342, 8
    %6344 = vset.pattern.permute.xlu0 %v6343
    %6345 = vperm.xlu0 %6344, %v6334
    %v6346 = vpop.permute.xlu0 %6345
    %v6347 = vlaneseq
    %v6348 = vshrl.u32 %v6347, 7
    %v6349 = vadd.s32 %v6348, 16
    %6350 = vset.pattern.permute.xlu0 %v6349
    %6351 = vperm.xlu0 %6350, %v6334
    %v6352 = vpop.permute.xlu0 %6351
    %v6353 = vlaneseq
    %v6354 = vshrl.u32 %v6353, 7
    %v6355 = vadd.s32 %v6354, 24
    %6356 = vset.pattern.permute.xlu0 %v6355
    %6357 = vperm.xlu0 %6356, %v6334
    %v6358 = vpop.permute.xlu0 %6357
    %v6359 = vlaneseq
    %v6360 = vshrl.u32 %v6359, 7
    %v6361 = vadd.s32 %v6360, 32
    %6362 = vset.pattern.permute.xlu0 %v6361
    %6363 = vperm.xlu0 %6362, %v6334
    %v6364 = vpop.permute.xlu0 %6363
    %v6365 = vlaneseq
    %v6366 = vshrl.u32 %v6365, 7
    %v6367 = vadd.s32 %v6366, 40
    %6368 = vset.pattern.permute.xlu0 %v6367
    %6369 = vperm.xlu0 %6368, %v6334
    %v6370 = vpop.permute.xlu0 %6369
    %v6371 = vlaneseq
    %v6372 = vshrl.u32 %v6371, 7
    %v6373 = vadd.s32 %v6372, 48
    %6374 = vset.pattern.permute.xlu0 %v6373
    %6375 = vperm.xlu0 %6374, %v6334
    %v6376 = vpop.permute.xlu0 %6375
    %v6377 = vlaneseq
    %v6378 = vshrl.u32 %v6377, 7
    %v6379 = vadd.s32 %v6378, 56
    %6380 = vset.pattern.permute.xlu0 %v6379
    %6381 = vperm.xlu0 %6380, %v6334
    %v6382 = vpop.permute.xlu0 %6381
    %v6383 = vlaneseq
    %v6384 = vshrl.u32 %v6383, 7
    %v6385 = vadd.s32 %v6384, 64
    %6386 = vset.pattern.permute.xlu0 %v6385
    %6387 = vperm.xlu0 %6386, %v6334
    %v6388 = vpop.permute.xlu0 %6387
    %v6389 = vlaneseq
    %v6390 = vshrl.u32 %v6389, 7
    %v6391 = vadd.s32 %v6390, 72
    %6392 = vset.pattern.permute.xlu0 %v6391
    %6393 = vperm.xlu0 %6392, %v6334
    %v6394 = vpop.permute.xlu0 %6393
    %v6395 = vlaneseq
    %v6396 = vshrl.u32 %v6395, 7
    %v6397 = vadd.s32 %v6396, 80
    %6398 = vset.pattern.permute.xlu0 %v6397
    %6399 = vperm.xlu0 %6398, %v6334
    %v6400 = vpop.permute.xlu0 %6399
    %v6401 = vlaneseq
    %v6402 = vshrl.u32 %v6401, 7
    %v6403 = vadd.s32 %v6402, 88
    %6404 = vset.pattern.permute.xlu0 %v6403
    %6405 = vperm.xlu0 %6404, %v6334
    %v6406 = vpop.permute.xlu0 %6405
    %v6407 = vlaneseq
    %v6408 = vshrl.u32 %v6407, 7
    %v6409 = vadd.s32 %v6408, 96
    %6410 = vset.pattern.permute.xlu0 %v6409
    %6411 = vperm.xlu0 %6410, %v6334
    %v6412 = vpop.permute.xlu0 %6411
    %v6413 = vlaneseq
    %v6414 = vshrl.u32 %v6413, 7
    %v6415 = vadd.s32 %v6414, 104
    %6416 = vset.pattern.permute.xlu0 %v6415
    %6417 = vperm.xlu0 %6416, %v6334
    %v6418 = vpop.permute.xlu0 %6417
    %v6419 = vlaneseq
    %v6420 = vshrl.u32 %v6419, 7
    %v6421 = vadd.s32 %v6420, 112
    %6422 = vset.pattern.permute.xlu0 %v6421
    %6423 = vperm.xlu0 %6422, %v6334
    %v6424 = vpop.permute.xlu0 %6423
    %v6425 = vlaneseq
    %v6426 = vshrl.u32 %v6425, 7
    %v6427 = vadd.s32 %v6426, 120
    %6428 = vset.pattern.permute.xlu0 %v6427
    %6429 = vperm.xlu0 %6428, %v6334
    %v6430 = vpop.permute.xlu0 %6429
    %v6431 = vperm.slane %v142, 2
    %v6432 = vlaneseq
    %v6433 = vshrl.u32 %v6432, 7
    %6435 = vset.pattern.permute.xlu0 %v6433
    %6436 = vperm.xlu0 %6435, %v6431
    %v6437 = vpop.permute.xlu0 %6436
    %v6438 = vlaneseq
    %v6439 = vshrl.u32 %v6438, 7
    %v6440 = vadd.s32 %v6439, 8
    %6441 = vset.pattern.permute.xlu0 %v6440
    %6442 = vperm.xlu0 %6441, %v6431
    %v6443 = vpop.permute.xlu0 %6442
    %v6444 = vlaneseq
    %v6445 = vshrl.u32 %v6444, 7
    %v6446 = vadd.s32 %v6445, 16
    %6447 = vset.pattern.permute.xlu0 %v6446
    %6448 = vperm.xlu0 %6447, %v6431
    %v6449 = vpop.permute.xlu0 %6448
    %v6450 = vlaneseq
    %v6451 = vshrl.u32 %v6450, 7
    %v6452 = vadd.s32 %v6451, 24
    %6453 = vset.pattern.permute.xlu0 %v6452
    %6454 = vperm.xlu0 %6453, %v6431
    %v6455 = vpop.permute.xlu0 %6454
    %v6456 = vlaneseq
    %v6457 = vshrl.u32 %v6456, 7
    %v6458 = vadd.s32 %v6457, 32
    %6459 = vset.pattern.permute.xlu0 %v6458
    %6460 = vperm.xlu0 %6459, %v6431
    %v6461 = vpop.permute.xlu0 %6460
    %v6462 = vlaneseq
    %v6463 = vshrl.u32 %v6462, 7
    %v6464 = vadd.s32 %v6463, 40
    %6465 = vset.pattern.permute.xlu0 %v6464
    %6466 = vperm.xlu0 %6465, %v6431
    %v6467 = vpop.permute.xlu0 %6466
    %v6468 = vlaneseq
    %v6469 = vshrl.u32 %v6468, 7
    %v6470 = vadd.s32 %v6469, 48
    %6471 = vset.pattern.permute.xlu0 %v6470
    %6472 = vperm.xlu0 %6471, %v6431
    %v6473 = vpop.permute.xlu0 %6472
    %v6474 = vlaneseq
    %v6475 = vshrl.u32 %v6474, 7
    %v6476 = vadd.s32 %v6475, 56
    %6477 = vset.pattern.permute.xlu0 %v6476
    %6478 = vperm.xlu0 %6477, %v6431
    %v6479 = vpop.permute.xlu0 %6478
    %v6480 = vlaneseq
    %v6481 = vshrl.u32 %v6480, 7
    %v6482 = vadd.s32 %v6481, 64
    %6483 = vset.pattern.permute.xlu0 %v6482
    %6484 = vperm.xlu0 %6483, %v6431
    %v6485 = vpop.permute.xlu0 %6484
    %v6486 = vlaneseq
    %v6487 = vshrl.u32 %v6486, 7
    %v6488 = vadd.s32 %v6487, 72
    %6489 = vset.pattern.permute.xlu0 %v6488
    %6490 = vperm.xlu0 %6489, %v6431
    %v6491 = vpop.permute.xlu0 %6490
    %v6492 = vlaneseq
    %v6493 = vshrl.u32 %v6492, 7
    %v6494 = vadd.s32 %v6493, 80
    %6495 = vset.pattern.permute.xlu0 %v6494
    %6496 = vperm.xlu0 %6495, %v6431
    %v6497 = vpop.permute.xlu0 %6496
    %v6498 = vlaneseq
    %v6499 = vshrl.u32 %v6498, 7
    %v6500 = vadd.s32 %v6499, 88
    %6501 = vset.pattern.permute.xlu0 %v6500
    %6502 = vperm.xlu0 %6501, %v6431
    %v6503 = vpop.permute.xlu0 %6502
    %v6504 = vlaneseq
    %v6505 = vshrl.u32 %v6504, 7
    %v6506 = vadd.s32 %v6505, 96
    %6507 = vset.pattern.permute.xlu0 %v6506
    %6508 = vperm.xlu0 %6507, %v6431
    %v6509 = vpop.permute.xlu0 %6508
    %v6510 = vlaneseq
    %v6511 = vshrl.u32 %v6510, 7
    %v6512 = vadd.s32 %v6511, 104
    %6513 = vset.pattern.permute.xlu0 %v6512
    %6514 = vperm.xlu0 %6513, %v6431
    %v6515 = vpop.permute.xlu0 %6514
    %v6516 = vlaneseq
    %v6517 = vshrl.u32 %v6516, 7
    %v6518 = vadd.s32 %v6517, 112
    %6519 = vset.pattern.permute.xlu0 %v6518
    %6520 = vperm.xlu0 %6519, %v6431
    %v6521 = vpop.permute.xlu0 %6520
    %v6522 = vlaneseq
    %v6523 = vshrl.u32 %v6522, 7
    %v6524 = vadd.s32 %v6523, 120
    %6525 = vset.pattern.permute.xlu0 %v6524
    %6526 = vperm.xlu0 %6525, %v6431
    %v6527 = vpop.permute.xlu0 %6526
    %v6528 = vperm.slane %v143, 2
    %v6529 = vlaneseq
    %v6530 = vshrl.u32 %v6529, 7
    %6532 = vset.pattern.permute.xlu0 %v6530
    %6533 = vperm.xlu0 %6532, %v6528
    %v6534 = vpop.permute.xlu0 %6533
    %v6535 = vlaneseq
    %v6536 = vshrl.u32 %v6535, 7
    %v6537 = vadd.s32 %v6536, 8
    %6538 = vset.pattern.permute.xlu0 %v6537
    %6539 = vperm.xlu0 %6538, %v6528
    %v6540 = vpop.permute.xlu0 %6539
    %v6541 = vlaneseq
    %v6542 = vshrl.u32 %v6541, 7
    %v6543 = vadd.s32 %v6542, 16
    %6544 = vset.pattern.permute.xlu0 %v6543
    %6545 = vperm.xlu0 %6544, %v6528
    %v6546 = vpop.permute.xlu0 %6545
    %v6547 = vlaneseq
    %v6548 = vshrl.u32 %v6547, 7
    %v6549 = vadd.s32 %v6548, 24
    %6550 = vset.pattern.permute.xlu0 %v6549
    %6551 = vperm.xlu0 %6550, %v6528
    %v6552 = vpop.permute.xlu0 %6551
    %v6553 = vlaneseq
    %v6554 = vshrl.u32 %v6553, 7
    %v6555 = vadd.s32 %v6554, 32
    %6556 = vset.pattern.permute.xlu0 %v6555
    %6557 = vperm.xlu0 %6556, %v6528
    %v6558 = vpop.permute.xlu0 %6557
    %v6559 = vlaneseq
    %v6560 = vshrl.u32 %v6559, 7
    %v6561 = vadd.s32 %v6560, 40
    %6562 = vset.pattern.permute.xlu0 %v6561
    %6563 = vperm.xlu0 %6562, %v6528
    %v6564 = vpop.permute.xlu0 %6563
    %v6565 = vlaneseq
    %v6566 = vshrl.u32 %v6565, 7
    %v6567 = vadd.s32 %v6566, 48
    %6568 = vset.pattern.permute.xlu0 %v6567
    %6569 = vperm.xlu0 %6568, %v6528
    %v6570 = vpop.permute.xlu0 %6569
    %v6571 = vlaneseq
    %v6572 = vshrl.u32 %v6571, 7
    %v6573 = vadd.s32 %v6572, 56
    %6574 = vset.pattern.permute.xlu0 %v6573
    %6575 = vperm.xlu0 %6574, %v6528
    %v6576 = vpop.permute.xlu0 %6575
    %v6577 = vlaneseq
    %v6578 = vshrl.u32 %v6577, 7
    %v6579 = vadd.s32 %v6578, 64
    %6580 = vset.pattern.permute.xlu0 %v6579
    %6581 = vperm.xlu0 %6580, %v6528
    %v6582 = vpop.permute.xlu0 %6581
    %v6583 = vlaneseq
    %v6584 = vshrl.u32 %v6583, 7
    %v6585 = vadd.s32 %v6584, 72
    %6586 = vset.pattern.permute.xlu0 %v6585
    %6587 = vperm.xlu0 %6586, %v6528
    %v6588 = vpop.permute.xlu0 %6587
    %v6589 = vlaneseq
    %v6590 = vshrl.u32 %v6589, 7
    %v6591 = vadd.s32 %v6590, 80
    %6592 = vset.pattern.permute.xlu0 %v6591
    %6593 = vperm.xlu0 %6592, %v6528
    %v6594 = vpop.permute.xlu0 %6593
    %v6595 = vlaneseq
    %v6596 = vshrl.u32 %v6595, 7
    %v6597 = vadd.s32 %v6596, 88
    %6598 = vset.pattern.permute.xlu0 %v6597
    %6599 = vperm.xlu0 %6598, %v6528
    %v6600 = vpop.permute.xlu0 %6599
    %v6601 = vlaneseq
    %v6602 = vshrl.u32 %v6601, 7
    %v6603 = vadd.s32 %v6602, 96
    %6604 = vset.pattern.permute.xlu0 %v6603
    %6605 = vperm.xlu0 %6604, %v6528
    %v6606 = vpop.permute.xlu0 %6605
    %v6607 = vlaneseq
    %v6608 = vshrl.u32 %v6607, 7
    %v6609 = vadd.s32 %v6608, 104
    %6610 = vset.pattern.permute.xlu0 %v6609
    %6611 = vperm.xlu0 %6610, %v6528
    %v6612 = vpop.permute.xlu0 %6611
    %v6613 = vlaneseq
    %v6614 = vshrl.u32 %v6613, 7
    %v6615 = vadd.s32 %v6614, 112
    %6616 = vset.pattern.permute.xlu0 %v6615
    %6617 = vperm.xlu0 %6616, %v6528
    %v6618 = vpop.permute.xlu0 %6617
    %v6619 = vlaneseq
    %v6620 = vshrl.u32 %v6619, 7
    %v6621 = vadd.s32 %v6620, 120
    %6622 = vset.pattern.permute.xlu0 %v6621
    %6623 = vperm.xlu0 %6622, %v6528
    %v6624 = vpop.permute.xlu0 %6623
    %v6625 = vperm.slane %v144, 2
    %v6626 = vlaneseq
    %v6627 = vshrl.u32 %v6626, 7
    %6629 = vset.pattern.permute.xlu0 %v6627
    %6630 = vperm.xlu0 %6629, %v6625
    %v6631 = vpop.permute.xlu0 %6630
    %v6632 = vlaneseq
    %v6633 = vshrl.u32 %v6632, 7
    %v6634 = vadd.s32 %v6633, 8
    %6635 = vset.pattern.permute.xlu0 %v6634
    %6636 = vperm.xlu0 %6635, %v6625
    %v6637 = vpop.permute.xlu0 %6636
    %v6638 = vlaneseq
    %v6639 = vshrl.u32 %v6638, 7
    %v6640 = vadd.s32 %v6639, 16
    %6641 = vset.pattern.permute.xlu0 %v6640
    %6642 = vperm.xlu0 %6641, %v6625
    %v6643 = vpop.permute.xlu0 %6642
    %v6644 = vlaneseq
    %v6645 = vshrl.u32 %v6644, 7
    %v6646 = vadd.s32 %v6645, 24
    %6647 = vset.pattern.permute.xlu0 %v6646
    %6648 = vperm.xlu0 %6647, %v6625
    %v6649 = vpop.permute.xlu0 %6648
    %v6650 = vlaneseq
    %v6651 = vshrl.u32 %v6650, 7
    %v6652 = vadd.s32 %v6651, 32
    %6653 = vset.pattern.permute.xlu0 %v6652
    %6654 = vperm.xlu0 %6653, %v6625
    %v6655 = vpop.permute.xlu0 %6654
    %v6656 = vlaneseq
    %v6657 = vshrl.u32 %v6656, 7
    %v6658 = vadd.s32 %v6657, 40
    %6659 = vset.pattern.permute.xlu0 %v6658
    %6660 = vperm.xlu0 %6659, %v6625
    %v6661 = vpop.permute.xlu0 %6660
    %v6662 = vlaneseq
    %v6663 = vshrl.u32 %v6662, 7
    %v6664 = vadd.s32 %v6663, 48
    %6665 = vset.pattern.permute.xlu0 %v6664
    %6666 = vperm.xlu0 %6665, %v6625
    %v6667 = vpop.permute.xlu0 %6666
    %v6668 = vlaneseq
    %v6669 = vshrl.u32 %v6668, 7
    %v6670 = vadd.s32 %v6669, 56
    %6671 = vset.pattern.permute.xlu0 %v6670
    %6672 = vperm.xlu0 %6671, %v6625
    %v6673 = vpop.permute.xlu0 %6672
    %v6674 = vlaneseq
    %v6675 = vshrl.u32 %v6674, 7
    %v6676 = vadd.s32 %v6675, 64
    %6677 = vset.pattern.permute.xlu0 %v6676
    %6678 = vperm.xlu0 %6677, %v6625
    %v6679 = vpop.permute.xlu0 %6678
    %v6680 = vlaneseq
    %v6681 = vshrl.u32 %v6680, 7
    %v6682 = vadd.s32 %v6681, 72
    %6683 = vset.pattern.permute.xlu0 %v6682
    %6684 = vperm.xlu0 %6683, %v6625
    %v6685 = vpop.permute.xlu0 %6684
    %v6686 = vlaneseq
    %v6687 = vshrl.u32 %v6686, 7
    %v6688 = vadd.s32 %v6687, 80
    %6689 = vset.pattern.permute.xlu0 %v6688
    %6690 = vperm.xlu0 %6689, %v6625
    %v6691 = vpop.permute.xlu0 %6690
    %v6692 = vlaneseq
    %v6693 = vshrl.u32 %v6692, 7
    %v6694 = vadd.s32 %v6693, 88
    %6695 = vset.pattern.permute.xlu0 %v6694
    %6696 = vperm.xlu0 %6695, %v6625
    %v6697 = vpop.permute.xlu0 %6696
    %v6698 = vlaneseq
    %v6699 = vshrl.u32 %v6698, 7
    %v6700 = vadd.s32 %v6699, 96
    %6701 = vset.pattern.permute.xlu0 %v6700
    %6702 = vperm.xlu0 %6701, %v6625
    %v6703 = vpop.permute.xlu0 %6702
    %v6704 = vlaneseq
    %v6705 = vshrl.u32 %v6704, 7
    %v6706 = vadd.s32 %v6705, 104
    %6707 = vset.pattern.permute.xlu0 %v6706
    %6708 = vperm.xlu0 %6707, %v6625
    %v6709 = vpop.permute.xlu0 %6708
    %v6710 = vlaneseq
    %v6711 = vshrl.u32 %v6710, 7
    %v6712 = vadd.s32 %v6711, 112
    %6713 = vset.pattern.permute.xlu0 %v6712
    %6714 = vperm.xlu0 %6713, %v6625
    %v6715 = vpop.permute.xlu0 %6714
    %v6716 = vlaneseq
    %v6717 = vshrl.u32 %v6716, 7
    %v6718 = vadd.s32 %v6717, 120
    %6719 = vset.pattern.permute.xlu0 %v6718
    %6720 = vperm.xlu0 %6719, %v6625
    %v6721 = vpop.permute.xlu0 %6720
    %v6722 = vperm.slane %v145, 2
    %v6723 = vlaneseq
    %v6724 = vshrl.u32 %v6723, 7
    %6726 = vset.pattern.permute.xlu0 %v6724
    %6727 = vperm.xlu0 %6726, %v6722
    %v6728 = vpop.permute.xlu0 %6727
    %v6729 = vlaneseq
    %v6730 = vshrl.u32 %v6729, 7
    %v6731 = vadd.s32 %v6730, 8
    %6732 = vset.pattern.permute.xlu0 %v6731
    %6733 = vperm.xlu0 %6732, %v6722
    %v6734 = vpop.permute.xlu0 %6733
    %v6735 = vlaneseq
    %v6736 = vshrl.u32 %v6735, 7
    %v6737 = vadd.s32 %v6736, 16
    %6738 = vset.pattern.permute.xlu0 %v6737
    %6739 = vperm.xlu0 %6738, %v6722
    %v6740 = vpop.permute.xlu0 %6739
    %v6741 = vlaneseq
    %v6742 = vshrl.u32 %v6741, 7
    %v6743 = vadd.s32 %v6742, 24
    %6744 = vset.pattern.permute.xlu0 %v6743
    %6745 = vperm.xlu0 %6744, %v6722
    %v6746 = vpop.permute.xlu0 %6745
    %v6747 = vlaneseq
    %v6748 = vshrl.u32 %v6747, 7
    %v6749 = vadd.s32 %v6748, 32
    %6750 = vset.pattern.permute.xlu0 %v6749
    %6751 = vperm.xlu0 %6750, %v6722
    %v6752 = vpop.permute.xlu0 %6751
    %v6753 = vlaneseq
    %v6754 = vshrl.u32 %v6753, 7
    %v6755 = vadd.s32 %v6754, 40
    %6756 = vset.pattern.permute.xlu0 %v6755
    %6757 = vperm.xlu0 %6756, %v6722
    %v6758 = vpop.permute.xlu0 %6757
    %v6759 = vlaneseq
    %v6760 = vshrl.u32 %v6759, 7
    %v6761 = vadd.s32 %v6760, 48
    %6762 = vset.pattern.permute.xlu0 %v6761
    %6763 = vperm.xlu0 %6762, %v6722
    %v6764 = vpop.permute.xlu0 %6763
    %v6765 = vlaneseq
    %v6766 = vshrl.u32 %v6765, 7
    %v6767 = vadd.s32 %v6766, 56
    %6768 = vset.pattern.permute.xlu0 %v6767
    %6769 = vperm.xlu0 %6768, %v6722
    %v6770 = vpop.permute.xlu0 %6769
    %v6771 = vlaneseq
    %v6772 = vshrl.u32 %v6771, 7
    %v6773 = vadd.s32 %v6772, 64
    %6774 = vset.pattern.permute.xlu0 %v6773
    %6775 = vperm.xlu0 %6774, %v6722
    %v6776 = vpop.permute.xlu0 %6775
    %v6777 = vlaneseq
    %v6778 = vshrl.u32 %v6777, 7
    %v6779 = vadd.s32 %v6778, 72
    %6780 = vset.pattern.permute.xlu0 %v6779
    %6781 = vperm.xlu0 %6780, %v6722
    %v6782 = vpop.permute.xlu0 %6781
    %v6783 = vlaneseq
    %v6784 = vshrl.u32 %v6783, 7
    %v6785 = vadd.s32 %v6784, 80
    %6786 = vset.pattern.permute.xlu0 %v6785
    %6787 = vperm.xlu0 %6786, %v6722
    %v6788 = vpop.permute.xlu0 %6787
    %v6789 = vlaneseq
    %v6790 = vshrl.u32 %v6789, 7
    %v6791 = vadd.s32 %v6790, 88
    %6792 = vset.pattern.permute.xlu0 %v6791
    %6793 = vperm.xlu0 %6792, %v6722
    %v6794 = vpop.permute.xlu0 %6793
    %v6795 = vlaneseq
    %v6796 = vshrl.u32 %v6795, 7
    %v6797 = vadd.s32 %v6796, 96
    %6798 = vset.pattern.permute.xlu0 %v6797
    %6799 = vperm.xlu0 %6798, %v6722
    %v6800 = vpop.permute.xlu0 %6799
    %v6801 = vlaneseq
    %v6802 = vshrl.u32 %v6801, 7
    %v6803 = vadd.s32 %v6802, 104
    %6804 = vset.pattern.permute.xlu0 %v6803
    %6805 = vperm.xlu0 %6804, %v6722
    %v6806 = vpop.permute.xlu0 %6805
    %v6807 = vlaneseq
    %v6808 = vshrl.u32 %v6807, 7
    %v6809 = vadd.s32 %v6808, 112
    %6810 = vset.pattern.permute.xlu0 %v6809
    %6811 = vperm.xlu0 %6810, %v6722
    %v6812 = vpop.permute.xlu0 %6811
    %v6813 = vlaneseq
    %v6814 = vshrl.u32 %v6813, 7
    %v6815 = vadd.s32 %v6814, 120
    %6816 = vset.pattern.permute.xlu0 %v6815
    %6817 = vperm.xlu0 %6816, %v6722
    %v6818 = vpop.permute.xlu0 %6817
    %v6819 = vperm.slane %v146, 2
    %v6820 = vlaneseq
    %v6821 = vshrl.u32 %v6820, 7
    %6823 = vset.pattern.permute.xlu0 %v6821
    %6824 = vperm.xlu0 %6823, %v6819
    %v6825 = vpop.permute.xlu0 %6824
    %v6826 = vlaneseq
    %v6827 = vshrl.u32 %v6826, 7
    %v6828 = vadd.s32 %v6827, 8
    %6829 = vset.pattern.permute.xlu0 %v6828
    %6830 = vperm.xlu0 %6829, %v6819
    %v6831 = vpop.permute.xlu0 %6830
    %v6832 = vlaneseq
    %v6833 = vshrl.u32 %v6832, 7
    %v6834 = vadd.s32 %v6833, 16
    %6835 = vset.pattern.permute.xlu0 %v6834
    %6836 = vperm.xlu0 %6835, %v6819
    %v6837 = vpop.permute.xlu0 %6836
    %v6838 = vlaneseq
    %v6839 = vshrl.u32 %v6838, 7
    %v6840 = vadd.s32 %v6839, 24
    %6841 = vset.pattern.permute.xlu0 %v6840
    %6842 = vperm.xlu0 %6841, %v6819
    %v6843 = vpop.permute.xlu0 %6842
    %v6844 = vlaneseq
    %v6845 = vshrl.u32 %v6844, 7
    %v6846 = vadd.s32 %v6845, 32
    %6847 = vset.pattern.permute.xlu0 %v6846
    %6848 = vperm.xlu0 %6847, %v6819
    %v6849 = vpop.permute.xlu0 %6848
    %v6850 = vlaneseq
    %v6851 = vshrl.u32 %v6850, 7
    %v6852 = vadd.s32 %v6851, 40
    %6853 = vset.pattern.permute.xlu0 %v6852
    %6854 = vperm.xlu0 %6853, %v6819
    %v6855 = vpop.permute.xlu0 %6854
    %v6856 = vlaneseq
    %v6857 = vshrl.u32 %v6856, 7
    %v6858 = vadd.s32 %v6857, 48
    %6859 = vset.pattern.permute.xlu0 %v6858
    %6860 = vperm.xlu0 %6859, %v6819
    %v6861 = vpop.permute.xlu0 %6860
    %v6862 = vlaneseq
    %v6863 = vshrl.u32 %v6862, 7
    %v6864 = vadd.s32 %v6863, 56
    %6865 = vset.pattern.permute.xlu0 %v6864
    %6866 = vperm.xlu0 %6865, %v6819
    %v6867 = vpop.permute.xlu0 %6866
    %v6868 = vlaneseq
    %v6869 = vshrl.u32 %v6868, 7
    %v6870 = vadd.s32 %v6869, 64
    %6871 = vset.pattern.permute.xlu0 %v6870
    %6872 = vperm.xlu0 %6871, %v6819
    %v6873 = vpop.permute.xlu0 %6872
    %v6874 = vlaneseq
    %v6875 = vshrl.u32 %v6874, 7
    %v6876 = vadd.s32 %v6875, 72
    %6877 = vset.pattern.permute.xlu0 %v6876
    %6878 = vperm.xlu0 %6877, %v6819
    %v6879 = vpop.permute.xlu0 %6878
    %v6880 = vlaneseq
    %v6881 = vshrl.u32 %v6880, 7
    %v6882 = vadd.s32 %v6881, 80
    %6883 = vset.pattern.permute.xlu0 %v6882
    %6884 = vperm.xlu0 %6883, %v6819
    %v6885 = vpop.permute.xlu0 %6884
    %v6886 = vlaneseq
    %v6887 = vshrl.u32 %v6886, 7
    %v6888 = vadd.s32 %v6887, 88
    %6889 = vset.pattern.permute.xlu0 %v6888
    %6890 = vperm.xlu0 %6889, %v6819
    %v6891 = vpop.permute.xlu0 %6890
    %v6892 = vlaneseq
    %v6893 = vshrl.u32 %v6892, 7
    %v6894 = vadd.s32 %v6893, 96
    %6895 = vset.pattern.permute.xlu0 %v6894
    %6896 = vperm.xlu0 %6895, %v6819
    %v6897 = vpop.permute.xlu0 %6896
    %v6898 = vlaneseq
    %v6899 = vshrl.u32 %v6898, 7
    %v6900 = vadd.s32 %v6899, 104
    %6901 = vset.pattern.permute.xlu0 %v6900
    %6902 = vperm.xlu0 %6901, %v6819
    %v6903 = vpop.permute.xlu0 %6902
    %v6904 = vlaneseq
    %v6905 = vshrl.u32 %v6904, 7
    %v6906 = vadd.s32 %v6905, 112
    %6907 = vset.pattern.permute.xlu0 %v6906
    %6908 = vperm.xlu0 %6907, %v6819
    %v6909 = vpop.permute.xlu0 %6908
    %v6910 = vlaneseq
    %v6911 = vshrl.u32 %v6910, 7
    %v6912 = vadd.s32 %v6911, 120
    %6913 = vset.pattern.permute.xlu0 %v6912
    %6914 = vperm.xlu0 %6913, %v6819
    %v6915 = vpop.permute.xlu0 %6914
    %v7172 = vmul.f32 %v5348, %v5370
    %v7173 = vmul.f32 %v5348, %v5376
    %v7174 = vmul.f32 %v5348, %v5382
    %v7175 = vmul.f32 %v5348, %v5388
    %v7176 = vmul.f32 %v5348, %v5394
    %v7177 = vmul.f32 %v5348, %v5400
    %v7178 = vmul.f32 %v5348, %v5406
    %v7179 = vmul.f32 %v5348, %v5412
    %v7180 = vmul.f32 %v5348, %v5418
    %v7181 = vmul.f32 %v5348, %v5424
    %v7182 = vmul.f32 %v5348, %v5430
    %v7183 = vmul.f32 %v5348, %v5436
    %v7184 = vmul.f32 %v5348, %v5442
    %v7185 = vmul.f32 %v5348, %v5448
    %v7186 = vmul.f32 %v5348, %v5454
    %v7187 = vmul.f32 %v5348, %v5460
    %v7188 = vmul.f32 %v5349, %v5467
    %v7189 = vmul.f32 %v5349, %v5473
    %v7190 = vmul.f32 %v5349, %v5479
    %v7191 = vmul.f32 %v5349, %v5485
    %v7192 = vmul.f32 %v5349, %v5491
    %v7193 = vmul.f32 %v5349, %v5497
    %v7194 = vmul.f32 %v5349, %v5503
    %v7195 = vmul.f32 %v5349, %v5509
    %v7196 = vmul.f32 %v5349, %v5515
    %v7197 = vmul.f32 %v5349, %v5521
    %v7198 = vmul.f32 %v5349, %v5527
    %v7199 = vmul.f32 %v5349, %v5533
    %v7200 = vmul.f32 %v5349, %v5539
    %v7201 = vmul.f32 %v5349, %v5545
    %v7202 = vmul.f32 %v5349, %v5551
    %v7203 = vmul.f32 %v5349, %v5557
    %v7204 = vmul.f32 %v5350, %v5564
    %v7205 = vmul.f32 %v5350, %v5570
    %v7206 = vmul.f32 %v5350, %v5576
    %v7207 = vmul.f32 %v5350, %v5582
    %v7208 = vmul.f32 %v5350, %v5588
    %v7209 = vmul.f32 %v5350, %v5594
    %v7210 = vmul.f32 %v5350, %v5600
    %v7211 = vmul.f32 %v5350, %v5606
    %v7212 = vmul.f32 %v5350, %v5612
    %v7213 = vmul.f32 %v5350, %v5618
    %v7214 = vmul.f32 %v5350, %v5624
    %v7215 = vmul.f32 %v5350, %v5630
    %v7216 = vmul.f32 %v5350, %v5636
    %v7217 = vmul.f32 %v5350, %v5642
    %v7218 = vmul.f32 %v5350, %v5648
    %v7219 = vmul.f32 %v5350, %v5654
    %v7220 = vmul.f32 %v5351, %v5661
    %v7221 = vmul.f32 %v5351, %v5667
    %v7222 = vmul.f32 %v5351, %v5673
    %v7223 = vmul.f32 %v5351, %v5679
    %v7224 = vmul.f32 %v5351, %v5685
    %v7225 = vmul.f32 %v5351, %v5691
    %v7226 = vmul.f32 %v5351, %v5697
    %v7227 = vmul.f32 %v5351, %v5703
    %v7228 = vmul.f32 %v5351, %v5709
    %v7229 = vmul.f32 %v5351, %v5715
    %v7230 = vmul.f32 %v5351, %v5721
    %v7231 = vmul.f32 %v5351, %v5727
    %v7232 = vmul.f32 %v5351, %v5733
    %v7233 = vmul.f32 %v5351, %v5739
    %v7234 = vmul.f32 %v5351, %v5745
    %v7235 = vmul.f32 %v5351, %v5751
    %v7236 = vmul.f32 %v5352, %v5758
    %v7237 = vmul.f32 %v5352, %v5764
    %v7238 = vmul.f32 %v5352, %v5770
    %v7239 = vmul.f32 %v5352, %v5776
    %v7240 = vmul.f32 %v5352, %v5782
    %v7241 = vmul.f32 %v5352, %v5788
    %v7242 = vmul.f32 %v5352, %v5794
    %v7243 = vmul.f32 %v5352, %v5800
    %v7244 = vmul.f32 %v5352, %v5806
    %v7245 = vmul.f32 %v5352, %v5812
    %v7246 = vmul.f32 %v5352, %v5818
    %v7247 = vmul.f32 %v5352, %v5824
    %v7248 = vmul.f32 %v5352, %v5830
    %v7249 = vmul.f32 %v5352, %v5836
    %v7250 = vmul.f32 %v5352, %v5842
    %v7251 = vmul.f32 %v5352, %v5848
    %v7252 = vmul.f32 %v5353, %v5855
    %v7253 = vmul.f32 %v5353, %v5861
    %v7254 = vmul.f32 %v5353, %v5867
    %v7255 = vmul.f32 %v5353, %v5873
    %v7256 = vmul.f32 %v5353, %v5879
    %v7257 = vmul.f32 %v5353, %v5885
    %v7258 = vmul.f32 %v5353, %v5891
    %v7259 = vmul.f32 %v5353, %v5897
    %v7260 = vmul.f32 %v5353, %v5903
    %v7261 = vmul.f32 %v5353, %v5909
    %v7262 = vmul.f32 %v5353, %v5915
    %v7263 = vmul.f32 %v5353, %v5921
    %v7264 = vmul.f32 %v5353, %v5927
    %v7265 = vmul.f32 %v5353, %v5933
    %v7266 = vmul.f32 %v5353, %v5939
    %v7267 = vmul.f32 %v5353, %v5945
    %v7268 = vmul.f32 %v5354, %v5952
    %v7269 = vmul.f32 %v5354, %v5958
    %v7270 = vmul.f32 %v5354, %v5964
    %v7271 = vmul.f32 %v5354, %v5970
    %v7272 = vmul.f32 %v5354, %v5976
    %v7273 = vmul.f32 %v5354, %v5982
    %v7274 = vmul.f32 %v5354, %v5988
    %v7275 = vmul.f32 %v5354, %v5994
    %v7276 = vmul.f32 %v5354, %v6000
    %v7277 = vmul.f32 %v5354, %v6006
    %v7278 = vmul.f32 %v5354, %v6012
    %v7279 = vmul.f32 %v5354, %v6018
    %v7280 = vmul.f32 %v5354, %v6024
    %v7281 = vmul.f32 %v5354, %v6030
    %v7282 = vmul.f32 %v5354, %v6036
    %v7283 = vmul.f32 %v5354, %v6042
    %v7284 = vmul.f32 %v5355, %v6049
    %v7285 = vmul.f32 %v5355, %v6055
    %v7286 = vmul.f32 %v5355, %v6061
    %v7287 = vmul.f32 %v5355, %v6067
    %v7288 = vmul.f32 %v5355, %v6073
    %v7289 = vmul.f32 %v5355, %v6079
    %v7290 = vmul.f32 %v5355, %v6085
    %v7291 = vmul.f32 %v5355, %v6091
    %v7292 = vmul.f32 %v5355, %v6097
    %v7293 = vmul.f32 %v5355, %v6103
    %v7294 = vmul.f32 %v5355, %v6109
    %v7295 = vmul.f32 %v5355, %v6115
    %v7296 = vmul.f32 %v5355, %v6121
    %v7297 = vmul.f32 %v5355, %v6127
    %v7298 = vmul.f32 %v5355, %v6133
    %v7299 = vmul.f32 %v5355, %v6139
    %v7300 = vmul.f32 %v5356, %v6146
    %v7301 = vmul.f32 %v5356, %v6152
    %v7302 = vmul.f32 %v5356, %v6158
    %v7303 = vmul.f32 %v5356, %v6164
    %v7304 = vmul.f32 %v5356, %v6170
    %v7305 = vmul.f32 %v5356, %v6176
    %v7306 = vmul.f32 %v5356, %v6182
    %v7307 = vmul.f32 %v5356, %v6188
    %v7308 = vmul.f32 %v5356, %v6194
    %v7309 = vmul.f32 %v5356, %v6200
    %v7310 = vmul.f32 %v5356, %v6206
    %v7311 = vmul.f32 %v5356, %v6212
    %v7312 = vmul.f32 %v5356, %v6218
    %v7313 = vmul.f32 %v5356, %v6224
    %v7314 = vmul.f32 %v5356, %v6230
    %v7315 = vmul.f32 %v5356, %v6236
    %v7316 = vmul.f32 %v5357, %v6243
    %v7317 = vmul.f32 %v5357, %v6249
    %v7318 = vmul.f32 %v5357, %v6255
    %v7319 = vmul.f32 %v5357, %v6261
    %v7320 = vmul.f32 %v5357, %v6267
    %v7321 = vmul.f32 %v5357, %v6273
    %v7322 = vmul.f32 %v5357, %v6279
    %v7323 = vmul.f32 %v5357, %v6285
    %v7324 = vmul.f32 %v5357, %v6291
    %v7325 = vmul.f32 %v5357, %v6297
    %v7326 = vmul.f32 %v5357, %v6303
    %v7327 = vmul.f32 %v5357, %v6309
    %v7328 = vmul.f32 %v5357, %v6315
    %v7329 = vmul.f32 %v5357, %v6321
    %v7330 = vmul.f32 %v5357, %v6327
    %v7331 = vmul.f32 %v5357, %v6333
    %v7332 = vmul.f32 %v5358, %v6340
    %v7333 = vmul.f32 %v5358, %v6346
    %v7334 = vmul.f32 %v5358, %v6352
    %v7335 = vmul.f32 %v5358, %v6358
    %v7336 = vmul.f32 %v5358, %v6364
    %v7337 = vmul.f32 %v5358, %v6370
    %v7338 = vmul.f32 %v5358, %v6376
    %v7339 = vmul.f32 %v5358, %v6382
    %v7340 = vmul.f32 %v5358, %v6388
    %v7341 = vmul.f32 %v5358, %v6394
    %v7342 = vmul.f32 %v5358, %v6400
    %v7343 = vmul.f32 %v5358, %v6406
    %v7344 = vmul.f32 %v5358, %v6412
    %v7345 = vmul.f32 %v5358, %v6418
    %v7346 = vmul.f32 %v5358, %v6424
    %v7347 = vmul.f32 %v5358, %v6430
    %v7348 = vmul.f32 %v5359, %v6437
    %v7349 = vmul.f32 %v5359, %v6443
    %v7350 = vmul.f32 %v5359, %v6449
    %v7351 = vmul.f32 %v5359, %v6455
    %v7352 = vmul.f32 %v5359, %v6461
    %v7353 = vmul.f32 %v5359, %v6467
    %v7354 = vmul.f32 %v5359, %v6473
    %v7355 = vmul.f32 %v5359, %v6479
    %v7356 = vmul.f32 %v5359, %v6485
    %v7357 = vmul.f32 %v5359, %v6491
    %v7358 = vmul.f32 %v5359, %v6497
    %v7359 = vmul.f32 %v5359, %v6503
    %v7360 = vmul.f32 %v5359, %v6509
    %v7361 = vmul.f32 %v5359, %v6515
    %v7362 = vmul.f32 %v5359, %v6521
    %v7363 = vmul.f32 %v5359, %v6527
    %v7364 = vmul.f32 %v5360, %v6534
    %v7365 = vmul.f32 %v5360, %v6540
    %v7366 = vmul.f32 %v5360, %v6546
    %v7367 = vmul.f32 %v5360, %v6552
    %v7368 = vmul.f32 %v5360, %v6558
    %v7369 = vmul.f32 %v5360, %v6564
    %v7370 = vmul.f32 %v5360, %v6570
    %v7371 = vmul.f32 %v5360, %v6576
    %v7372 = vmul.f32 %v5360, %v6582
    %v7373 = vmul.f32 %v5360, %v6588
    %v7374 = vmul.f32 %v5360, %v6594
    %v7375 = vmul.f32 %v5360, %v6600
    %v7376 = vmul.f32 %v5360, %v6606
    %v7377 = vmul.f32 %v5360, %v6612
    %v7378 = vmul.f32 %v5360, %v6618
    %v7379 = vmul.f32 %v5360, %v6624
    %v7380 = vmul.f32 %v5361, %v6631
    %v7381 = vmul.f32 %v5361, %v6637
    %v7382 = vmul.f32 %v5361, %v6643
    %v7383 = vmul.f32 %v5361, %v6649
    %v7384 = vmul.f32 %v5361, %v6655
    %v7385 = vmul.f32 %v5361, %v6661
    %v7386 = vmul.f32 %v5361, %v6667
    %v7387 = vmul.f32 %v5361, %v6673
    %v7388 = vmul.f32 %v5361, %v6679
    %v7389 = vmul.f32 %v5361, %v6685
    %v7390 = vmul.f32 %v5361, %v6691
    %v7391 = vmul.f32 %v5361, %v6697
    %v7392 = vmul.f32 %v5361, %v6703
    %v7393 = vmul.f32 %v5361, %v6709
    %v7394 = vmul.f32 %v5361, %v6715
    %v7395 = vmul.f32 %v5361, %v6721
    %v7396 = vmul.f32 %v5362, %v6728
    %v7397 = vmul.f32 %v5362, %v6734
    %v7398 = vmul.f32 %v5362, %v6740
    %v7399 = vmul.f32 %v5362, %v6746
    %v7400 = vmul.f32 %v5362, %v6752
    %v7401 = vmul.f32 %v5362, %v6758
    %v7402 = vmul.f32 %v5362, %v6764
    %v7403 = vmul.f32 %v5362, %v6770
    %v7404 = vmul.f32 %v5362, %v6776
    %v7405 = vmul.f32 %v5362, %v6782
    %v7406 = vmul.f32 %v5362, %v6788
    %v7407 = vmul.f32 %v5362, %v6794
    %v7408 = vmul.f32 %v5362, %v6800
    %v7409 = vmul.f32 %v5362, %v6806
    %v7410 = vmul.f32 %v5362, %v6812
    %v7411 = vmul.f32 %v5362, %v6818
    %v7412 = vmul.f32 %v5363, %v6825
    %v7413 = vmul.f32 %v5363, %v6831
    %v7414 = vmul.f32 %v5363, %v6837
    %v7415 = vmul.f32 %v5363, %v6843
    %v7416 = vmul.f32 %v5363, %v6849
    %v7417 = vmul.f32 %v5363, %v6855
    %v7418 = vmul.f32 %v5363, %v6861
    %v7419 = vmul.f32 %v5363, %v6867
    %v7420 = vmul.f32 %v5363, %v6873
    %v7421 = vmul.f32 %v5363, %v6879
    %v7422 = vmul.f32 %v5363, %v6885
    %v7423 = vmul.f32 %v5363, %v6891
    %v7424 = vmul.f32 %v5363, %v6897
    %v7425 = vmul.f32 %v5363, %v6903
    %v7426 = vmul.f32 %v5363, %v6909
    %v7427 = vmul.f32 %v5363, %v6915
    %v7428 = vadd.f32 %v5092, %v7172
    %v7429 = vadd.f32 %v5093, %v7173
    %v7430 = vadd.f32 %v5094, %v7174
    %v7431 = vadd.f32 %v5095, %v7175
    %v7432 = vadd.f32 %v5096, %v7176
    %v7433 = vadd.f32 %v5097, %v7177
    %v7434 = vadd.f32 %v5098, %v7178
    %v7435 = vadd.f32 %v5099, %v7179
    %v7436 = vadd.f32 %v5100, %v7180
    %v7437 = vadd.f32 %v5101, %v7181
    %v7438 = vadd.f32 %v5102, %v7182
    %v7439 = vadd.f32 %v5103, %v7183
    %v7440 = vadd.f32 %v5104, %v7184
    %v7441 = vadd.f32 %v5105, %v7185
    %v7442 = vadd.f32 %v5106, %v7186
    %v7443 = vadd.f32 %v5107, %v7187
    %v7444 = vadd.f32 %v5108, %v7188
    %v7445 = vadd.f32 %v5109, %v7189
    %v7446 = vadd.f32 %v5110, %v7190
    %v7447 = vadd.f32 %v5111, %v7191
    %v7448 = vadd.f32 %v5112, %v7192
    %v7449 = vadd.f32 %v5113, %v7193
    %v7450 = vadd.f32 %v5114, %v7194
    %v7451 = vadd.f32 %v5115, %v7195
    %v7452 = vadd.f32 %v5116, %v7196
    %v7453 = vadd.f32 %v5117, %v7197
    %v7454 = vadd.f32 %v5118, %v7198
    %v7455 = vadd.f32 %v5119, %v7199
    %v7456 = vadd.f32 %v5120, %v7200
    %v7457 = vadd.f32 %v5121, %v7201
    %v7458 = vadd.f32 %v5122, %v7202
    %v7459 = vadd.f32 %v5123, %v7203
    %v7460 = vadd.f32 %v5124, %v7204
    %v7461 = vadd.f32 %v5125, %v7205
    %v7462 = vadd.f32 %v5126, %v7206
    %v7463 = vadd.f32 %v5127, %v7207
    %v7464 = vadd.f32 %v5128, %v7208
    %v7465 = vadd.f32 %v5129, %v7209
    %v7466 = vadd.f32 %v5130, %v7210
    %v7467 = vadd.f32 %v5131, %v7211
    %v7468 = vadd.f32 %v5132, %v7212
    %v7469 = vadd.f32 %v5133, %v7213
    %v7470 = vadd.f32 %v5134, %v7214
    %v7471 = vadd.f32 %v5135, %v7215
    %v7472 = vadd.f32 %v5136, %v7216
    %v7473 = vadd.f32 %v5137, %v7217
    %v7474 = vadd.f32 %v5138, %v7218
    %v7475 = vadd.f32 %v5139, %v7219
    %v7476 = vadd.f32 %v5140, %v7220
    %v7477 = vadd.f32 %v5141, %v7221
    %v7478 = vadd.f32 %v5142, %v7222
    %v7479 = vadd.f32 %v5143, %v7223
    %v7480 = vadd.f32 %v5144, %v7224
    %v7481 = vadd.f32 %v5145, %v7225
    %v7482 = vadd.f32 %v5146, %v7226
    %v7483 = vadd.f32 %v5147, %v7227
    %v7484 = vadd.f32 %v5148, %v7228
    %v7485 = vadd.f32 %v5149, %v7229
    %v7486 = vadd.f32 %v5150, %v7230
    %v7487 = vadd.f32 %v5151, %v7231
    %v7488 = vadd.f32 %v5152, %v7232
    %v7489 = vadd.f32 %v5153, %v7233
    %v7490 = vadd.f32 %v5154, %v7234
    %v7491 = vadd.f32 %v5155, %v7235
    %v7492 = vadd.f32 %v5156, %v7236
    %v7493 = vadd.f32 %v5157, %v7237
    %v7494 = vadd.f32 %v5158, %v7238
    %v7495 = vadd.f32 %v5159, %v7239
    %v7496 = vadd.f32 %v5160, %v7240
    %v7497 = vadd.f32 %v5161, %v7241
    %v7498 = vadd.f32 %v5162, %v7242
    %v7499 = vadd.f32 %v5163, %v7243
    %v7500 = vadd.f32 %v5164, %v7244
    %v7501 = vadd.f32 %v5165, %v7245
    %v7502 = vadd.f32 %v5166, %v7246
    %v7503 = vadd.f32 %v5167, %v7247
    %v7504 = vadd.f32 %v5168, %v7248
    %v7505 = vadd.f32 %v5169, %v7249
    %v7506 = vadd.f32 %v5170, %v7250
    %v7507 = vadd.f32 %v5171, %v7251
    %v7508 = vadd.f32 %v5172, %v7252
    %v7509 = vadd.f32 %v5173, %v7253
    %v7510 = vadd.f32 %v5174, %v7254
    %v7511 = vadd.f32 %v5175, %v7255
    %v7512 = vadd.f32 %v5176, %v7256
    %v7513 = vadd.f32 %v5177, %v7257
    %v7514 = vadd.f32 %v5178, %v7258
    %v7515 = vadd.f32 %v5179, %v7259
    %v7516 = vadd.f32 %v5180, %v7260
    %v7517 = vadd.f32 %v5181, %v7261
    %v7518 = vadd.f32 %v5182, %v7262
    %v7519 = vadd.f32 %v5183, %v7263
    %v7520 = vadd.f32 %v5184, %v7264
    %v7521 = vadd.f32 %v5185, %v7265
    %v7522 = vadd.f32 %v5186, %v7266
    %v7523 = vadd.f32 %v5187, %v7267
    %v7524 = vadd.f32 %v5188, %v7268
    %v7525 = vadd.f32 %v5189, %v7269
    %v7526 = vadd.f32 %v5190, %v7270
    %v7527 = vadd.f32 %v5191, %v7271
    %v7528 = vadd.f32 %v5192, %v7272
    %v7529 = vadd.f32 %v5193, %v7273
    %v7530 = vadd.f32 %v5194, %v7274
    %v7531 = vadd.f32 %v5195, %v7275
    %v7532 = vadd.f32 %v5196, %v7276
    %v7533 = vadd.f32 %v5197, %v7277
    %v7534 = vadd.f32 %v5198, %v7278
    %v7535 = vadd.f32 %v5199, %v7279
    %v7536 = vadd.f32 %v5200, %v7280
    %v7537 = vadd.f32 %v5201, %v7281
    %v7538 = vadd.f32 %v5202, %v7282
    %v7539 = vadd.f32 %v5203, %v7283
    %v7540 = vadd.f32 %v5204, %v7284
    %v7541 = vadd.f32 %v5205, %v7285
    %v7542 = vadd.f32 %v5206, %v7286
    %v7543 = vadd.f32 %v5207, %v7287
    %v7544 = vadd.f32 %v5208, %v7288
    %v7545 = vadd.f32 %v5209, %v7289
    %v7546 = vadd.f32 %v5210, %v7290
    %v7547 = vadd.f32 %v5211, %v7291
    %v7548 = vadd.f32 %v5212, %v7292
    %v7549 = vadd.f32 %v5213, %v7293
    %v7550 = vadd.f32 %v5214, %v7294
    %v7551 = vadd.f32 %v5215, %v7295
    %v7552 = vadd.f32 %v5216, %v7296
    %v7553 = vadd.f32 %v5217, %v7297
    %v7554 = vadd.f32 %v5218, %v7298
    %v7555 = vadd.f32 %v5219, %v7299
    %v7556 = vadd.f32 %v5220, %v7300
    %v7557 = vadd.f32 %v5221, %v7301
    %v7558 = vadd.f32 %v5222, %v7302
    %v7559 = vadd.f32 %v5223, %v7303
    %v7560 = vadd.f32 %v5224, %v7304
    %v7561 = vadd.f32 %v5225, %v7305
    %v7562 = vadd.f32 %v5226, %v7306
    %v7563 = vadd.f32 %v5227, %v7307
    %v7564 = vadd.f32 %v5228, %v7308
    %v7565 = vadd.f32 %v5229, %v7309
    %v7566 = vadd.f32 %v5230, %v7310
    %v7567 = vadd.f32 %v5231, %v7311
    %v7568 = vadd.f32 %v5232, %v7312
    %v7569 = vadd.f32 %v5233, %v7313
    %v7570 = vadd.f32 %v5234, %v7314
    %v7571 = vadd.f32 %v5235, %v7315
    %v7572 = vadd.f32 %v5236, %v7316
    %v7573 = vadd.f32 %v5237, %v7317
    %v7574 = vadd.f32 %v5238, %v7318
    %v7575 = vadd.f32 %v5239, %v7319
    %v7576 = vadd.f32 %v5240, %v7320
    %v7577 = vadd.f32 %v5241, %v7321
    %v7578 = vadd.f32 %v5242, %v7322
    %v7579 = vadd.f32 %v5243, %v7323
    %v7580 = vadd.f32 %v5244, %v7324
    %v7581 = vadd.f32 %v5245, %v7325
    %v7582 = vadd.f32 %v5246, %v7326
    %v7583 = vadd.f32 %v5247, %v7327
    %v7584 = vadd.f32 %v5248, %v7328
    %v7585 = vadd.f32 %v5249, %v7329
    %v7586 = vadd.f32 %v5250, %v7330
    %v7587 = vadd.f32 %v5251, %v7331
    %v7588 = vadd.f32 %v5252, %v7332
    %v7589 = vadd.f32 %v5253, %v7333
    %v7590 = vadd.f32 %v5254, %v7334
    %v7591 = vadd.f32 %v5255, %v7335
    %v7592 = vadd.f32 %v5256, %v7336
    %v7593 = vadd.f32 %v5257, %v7337
    %v7594 = vadd.f32 %v5258, %v7338
    %v7595 = vadd.f32 %v5259, %v7339
    %v7596 = vadd.f32 %v5260, %v7340
    %v7597 = vadd.f32 %v5261, %v7341
    %v7598 = vadd.f32 %v5262, %v7342
    %v7599 = vadd.f32 %v5263, %v7343
    %v7600 = vadd.f32 %v5264, %v7344
    %v7601 = vadd.f32 %v5265, %v7345
    %v7602 = vadd.f32 %v5266, %v7346
    %v7603 = vadd.f32 %v5267, %v7347
    %v7604 = vadd.f32 %v5268, %v7348
    %v7605 = vadd.f32 %v5269, %v7349
    %v7606 = vadd.f32 %v5270, %v7350
    %v7607 = vadd.f32 %v5271, %v7351
    %v7608 = vadd.f32 %v5272, %v7352
    %v7609 = vadd.f32 %v5273, %v7353
    %v7610 = vadd.f32 %v5274, %v7354
    %v7611 = vadd.f32 %v5275, %v7355
    %v7612 = vadd.f32 %v5276, %v7356
    %v7613 = vadd.f32 %v5277, %v7357
    %v7614 = vadd.f32 %v5278, %v7358
    %v7615 = vadd.f32 %v5279, %v7359
    %v7616 = vadd.f32 %v5280, %v7360
    %v7617 = vadd.f32 %v5281, %v7361
    %v7618 = vadd.f32 %v5282, %v7362
    %v7619 = vadd.f32 %v5283, %v7363
    %v7620 = vadd.f32 %v5284, %v7364
    %v7621 = vadd.f32 %v5285, %v7365
    %v7622 = vadd.f32 %v5286, %v7366
    %v7623 = vadd.f32 %v5287, %v7367
    %v7624 = vadd.f32 %v5288, %v7368
    %v7625 = vadd.f32 %v5289, %v7369
    %v7626 = vadd.f32 %v5290, %v7370
    %v7627 = vadd.f32 %v5291, %v7371
    %v7628 = vadd.f32 %v5292, %v7372
    %v7629 = vadd.f32 %v5293, %v7373
    %v7630 = vadd.f32 %v5294, %v7374
    %v7631 = vadd.f32 %v5295, %v7375
    %v7632 = vadd.f32 %v5296, %v7376
    %v7633 = vadd.f32 %v5297, %v7377
    %v7634 = vadd.f32 %v5298, %v7378
    %v7635 = vadd.f32 %v5299, %v7379
    %v7636 = vadd.f32 %v5300, %v7380
    %v7637 = vadd.f32 %v5301, %v7381
    %v7638 = vadd.f32 %v5302, %v7382
    %v7639 = vadd.f32 %v5303, %v7383
    %v7640 = vadd.f32 %v5304, %v7384
    %v7641 = vadd.f32 %v5305, %v7385
    %v7642 = vadd.f32 %v5306, %v7386
    %v7643 = vadd.f32 %v5307, %v7387
    %v7644 = vadd.f32 %v5308, %v7388
    %v7645 = vadd.f32 %v5309, %v7389
    %v7646 = vadd.f32 %v5310, %v7390
    %v7647 = vadd.f32 %v5311, %v7391
    %v7648 = vadd.f32 %v5312, %v7392
    %v7649 = vadd.f32 %v5313, %v7393
    %v7650 = vadd.f32 %v5314, %v7394
    %v7651 = vadd.f32 %v5315, %v7395
    %v7652 = vadd.f32 %v5316, %v7396
    %v7653 = vadd.f32 %v5317, %v7397
    %v7654 = vadd.f32 %v5318, %v7398
    %v7655 = vadd.f32 %v5319, %v7399
    %v7656 = vadd.f32 %v5320, %v7400
    %v7657 = vadd.f32 %v5321, %v7401
    %v7658 = vadd.f32 %v5322, %v7402
    %v7659 = vadd.f32 %v5323, %v7403
    %v7660 = vadd.f32 %v5324, %v7404
    %v7661 = vadd.f32 %v5325, %v7405
    %v7662 = vadd.f32 %v5326, %v7406
    %v7663 = vadd.f32 %v5327, %v7407
    %v7664 = vadd.f32 %v5328, %v7408
    %v7665 = vadd.f32 %v5329, %v7409
    %v7666 = vadd.f32 %v5330, %v7410
    %v7667 = vadd.f32 %v5331, %v7411
    %v7668 = vadd.f32 %v5332, %v7412
    %v7669 = vadd.f32 %v5333, %v7413
    %v7670 = vadd.f32 %v5334, %v7414
    %v7671 = vadd.f32 %v5335, %v7415
    %v7672 = vadd.f32 %v5336, %v7416
    %v7673 = vadd.f32 %v5337, %v7417
    %v7674 = vadd.f32 %v5338, %v7418
    %v7675 = vadd.f32 %v5339, %v7419
    %v7676 = vadd.f32 %v5340, %v7420
    %v7677 = vadd.f32 %v5341, %v7421
    %v7678 = vadd.f32 %v5342, %v7422
    %v7679 = vadd.f32 %v5343, %v7423
    %v7680 = vadd.f32 %v5344, %v7424
    %v7681 = vadd.f32 %v5345, %v7425
    %v7682 = vadd.f32 %v5346, %v7426
    %v7683 = vadd.f32 %v5347, %v7427
    %v7684 = vperm.slane %v706, 3
    %v7685 = vperm.slane %v721, 3
    %v7686 = vperm.slane %v736, 3
    %v7687 = vperm.slane %v751, 3
    %v7688 = vperm.slane %v766, 3
    %v7689 = vperm.slane %v781, 3
    %v7690 = vperm.slane %v796, 3
    %v7691 = vperm.slane %v811, 3
    %v7692 = vperm.slane %v826, 3
    %v7693 = vperm.slane %v841, 3
    %v7694 = vperm.slane %v856, 3
    %v7695 = vperm.slane %v871, 3
    %v7696 = vperm.slane %v886, 3
    %v7697 = vperm.slane %v901, 3
    %v7698 = vperm.slane %v916, 3
    %v7699 = vperm.slane %v931, 3
    %v7700 = vperm.slane %v131, 3
    %v7701 = vlaneseq
    %v7702 = vshrl.u32 %v7701, 7
    %7704 = vset.pattern.permute.xlu0 %v7702
    %7705 = vperm.xlu0 %7704, %v7700
    %v7706 = vpop.permute.xlu0 %7705
    %v7707 = vlaneseq
    %v7708 = vshrl.u32 %v7707, 7
    %v7709 = vadd.s32 %v7708, 8
    %7710 = vset.pattern.permute.xlu0 %v7709
    %7711 = vperm.xlu0 %7710, %v7700
    %v7712 = vpop.permute.xlu0 %7711
    %v7713 = vlaneseq
    %v7714 = vshrl.u32 %v7713, 7
    %v7715 = vadd.s32 %v7714, 16
    %7716 = vset.pattern.permute.xlu0 %v7715
    %7717 = vperm.xlu0 %7716, %v7700
    %v7718 = vpop.permute.xlu0 %7717
    %v7719 = vlaneseq
    %v7720 = vshrl.u32 %v7719, 7
    %v7721 = vadd.s32 %v7720, 24
    %7722 = vset.pattern.permute.xlu0 %v7721
    %7723 = vperm.xlu0 %7722, %v7700
    %v7724 = vpop.permute.xlu0 %7723
    %v7725 = vlaneseq
    %v7726 = vshrl.u32 %v7725, 7
    %v7727 = vadd.s32 %v7726, 32
    %7728 = vset.pattern.permute.xlu0 %v7727
    %7729 = vperm.xlu0 %7728, %v7700
    %v7730 = vpop.permute.xlu0 %7729
    %v7731 = vlaneseq
    %v7732 = vshrl.u32 %v7731, 7
    %v7733 = vadd.s32 %v7732, 40
    %7734 = vset.pattern.permute.xlu0 %v7733
    %7735 = vperm.xlu0 %7734, %v7700
    %v7736 = vpop.permute.xlu0 %7735
    %v7737 = vlaneseq
    %v7738 = vshrl.u32 %v7737, 7
    %v7739 = vadd.s32 %v7738, 48
    %7740 = vset.pattern.permute.xlu0 %v7739
    %7741 = vperm.xlu0 %7740, %v7700
    %v7742 = vpop.permute.xlu0 %7741
    %v7743 = vlaneseq
    %v7744 = vshrl.u32 %v7743, 7
    %v7745 = vadd.s32 %v7744, 56
    %7746 = vset.pattern.permute.xlu0 %v7745
    %7747 = vperm.xlu0 %7746, %v7700
    %v7748 = vpop.permute.xlu0 %7747
    %v7749 = vlaneseq
    %v7750 = vshrl.u32 %v7749, 7
    %v7751 = vadd.s32 %v7750, 64
    %7752 = vset.pattern.permute.xlu0 %v7751
    %7753 = vperm.xlu0 %7752, %v7700
    %v7754 = vpop.permute.xlu0 %7753
    %v7755 = vlaneseq
    %v7756 = vshrl.u32 %v7755, 7
    %v7757 = vadd.s32 %v7756, 72
    %7758 = vset.pattern.permute.xlu0 %v7757
    %7759 = vperm.xlu0 %7758, %v7700
    %v7760 = vpop.permute.xlu0 %7759
    %v7761 = vlaneseq
    %v7762 = vshrl.u32 %v7761, 7
    %v7763 = vadd.s32 %v7762, 80
    %7764 = vset.pattern.permute.xlu0 %v7763
    %7765 = vperm.xlu0 %7764, %v7700
    %v7766 = vpop.permute.xlu0 %7765
    %v7767 = vlaneseq
    %v7768 = vshrl.u32 %v7767, 7
    %v7769 = vadd.s32 %v7768, 88
    %7770 = vset.pattern.permute.xlu0 %v7769
    %7771 = vperm.xlu0 %7770, %v7700
    %v7772 = vpop.permute.xlu0 %7771
    %v7773 = vlaneseq
    %v7774 = vshrl.u32 %v7773, 7
    %v7775 = vadd.s32 %v7774, 96
    %7776 = vset.pattern.permute.xlu0 %v7775
    %7777 = vperm.xlu0 %7776, %v7700
    %v7778 = vpop.permute.xlu0 %7777
    %v7779 = vlaneseq
    %v7780 = vshrl.u32 %v7779, 7
    %v7781 = vadd.s32 %v7780, 104
    %7782 = vset.pattern.permute.xlu0 %v7781
    %7783 = vperm.xlu0 %7782, %v7700
    %v7784 = vpop.permute.xlu0 %7783
    %v7785 = vlaneseq
    %v7786 = vshrl.u32 %v7785, 7
    %v7787 = vadd.s32 %v7786, 112
    %7788 = vset.pattern.permute.xlu0 %v7787
    %7789 = vperm.xlu0 %7788, %v7700
    %v7790 = vpop.permute.xlu0 %7789
    %v7791 = vlaneseq
    %v7792 = vshrl.u32 %v7791, 7
    %v7793 = vadd.s32 %v7792, 120
    %7794 = vset.pattern.permute.xlu0 %v7793
    %7795 = vperm.xlu0 %7794, %v7700
    %v7796 = vpop.permute.xlu0 %7795
    %v7797 = vperm.slane %v132, 3
    %v7798 = vlaneseq
    %v7799 = vshrl.u32 %v7798, 7
    %7801 = vset.pattern.permute.xlu0 %v7799
    %7802 = vperm.xlu0 %7801, %v7797
    %v7803 = vpop.permute.xlu0 %7802
    %v7804 = vlaneseq
    %v7805 = vshrl.u32 %v7804, 7
    %v7806 = vadd.s32 %v7805, 8
    %7807 = vset.pattern.permute.xlu0 %v7806
    %7808 = vperm.xlu0 %7807, %v7797
    %v7809 = vpop.permute.xlu0 %7808
    %v7810 = vlaneseq
    %v7811 = vshrl.u32 %v7810, 7
    %v7812 = vadd.s32 %v7811, 16
    %7813 = vset.pattern.permute.xlu0 %v7812
    %7814 = vperm.xlu0 %7813, %v7797
    %v7815 = vpop.permute.xlu0 %7814
    %v7816 = vlaneseq
    %v7817 = vshrl.u32 %v7816, 7
    %v7818 = vadd.s32 %v7817, 24
    %7819 = vset.pattern.permute.xlu0 %v7818
    %7820 = vperm.xlu0 %7819, %v7797
    %v7821 = vpop.permute.xlu0 %7820
    %v7822 = vlaneseq
    %v7823 = vshrl.u32 %v7822, 7
    %v7824 = vadd.s32 %v7823, 32
    %7825 = vset.pattern.permute.xlu0 %v7824
    %7826 = vperm.xlu0 %7825, %v7797
    %v7827 = vpop.permute.xlu0 %7826
    %v7828 = vlaneseq
    %v7829 = vshrl.u32 %v7828, 7
    %v7830 = vadd.s32 %v7829, 40
    %7831 = vset.pattern.permute.xlu0 %v7830
    %7832 = vperm.xlu0 %7831, %v7797
    %v7833 = vpop.permute.xlu0 %7832
    %v7834 = vlaneseq
    %v7835 = vshrl.u32 %v7834, 7
    %v7836 = vadd.s32 %v7835, 48
    %7837 = vset.pattern.permute.xlu0 %v7836
    %7838 = vperm.xlu0 %7837, %v7797
    %v7839 = vpop.permute.xlu0 %7838
    %v7840 = vlaneseq
    %v7841 = vshrl.u32 %v7840, 7
    %v7842 = vadd.s32 %v7841, 56
    %7843 = vset.pattern.permute.xlu0 %v7842
    %7844 = vperm.xlu0 %7843, %v7797
    %v7845 = vpop.permute.xlu0 %7844
    %v7846 = vlaneseq
    %v7847 = vshrl.u32 %v7846, 7
    %v7848 = vadd.s32 %v7847, 64
    %7849 = vset.pattern.permute.xlu0 %v7848
    %7850 = vperm.xlu0 %7849, %v7797
    %v7851 = vpop.permute.xlu0 %7850
    %v7852 = vlaneseq
    %v7853 = vshrl.u32 %v7852, 7
    %v7854 = vadd.s32 %v7853, 72
    %7855 = vset.pattern.permute.xlu0 %v7854
    %7856 = vperm.xlu0 %7855, %v7797
    %v7857 = vpop.permute.xlu0 %7856
    %v7858 = vlaneseq
    %v7859 = vshrl.u32 %v7858, 7
    %v7860 = vadd.s32 %v7859, 80
    %7861 = vset.pattern.permute.xlu0 %v7860
    %7862 = vperm.xlu0 %7861, %v7797
    %v7863 = vpop.permute.xlu0 %7862
    %v7864 = vlaneseq
    %v7865 = vshrl.u32 %v7864, 7
    %v7866 = vadd.s32 %v7865, 88
    %7867 = vset.pattern.permute.xlu0 %v7866
    %7868 = vperm.xlu0 %7867, %v7797
    %v7869 = vpop.permute.xlu0 %7868
    %v7870 = vlaneseq
    %v7871 = vshrl.u32 %v7870, 7
    %v7872 = vadd.s32 %v7871, 96
    %7873 = vset.pattern.permute.xlu0 %v7872
    %7874 = vperm.xlu0 %7873, %v7797
    %v7875 = vpop.permute.xlu0 %7874
    %v7876 = vlaneseq
    %v7877 = vshrl.u32 %v7876, 7
    %v7878 = vadd.s32 %v7877, 104
    %7879 = vset.pattern.permute.xlu0 %v7878
    %7880 = vperm.xlu0 %7879, %v7797
    %v7881 = vpop.permute.xlu0 %7880
    %v7882 = vlaneseq
    %v7883 = vshrl.u32 %v7882, 7
    %v7884 = vadd.s32 %v7883, 112
    %7885 = vset.pattern.permute.xlu0 %v7884
    %7886 = vperm.xlu0 %7885, %v7797
    %v7887 = vpop.permute.xlu0 %7886
    %v7888 = vlaneseq
    %v7889 = vshrl.u32 %v7888, 7
    %v7890 = vadd.s32 %v7889, 120
    %7891 = vset.pattern.permute.xlu0 %v7890
    %7892 = vperm.xlu0 %7891, %v7797
    %v7893 = vpop.permute.xlu0 %7892
    %v7894 = vperm.slane %v133, 3
    %v7895 = vlaneseq
    %v7896 = vshrl.u32 %v7895, 7
    %7898 = vset.pattern.permute.xlu0 %v7896
    %7899 = vperm.xlu0 %7898, %v7894
    %v7900 = vpop.permute.xlu0 %7899
    %v7901 = vlaneseq
    %v7902 = vshrl.u32 %v7901, 7
    %v7903 = vadd.s32 %v7902, 8
    %7904 = vset.pattern.permute.xlu0 %v7903
    %7905 = vperm.xlu0 %7904, %v7894
    %v7906 = vpop.permute.xlu0 %7905
    %v7907 = vlaneseq
    %v7908 = vshrl.u32 %v7907, 7
    %v7909 = vadd.s32 %v7908, 16
    %7910 = vset.pattern.permute.xlu0 %v7909
    %7911 = vperm.xlu0 %7910, %v7894
    %v7912 = vpop.permute.xlu0 %7911
    %v7913 = vlaneseq
    %v7914 = vshrl.u32 %v7913, 7
    %v7915 = vadd.s32 %v7914, 24
    %7916 = vset.pattern.permute.xlu0 %v7915
    %7917 = vperm.xlu0 %7916, %v7894
    %v7918 = vpop.permute.xlu0 %7917
    %v7919 = vlaneseq
    %v7920 = vshrl.u32 %v7919, 7
    %v7921 = vadd.s32 %v7920, 32
    %7922 = vset.pattern.permute.xlu0 %v7921
    %7923 = vperm.xlu0 %7922, %v7894
    %v7924 = vpop.permute.xlu0 %7923
    %v7925 = vlaneseq
    %v7926 = vshrl.u32 %v7925, 7
    %v7927 = vadd.s32 %v7926, 40
    %7928 = vset.pattern.permute.xlu0 %v7927
    %7929 = vperm.xlu0 %7928, %v7894
    %v7930 = vpop.permute.xlu0 %7929
    %v7931 = vlaneseq
    %v7932 = vshrl.u32 %v7931, 7
    %v7933 = vadd.s32 %v7932, 48
    %7934 = vset.pattern.permute.xlu0 %v7933
    %7935 = vperm.xlu0 %7934, %v7894
    %v7936 = vpop.permute.xlu0 %7935
    %v7937 = vlaneseq
    %v7938 = vshrl.u32 %v7937, 7
    %v7939 = vadd.s32 %v7938, 56
    %7940 = vset.pattern.permute.xlu0 %v7939
    %7941 = vperm.xlu0 %7940, %v7894
    %v7942 = vpop.permute.xlu0 %7941
    %v7943 = vlaneseq
    %v7944 = vshrl.u32 %v7943, 7
    %v7945 = vadd.s32 %v7944, 64
    %7946 = vset.pattern.permute.xlu0 %v7945
    %7947 = vperm.xlu0 %7946, %v7894
    %v7948 = vpop.permute.xlu0 %7947
    %v7949 = vlaneseq
    %v7950 = vshrl.u32 %v7949, 7
    %v7951 = vadd.s32 %v7950, 72
    %7952 = vset.pattern.permute.xlu0 %v7951
    %7953 = vperm.xlu0 %7952, %v7894
    %v7954 = vpop.permute.xlu0 %7953
    %v7955 = vlaneseq
    %v7956 = vshrl.u32 %v7955, 7
    %v7957 = vadd.s32 %v7956, 80
    %7958 = vset.pattern.permute.xlu0 %v7957
    %7959 = vperm.xlu0 %7958, %v7894
    %v7960 = vpop.permute.xlu0 %7959
    %v7961 = vlaneseq
    %v7962 = vshrl.u32 %v7961, 7
    %v7963 = vadd.s32 %v7962, 88
    %7964 = vset.pattern.permute.xlu0 %v7963
    %7965 = vperm.xlu0 %7964, %v7894
    %v7966 = vpop.permute.xlu0 %7965
    %v7967 = vlaneseq
    %v7968 = vshrl.u32 %v7967, 7
    %v7969 = vadd.s32 %v7968, 96
    %7970 = vset.pattern.permute.xlu0 %v7969
    %7971 = vperm.xlu0 %7970, %v7894
    %v7972 = vpop.permute.xlu0 %7971
    %v7973 = vlaneseq
    %v7974 = vshrl.u32 %v7973, 7
    %v7975 = vadd.s32 %v7974, 104
    %7976 = vset.pattern.permute.xlu0 %v7975
    %7977 = vperm.xlu0 %7976, %v7894
    %v7978 = vpop.permute.xlu0 %7977
    %v7979 = vlaneseq
    %v7980 = vshrl.u32 %v7979, 7
    %v7981 = vadd.s32 %v7980, 112
    %7982 = vset.pattern.permute.xlu0 %v7981
    %7983 = vperm.xlu0 %7982, %v7894
    %v7984 = vpop.permute.xlu0 %7983
    %v7985 = vlaneseq
    %v7986 = vshrl.u32 %v7985, 7
    %v7987 = vadd.s32 %v7986, 120
    %7988 = vset.pattern.permute.xlu0 %v7987
    %7989 = vperm.xlu0 %7988, %v7894
    %v7990 = vpop.permute.xlu0 %7989
    %v7991 = vperm.slane %v134, 3
    %v7992 = vlaneseq
    %v7993 = vshrl.u32 %v7992, 7
    %7995 = vset.pattern.permute.xlu0 %v7993
    %7996 = vperm.xlu0 %7995, %v7991
    %v7997 = vpop.permute.xlu0 %7996
    %v7998 = vlaneseq
    %v7999 = vshrl.u32 %v7998, 7
    %v8000 = vadd.s32 %v7999, 8
    %8001 = vset.pattern.permute.xlu0 %v8000
    %8002 = vperm.xlu0 %8001, %v7991
    %v8003 = vpop.permute.xlu0 %8002
    %v8004 = vlaneseq
    %v8005 = vshrl.u32 %v8004, 7
    %v8006 = vadd.s32 %v8005, 16
    %8007 = vset.pattern.permute.xlu0 %v8006
    %8008 = vperm.xlu0 %8007, %v7991
    %v8009 = vpop.permute.xlu0 %8008
    %v8010 = vlaneseq
    %v8011 = vshrl.u32 %v8010, 7
    %v8012 = vadd.s32 %v8011, 24
    %8013 = vset.pattern.permute.xlu0 %v8012
    %8014 = vperm.xlu0 %8013, %v7991
    %v8015 = vpop.permute.xlu0 %8014
    %v8016 = vlaneseq
    %v8017 = vshrl.u32 %v8016, 7
    %v8018 = vadd.s32 %v8017, 32
    %8019 = vset.pattern.permute.xlu0 %v8018
    %8020 = vperm.xlu0 %8019, %v7991
    %v8021 = vpop.permute.xlu0 %8020
    %v8022 = vlaneseq
    %v8023 = vshrl.u32 %v8022, 7
    %v8024 = vadd.s32 %v8023, 40
    %8025 = vset.pattern.permute.xlu0 %v8024
    %8026 = vperm.xlu0 %8025, %v7991
    %v8027 = vpop.permute.xlu0 %8026
    %v8028 = vlaneseq
    %v8029 = vshrl.u32 %v8028, 7
    %v8030 = vadd.s32 %v8029, 48
    %8031 = vset.pattern.permute.xlu0 %v8030
    %8032 = vperm.xlu0 %8031, %v7991
    %v8033 = vpop.permute.xlu0 %8032
    %v8034 = vlaneseq
    %v8035 = vshrl.u32 %v8034, 7
    %v8036 = vadd.s32 %v8035, 56
    %8037 = vset.pattern.permute.xlu0 %v8036
    %8038 = vperm.xlu0 %8037, %v7991
    %v8039 = vpop.permute.xlu0 %8038
    %v8040 = vlaneseq
    %v8041 = vshrl.u32 %v8040, 7
    %v8042 = vadd.s32 %v8041, 64
    %8043 = vset.pattern.permute.xlu0 %v8042
    %8044 = vperm.xlu0 %8043, %v7991
    %v8045 = vpop.permute.xlu0 %8044
    %v8046 = vlaneseq
    %v8047 = vshrl.u32 %v8046, 7
    %v8048 = vadd.s32 %v8047, 72
    %8049 = vset.pattern.permute.xlu0 %v8048
    %8050 = vperm.xlu0 %8049, %v7991
    %v8051 = vpop.permute.xlu0 %8050
    %v8052 = vlaneseq
    %v8053 = vshrl.u32 %v8052, 7
    %v8054 = vadd.s32 %v8053, 80
    %8055 = vset.pattern.permute.xlu0 %v8054
    %8056 = vperm.xlu0 %8055, %v7991
    %v8057 = vpop.permute.xlu0 %8056
    %v8058 = vlaneseq
    %v8059 = vshrl.u32 %v8058, 7
    %v8060 = vadd.s32 %v8059, 88
    %8061 = vset.pattern.permute.xlu0 %v8060
    %8062 = vperm.xlu0 %8061, %v7991
    %v8063 = vpop.permute.xlu0 %8062
    %v8064 = vlaneseq
    %v8065 = vshrl.u32 %v8064, 7
    %v8066 = vadd.s32 %v8065, 96
    %8067 = vset.pattern.permute.xlu0 %v8066
    %8068 = vperm.xlu0 %8067, %v7991
    %v8069 = vpop.permute.xlu0 %8068
    %v8070 = vlaneseq
    %v8071 = vshrl.u32 %v8070, 7
    %v8072 = vadd.s32 %v8071, 104
    %8073 = vset.pattern.permute.xlu0 %v8072
    %8074 = vperm.xlu0 %8073, %v7991
    %v8075 = vpop.permute.xlu0 %8074
    %v8076 = vlaneseq
    %v8077 = vshrl.u32 %v8076, 7
    %v8078 = vadd.s32 %v8077, 112
    %8079 = vset.pattern.permute.xlu0 %v8078
    %8080 = vperm.xlu0 %8079, %v7991
    %v8081 = vpop.permute.xlu0 %8080
    %v8082 = vlaneseq
    %v8083 = vshrl.u32 %v8082, 7
    %v8084 = vadd.s32 %v8083, 120
    %8085 = vset.pattern.permute.xlu0 %v8084
    %8086 = vperm.xlu0 %8085, %v7991
    %v8087 = vpop.permute.xlu0 %8086
    %v8088 = vperm.slane %v135, 3
    %v8089 = vlaneseq
    %v8090 = vshrl.u32 %v8089, 7
    %8092 = vset.pattern.permute.xlu0 %v8090
    %8093 = vperm.xlu0 %8092, %v8088
    %v8094 = vpop.permute.xlu0 %8093
    %v8095 = vlaneseq
    %v8096 = vshrl.u32 %v8095, 7
    %v8097 = vadd.s32 %v8096, 8
    %8098 = vset.pattern.permute.xlu0 %v8097
    %8099 = vperm.xlu0 %8098, %v8088
    %v8100 = vpop.permute.xlu0 %8099
    %v8101 = vlaneseq
    %v8102 = vshrl.u32 %v8101, 7
    %v8103 = vadd.s32 %v8102, 16
    %8104 = vset.pattern.permute.xlu0 %v8103
    %8105 = vperm.xlu0 %8104, %v8088
    %v8106 = vpop.permute.xlu0 %8105
    %v8107 = vlaneseq
    %v8108 = vshrl.u32 %v8107, 7
    %v8109 = vadd.s32 %v8108, 24
    %8110 = vset.pattern.permute.xlu0 %v8109
    %8111 = vperm.xlu0 %8110, %v8088
    %v8112 = vpop.permute.xlu0 %8111
    %v8113 = vlaneseq
    %v8114 = vshrl.u32 %v8113, 7
    %v8115 = vadd.s32 %v8114, 32
    %8116 = vset.pattern.permute.xlu0 %v8115
    %8117 = vperm.xlu0 %8116, %v8088
    %v8118 = vpop.permute.xlu0 %8117
    %v8119 = vlaneseq
    %v8120 = vshrl.u32 %v8119, 7
    %v8121 = vadd.s32 %v8120, 40
    %8122 = vset.pattern.permute.xlu0 %v8121
    %8123 = vperm.xlu0 %8122, %v8088
    %v8124 = vpop.permute.xlu0 %8123
    %v8125 = vlaneseq
    %v8126 = vshrl.u32 %v8125, 7
    %v8127 = vadd.s32 %v8126, 48
    %8128 = vset.pattern.permute.xlu0 %v8127
    %8129 = vperm.xlu0 %8128, %v8088
    %v8130 = vpop.permute.xlu0 %8129
    %v8131 = vlaneseq
    %v8132 = vshrl.u32 %v8131, 7
    %v8133 = vadd.s32 %v8132, 56
    %8134 = vset.pattern.permute.xlu0 %v8133
    %8135 = vperm.xlu0 %8134, %v8088
    %v8136 = vpop.permute.xlu0 %8135
    %v8137 = vlaneseq
    %v8138 = vshrl.u32 %v8137, 7
    %v8139 = vadd.s32 %v8138, 64
    %8140 = vset.pattern.permute.xlu0 %v8139
    %8141 = vperm.xlu0 %8140, %v8088
    %v8142 = vpop.permute.xlu0 %8141
    %v8143 = vlaneseq
    %v8144 = vshrl.u32 %v8143, 7
    %v8145 = vadd.s32 %v8144, 72
    %8146 = vset.pattern.permute.xlu0 %v8145
    %8147 = vperm.xlu0 %8146, %v8088
    %v8148 = vpop.permute.xlu0 %8147
    %v8149 = vlaneseq
    %v8150 = vshrl.u32 %v8149, 7
    %v8151 = vadd.s32 %v8150, 80
    %8152 = vset.pattern.permute.xlu0 %v8151
    %8153 = vperm.xlu0 %8152, %v8088
    %v8154 = vpop.permute.xlu0 %8153
    %v8155 = vlaneseq
    %v8156 = vshrl.u32 %v8155, 7
    %v8157 = vadd.s32 %v8156, 88
    %8158 = vset.pattern.permute.xlu0 %v8157
    %8159 = vperm.xlu0 %8158, %v8088
    %v8160 = vpop.permute.xlu0 %8159
    %v8161 = vlaneseq
    %v8162 = vshrl.u32 %v8161, 7
    %v8163 = vadd.s32 %v8162, 96
    %8164 = vset.pattern.permute.xlu0 %v8163
    %8165 = vperm.xlu0 %8164, %v8088
    %v8166 = vpop.permute.xlu0 %8165
    %v8167 = vlaneseq
    %v8168 = vshrl.u32 %v8167, 7
    %v8169 = vadd.s32 %v8168, 104
    %8170 = vset.pattern.permute.xlu0 %v8169
    %8171 = vperm.xlu0 %8170, %v8088
    %v8172 = vpop.permute.xlu0 %8171
    %v8173 = vlaneseq
    %v8174 = vshrl.u32 %v8173, 7
    %v8175 = vadd.s32 %v8174, 112
    %8176 = vset.pattern.permute.xlu0 %v8175
    %8177 = vperm.xlu0 %8176, %v8088
    %v8178 = vpop.permute.xlu0 %8177
    %v8179 = vlaneseq
    %v8180 = vshrl.u32 %v8179, 7
    %v8181 = vadd.s32 %v8180, 120
    %8182 = vset.pattern.permute.xlu0 %v8181
    %8183 = vperm.xlu0 %8182, %v8088
    %v8184 = vpop.permute.xlu0 %8183
    %v8185 = vperm.slane %v136, 3
    %v8186 = vlaneseq
    %v8187 = vshrl.u32 %v8186, 7
    %8189 = vset.pattern.permute.xlu0 %v8187
    %8190 = vperm.xlu0 %8189, %v8185
    %v8191 = vpop.permute.xlu0 %8190
    %v8192 = vlaneseq
    %v8193 = vshrl.u32 %v8192, 7
    %v8194 = vadd.s32 %v8193, 8
    %8195 = vset.pattern.permute.xlu0 %v8194
    %8196 = vperm.xlu0 %8195, %v8185
    %v8197 = vpop.permute.xlu0 %8196
    %v8198 = vlaneseq
    %v8199 = vshrl.u32 %v8198, 7
    %v8200 = vadd.s32 %v8199, 16
    %8201 = vset.pattern.permute.xlu0 %v8200
    %8202 = vperm.xlu0 %8201, %v8185
    %v8203 = vpop.permute.xlu0 %8202
    %v8204 = vlaneseq
    %v8205 = vshrl.u32 %v8204, 7
    %v8206 = vadd.s32 %v8205, 24
    %8207 = vset.pattern.permute.xlu0 %v8206
    %8208 = vperm.xlu0 %8207, %v8185
    %v8209 = vpop.permute.xlu0 %8208
    %v8210 = vlaneseq
    %v8211 = vshrl.u32 %v8210, 7
    %v8212 = vadd.s32 %v8211, 32
    %8213 = vset.pattern.permute.xlu0 %v8212
    %8214 = vperm.xlu0 %8213, %v8185
    %v8215 = vpop.permute.xlu0 %8214
    %v8216 = vlaneseq
    %v8217 = vshrl.u32 %v8216, 7
    %v8218 = vadd.s32 %v8217, 40
    %8219 = vset.pattern.permute.xlu0 %v8218
    %8220 = vperm.xlu0 %8219, %v8185
    %v8221 = vpop.permute.xlu0 %8220
    %v8222 = vlaneseq
    %v8223 = vshrl.u32 %v8222, 7
    %v8224 = vadd.s32 %v8223, 48
    %8225 = vset.pattern.permute.xlu0 %v8224
    %8226 = vperm.xlu0 %8225, %v8185
    %v8227 = vpop.permute.xlu0 %8226
    %v8228 = vlaneseq
    %v8229 = vshrl.u32 %v8228, 7
    %v8230 = vadd.s32 %v8229, 56
    %8231 = vset.pattern.permute.xlu0 %v8230
    %8232 = vperm.xlu0 %8231, %v8185
    %v8233 = vpop.permute.xlu0 %8232
    %v8234 = vlaneseq
    %v8235 = vshrl.u32 %v8234, 7
    %v8236 = vadd.s32 %v8235, 64
    %8237 = vset.pattern.permute.xlu0 %v8236
    %8238 = vperm.xlu0 %8237, %v8185
    %v8239 = vpop.permute.xlu0 %8238
    %v8240 = vlaneseq
    %v8241 = vshrl.u32 %v8240, 7
    %v8242 = vadd.s32 %v8241, 72
    %8243 = vset.pattern.permute.xlu0 %v8242
    %8244 = vperm.xlu0 %8243, %v8185
    %v8245 = vpop.permute.xlu0 %8244
    %v8246 = vlaneseq
    %v8247 = vshrl.u32 %v8246, 7
    %v8248 = vadd.s32 %v8247, 80
    %8249 = vset.pattern.permute.xlu0 %v8248
    %8250 = vperm.xlu0 %8249, %v8185
    %v8251 = vpop.permute.xlu0 %8250
    %v8252 = vlaneseq
    %v8253 = vshrl.u32 %v8252, 7
    %v8254 = vadd.s32 %v8253, 88
    %8255 = vset.pattern.permute.xlu0 %v8254
    %8256 = vperm.xlu0 %8255, %v8185
    %v8257 = vpop.permute.xlu0 %8256
    %v8258 = vlaneseq
    %v8259 = vshrl.u32 %v8258, 7
    %v8260 = vadd.s32 %v8259, 96
    %8261 = vset.pattern.permute.xlu0 %v8260
    %8262 = vperm.xlu0 %8261, %v8185
    %v8263 = vpop.permute.xlu0 %8262
    %v8264 = vlaneseq
    %v8265 = vshrl.u32 %v8264, 7
    %v8266 = vadd.s32 %v8265, 104
    %8267 = vset.pattern.permute.xlu0 %v8266
    %8268 = vperm.xlu0 %8267, %v8185
    %v8269 = vpop.permute.xlu0 %8268
    %v8270 = vlaneseq
    %v8271 = vshrl.u32 %v8270, 7
    %v8272 = vadd.s32 %v8271, 112
    %8273 = vset.pattern.permute.xlu0 %v8272
    %8274 = vperm.xlu0 %8273, %v8185
    %v8275 = vpop.permute.xlu0 %8274
    %v8276 = vlaneseq
    %v8277 = vshrl.u32 %v8276, 7
    %v8278 = vadd.s32 %v8277, 120
    %8279 = vset.pattern.permute.xlu0 %v8278
    %8280 = vperm.xlu0 %8279, %v8185
    %v8281 = vpop.permute.xlu0 %8280
    %v8282 = vperm.slane %v137, 3
    %v8283 = vlaneseq
    %v8284 = vshrl.u32 %v8283, 7
    %8286 = vset.pattern.permute.xlu0 %v8284
    %8287 = vperm.xlu0 %8286, %v8282
    %v8288 = vpop.permute.xlu0 %8287
    %v8289 = vlaneseq
    %v8290 = vshrl.u32 %v8289, 7
    %v8291 = vadd.s32 %v8290, 8
    %8292 = vset.pattern.permute.xlu0 %v8291
    %8293 = vperm.xlu0 %8292, %v8282
    %v8294 = vpop.permute.xlu0 %8293
    %v8295 = vlaneseq
    %v8296 = vshrl.u32 %v8295, 7
    %v8297 = vadd.s32 %v8296, 16
    %8298 = vset.pattern.permute.xlu0 %v8297
    %8299 = vperm.xlu0 %8298, %v8282
    %v8300 = vpop.permute.xlu0 %8299
    %v8301 = vlaneseq
    %v8302 = vshrl.u32 %v8301, 7
    %v8303 = vadd.s32 %v8302, 24
    %8304 = vset.pattern.permute.xlu0 %v8303
    %8305 = vperm.xlu0 %8304, %v8282
    %v8306 = vpop.permute.xlu0 %8305
    %v8307 = vlaneseq
    %v8308 = vshrl.u32 %v8307, 7
    %v8309 = vadd.s32 %v8308, 32
    %8310 = vset.pattern.permute.xlu0 %v8309
    %8311 = vperm.xlu0 %8310, %v8282
    %v8312 = vpop.permute.xlu0 %8311
    %v8313 = vlaneseq
    %v8314 = vshrl.u32 %v8313, 7
    %v8315 = vadd.s32 %v8314, 40
    %8316 = vset.pattern.permute.xlu0 %v8315
    %8317 = vperm.xlu0 %8316, %v8282
    %v8318 = vpop.permute.xlu0 %8317
    %v8319 = vlaneseq
    %v8320 = vshrl.u32 %v8319, 7
    %v8321 = vadd.s32 %v8320, 48
    %8322 = vset.pattern.permute.xlu0 %v8321
    %8323 = vperm.xlu0 %8322, %v8282
    %v8324 = vpop.permute.xlu0 %8323
    %v8325 = vlaneseq
    %v8326 = vshrl.u32 %v8325, 7
    %v8327 = vadd.s32 %v8326, 56
    %8328 = vset.pattern.permute.xlu0 %v8327
    %8329 = vperm.xlu0 %8328, %v8282
    %v8330 = vpop.permute.xlu0 %8329
    %v8331 = vlaneseq
    %v8332 = vshrl.u32 %v8331, 7
    %v8333 = vadd.s32 %v8332, 64
    %8334 = vset.pattern.permute.xlu0 %v8333
    %8335 = vperm.xlu0 %8334, %v8282
    %v8336 = vpop.permute.xlu0 %8335
    %v8337 = vlaneseq
    %v8338 = vshrl.u32 %v8337, 7
    %v8339 = vadd.s32 %v8338, 72
    %8340 = vset.pattern.permute.xlu0 %v8339
    %8341 = vperm.xlu0 %8340, %v8282
    %v8342 = vpop.permute.xlu0 %8341
    %v8343 = vlaneseq
    %v8344 = vshrl.u32 %v8343, 7
    %v8345 = vadd.s32 %v8344, 80
    %8346 = vset.pattern.permute.xlu0 %v8345
    %8347 = vperm.xlu0 %8346, %v8282
    %v8348 = vpop.permute.xlu0 %8347
    %v8349 = vlaneseq
    %v8350 = vshrl.u32 %v8349, 7
    %v8351 = vadd.s32 %v8350, 88
    %8352 = vset.pattern.permute.xlu0 %v8351
    %8353 = vperm.xlu0 %8352, %v8282
    %v8354 = vpop.permute.xlu0 %8353
    %v8355 = vlaneseq
    %v8356 = vshrl.u32 %v8355, 7
    %v8357 = vadd.s32 %v8356, 96
    %8358 = vset.pattern.permute.xlu0 %v8357
    %8359 = vperm.xlu0 %8358, %v8282
    %v8360 = vpop.permute.xlu0 %8359
    %v8361 = vlaneseq
    %v8362 = vshrl.u32 %v8361, 7
    %v8363 = vadd.s32 %v8362, 104
    %8364 = vset.pattern.permute.xlu0 %v8363
    %8365 = vperm.xlu0 %8364, %v8282
    %v8366 = vpop.permute.xlu0 %8365
    %v8367 = vlaneseq
    %v8368 = vshrl.u32 %v8367, 7
    %v8369 = vadd.s32 %v8368, 112
    %8370 = vset.pattern.permute.xlu0 %v8369
    %8371 = vperm.xlu0 %8370, %v8282
    %v8372 = vpop.permute.xlu0 %8371
    %v8373 = vlaneseq
    %v8374 = vshrl.u32 %v8373, 7
    %v8375 = vadd.s32 %v8374, 120
    %8376 = vset.pattern.permute.xlu0 %v8375
    %8377 = vperm.xlu0 %8376, %v8282
    %v8378 = vpop.permute.xlu0 %8377
    %v8379 = vperm.slane %v138, 3
    %v8380 = vlaneseq
    %v8381 = vshrl.u32 %v8380, 7
    %8383 = vset.pattern.permute.xlu0 %v8381
    %8384 = vperm.xlu0 %8383, %v8379
    %v8385 = vpop.permute.xlu0 %8384
    %v8386 = vlaneseq
    %v8387 = vshrl.u32 %v8386, 7
    %v8388 = vadd.s32 %v8387, 8
    %8389 = vset.pattern.permute.xlu0 %v8388
    %8390 = vperm.xlu0 %8389, %v8379
    %v8391 = vpop.permute.xlu0 %8390
    %v8392 = vlaneseq
    %v8393 = vshrl.u32 %v8392, 7
    %v8394 = vadd.s32 %v8393, 16
    %8395 = vset.pattern.permute.xlu0 %v8394
    %8396 = vperm.xlu0 %8395, %v8379
    %v8397 = vpop.permute.xlu0 %8396
    %v8398 = vlaneseq
    %v8399 = vshrl.u32 %v8398, 7
    %v8400 = vadd.s32 %v8399, 24
    %8401 = vset.pattern.permute.xlu0 %v8400
    %8402 = vperm.xlu0 %8401, %v8379
    %v8403 = vpop.permute.xlu0 %8402
    %v8404 = vlaneseq
    %v8405 = vshrl.u32 %v8404, 7
    %v8406 = vadd.s32 %v8405, 32
    %8407 = vset.pattern.permute.xlu0 %v8406
    %8408 = vperm.xlu0 %8407, %v8379
    %v8409 = vpop.permute.xlu0 %8408
    %v8410 = vlaneseq
    %v8411 = vshrl.u32 %v8410, 7
    %v8412 = vadd.s32 %v8411, 40
    %8413 = vset.pattern.permute.xlu0 %v8412
    %8414 = vperm.xlu0 %8413, %v8379
    %v8415 = vpop.permute.xlu0 %8414
    %v8416 = vlaneseq
    %v8417 = vshrl.u32 %v8416, 7
    %v8418 = vadd.s32 %v8417, 48
    %8419 = vset.pattern.permute.xlu0 %v8418
    %8420 = vperm.xlu0 %8419, %v8379
    %v8421 = vpop.permute.xlu0 %8420
    %v8422 = vlaneseq
    %v8423 = vshrl.u32 %v8422, 7
    %v8424 = vadd.s32 %v8423, 56
    %8425 = vset.pattern.permute.xlu0 %v8424
    %8426 = vperm.xlu0 %8425, %v8379
    %v8427 = vpop.permute.xlu0 %8426
    %v8428 = vlaneseq
    %v8429 = vshrl.u32 %v8428, 7
    %v8430 = vadd.s32 %v8429, 64
    %8431 = vset.pattern.permute.xlu0 %v8430
    %8432 = vperm.xlu0 %8431, %v8379
    %v8433 = vpop.permute.xlu0 %8432
    %v8434 = vlaneseq
    %v8435 = vshrl.u32 %v8434, 7
    %v8436 = vadd.s32 %v8435, 72
    %8437 = vset.pattern.permute.xlu0 %v8436
    %8438 = vperm.xlu0 %8437, %v8379
    %v8439 = vpop.permute.xlu0 %8438
    %v8440 = vlaneseq
    %v8441 = vshrl.u32 %v8440, 7
    %v8442 = vadd.s32 %v8441, 80
    %8443 = vset.pattern.permute.xlu0 %v8442
    %8444 = vperm.xlu0 %8443, %v8379
    %v8445 = vpop.permute.xlu0 %8444
    %v8446 = vlaneseq
    %v8447 = vshrl.u32 %v8446, 7
    %v8448 = vadd.s32 %v8447, 88
    %8449 = vset.pattern.permute.xlu0 %v8448
    %8450 = vperm.xlu0 %8449, %v8379
    %v8451 = vpop.permute.xlu0 %8450
    %v8452 = vlaneseq
    %v8453 = vshrl.u32 %v8452, 7
    %v8454 = vadd.s32 %v8453, 96
    %8455 = vset.pattern.permute.xlu0 %v8454
    %8456 = vperm.xlu0 %8455, %v8379
    %v8457 = vpop.permute.xlu0 %8456
    %v8458 = vlaneseq
    %v8459 = vshrl.u32 %v8458, 7
    %v8460 = vadd.s32 %v8459, 104
    %8461 = vset.pattern.permute.xlu0 %v8460
    %8462 = vperm.xlu0 %8461, %v8379
    %v8463 = vpop.permute.xlu0 %8462
    %v8464 = vlaneseq
    %v8465 = vshrl.u32 %v8464, 7
    %v8466 = vadd.s32 %v8465, 112
    %8467 = vset.pattern.permute.xlu0 %v8466
    %8468 = vperm.xlu0 %8467, %v8379
    %v8469 = vpop.permute.xlu0 %8468
    %v8470 = vlaneseq
    %v8471 = vshrl.u32 %v8470, 7
    %v8472 = vadd.s32 %v8471, 120
    %8473 = vset.pattern.permute.xlu0 %v8472
    %8474 = vperm.xlu0 %8473, %v8379
    %v8475 = vpop.permute.xlu0 %8474
    %v8476 = vperm.slane %v139, 3
    %v8477 = vlaneseq
    %v8478 = vshrl.u32 %v8477, 7
    %8480 = vset.pattern.permute.xlu0 %v8478
    %8481 = vperm.xlu0 %8480, %v8476
    %v8482 = vpop.permute.xlu0 %8481
    %v8483 = vlaneseq
    %v8484 = vshrl.u32 %v8483, 7
    %v8485 = vadd.s32 %v8484, 8
    %8486 = vset.pattern.permute.xlu0 %v8485
    %8487 = vperm.xlu0 %8486, %v8476
    %v8488 = vpop.permute.xlu0 %8487
    %v8489 = vlaneseq
    %v8490 = vshrl.u32 %v8489, 7
    %v8491 = vadd.s32 %v8490, 16
    %8492 = vset.pattern.permute.xlu0 %v8491
    %8493 = vperm.xlu0 %8492, %v8476
    %v8494 = vpop.permute.xlu0 %8493
    %v8495 = vlaneseq
    %v8496 = vshrl.u32 %v8495, 7
    %v8497 = vadd.s32 %v8496, 24
    %8498 = vset.pattern.permute.xlu0 %v8497
    %8499 = vperm.xlu0 %8498, %v8476
    %v8500 = vpop.permute.xlu0 %8499
    %v8501 = vlaneseq
    %v8502 = vshrl.u32 %v8501, 7
    %v8503 = vadd.s32 %v8502, 32
    %8504 = vset.pattern.permute.xlu0 %v8503
    %8505 = vperm.xlu0 %8504, %v8476
    %v8506 = vpop.permute.xlu0 %8505
    %v8507 = vlaneseq
    %v8508 = vshrl.u32 %v8507, 7
    %v8509 = vadd.s32 %v8508, 40
    %8510 = vset.pattern.permute.xlu0 %v8509
    %8511 = vperm.xlu0 %8510, %v8476
    %v8512 = vpop.permute.xlu0 %8511
    %v8513 = vlaneseq
    %v8514 = vshrl.u32 %v8513, 7
    %v8515 = vadd.s32 %v8514, 48
    %8516 = vset.pattern.permute.xlu0 %v8515
    %8517 = vperm.xlu0 %8516, %v8476
    %v8518 = vpop.permute.xlu0 %8517
    %v8519 = vlaneseq
    %v8520 = vshrl.u32 %v8519, 7
    %v8521 = vadd.s32 %v8520, 56
    %8522 = vset.pattern.permute.xlu0 %v8521
    %8523 = vperm.xlu0 %8522, %v8476
    %v8524 = vpop.permute.xlu0 %8523
    %v8525 = vlaneseq
    %v8526 = vshrl.u32 %v8525, 7
    %v8527 = vadd.s32 %v8526, 64
    %8528 = vset.pattern.permute.xlu0 %v8527
    %8529 = vperm.xlu0 %8528, %v8476
    %v8530 = vpop.permute.xlu0 %8529
    %v8531 = vlaneseq
    %v8532 = vshrl.u32 %v8531, 7
    %v8533 = vadd.s32 %v8532, 72
    %8534 = vset.pattern.permute.xlu0 %v8533
    %8535 = vperm.xlu0 %8534, %v8476
    %v8536 = vpop.permute.xlu0 %8535
    %v8537 = vlaneseq
    %v8538 = vshrl.u32 %v8537, 7
    %v8539 = vadd.s32 %v8538, 80
    %8540 = vset.pattern.permute.xlu0 %v8539
    %8541 = vperm.xlu0 %8540, %v8476
    %v8542 = vpop.permute.xlu0 %8541
    %v8543 = vlaneseq
    %v8544 = vshrl.u32 %v8543, 7
    %v8545 = vadd.s32 %v8544, 88
    %8546 = vset.pattern.permute.xlu0 %v8545
    %8547 = vperm.xlu0 %8546, %v8476
    %v8548 = vpop.permute.xlu0 %8547
    %v8549 = vlaneseq
    %v8550 = vshrl.u32 %v8549, 7
    %v8551 = vadd.s32 %v8550, 96
    %8552 = vset.pattern.permute.xlu0 %v8551
    %8553 = vperm.xlu0 %8552, %v8476
    %v8554 = vpop.permute.xlu0 %8553
    %v8555 = vlaneseq
    %v8556 = vshrl.u32 %v8555, 7
    %v8557 = vadd.s32 %v8556, 104
    %8558 = vset.pattern.permute.xlu0 %v8557
    %8559 = vperm.xlu0 %8558, %v8476
    %v8560 = vpop.permute.xlu0 %8559
    %v8561 = vlaneseq
    %v8562 = vshrl.u32 %v8561, 7
    %v8563 = vadd.s32 %v8562, 112
    %8564 = vset.pattern.permute.xlu0 %v8563
    %8565 = vperm.xlu0 %8564, %v8476
    %v8566 = vpop.permute.xlu0 %8565
    %v8567 = vlaneseq
    %v8568 = vshrl.u32 %v8567, 7
    %v8569 = vadd.s32 %v8568, 120
    %8570 = vset.pattern.permute.xlu0 %v8569
    %8571 = vperm.xlu0 %8570, %v8476
    %v8572 = vpop.permute.xlu0 %8571
    %v8573 = vperm.slane %v140, 3
    %v8574 = vlaneseq
    %v8575 = vshrl.u32 %v8574, 7
    %8577 = vset.pattern.permute.xlu0 %v8575
    %8578 = vperm.xlu0 %8577, %v8573
    %v8579 = vpop.permute.xlu0 %8578
    %v8580 = vlaneseq
    %v8581 = vshrl.u32 %v8580, 7
    %v8582 = vadd.s32 %v8581, 8
    %8583 = vset.pattern.permute.xlu0 %v8582
    %8584 = vperm.xlu0 %8583, %v8573
    %v8585 = vpop.permute.xlu0 %8584
    %v8586 = vlaneseq
    %v8587 = vshrl.u32 %v8586, 7
    %v8588 = vadd.s32 %v8587, 16
    %8589 = vset.pattern.permute.xlu0 %v8588
    %8590 = vperm.xlu0 %8589, %v8573
    %v8591 = vpop.permute.xlu0 %8590
    %v8592 = vlaneseq
    %v8593 = vshrl.u32 %v8592, 7
    %v8594 = vadd.s32 %v8593, 24
    %8595 = vset.pattern.permute.xlu0 %v8594
    %8596 = vperm.xlu0 %8595, %v8573
    %v8597 = vpop.permute.xlu0 %8596
    %v8598 = vlaneseq
    %v8599 = vshrl.u32 %v8598, 7
    %v8600 = vadd.s32 %v8599, 32
    %8601 = vset.pattern.permute.xlu0 %v8600
    %8602 = vperm.xlu0 %8601, %v8573
    %v8603 = vpop.permute.xlu0 %8602
    %v8604 = vlaneseq
    %v8605 = vshrl.u32 %v8604, 7
    %v8606 = vadd.s32 %v8605, 40
    %8607 = vset.pattern.permute.xlu0 %v8606
    %8608 = vperm.xlu0 %8607, %v8573
    %v8609 = vpop.permute.xlu0 %8608
    %v8610 = vlaneseq
    %v8611 = vshrl.u32 %v8610, 7
    %v8612 = vadd.s32 %v8611, 48
    %8613 = vset.pattern.permute.xlu0 %v8612
    %8614 = vperm.xlu0 %8613, %v8573
    %v8615 = vpop.permute.xlu0 %8614
    %v8616 = vlaneseq
    %v8617 = vshrl.u32 %v8616, 7
    %v8618 = vadd.s32 %v8617, 56
    %8619 = vset.pattern.permute.xlu0 %v8618
    %8620 = vperm.xlu0 %8619, %v8573
    %v8621 = vpop.permute.xlu0 %8620
    %v8622 = vlaneseq
    %v8623 = vshrl.u32 %v8622, 7
    %v8624 = vadd.s32 %v8623, 64
    %8625 = vset.pattern.permute.xlu0 %v8624
    %8626 = vperm.xlu0 %8625, %v8573
    %v8627 = vpop.permute.xlu0 %8626
    %v8628 = vlaneseq
    %v8629 = vshrl.u32 %v8628, 7
    %v8630 = vadd.s32 %v8629, 72
    %8631 = vset.pattern.permute.xlu0 %v8630
    %8632 = vperm.xlu0 %8631, %v8573
    %v8633 = vpop.permute.xlu0 %8632
    %v8634 = vlaneseq
    %v8635 = vshrl.u32 %v8634, 7
    %v8636 = vadd.s32 %v8635, 80
    %8637 = vset.pattern.permute.xlu0 %v8636
    %8638 = vperm.xlu0 %8637, %v8573
    %v8639 = vpop.permute.xlu0 %8638
    %v8640 = vlaneseq
    %v8641 = vshrl.u32 %v8640, 7
    %v8642 = vadd.s32 %v8641, 88
    %8643 = vset.pattern.permute.xlu0 %v8642
    %8644 = vperm.xlu0 %8643, %v8573
    %v8645 = vpop.permute.xlu0 %8644
    %v8646 = vlaneseq
    %v8647 = vshrl.u32 %v8646, 7
    %v8648 = vadd.s32 %v8647, 96
    %8649 = vset.pattern.permute.xlu0 %v8648
    %8650 = vperm.xlu0 %8649, %v8573
    %v8651 = vpop.permute.xlu0 %8650
    %v8652 = vlaneseq
    %v8653 = vshrl.u32 %v8652, 7
    %v8654 = vadd.s32 %v8653, 104
    %8655 = vset.pattern.permute.xlu0 %v8654
    %8656 = vperm.xlu0 %8655, %v8573
    %v8657 = vpop.permute.xlu0 %8656
    %v8658 = vlaneseq
    %v8659 = vshrl.u32 %v8658, 7
    %v8660 = vadd.s32 %v8659, 112
    %8661 = vset.pattern.permute.xlu0 %v8660
    %8662 = vperm.xlu0 %8661, %v8573
    %v8663 = vpop.permute.xlu0 %8662
    %v8664 = vlaneseq
    %v8665 = vshrl.u32 %v8664, 7
    %v8666 = vadd.s32 %v8665, 120
    %8667 = vset.pattern.permute.xlu0 %v8666
    %8668 = vperm.xlu0 %8667, %v8573
    %v8669 = vpop.permute.xlu0 %8668
    %v8670 = vperm.slane %v141, 3
    %v8671 = vlaneseq
    %v8672 = vshrl.u32 %v8671, 7
    %8674 = vset.pattern.permute.xlu0 %v8672
    %8675 = vperm.xlu0 %8674, %v8670
    %v8676 = vpop.permute.xlu0 %8675
    %v8677 = vlaneseq
    %v8678 = vshrl.u32 %v8677, 7
    %v8679 = vadd.s32 %v8678, 8
    %8680 = vset.pattern.permute.xlu0 %v8679
    %8681 = vperm.xlu0 %8680, %v8670
    %v8682 = vpop.permute.xlu0 %8681
    %v8683 = vlaneseq
    %v8684 = vshrl.u32 %v8683, 7
    %v8685 = vadd.s32 %v8684, 16
    %8686 = vset.pattern.permute.xlu0 %v8685
    %8687 = vperm.xlu0 %8686, %v8670
    %v8688 = vpop.permute.xlu0 %8687
    %v8689 = vlaneseq
    %v8690 = vshrl.u32 %v8689, 7
    %v8691 = vadd.s32 %v8690, 24
    %8692 = vset.pattern.permute.xlu0 %v8691
    %8693 = vperm.xlu0 %8692, %v8670
    %v8694 = vpop.permute.xlu0 %8693
    %v8695 = vlaneseq
    %v8696 = vshrl.u32 %v8695, 7
    %v8697 = vadd.s32 %v8696, 32
    %8698 = vset.pattern.permute.xlu0 %v8697
    %8699 = vperm.xlu0 %8698, %v8670
    %v8700 = vpop.permute.xlu0 %8699
    %v8701 = vlaneseq
    %v8702 = vshrl.u32 %v8701, 7
    %v8703 = vadd.s32 %v8702, 40
    %8704 = vset.pattern.permute.xlu0 %v8703
    %8705 = vperm.xlu0 %8704, %v8670
    %v8706 = vpop.permute.xlu0 %8705
    %v8707 = vlaneseq
    %v8708 = vshrl.u32 %v8707, 7
    %v8709 = vadd.s32 %v8708, 48
    %8710 = vset.pattern.permute.xlu0 %v8709
    %8711 = vperm.xlu0 %8710, %v8670
    %v8712 = vpop.permute.xlu0 %8711
    %v8713 = vlaneseq
    %v8714 = vshrl.u32 %v8713, 7
    %v8715 = vadd.s32 %v8714, 56
    %8716 = vset.pattern.permute.xlu0 %v8715
    %8717 = vperm.xlu0 %8716, %v8670
    %v8718 = vpop.permute.xlu0 %8717
    %v8719 = vlaneseq
    %v8720 = vshrl.u32 %v8719, 7
    %v8721 = vadd.s32 %v8720, 64
    %8722 = vset.pattern.permute.xlu0 %v8721
    %8723 = vperm.xlu0 %8722, %v8670
    %v8724 = vpop.permute.xlu0 %8723
    %v8725 = vlaneseq
    %v8726 = vshrl.u32 %v8725, 7
    %v8727 = vadd.s32 %v8726, 72
    %8728 = vset.pattern.permute.xlu0 %v8727
    %8729 = vperm.xlu0 %8728, %v8670
    %v8730 = vpop.permute.xlu0 %8729
    %v8731 = vlaneseq
    %v8732 = vshrl.u32 %v8731, 7
    %v8733 = vadd.s32 %v8732, 80
    %8734 = vset.pattern.permute.xlu0 %v8733
    %8735 = vperm.xlu0 %8734, %v8670
    %v8736 = vpop.permute.xlu0 %8735
    %v8737 = vlaneseq
    %v8738 = vshrl.u32 %v8737, 7
    %v8739 = vadd.s32 %v8738, 88
    %8740 = vset.pattern.permute.xlu0 %v8739
    %8741 = vperm.xlu0 %8740, %v8670
    %v8742 = vpop.permute.xlu0 %8741
    %v8743 = vlaneseq
    %v8744 = vshrl.u32 %v8743, 7
    %v8745 = vadd.s32 %v8744, 96
    %8746 = vset.pattern.permute.xlu0 %v8745
    %8747 = vperm.xlu0 %8746, %v8670
    %v8748 = vpop.permute.xlu0 %8747
    %v8749 = vlaneseq
    %v8750 = vshrl.u32 %v8749, 7
    %v8751 = vadd.s32 %v8750, 104
    %8752 = vset.pattern.permute.xlu0 %v8751
    %8753 = vperm.xlu0 %8752, %v8670
    %v8754 = vpop.permute.xlu0 %8753
    %v8755 = vlaneseq
    %v8756 = vshrl.u32 %v8755, 7
    %v8757 = vadd.s32 %v8756, 112
    %8758 = vset.pattern.permute.xlu0 %v8757
    %8759 = vperm.xlu0 %8758, %v8670
    %v8760 = vpop.permute.xlu0 %8759
    %v8761 = vlaneseq
    %v8762 = vshrl.u32 %v8761, 7
    %v8763 = vadd.s32 %v8762, 120
    %8764 = vset.pattern.permute.xlu0 %v8763
    %8765 = vperm.xlu0 %8764, %v8670
    %v8766 = vpop.permute.xlu0 %8765
    %v8767 = vperm.slane %v142, 3
    %v8768 = vlaneseq
    %v8769 = vshrl.u32 %v8768, 7
    %8771 = vset.pattern.permute.xlu0 %v8769
    %8772 = vperm.xlu0 %8771, %v8767
    %v8773 = vpop.permute.xlu0 %8772
    %v8774 = vlaneseq
    %v8775 = vshrl.u32 %v8774, 7
    %v8776 = vadd.s32 %v8775, 8
    %8777 = vset.pattern.permute.xlu0 %v8776
    %8778 = vperm.xlu0 %8777, %v8767
    %v8779 = vpop.permute.xlu0 %8778
    %v8780 = vlaneseq
    %v8781 = vshrl.u32 %v8780, 7
    %v8782 = vadd.s32 %v8781, 16
    %8783 = vset.pattern.permute.xlu0 %v8782
    %8784 = vperm.xlu0 %8783, %v8767
    %v8785 = vpop.permute.xlu0 %8784
    %v8786 = vlaneseq
    %v8787 = vshrl.u32 %v8786, 7
    %v8788 = vadd.s32 %v8787, 24
    %8789 = vset.pattern.permute.xlu0 %v8788
    %8790 = vperm.xlu0 %8789, %v8767
    %v8791 = vpop.permute.xlu0 %8790
    %v8792 = vlaneseq
    %v8793 = vshrl.u32 %v8792, 7
    %v8794 = vadd.s32 %v8793, 32
    %8795 = vset.pattern.permute.xlu0 %v8794
    %8796 = vperm.xlu0 %8795, %v8767
    %v8797 = vpop.permute.xlu0 %8796
    %v8798 = vlaneseq
    %v8799 = vshrl.u32 %v8798, 7
    %v8800 = vadd.s32 %v8799, 40
    %8801 = vset.pattern.permute.xlu0 %v8800
    %8802 = vperm.xlu0 %8801, %v8767
    %v8803 = vpop.permute.xlu0 %8802
    %v8804 = vlaneseq
    %v8805 = vshrl.u32 %v8804, 7
    %v8806 = vadd.s32 %v8805, 48
    %8807 = vset.pattern.permute.xlu0 %v8806
    %8808 = vperm.xlu0 %8807, %v8767
    %v8809 = vpop.permute.xlu0 %8808
    %v8810 = vlaneseq
    %v8811 = vshrl.u32 %v8810, 7
    %v8812 = vadd.s32 %v8811, 56
    %8813 = vset.pattern.permute.xlu0 %v8812
    %8814 = vperm.xlu0 %8813, %v8767
    %v8815 = vpop.permute.xlu0 %8814
    %v8816 = vlaneseq
    %v8817 = vshrl.u32 %v8816, 7
    %v8818 = vadd.s32 %v8817, 64
    %8819 = vset.pattern.permute.xlu0 %v8818
    %8820 = vperm.xlu0 %8819, %v8767
    %v8821 = vpop.permute.xlu0 %8820
    %v8822 = vlaneseq
    %v8823 = vshrl.u32 %v8822, 7
    %v8824 = vadd.s32 %v8823, 72
    %8825 = vset.pattern.permute.xlu0 %v8824
    %8826 = vperm.xlu0 %8825, %v8767
    %v8827 = vpop.permute.xlu0 %8826
    %v8828 = vlaneseq
    %v8829 = vshrl.u32 %v8828, 7
    %v8830 = vadd.s32 %v8829, 80
    %8831 = vset.pattern.permute.xlu0 %v8830
    %8832 = vperm.xlu0 %8831, %v8767
    %v8833 = vpop.permute.xlu0 %8832
    %v8834 = vlaneseq
    %v8835 = vshrl.u32 %v8834, 7
    %v8836 = vadd.s32 %v8835, 88
    %8837 = vset.pattern.permute.xlu0 %v8836
    %8838 = vperm.xlu0 %8837, %v8767
    %v8839 = vpop.permute.xlu0 %8838
    %v8840 = vlaneseq
    %v8841 = vshrl.u32 %v8840, 7
    %v8842 = vadd.s32 %v8841, 96
    %8843 = vset.pattern.permute.xlu0 %v8842
    %8844 = vperm.xlu0 %8843, %v8767
    %v8845 = vpop.permute.xlu0 %8844
    %v8846 = vlaneseq
    %v8847 = vshrl.u32 %v8846, 7
    %v8848 = vadd.s32 %v8847, 104
    %8849 = vset.pattern.permute.xlu0 %v8848
    %8850 = vperm.xlu0 %8849, %v8767
    %v8851 = vpop.permute.xlu0 %8850
    %v8852 = vlaneseq
    %v8853 = vshrl.u32 %v8852, 7
    %v8854 = vadd.s32 %v8853, 112
    %8855 = vset.pattern.permute.xlu0 %v8854
    %8856 = vperm.xlu0 %8855, %v8767
    %v8857 = vpop.permute.xlu0 %8856
    %v8858 = vlaneseq
    %v8859 = vshrl.u32 %v8858, 7
    %v8860 = vadd.s32 %v8859, 120
    %8861 = vset.pattern.permute.xlu0 %v8860
    %8862 = vperm.xlu0 %8861, %v8767
    %v8863 = vpop.permute.xlu0 %8862
    %v8864 = vperm.slane %v143, 3
    %v8865 = vlaneseq
    %v8866 = vshrl.u32 %v8865, 7
    %8868 = vset.pattern.permute.xlu0 %v8866
    %8869 = vperm.xlu0 %8868, %v8864
    %v8870 = vpop.permute.xlu0 %8869
    %v8871 = vlaneseq
    %v8872 = vshrl.u32 %v8871, 7
    %v8873 = vadd.s32 %v8872, 8
    %8874 = vset.pattern.permute.xlu0 %v8873
    %8875 = vperm.xlu0 %8874, %v8864
    %v8876 = vpop.permute.xlu0 %8875
    %v8877 = vlaneseq
    %v8878 = vshrl.u32 %v8877, 7
    %v8879 = vadd.s32 %v8878, 16
    %8880 = vset.pattern.permute.xlu0 %v8879
    %8881 = vperm.xlu0 %8880, %v8864
    %v8882 = vpop.permute.xlu0 %8881
    %v8883 = vlaneseq
    %v8884 = vshrl.u32 %v8883, 7
    %v8885 = vadd.s32 %v8884, 24
    %8886 = vset.pattern.permute.xlu0 %v8885
    %8887 = vperm.xlu0 %8886, %v8864
    %v8888 = vpop.permute.xlu0 %8887
    %v8889 = vlaneseq
    %v8890 = vshrl.u32 %v8889, 7
    %v8891 = vadd.s32 %v8890, 32
    %8892 = vset.pattern.permute.xlu0 %v8891
    %8893 = vperm.xlu0 %8892, %v8864
    %v8894 = vpop.permute.xlu0 %8893
    %v8895 = vlaneseq
    %v8896 = vshrl.u32 %v8895, 7
    %v8897 = vadd.s32 %v8896, 40
    %8898 = vset.pattern.permute.xlu0 %v8897
    %8899 = vperm.xlu0 %8898, %v8864
    %v8900 = vpop.permute.xlu0 %8899
    %v8901 = vlaneseq
    %v8902 = vshrl.u32 %v8901, 7
    %v8903 = vadd.s32 %v8902, 48
    %8904 = vset.pattern.permute.xlu0 %v8903
    %8905 = vperm.xlu0 %8904, %v8864
    %v8906 = vpop.permute.xlu0 %8905
    %v8907 = vlaneseq
    %v8908 = vshrl.u32 %v8907, 7
    %v8909 = vadd.s32 %v8908, 56
    %8910 = vset.pattern.permute.xlu0 %v8909
    %8911 = vperm.xlu0 %8910, %v8864
    %v8912 = vpop.permute.xlu0 %8911
    %v8913 = vlaneseq
    %v8914 = vshrl.u32 %v8913, 7
    %v8915 = vadd.s32 %v8914, 64
    %8916 = vset.pattern.permute.xlu0 %v8915
    %8917 = vperm.xlu0 %8916, %v8864
    %v8918 = vpop.permute.xlu0 %8917
    %v8919 = vlaneseq
    %v8920 = vshrl.u32 %v8919, 7
    %v8921 = vadd.s32 %v8920, 72
    %8922 = vset.pattern.permute.xlu0 %v8921
    %8923 = vperm.xlu0 %8922, %v8864
    %v8924 = vpop.permute.xlu0 %8923
    %v8925 = vlaneseq
    %v8926 = vshrl.u32 %v8925, 7
    %v8927 = vadd.s32 %v8926, 80
    %8928 = vset.pattern.permute.xlu0 %v8927
    %8929 = vperm.xlu0 %8928, %v8864
    %v8930 = vpop.permute.xlu0 %8929
    %v8931 = vlaneseq
    %v8932 = vshrl.u32 %v8931, 7
    %v8933 = vadd.s32 %v8932, 88
    %8934 = vset.pattern.permute.xlu0 %v8933
    %8935 = vperm.xlu0 %8934, %v8864
    %v8936 = vpop.permute.xlu0 %8935
    %v8937 = vlaneseq
    %v8938 = vshrl.u32 %v8937, 7
    %v8939 = vadd.s32 %v8938, 96
    %8940 = vset.pattern.permute.xlu0 %v8939
    %8941 = vperm.xlu0 %8940, %v8864
    %v8942 = vpop.permute.xlu0 %8941
    %v8943 = vlaneseq
    %v8944 = vshrl.u32 %v8943, 7
    %v8945 = vadd.s32 %v8944, 104
    %8946 = vset.pattern.permute.xlu0 %v8945
    %8947 = vperm.xlu0 %8946, %v8864
    %v8948 = vpop.permute.xlu0 %8947
    %v8949 = vlaneseq
    %v8950 = vshrl.u32 %v8949, 7
    %v8951 = vadd.s32 %v8950, 112
    %8952 = vset.pattern.permute.xlu0 %v8951
    %8953 = vperm.xlu0 %8952, %v8864
    %v8954 = vpop.permute.xlu0 %8953
    %v8955 = vlaneseq
    %v8956 = vshrl.u32 %v8955, 7
    %v8957 = vadd.s32 %v8956, 120
    %8958 = vset.pattern.permute.xlu0 %v8957
    %8959 = vperm.xlu0 %8958, %v8864
    %v8960 = vpop.permute.xlu0 %8959
    %v8961 = vperm.slane %v144, 3
    %v8962 = vlaneseq
    %v8963 = vshrl.u32 %v8962, 7
    %8965 = vset.pattern.permute.xlu0 %v8963
    %8966 = vperm.xlu0 %8965, %v8961
    %v8967 = vpop.permute.xlu0 %8966
    %v8968 = vlaneseq
    %v8969 = vshrl.u32 %v8968, 7
    %v8970 = vadd.s32 %v8969, 8
    %8971 = vset.pattern.permute.xlu0 %v8970
    %8972 = vperm.xlu0 %8971, %v8961
    %v8973 = vpop.permute.xlu0 %8972
    %v8974 = vlaneseq
    %v8975 = vshrl.u32 %v8974, 7
    %v8976 = vadd.s32 %v8975, 16
    %8977 = vset.pattern.permute.xlu0 %v8976
    %8978 = vperm.xlu0 %8977, %v8961
    %v8979 = vpop.permute.xlu0 %8978
    %v8980 = vlaneseq
    %v8981 = vshrl.u32 %v8980, 7
    %v8982 = vadd.s32 %v8981, 24
    %8983 = vset.pattern.permute.xlu0 %v8982
    %8984 = vperm.xlu0 %8983, %v8961
    %v8985 = vpop.permute.xlu0 %8984
    %v8986 = vlaneseq
    %v8987 = vshrl.u32 %v8986, 7
    %v8988 = vadd.s32 %v8987, 32
    %8989 = vset.pattern.permute.xlu0 %v8988
    %8990 = vperm.xlu0 %8989, %v8961
    %v8991 = vpop.permute.xlu0 %8990
    %v8992 = vlaneseq
    %v8993 = vshrl.u32 %v8992, 7
    %v8994 = vadd.s32 %v8993, 40
    %8995 = vset.pattern.permute.xlu0 %v8994
    %8996 = vperm.xlu0 %8995, %v8961
    %v8997 = vpop.permute.xlu0 %8996
    %v8998 = vlaneseq
    %v8999 = vshrl.u32 %v8998, 7
    %v9000 = vadd.s32 %v8999, 48
    %9001 = vset.pattern.permute.xlu0 %v9000
    %9002 = vperm.xlu0 %9001, %v8961
    %v9003 = vpop.permute.xlu0 %9002
    %v9004 = vlaneseq
    %v9005 = vshrl.u32 %v9004, 7
    %v9006 = vadd.s32 %v9005, 56
    %9007 = vset.pattern.permute.xlu0 %v9006
    %9008 = vperm.xlu0 %9007, %v8961
    %v9009 = vpop.permute.xlu0 %9008
    %v9010 = vlaneseq
    %v9011 = vshrl.u32 %v9010, 7
    %v9012 = vadd.s32 %v9011, 64
    %9013 = vset.pattern.permute.xlu0 %v9012
    %9014 = vperm.xlu0 %9013, %v8961
    %v9015 = vpop.permute.xlu0 %9014
    %v9016 = vlaneseq
    %v9017 = vshrl.u32 %v9016, 7
    %v9018 = vadd.s32 %v9017, 72
    %9019 = vset.pattern.permute.xlu0 %v9018
    %9020 = vperm.xlu0 %9019, %v8961
    %v9021 = vpop.permute.xlu0 %9020
    %v9022 = vlaneseq
    %v9023 = vshrl.u32 %v9022, 7
    %v9024 = vadd.s32 %v9023, 80
    %9025 = vset.pattern.permute.xlu0 %v9024
    %9026 = vperm.xlu0 %9025, %v8961
    %v9027 = vpop.permute.xlu0 %9026
    %v9028 = vlaneseq
    %v9029 = vshrl.u32 %v9028, 7
    %v9030 = vadd.s32 %v9029, 88
    %9031 = vset.pattern.permute.xlu0 %v9030
    %9032 = vperm.xlu0 %9031, %v8961
    %v9033 = vpop.permute.xlu0 %9032
    %v9034 = vlaneseq
    %v9035 = vshrl.u32 %v9034, 7
    %v9036 = vadd.s32 %v9035, 96
    %9037 = vset.pattern.permute.xlu0 %v9036
    %9038 = vperm.xlu0 %9037, %v8961
    %v9039 = vpop.permute.xlu0 %9038
    %v9040 = vlaneseq
    %v9041 = vshrl.u32 %v9040, 7
    %v9042 = vadd.s32 %v9041, 104
    %9043 = vset.pattern.permute.xlu0 %v9042
    %9044 = vperm.xlu0 %9043, %v8961
    %v9045 = vpop.permute.xlu0 %9044
    %v9046 = vlaneseq
    %v9047 = vshrl.u32 %v9046, 7
    %v9048 = vadd.s32 %v9047, 112
    %9049 = vset.pattern.permute.xlu0 %v9048
    %9050 = vperm.xlu0 %9049, %v8961
    %v9051 = vpop.permute.xlu0 %9050
    %v9052 = vlaneseq
    %v9053 = vshrl.u32 %v9052, 7
    %v9054 = vadd.s32 %v9053, 120
    %9055 = vset.pattern.permute.xlu0 %v9054
    %9056 = vperm.xlu0 %9055, %v8961
    %v9057 = vpop.permute.xlu0 %9056
    %v9058 = vperm.slane %v145, 3
    %v9059 = vlaneseq
    %v9060 = vshrl.u32 %v9059, 7
    %9062 = vset.pattern.permute.xlu0 %v9060
    %9063 = vperm.xlu0 %9062, %v9058
    %v9064 = vpop.permute.xlu0 %9063
    %v9065 = vlaneseq
    %v9066 = vshrl.u32 %v9065, 7
    %v9067 = vadd.s32 %v9066, 8
    %9068 = vset.pattern.permute.xlu0 %v9067
    %9069 = vperm.xlu0 %9068, %v9058
    %v9070 = vpop.permute.xlu0 %9069
    %v9071 = vlaneseq
    %v9072 = vshrl.u32 %v9071, 7
    %v9073 = vadd.s32 %v9072, 16
    %9074 = vset.pattern.permute.xlu0 %v9073
    %9075 = vperm.xlu0 %9074, %v9058
    %v9076 = vpop.permute.xlu0 %9075
    %v9077 = vlaneseq
    %v9078 = vshrl.u32 %v9077, 7
    %v9079 = vadd.s32 %v9078, 24
    %9080 = vset.pattern.permute.xlu0 %v9079
    %9081 = vperm.xlu0 %9080, %v9058
    %v9082 = vpop.permute.xlu0 %9081
    %v9083 = vlaneseq
    %v9084 = vshrl.u32 %v9083, 7
    %v9085 = vadd.s32 %v9084, 32
    %9086 = vset.pattern.permute.xlu0 %v9085
    %9087 = vperm.xlu0 %9086, %v9058
    %v9088 = vpop.permute.xlu0 %9087
    %v9089 = vlaneseq
    %v9090 = vshrl.u32 %v9089, 7
    %v9091 = vadd.s32 %v9090, 40
    %9092 = vset.pattern.permute.xlu0 %v9091
    %9093 = vperm.xlu0 %9092, %v9058
    %v9094 = vpop.permute.xlu0 %9093
    %v9095 = vlaneseq
    %v9096 = vshrl.u32 %v9095, 7
    %v9097 = vadd.s32 %v9096, 48
    %9098 = vset.pattern.permute.xlu0 %v9097
    %9099 = vperm.xlu0 %9098, %v9058
    %v9100 = vpop.permute.xlu0 %9099
    %v9101 = vlaneseq
    %v9102 = vshrl.u32 %v9101, 7
    %v9103 = vadd.s32 %v9102, 56
    %9104 = vset.pattern.permute.xlu0 %v9103
    %9105 = vperm.xlu0 %9104, %v9058
    %v9106 = vpop.permute.xlu0 %9105
    %v9107 = vlaneseq
    %v9108 = vshrl.u32 %v9107, 7
    %v9109 = vadd.s32 %v9108, 64
    %9110 = vset.pattern.permute.xlu0 %v9109
    %9111 = vperm.xlu0 %9110, %v9058
    %v9112 = vpop.permute.xlu0 %9111
    %v9113 = vlaneseq
    %v9114 = vshrl.u32 %v9113, 7
    %v9115 = vadd.s32 %v9114, 72
    %9116 = vset.pattern.permute.xlu0 %v9115
    %9117 = vperm.xlu0 %9116, %v9058
    %v9118 = vpop.permute.xlu0 %9117
    %v9119 = vlaneseq
    %v9120 = vshrl.u32 %v9119, 7
    %v9121 = vadd.s32 %v9120, 80
    %9122 = vset.pattern.permute.xlu0 %v9121
    %9123 = vperm.xlu0 %9122, %v9058
    %v9124 = vpop.permute.xlu0 %9123
    %v9125 = vlaneseq
    %v9126 = vshrl.u32 %v9125, 7
    %v9127 = vadd.s32 %v9126, 88
    %9128 = vset.pattern.permute.xlu0 %v9127
    %9129 = vperm.xlu0 %9128, %v9058
    %v9130 = vpop.permute.xlu0 %9129
    %v9131 = vlaneseq
    %v9132 = vshrl.u32 %v9131, 7
    %v9133 = vadd.s32 %v9132, 96
    %9134 = vset.pattern.permute.xlu0 %v9133
    %9135 = vperm.xlu0 %9134, %v9058
    %v9136 = vpop.permute.xlu0 %9135
    %v9137 = vlaneseq
    %v9138 = vshrl.u32 %v9137, 7
    %v9139 = vadd.s32 %v9138, 104
    %9140 = vset.pattern.permute.xlu0 %v9139
    %9141 = vperm.xlu0 %9140, %v9058
    %v9142 = vpop.permute.xlu0 %9141
    %v9143 = vlaneseq
    %v9144 = vshrl.u32 %v9143, 7
    %v9145 = vadd.s32 %v9144, 112
    %9146 = vset.pattern.permute.xlu0 %v9145
    %9147 = vperm.xlu0 %9146, %v9058
    %v9148 = vpop.permute.xlu0 %9147
    %v9149 = vlaneseq
    %v9150 = vshrl.u32 %v9149, 7
    %v9151 = vadd.s32 %v9150, 120
    %9152 = vset.pattern.permute.xlu0 %v9151
    %9153 = vperm.xlu0 %9152, %v9058
    %v9154 = vpop.permute.xlu0 %9153
    %v9155 = vperm.slane %v146, 3
    %v9156 = vlaneseq
    %v9157 = vshrl.u32 %v9156, 7
    %9159 = vset.pattern.permute.xlu0 %v9157
    %9160 = vperm.xlu0 %9159, %v9155
    %v9161 = vpop.permute.xlu0 %9160
    %v9162 = vlaneseq
    %v9163 = vshrl.u32 %v9162, 7
    %v9164 = vadd.s32 %v9163, 8
    %9165 = vset.pattern.permute.xlu0 %v9164
    %9166 = vperm.xlu0 %9165, %v9155
    %v9167 = vpop.permute.xlu0 %9166
    %v9168 = vlaneseq
    %v9169 = vshrl.u32 %v9168, 7
    %v9170 = vadd.s32 %v9169, 16
    %9171 = vset.pattern.permute.xlu0 %v9170
    %9172 = vperm.xlu0 %9171, %v9155
    %v9173 = vpop.permute.xlu0 %9172
    %v9174 = vlaneseq
    %v9175 = vshrl.u32 %v9174, 7
    %v9176 = vadd.s32 %v9175, 24
    %9177 = vset.pattern.permute.xlu0 %v9176
    %9178 = vperm.xlu0 %9177, %v9155
    %v9179 = vpop.permute.xlu0 %9178
    %v9180 = vlaneseq
    %v9181 = vshrl.u32 %v9180, 7
    %v9182 = vadd.s32 %v9181, 32
    %9183 = vset.pattern.permute.xlu0 %v9182
    %9184 = vperm.xlu0 %9183, %v9155
    %v9185 = vpop.permute.xlu0 %9184
    %v9186 = vlaneseq
    %v9187 = vshrl.u32 %v9186, 7
    %v9188 = vadd.s32 %v9187, 40
    %9189 = vset.pattern.permute.xlu0 %v9188
    %9190 = vperm.xlu0 %9189, %v9155
    %v9191 = vpop.permute.xlu0 %9190
    %v9192 = vlaneseq
    %v9193 = vshrl.u32 %v9192, 7
    %v9194 = vadd.s32 %v9193, 48
    %9195 = vset.pattern.permute.xlu0 %v9194
    %9196 = vperm.xlu0 %9195, %v9155
    %v9197 = vpop.permute.xlu0 %9196
    %v9198 = vlaneseq
    %v9199 = vshrl.u32 %v9198, 7
    %v9200 = vadd.s32 %v9199, 56
    %9201 = vset.pattern.permute.xlu0 %v9200
    %9202 = vperm.xlu0 %9201, %v9155
    %v9203 = vpop.permute.xlu0 %9202
    %v9204 = vlaneseq
    %v9205 = vshrl.u32 %v9204, 7
    %v9206 = vadd.s32 %v9205, 64
    %9207 = vset.pattern.permute.xlu0 %v9206
    %9208 = vperm.xlu0 %9207, %v9155
    %v9209 = vpop.permute.xlu0 %9208
    %v9210 = vlaneseq
    %v9211 = vshrl.u32 %v9210, 7
    %v9212 = vadd.s32 %v9211, 72
    %9213 = vset.pattern.permute.xlu0 %v9212
    %9214 = vperm.xlu0 %9213, %v9155
    %v9215 = vpop.permute.xlu0 %9214
    %v9216 = vlaneseq
    %v9217 = vshrl.u32 %v9216, 7
    %v9218 = vadd.s32 %v9217, 80
    %9219 = vset.pattern.permute.xlu0 %v9218
    %9220 = vperm.xlu0 %9219, %v9155
    %v9221 = vpop.permute.xlu0 %9220
    %v9222 = vlaneseq
    %v9223 = vshrl.u32 %v9222, 7
    %v9224 = vadd.s32 %v9223, 88
    %9225 = vset.pattern.permute.xlu0 %v9224
    %9226 = vperm.xlu0 %9225, %v9155
    %v9227 = vpop.permute.xlu0 %9226
    %v9228 = vlaneseq
    %v9229 = vshrl.u32 %v9228, 7
    %v9230 = vadd.s32 %v9229, 96
    %9231 = vset.pattern.permute.xlu0 %v9230
    %9232 = vperm.xlu0 %9231, %v9155
    %v9233 = vpop.permute.xlu0 %9232
    %v9234 = vlaneseq
    %v9235 = vshrl.u32 %v9234, 7
    %v9236 = vadd.s32 %v9235, 104
    %9237 = vset.pattern.permute.xlu0 %v9236
    %9238 = vperm.xlu0 %9237, %v9155
    %v9239 = vpop.permute.xlu0 %9238
    %v9240 = vlaneseq
    %v9241 = vshrl.u32 %v9240, 7
    %v9242 = vadd.s32 %v9241, 112
    %9243 = vset.pattern.permute.xlu0 %v9242
    %9244 = vperm.xlu0 %9243, %v9155
    %v9245 = vpop.permute.xlu0 %9244
    %v9246 = vlaneseq
    %v9247 = vshrl.u32 %v9246, 7
    %v9248 = vadd.s32 %v9247, 120
    %9249 = vset.pattern.permute.xlu0 %v9248
    %9250 = vperm.xlu0 %9249, %v9155
    %v9251 = vpop.permute.xlu0 %9250
    %v9508 = vmul.f32 %v7684, %v7706
    %v9509 = vmul.f32 %v7684, %v7712
    %v9510 = vmul.f32 %v7684, %v7718
    %v9511 = vmul.f32 %v7684, %v7724
    %v9512 = vmul.f32 %v7684, %v7730
    %v9513 = vmul.f32 %v7684, %v7736
    %v9514 = vmul.f32 %v7684, %v7742
    %v9515 = vmul.f32 %v7684, %v7748
    %v9516 = vmul.f32 %v7684, %v7754
    %v9517 = vmul.f32 %v7684, %v7760
    %v9518 = vmul.f32 %v7684, %v7766
    %v9519 = vmul.f32 %v7684, %v7772
    %v9520 = vmul.f32 %v7684, %v7778
    %v9521 = vmul.f32 %v7684, %v7784
    %v9522 = vmul.f32 %v7684, %v7790
    %v9523 = vmul.f32 %v7684, %v7796
    %v9524 = vmul.f32 %v7685, %v7803
    %v9525 = vmul.f32 %v7685, %v7809
    %v9526 = vmul.f32 %v7685, %v7815
    %v9527 = vmul.f32 %v7685, %v7821
    %v9528 = vmul.f32 %v7685, %v7827
    %v9529 = vmul.f32 %v7685, %v7833
    %v9530 = vmul.f32 %v7685, %v7839
    %v9531 = vmul.f32 %v7685, %v7845
    %v9532 = vmul.f32 %v7685, %v7851
    %v9533 = vmul.f32 %v7685, %v7857
    %v9534 = vmul.f32 %v7685, %v7863
    %v9535 = vmul.f32 %v7685, %v7869
    %v9536 = vmul.f32 %v7685, %v7875
    %v9537 = vmul.f32 %v7685, %v7881
    %v9538 = vmul.f32 %v7685, %v7887
    %v9539 = vmul.f32 %v7685, %v7893
    %v9540 = vmul.f32 %v7686, %v7900
    %v9541 = vmul.f32 %v7686, %v7906
    %v9542 = vmul.f32 %v7686, %v7912
    %v9543 = vmul.f32 %v7686, %v7918
    %v9544 = vmul.f32 %v7686, %v7924
    %v9545 = vmul.f32 %v7686, %v7930
    %v9546 = vmul.f32 %v7686, %v7936
    %v9547 = vmul.f32 %v7686, %v7942
    %v9548 = vmul.f32 %v7686, %v7948
    %v9549 = vmul.f32 %v7686, %v7954
    %v9550 = vmul.f32 %v7686, %v7960
    %v9551 = vmul.f32 %v7686, %v7966
    %v9552 = vmul.f32 %v7686, %v7972
    %v9553 = vmul.f32 %v7686, %v7978
    %v9554 = vmul.f32 %v7686, %v7984
    %v9555 = vmul.f32 %v7686, %v7990
    %v9556 = vmul.f32 %v7687, %v7997
    %v9557 = vmul.f32 %v7687, %v8003
    %v9558 = vmul.f32 %v7687, %v8009
    %v9559 = vmul.f32 %v7687, %v8015
    %v9560 = vmul.f32 %v7687, %v8021
    %v9561 = vmul.f32 %v7687, %v8027
    %v9562 = vmul.f32 %v7687, %v8033
    %v9563 = vmul.f32 %v7687, %v8039
    %v9564 = vmul.f32 %v7687, %v8045
    %v9565 = vmul.f32 %v7687, %v8051
    %v9566 = vmul.f32 %v7687, %v8057
    %v9567 = vmul.f32 %v7687, %v8063
    %v9568 = vmul.f32 %v7687, %v8069
    %v9569 = vmul.f32 %v7687, %v8075
    %v9570 = vmul.f32 %v7687, %v8081
    %v9571 = vmul.f32 %v7687, %v8087
    %v9572 = vmul.f32 %v7688, %v8094
    %v9573 = vmul.f32 %v7688, %v8100
    %v9574 = vmul.f32 %v7688, %v8106
    %v9575 = vmul.f32 %v7688, %v8112
    %v9576 = vmul.f32 %v7688, %v8118
    %v9577 = vmul.f32 %v7688, %v8124
    %v9578 = vmul.f32 %v7688, %v8130
    %v9579 = vmul.f32 %v7688, %v8136
    %v9580 = vmul.f32 %v7688, %v8142
    %v9581 = vmul.f32 %v7688, %v8148
    %v9582 = vmul.f32 %v7688, %v8154
    %v9583 = vmul.f32 %v7688, %v8160
    %v9584 = vmul.f32 %v7688, %v8166
    %v9585 = vmul.f32 %v7688, %v8172
    %v9586 = vmul.f32 %v7688, %v8178
    %v9587 = vmul.f32 %v7688, %v8184
    %v9588 = vmul.f32 %v7689, %v8191
    %v9589 = vmul.f32 %v7689, %v8197
    %v9590 = vmul.f32 %v7689, %v8203
    %v9591 = vmul.f32 %v7689, %v8209
    %v9592 = vmul.f32 %v7689, %v8215
    %v9593 = vmul.f32 %v7689, %v8221
    %v9594 = vmul.f32 %v7689, %v8227
    %v9595 = vmul.f32 %v7689, %v8233
    %v9596 = vmul.f32 %v7689, %v8239
    %v9597 = vmul.f32 %v7689, %v8245
    %v9598 = vmul.f32 %v7689, %v8251
    %v9599 = vmul.f32 %v7689, %v8257
    %v9600 = vmul.f32 %v7689, %v8263
    %v9601 = vmul.f32 %v7689, %v8269
    %v9602 = vmul.f32 %v7689, %v8275
    %v9603 = vmul.f32 %v7689, %v8281
    %v9604 = vmul.f32 %v7690, %v8288
    %v9605 = vmul.f32 %v7690, %v8294
    %v9606 = vmul.f32 %v7690, %v8300
    %v9607 = vmul.f32 %v7690, %v8306
    %v9608 = vmul.f32 %v7690, %v8312
    %v9609 = vmul.f32 %v7690, %v8318
    %v9610 = vmul.f32 %v7690, %v8324
    %v9611 = vmul.f32 %v7690, %v8330
    %v9612 = vmul.f32 %v7690, %v8336
    %v9613 = vmul.f32 %v7690, %v8342
    %v9614 = vmul.f32 %v7690, %v8348
    %v9615 = vmul.f32 %v7690, %v8354
    %v9616 = vmul.f32 %v7690, %v8360
    %v9617 = vmul.f32 %v7690, %v8366
    %v9618 = vmul.f32 %v7690, %v8372
    %v9619 = vmul.f32 %v7690, %v8378
    %v9620 = vmul.f32 %v7691, %v8385
    %v9621 = vmul.f32 %v7691, %v8391
    %v9622 = vmul.f32 %v7691, %v8397
    %v9623 = vmul.f32 %v7691, %v8403
    %v9624 = vmul.f32 %v7691, %v8409
    %v9625 = vmul.f32 %v7691, %v8415
    %v9626 = vmul.f32 %v7691, %v8421
    %v9627 = vmul.f32 %v7691, %v8427
    %v9628 = vmul.f32 %v7691, %v8433
    %v9629 = vmul.f32 %v7691, %v8439
    %v9630 = vmul.f32 %v7691, %v8445
    %v9631 = vmul.f32 %v7691, %v8451
    %v9632 = vmul.f32 %v7691, %v8457
    %v9633 = vmul.f32 %v7691, %v8463
    %v9634 = vmul.f32 %v7691, %v8469
    %v9635 = vmul.f32 %v7691, %v8475
    %v9636 = vmul.f32 %v7692, %v8482
    %v9637 = vmul.f32 %v7692, %v8488
    %v9638 = vmul.f32 %v7692, %v8494
    %v9639 = vmul.f32 %v7692, %v8500
    %v9640 = vmul.f32 %v7692, %v8506
    %v9641 = vmul.f32 %v7692, %v8512
    %v9642 = vmul.f32 %v7692, %v8518
    %v9643 = vmul.f32 %v7692, %v8524
    %v9644 = vmul.f32 %v7692, %v8530
    %v9645 = vmul.f32 %v7692, %v8536
    %v9646 = vmul.f32 %v7692, %v8542
    %v9647 = vmul.f32 %v7692, %v8548
    %v9648 = vmul.f32 %v7692, %v8554
    %v9649 = vmul.f32 %v7692, %v8560
    %v9650 = vmul.f32 %v7692, %v8566
    %v9651 = vmul.f32 %v7692, %v8572
    %v9652 = vmul.f32 %v7693, %v8579
    %v9653 = vmul.f32 %v7693, %v8585
    %v9654 = vmul.f32 %v7693, %v8591
    %v9655 = vmul.f32 %v7693, %v8597
    %v9656 = vmul.f32 %v7693, %v8603
    %v9657 = vmul.f32 %v7693, %v8609
    %v9658 = vmul.f32 %v7693, %v8615
    %v9659 = vmul.f32 %v7693, %v8621
    %v9660 = vmul.f32 %v7693, %v8627
    %v9661 = vmul.f32 %v7693, %v8633
    %v9662 = vmul.f32 %v7693, %v8639
    %v9663 = vmul.f32 %v7693, %v8645
    %v9664 = vmul.f32 %v7693, %v8651
    %v9665 = vmul.f32 %v7693, %v8657
    %v9666 = vmul.f32 %v7693, %v8663
    %v9667 = vmul.f32 %v7693, %v8669
    %v9668 = vmul.f32 %v7694, %v8676
    %v9669 = vmul.f32 %v7694, %v8682
    %v9670 = vmul.f32 %v7694, %v8688
    %v9671 = vmul.f32 %v7694, %v8694
    %v9672 = vmul.f32 %v7694, %v8700
    %v9673 = vmul.f32 %v7694, %v8706
    %v9674 = vmul.f32 %v7694, %v8712
    %v9675 = vmul.f32 %v7694, %v8718
    %v9676 = vmul.f32 %v7694, %v8724
    %v9677 = vmul.f32 %v7694, %v8730
    %v9678 = vmul.f32 %v7694, %v8736
    %v9679 = vmul.f32 %v7694, %v8742
    %v9680 = vmul.f32 %v7694, %v8748
    %v9681 = vmul.f32 %v7694, %v8754
    %v9682 = vmul.f32 %v7694, %v8760
    %v9683 = vmul.f32 %v7694, %v8766
    %v9684 = vmul.f32 %v7695, %v8773
    %v9685 = vmul.f32 %v7695, %v8779
    %v9686 = vmul.f32 %v7695, %v8785
    %v9687 = vmul.f32 %v7695, %v8791
    %v9688 = vmul.f32 %v7695, %v8797
    %v9689 = vmul.f32 %v7695, %v8803
    %v9690 = vmul.f32 %v7695, %v8809
    %v9691 = vmul.f32 %v7695, %v8815
    %v9692 = vmul.f32 %v7695, %v8821
    %v9693 = vmul.f32 %v7695, %v8827
    %v9694 = vmul.f32 %v7695, %v8833
    %v9695 = vmul.f32 %v7695, %v8839
    %v9696 = vmul.f32 %v7695, %v8845
    %v9697 = vmul.f32 %v7695, %v8851
    %v9698 = vmul.f32 %v7695, %v8857
    %v9699 = vmul.f32 %v7695, %v8863
    %v9700 = vmul.f32 %v7696, %v8870
    %v9701 = vmul.f32 %v7696, %v8876
    %v9702 = vmul.f32 %v7696, %v8882
    %v9703 = vmul.f32 %v7696, %v8888
    %v9704 = vmul.f32 %v7696, %v8894
    %v9705 = vmul.f32 %v7696, %v8900
    %v9706 = vmul.f32 %v7696, %v8906
    %v9707 = vmul.f32 %v7696, %v8912
    %v9708 = vmul.f32 %v7696, %v8918
    %v9709 = vmul.f32 %v7696, %v8924
    %v9710 = vmul.f32 %v7696, %v8930
    %v9711 = vmul.f32 %v7696, %v8936
    %v9712 = vmul.f32 %v7696, %v8942
    %v9713 = vmul.f32 %v7696, %v8948
    %v9714 = vmul.f32 %v7696, %v8954
    %v9715 = vmul.f32 %v7696, %v8960
    %v9716 = vmul.f32 %v7697, %v8967
    %v9717 = vmul.f32 %v7697, %v8973
    %v9718 = vmul.f32 %v7697, %v8979
    %v9719 = vmul.f32 %v7697, %v8985
    %v9720 = vmul.f32 %v7697, %v8991
    %v9721 = vmul.f32 %v7697, %v8997
    %v9722 = vmul.f32 %v7697, %v9003
    %v9723 = vmul.f32 %v7697, %v9009
    %v9724 = vmul.f32 %v7697, %v9015
    %v9725 = vmul.f32 %v7697, %v9021
    %v9726 = vmul.f32 %v7697, %v9027
    %v9727 = vmul.f32 %v7697, %v9033
    %v9728 = vmul.f32 %v7697, %v9039
    %v9729 = vmul.f32 %v7697, %v9045
    %v9730 = vmul.f32 %v7697, %v9051
    %v9731 = vmul.f32 %v7697, %v9057
    %v9732 = vmul.f32 %v7698, %v9064
    %v9733 = vmul.f32 %v7698, %v9070
    %v9734 = vmul.f32 %v7698, %v9076
    %v9735 = vmul.f32 %v7698, %v9082
    %v9736 = vmul.f32 %v7698, %v9088
    %v9737 = vmul.f32 %v7698, %v9094
    %v9738 = vmul.f32 %v7698, %v9100
    %v9739 = vmul.f32 %v7698, %v9106
    %v9740 = vmul.f32 %v7698, %v9112
    %v9741 = vmul.f32 %v7698, %v9118
    %v9742 = vmul.f32 %v7698, %v9124
    %v9743 = vmul.f32 %v7698, %v9130
    %v9744 = vmul.f32 %v7698, %v9136
    %v9745 = vmul.f32 %v7698, %v9142
    %v9746 = vmul.f32 %v7698, %v9148
    %v9747 = vmul.f32 %v7698, %v9154
    %v9748 = vmul.f32 %v7699, %v9161
    %v9749 = vmul.f32 %v7699, %v9167
    %v9750 = vmul.f32 %v7699, %v9173
    %v9751 = vmul.f32 %v7699, %v9179
    %v9752 = vmul.f32 %v7699, %v9185
    %v9753 = vmul.f32 %v7699, %v9191
    %v9754 = vmul.f32 %v7699, %v9197
    %v9755 = vmul.f32 %v7699, %v9203
    %v9756 = vmul.f32 %v7699, %v9209
    %v9757 = vmul.f32 %v7699, %v9215
    %v9758 = vmul.f32 %v7699, %v9221
    %v9759 = vmul.f32 %v7699, %v9227
    %v9760 = vmul.f32 %v7699, %v9233
    %v9761 = vmul.f32 %v7699, %v9239
    %v9762 = vmul.f32 %v7699, %v9245
    %v9763 = vmul.f32 %v7699, %v9251
    %v9764 = vadd.f32 %v7428, %v9508
    %v9765 = vadd.f32 %v7429, %v9509
    %v9766 = vadd.f32 %v7430, %v9510
    %v9767 = vadd.f32 %v7431, %v9511
    %v9768 = vadd.f32 %v7432, %v9512
    %v9769 = vadd.f32 %v7433, %v9513
    %v9770 = vadd.f32 %v7434, %v9514
    %v9771 = vadd.f32 %v7435, %v9515
    %v9772 = vadd.f32 %v7436, %v9516
    %v9773 = vadd.f32 %v7437, %v9517
    %v9774 = vadd.f32 %v7438, %v9518
    %v9775 = vadd.f32 %v7439, %v9519
    %v9776 = vadd.f32 %v7440, %v9520
    %v9777 = vadd.f32 %v7441, %v9521
    %v9778 = vadd.f32 %v7442, %v9522
    %v9779 = vadd.f32 %v7443, %v9523
    %v9780 = vadd.f32 %v7444, %v9524
    %v9781 = vadd.f32 %v7445, %v9525
    %v9782 = vadd.f32 %v7446, %v9526
    %v9783 = vadd.f32 %v7447, %v9527
    %v9784 = vadd.f32 %v7448, %v9528
    %v9785 = vadd.f32 %v7449, %v9529
    %v9786 = vadd.f32 %v7450, %v9530
    %v9787 = vadd.f32 %v7451, %v9531
    %v9788 = vadd.f32 %v7452, %v9532
    %v9789 = vadd.f32 %v7453, %v9533
    %v9790 = vadd.f32 %v7454, %v9534
    %v9791 = vadd.f32 %v7455, %v9535
    %v9792 = vadd.f32 %v7456, %v9536
    %v9793 = vadd.f32 %v7457, %v9537
    %v9794 = vadd.f32 %v7458, %v9538
    %v9795 = vadd.f32 %v7459, %v9539
    %v9796 = vadd.f32 %v7460, %v9540
    %v9797 = vadd.f32 %v7461, %v9541
    %v9798 = vadd.f32 %v7462, %v9542
    %v9799 = vadd.f32 %v7463, %v9543
    %v9800 = vadd.f32 %v7464, %v9544
    %v9801 = vadd.f32 %v7465, %v9545
    %v9802 = vadd.f32 %v7466, %v9546
    %v9803 = vadd.f32 %v7467, %v9547
    %v9804 = vadd.f32 %v7468, %v9548
    %v9805 = vadd.f32 %v7469, %v9549
    %v9806 = vadd.f32 %v7470, %v9550
    %v9807 = vadd.f32 %v7471, %v9551
    %v9808 = vadd.f32 %v7472, %v9552
    %v9809 = vadd.f32 %v7473, %v9553
    %v9810 = vadd.f32 %v7474, %v9554
    %v9811 = vadd.f32 %v7475, %v9555
    %v9812 = vadd.f32 %v7476, %v9556
    %v9813 = vadd.f32 %v7477, %v9557
    %v9814 = vadd.f32 %v7478, %v9558
    %v9815 = vadd.f32 %v7479, %v9559
    %v9816 = vadd.f32 %v7480, %v9560
    %v9817 = vadd.f32 %v7481, %v9561
    %v9818 = vadd.f32 %v7482, %v9562
    %v9819 = vadd.f32 %v7483, %v9563
    %v9820 = vadd.f32 %v7484, %v9564
    %v9821 = vadd.f32 %v7485, %v9565
    %v9822 = vadd.f32 %v7486, %v9566
    %v9823 = vadd.f32 %v7487, %v9567
    %v9824 = vadd.f32 %v7488, %v9568
    %v9825 = vadd.f32 %v7489, %v9569
    %v9826 = vadd.f32 %v7490, %v9570
    %v9827 = vadd.f32 %v7491, %v9571
    %v9828 = vadd.f32 %v7492, %v9572
    %v9829 = vadd.f32 %v7493, %v9573
    %v9830 = vadd.f32 %v7494, %v9574
    %v9831 = vadd.f32 %v7495, %v9575
    %v9832 = vadd.f32 %v7496, %v9576
    %v9833 = vadd.f32 %v7497, %v9577
    %v9834 = vadd.f32 %v7498, %v9578
    %v9835 = vadd.f32 %v7499, %v9579
    %v9836 = vadd.f32 %v7500, %v9580
    %v9837 = vadd.f32 %v7501, %v9581
    %v9838 = vadd.f32 %v7502, %v9582
    %v9839 = vadd.f32 %v7503, %v9583
    %v9840 = vadd.f32 %v7504, %v9584
    %v9841 = vadd.f32 %v7505, %v9585
    %v9842 = vadd.f32 %v7506, %v9586
    %v9843 = vadd.f32 %v7507, %v9587
    %v9844 = vadd.f32 %v7508, %v9588
    %v9845 = vadd.f32 %v7509, %v9589
    %v9846 = vadd.f32 %v7510, %v9590
    %v9847 = vadd.f32 %v7511, %v9591
    %v9848 = vadd.f32 %v7512, %v9592
    %v9849 = vadd.f32 %v7513, %v9593
    %v9850 = vadd.f32 %v7514, %v9594
    %v9851 = vadd.f32 %v7515, %v9595
    %v9852 = vadd.f32 %v7516, %v9596
    %v9853 = vadd.f32 %v7517, %v9597
    %v9854 = vadd.f32 %v7518, %v9598
    %v9855 = vadd.f32 %v7519, %v9599
    %v9856 = vadd.f32 %v7520, %v9600
    %v9857 = vadd.f32 %v7521, %v9601
    %v9858 = vadd.f32 %v7522, %v9602
    %v9859 = vadd.f32 %v7523, %v9603
    %v9860 = vadd.f32 %v7524, %v9604
    %v9861 = vadd.f32 %v7525, %v9605
    %v9862 = vadd.f32 %v7526, %v9606
    %v9863 = vadd.f32 %v7527, %v9607
    %v9864 = vadd.f32 %v7528, %v9608
    %v9865 = vadd.f32 %v7529, %v9609
    %v9866 = vadd.f32 %v7530, %v9610
    %v9867 = vadd.f32 %v7531, %v9611
    %v9868 = vadd.f32 %v7532, %v9612
    %v9869 = vadd.f32 %v7533, %v9613
    %v9870 = vadd.f32 %v7534, %v9614
    %v9871 = vadd.f32 %v7535, %v9615
    %v9872 = vadd.f32 %v7536, %v9616
    %v9873 = vadd.f32 %v7537, %v9617
    %v9874 = vadd.f32 %v7538, %v9618
    %v9875 = vadd.f32 %v7539, %v9619
    %v9876 = vadd.f32 %v7540, %v9620
    %v9877 = vadd.f32 %v7541, %v9621
    %v9878 = vadd.f32 %v7542, %v9622
    %v9879 = vadd.f32 %v7543, %v9623
    %v9880 = vadd.f32 %v7544, %v9624
    %v9881 = vadd.f32 %v7545, %v9625
    %v9882 = vadd.f32 %v7546, %v9626
    %v9883 = vadd.f32 %v7547, %v9627
    %v9884 = vadd.f32 %v7548, %v9628
    %v9885 = vadd.f32 %v7549, %v9629
    %v9886 = vadd.f32 %v7550, %v9630
    %v9887 = vadd.f32 %v7551, %v9631
    %v9888 = vadd.f32 %v7552, %v9632
    %v9889 = vadd.f32 %v7553, %v9633
    %v9890 = vadd.f32 %v7554, %v9634
    %v9891 = vadd.f32 %v7555, %v9635
    %v9892 = vadd.f32 %v7556, %v9636
    %v9893 = vadd.f32 %v7557, %v9637
    %v9894 = vadd.f32 %v7558, %v9638
    %v9895 = vadd.f32 %v7559, %v9639
    %v9896 = vadd.f32 %v7560, %v9640
    %v9897 = vadd.f32 %v7561, %v9641
    %v9898 = vadd.f32 %v7562, %v9642
    %v9899 = vadd.f32 %v7563, %v9643
    %v9900 = vadd.f32 %v7564, %v9644
    %v9901 = vadd.f32 %v7565, %v9645
    %v9902 = vadd.f32 %v7566, %v9646
    %v9903 = vadd.f32 %v7567, %v9647
    %v9904 = vadd.f32 %v7568, %v9648
    %v9905 = vadd.f32 %v7569, %v9649
    %v9906 = vadd.f32 %v7570, %v9650
    %v9907 = vadd.f32 %v7571, %v9651
    %v9908 = vadd.f32 %v7572, %v9652
    %v9909 = vadd.f32 %v7573, %v9653
    %v9910 = vadd.f32 %v7574, %v9654
    %v9911 = vadd.f32 %v7575, %v9655
    %v9912 = vadd.f32 %v7576, %v9656
    %v9913 = vadd.f32 %v7577, %v9657
    %v9914 = vadd.f32 %v7578, %v9658
    %v9915 = vadd.f32 %v7579, %v9659
    %v9916 = vadd.f32 %v7580, %v9660
    %v9917 = vadd.f32 %v7581, %v9661
    %v9918 = vadd.f32 %v7582, %v9662
    %v9919 = vadd.f32 %v7583, %v9663
    %v9920 = vadd.f32 %v7584, %v9664
    %v9921 = vadd.f32 %v7585, %v9665
    %v9922 = vadd.f32 %v7586, %v9666
    %v9923 = vadd.f32 %v7587, %v9667
    %v9924 = vadd.f32 %v7588, %v9668
    %v9925 = vadd.f32 %v7589, %v9669
    %v9926 = vadd.f32 %v7590, %v9670
    %v9927 = vadd.f32 %v7591, %v9671
    %v9928 = vadd.f32 %v7592, %v9672
    %v9929 = vadd.f32 %v7593, %v9673
    %v9930 = vadd.f32 %v7594, %v9674
    %v9931 = vadd.f32 %v7595, %v9675
    %v9932 = vadd.f32 %v7596, %v9676
    %v9933 = vadd.f32 %v7597, %v9677
    %v9934 = vadd.f32 %v7598, %v9678
    %v9935 = vadd.f32 %v7599, %v9679
    %v9936 = vadd.f32 %v7600, %v9680
    %v9937 = vadd.f32 %v7601, %v9681
    %v9938 = vadd.f32 %v7602, %v9682
    %v9939 = vadd.f32 %v7603, %v9683
    %v9940 = vadd.f32 %v7604, %v9684
    %v9941 = vadd.f32 %v7605, %v9685
    %v9942 = vadd.f32 %v7606, %v9686
    %v9943 = vadd.f32 %v7607, %v9687
    %v9944 = vadd.f32 %v7608, %v9688
    %v9945 = vadd.f32 %v7609, %v9689
    %v9946 = vadd.f32 %v7610, %v9690
    %v9947 = vadd.f32 %v7611, %v9691
    %v9948 = vadd.f32 %v7612, %v9692
    %v9949 = vadd.f32 %v7613, %v9693
    %v9950 = vadd.f32 %v7614, %v9694
    %v9951 = vadd.f32 %v7615, %v9695
    %v9952 = vadd.f32 %v7616, %v9696
    %v9953 = vadd.f32 %v7617, %v9697
    %v9954 = vadd.f32 %v7618, %v9698
    %v9955 = vadd.f32 %v7619, %v9699
    %v9956 = vadd.f32 %v7620, %v9700
    %v9957 = vadd.f32 %v7621, %v9701
    %v9958 = vadd.f32 %v7622, %v9702
    %v9959 = vadd.f32 %v7623, %v9703
    %v9960 = vadd.f32 %v7624, %v9704
    %v9961 = vadd.f32 %v7625, %v9705
    %v9962 = vadd.f32 %v7626, %v9706
    %v9963 = vadd.f32 %v7627, %v9707
    %v9964 = vadd.f32 %v7628, %v9708
    %v9965 = vadd.f32 %v7629, %v9709
    %v9966 = vadd.f32 %v7630, %v9710
    %v9967 = vadd.f32 %v7631, %v9711
    %v9968 = vadd.f32 %v7632, %v9712
    %v9969 = vadd.f32 %v7633, %v9713
    %v9970 = vadd.f32 %v7634, %v9714
    %v9971 = vadd.f32 %v7635, %v9715
    %v9972 = vadd.f32 %v7636, %v9716
    %v9973 = vadd.f32 %v7637, %v9717
    %v9974 = vadd.f32 %v7638, %v9718
    %v9975 = vadd.f32 %v7639, %v9719
    %v9976 = vadd.f32 %v7640, %v9720
    %v9977 = vadd.f32 %v7641, %v9721
    %v9978 = vadd.f32 %v7642, %v9722
    %v9979 = vadd.f32 %v7643, %v9723
    %v9980 = vadd.f32 %v7644, %v9724
    %v9981 = vadd.f32 %v7645, %v9725
    %v9982 = vadd.f32 %v7646, %v9726
    %v9983 = vadd.f32 %v7647, %v9727
    %v9984 = vadd.f32 %v7648, %v9728
    %v9985 = vadd.f32 %v7649, %v9729
    %v9986 = vadd.f32 %v7650, %v9730
    %v9987 = vadd.f32 %v7651, %v9731
    %v9988 = vadd.f32 %v7652, %v9732
    %v9989 = vadd.f32 %v7653, %v9733
    %v9990 = vadd.f32 %v7654, %v9734
    %v9991 = vadd.f32 %v7655, %v9735
    %v9992 = vadd.f32 %v7656, %v9736
    %v9993 = vadd.f32 %v7657, %v9737
    %v9994 = vadd.f32 %v7658, %v9738
    %v9995 = vadd.f32 %v7659, %v9739
    %v9996 = vadd.f32 %v7660, %v9740
    %v9997 = vadd.f32 %v7661, %v9741
    %v9998 = vadd.f32 %v7662, %v9742
    %v9999 = vadd.f32 %v7663, %v9743
    %v10000 = vadd.f32 %v7664, %v9744
    %v10001 = vadd.f32 %v7665, %v9745
    %v10002 = vadd.f32 %v7666, %v9746
    %v10003 = vadd.f32 %v7667, %v9747
    %v10004 = vadd.f32 %v7668, %v9748
    %v10005 = vadd.f32 %v7669, %v9749
    %v10006 = vadd.f32 %v7670, %v9750
    %v10007 = vadd.f32 %v7671, %v9751
    %v10008 = vadd.f32 %v7672, %v9752
    %v10009 = vadd.f32 %v7673, %v9753
    %v10010 = vadd.f32 %v7674, %v9754
    %v10011 = vadd.f32 %v7675, %v9755
    %v10012 = vadd.f32 %v7676, %v9756
    %v10013 = vadd.f32 %v7677, %v9757
    %v10014 = vadd.f32 %v7678, %v9758
    %v10015 = vadd.f32 %v7679, %v9759
    %v10016 = vadd.f32 %v7680, %v9760
    %v10017 = vadd.f32 %v7681, %v9761
    %v10018 = vadd.f32 %v7682, %v9762
    %v10019 = vadd.f32 %v7683, %v9763
    %v10020 = vld [vmem:[#allocation12] sm:$0xff]
    %v10021 = vld [vmem:[#allocation12 + $0x8] sm:$0xff]
    %v10022 = vld [vmem:[#allocation12 + $0x10] sm:$0xff]
    %v10023 = vld [vmem:[#allocation12 + $0x18] sm:$0xff]
    %v10024 = vld [vmem:[#allocation12 + $0x20] sm:$0xff]
    %v10025 = vld [vmem:[#allocation12 + $0x28] sm:$0xff]
    %v10026 = vld [vmem:[#allocation12 + $0x30] sm:$0xff]
    %v10027 = vld [vmem:[#allocation12 + $0x38] sm:$0xff]
    %v10028 = vld [vmem:[#allocation12 + $0x40] sm:$0xff]
    %v10029 = vld [vmem:[#allocation12 + $0x48] sm:$0xff]
    %v10030 = vld [vmem:[#allocation12 + $0x50] sm:$0xff]
    %v10031 = vld [vmem:[#allocation12 + $0x58] sm:$0xff]
    %v10032 = vld [vmem:[#allocation12 + $0x60] sm:$0xff]
    %v10033 = vld [vmem:[#allocation12 + $0x68] sm:$0xff]
    %v10034 = vld [vmem:[#allocation12 + $0x70] sm:$0xff]
    %v10035 = vld [vmem:[#allocation12 + $0x78] sm:$0xff]
    %v10036 = vld [vmem:[%s6] sm:$0x1]
    %v10038 = vperm.slane %v10036, 0
    %10296 = vset.pattern.permute.xlu0 0
    %10297 = vperm.xlu0 %10296, %v9764
    %v10298 = vpop.permute.xlu0 %10297
    %10299 = vset.pattern.permute.xlu0 0
    %10300 = vperm.xlu0 %10299, %v9765
    %v10301 = vpop.permute.xlu0 %10300
    %10302 = vset.pattern.permute.xlu0 0
    %10303 = vperm.xlu0 %10302, %v9766
    %v10304 = vpop.permute.xlu0 %10303
    %10305 = vset.pattern.permute.xlu0 0
    %10306 = vperm.xlu0 %10305, %v9767
    %v10307 = vpop.permute.xlu0 %10306
    %10308 = vset.pattern.permute.xlu0 0
    %10309 = vperm.xlu0 %10308, %v9768
    %v10310 = vpop.permute.xlu0 %10309
    %10311 = vset.pattern.permute.xlu0 0
    %10312 = vperm.xlu0 %10311, %v9769
    %v10313 = vpop.permute.xlu0 %10312
    %10314 = vset.pattern.permute.xlu0 0
    %10315 = vperm.xlu0 %10314, %v9770
    %v10316 = vpop.permute.xlu0 %10315
    %10317 = vset.pattern.permute.xlu0 0
    %10318 = vperm.xlu0 %10317, %v9771
    %v10319 = vpop.permute.xlu0 %10318
    %10320 = vset.pattern.permute.xlu0 0
    %10321 = vperm.xlu0 %10320, %v9772
    %v10322 = vpop.permute.xlu0 %10321
    %10323 = vset.pattern.permute.xlu0 0
    %10324 = vperm.xlu0 %10323, %v9773
    %v10325 = vpop.permute.xlu0 %10324
    %10326 = vset.pattern.permute.xlu0 0
    %10327 = vperm.xlu0 %10326, %v9774
    %v10328 = vpop.permute.xlu0 %10327
    %10329 = vset.pattern.permute.xlu0 0
    %10330 = vperm.xlu0 %10329, %v9775
    %v10331 = vpop.permute.xlu0 %10330
    %10332 = vset.pattern.permute.xlu0 0
    %10333 = vperm.xlu0 %10332, %v9776
    %v10334 = vpop.permute.xlu0 %10333
    %10335 = vset.pattern.permute.xlu0 0
    %10336 = vperm.xlu0 %10335, %v9777
    %v10337 = vpop.permute.xlu0 %10336
    %10338 = vset.pattern.permute.xlu0 0
    %10339 = vperm.xlu0 %10338, %v9778
    %v10340 = vpop.permute.xlu0 %10339
    %10341 = vset.pattern.permute.xlu0 0
    %10342 = vperm.xlu0 %10341, %v9779
    %v10343 = vpop.permute.xlu0 %10342
    %10344 = vset.pattern.permute.xlu0 0
    %10345 = vperm.xlu0 %10344, %v9780
    %v10346 = vpop.permute.xlu0 %10345
    %10347 = vset.pattern.permute.xlu0 0
    %10348 = vperm.xlu0 %10347, %v9781
    %v10349 = vpop.permute.xlu0 %10348
    %10350 = vset.pattern.permute.xlu0 0
    %10351 = vperm.xlu0 %10350, %v9782
    %v10352 = vpop.permute.xlu0 %10351
    %10353 = vset.pattern.permute.xlu0 0
    %10354 = vperm.xlu0 %10353, %v9783
    %v10355 = vpop.permute.xlu0 %10354
    %10356 = vset.pattern.permute.xlu0 0
    %10357 = vperm.xlu0 %10356, %v9784
    %v10358 = vpop.permute.xlu0 %10357
    %10359 = vset.pattern.permute.xlu0 0
    %10360 = vperm.xlu0 %10359, %v9785
    %v10361 = vpop.permute.xlu0 %10360
    %10362 = vset.pattern.permute.xlu0 0
    %10363 = vperm.xlu0 %10362, %v9786
    %v10364 = vpop.permute.xlu0 %10363
    %10365 = vset.pattern.permute.xlu0 0
    %10366 = vperm.xlu0 %10365, %v9787
    %v10367 = vpop.permute.xlu0 %10366
    %10368 = vset.pattern.permute.xlu0 0
    %10369 = vperm.xlu0 %10368, %v9788
    %v10370 = vpop.permute.xlu0 %10369
    %10371 = vset.pattern.permute.xlu0 0
    %10372 = vperm.xlu0 %10371, %v9789
    %v10373 = vpop.permute.xlu0 %10372
    %10374 = vset.pattern.permute.xlu0 0
    %10375 = vperm.xlu0 %10374, %v9790
    %v10376 = vpop.permute.xlu0 %10375
    %10377 = vset.pattern.permute.xlu0 0
    %10378 = vperm.xlu0 %10377, %v9791
    %v10379 = vpop.permute.xlu0 %10378
    %10380 = vset.pattern.permute.xlu0 0
    %10381 = vperm.xlu0 %10380, %v9792
    %v10382 = vpop.permute.xlu0 %10381
    %10383 = vset.pattern.permute.xlu0 0
    %10384 = vperm.xlu0 %10383, %v9793
    %v10385 = vpop.permute.xlu0 %10384
    %10386 = vset.pattern.permute.xlu0 0
    %10387 = vperm.xlu0 %10386, %v9794
    %v10388 = vpop.permute.xlu0 %10387
    %10389 = vset.pattern.permute.xlu0 0
    %10390 = vperm.xlu0 %10389, %v9795
    %v10391 = vpop.permute.xlu0 %10390
    %10392 = vset.pattern.permute.xlu0 0
    %10393 = vperm.xlu0 %10392, %v9796
    %v10394 = vpop.permute.xlu0 %10393
    %10395 = vset.pattern.permute.xlu0 0
    %10396 = vperm.xlu0 %10395, %v9797
    %v10397 = vpop.permute.xlu0 %10396
    %10398 = vset.pattern.permute.xlu0 0
    %10399 = vperm.xlu0 %10398, %v9798
    %v10400 = vpop.permute.xlu0 %10399
    %10401 = vset.pattern.permute.xlu0 0
    %10402 = vperm.xlu0 %10401, %v9799
    %v10403 = vpop.permute.xlu0 %10402
    %10404 = vset.pattern.permute.xlu0 0
    %10405 = vperm.xlu0 %10404, %v9800
    %v10406 = vpop.permute.xlu0 %10405
    %10407 = vset.pattern.permute.xlu0 0
    %10408 = vperm.xlu0 %10407, %v9801
    %v10409 = vpop.permute.xlu0 %10408
    %10410 = vset.pattern.permute.xlu0 0
    %10411 = vperm.xlu0 %10410, %v9802
    %v10412 = vpop.permute.xlu0 %10411
    %10413 = vset.pattern.permute.xlu0 0
    %10414 = vperm.xlu0 %10413, %v9803
    %v10415 = vpop.permute.xlu0 %10414
    %10416 = vset.pattern.permute.xlu0 0
    %10417 = vperm.xlu0 %10416, %v9804
    %v10418 = vpop.permute.xlu0 %10417
    %10419 = vset.pattern.permute.xlu0 0
    %10420 = vperm.xlu0 %10419, %v9805
    %v10421 = vpop.permute.xlu0 %10420
    %10422 = vset.pattern.permute.xlu0 0
    %10423 = vperm.xlu0 %10422, %v9806
    %v10424 = vpop.permute.xlu0 %10423
    %10425 = vset.pattern.permute.xlu0 0
    %10426 = vperm.xlu0 %10425, %v9807
    %v10427 = vpop.permute.xlu0 %10426
    %10428 = vset.pattern.permute.xlu0 0
    %10429 = vperm.xlu0 %10428, %v9808
    %v10430 = vpop.permute.xlu0 %10429
    %10431 = vset.pattern.permute.xlu0 0
    %10432 = vperm.xlu0 %10431, %v9809
    %v10433 = vpop.permute.xlu0 %10432
    %10434 = vset.pattern.permute.xlu0 0
    %10435 = vperm.xlu0 %10434, %v9810
    %v10436 = vpop.permute.xlu0 %10435
    %10437 = vset.pattern.permute.xlu0 0
    %10438 = vperm.xlu0 %10437, %v9811
    %v10439 = vpop.permute.xlu0 %10438
    %10440 = vset.pattern.permute.xlu0 0
    %10441 = vperm.xlu0 %10440, %v9812
    %v10442 = vpop.permute.xlu0 %10441
    %10443 = vset.pattern.permute.xlu0 0
    %10444 = vperm.xlu0 %10443, %v9813
    %v10445 = vpop.permute.xlu0 %10444
    %10446 = vset.pattern.permute.xlu0 0
    %10447 = vperm.xlu0 %10446, %v9814
    %v10448 = vpop.permute.xlu0 %10447
    %10449 = vset.pattern.permute.xlu0 0
    %10450 = vperm.xlu0 %10449, %v9815
    %v10451 = vpop.permute.xlu0 %10450
    %10452 = vset.pattern.permute.xlu0 0
    %10453 = vperm.xlu0 %10452, %v9816
    %v10454 = vpop.permute.xlu0 %10453
    %10455 = vset.pattern.permute.xlu0 0
    %10456 = vperm.xlu0 %10455, %v9817
    %v10457 = vpop.permute.xlu0 %10456
    %10458 = vset.pattern.permute.xlu0 0
    %10459 = vperm.xlu0 %10458, %v9818
    %v10460 = vpop.permute.xlu0 %10459
    %10461 = vset.pattern.permute.xlu0 0
    %10462 = vperm.xlu0 %10461, %v9819
    %v10463 = vpop.permute.xlu0 %10462
    %10464 = vset.pattern.permute.xlu0 0
    %10465 = vperm.xlu0 %10464, %v9820
    %v10466 = vpop.permute.xlu0 %10465
    %10467 = vset.pattern.permute.xlu0 0
    %10468 = vperm.xlu0 %10467, %v9821
    %v10469 = vpop.permute.xlu0 %10468
    %10470 = vset.pattern.permute.xlu0 0
    %10471 = vperm.xlu0 %10470, %v9822
    %v10472 = vpop.permute.xlu0 %10471
    %10473 = vset.pattern.permute.xlu0 0
    %10474 = vperm.xlu0 %10473, %v9823
    %v10475 = vpop.permute.xlu0 %10474
    %10476 = vset.pattern.permute.xlu0 0
    %10477 = vperm.xlu0 %10476, %v9824
    %v10478 = vpop.permute.xlu0 %10477
    %10479 = vset.pattern.permute.xlu0 0
    %10480 = vperm.xlu0 %10479, %v9825
    %v10481 = vpop.permute.xlu0 %10480
    %10482 = vset.pattern.permute.xlu0 0
    %10483 = vperm.xlu0 %10482, %v9826
    %v10484 = vpop.permute.xlu0 %10483
    %10485 = vset.pattern.permute.xlu0 0
    %10486 = vperm.xlu0 %10485, %v9827
    %v10487 = vpop.permute.xlu0 %10486
    %10488 = vset.pattern.permute.xlu0 0
    %10489 = vperm.xlu0 %10488, %v9828
    %v10490 = vpop.permute.xlu0 %10489
    %10491 = vset.pattern.permute.xlu0 0
    %10492 = vperm.xlu0 %10491, %v9829
    %v10493 = vpop.permute.xlu0 %10492
    %10494 = vset.pattern.permute.xlu0 0
    %10495 = vperm.xlu0 %10494, %v9830
    %v10496 = vpop.permute.xlu0 %10495
    %10497 = vset.pattern.permute.xlu0 0
    %10498 = vperm.xlu0 %10497, %v9831
    %v10499 = vpop.permute.xlu0 %10498
    %10500 = vset.pattern.permute.xlu0 0
    %10501 = vperm.xlu0 %10500, %v9832
    %v10502 = vpop.permute.xlu0 %10501
    %10503 = vset.pattern.permute.xlu0 0
    %10504 = vperm.xlu0 %10503, %v9833
    %v10505 = vpop.permute.xlu0 %10504
    %10506 = vset.pattern.permute.xlu0 0
    %10507 = vperm.xlu0 %10506, %v9834
    %v10508 = vpop.permute.xlu0 %10507
    %10509 = vset.pattern.permute.xlu0 0
    %10510 = vperm.xlu0 %10509, %v9835
    %v10511 = vpop.permute.xlu0 %10510
    %10512 = vset.pattern.permute.xlu0 0
    %10513 = vperm.xlu0 %10512, %v9836
    %v10514 = vpop.permute.xlu0 %10513
    %10515 = vset.pattern.permute.xlu0 0
    %10516 = vperm.xlu0 %10515, %v9837
    %v10517 = vpop.permute.xlu0 %10516
    %10518 = vset.pattern.permute.xlu0 0
    %10519 = vperm.xlu0 %10518, %v9838
    %v10520 = vpop.permute.xlu0 %10519
    %10521 = vset.pattern.permute.xlu0 0
    %10522 = vperm.xlu0 %10521, %v9839
    %v10523 = vpop.permute.xlu0 %10522
    %10524 = vset.pattern.permute.xlu0 0
    %10525 = vperm.xlu0 %10524, %v9840
    %v10526 = vpop.permute.xlu0 %10525
    %10527 = vset.pattern.permute.xlu0 0
    %10528 = vperm.xlu0 %10527, %v9841
    %v10529 = vpop.permute.xlu0 %10528
    %10530 = vset.pattern.permute.xlu0 0
    %10531 = vperm.xlu0 %10530, %v9842
    %v10532 = vpop.permute.xlu0 %10531
    %10533 = vset.pattern.permute.xlu0 0
    %10534 = vperm.xlu0 %10533, %v9843
    %v10535 = vpop.permute.xlu0 %10534
    %10536 = vset.pattern.permute.xlu0 0
    %10537 = vperm.xlu0 %10536, %v9844
    %v10538 = vpop.permute.xlu0 %10537
    %10539 = vset.pattern.permute.xlu0 0
    %10540 = vperm.xlu0 %10539, %v9845
    %v10541 = vpop.permute.xlu0 %10540
    %10542 = vset.pattern.permute.xlu0 0
    %10543 = vperm.xlu0 %10542, %v9846
    %v10544 = vpop.permute.xlu0 %10543
    %10545 = vset.pattern.permute.xlu0 0
    %10546 = vperm.xlu0 %10545, %v9847
    %v10547 = vpop.permute.xlu0 %10546
    %10548 = vset.pattern.permute.xlu0 0
    %10549 = vperm.xlu0 %10548, %v9848
    %v10550 = vpop.permute.xlu0 %10549
    %10551 = vset.pattern.permute.xlu0 0
    %10552 = vperm.xlu0 %10551, %v9849
    %v10553 = vpop.permute.xlu0 %10552
    %10554 = vset.pattern.permute.xlu0 0
    %10555 = vperm.xlu0 %10554, %v9850
    %v10556 = vpop.permute.xlu0 %10555
    %10557 = vset.pattern.permute.xlu0 0
    %10558 = vperm.xlu0 %10557, %v9851
    %v10559 = vpop.permute.xlu0 %10558
    %10560 = vset.pattern.permute.xlu0 0
    %10561 = vperm.xlu0 %10560, %v9852
    %v10562 = vpop.permute.xlu0 %10561
    %10563 = vset.pattern.permute.xlu0 0
    %10564 = vperm.xlu0 %10563, %v9853
    %v10565 = vpop.permute.xlu0 %10564
    %10566 = vset.pattern.permute.xlu0 0
    %10567 = vperm.xlu0 %10566, %v9854
    %v10568 = vpop.permute.xlu0 %10567
    %10569 = vset.pattern.permute.xlu0 0
    %10570 = vperm.xlu0 %10569, %v9855
    %v10571 = vpop.permute.xlu0 %10570
    %10572 = vset.pattern.permute.xlu0 0
    %10573 = vperm.xlu0 %10572, %v9856
    %v10574 = vpop.permute.xlu0 %10573
    %10575 = vset.pattern.permute.xlu0 0
    %10576 = vperm.xlu0 %10575, %v9857
    %v10577 = vpop.permute.xlu0 %10576
    %10578 = vset.pattern.permute.xlu0 0
    %10579 = vperm.xlu0 %10578, %v9858
    %v10580 = vpop.permute.xlu0 %10579
    %10581 = vset.pattern.permute.xlu0 0
    %10582 = vperm.xlu0 %10581, %v9859
    %v10583 = vpop.permute.xlu0 %10582
    %10584 = vset.pattern.permute.xlu0 0
    %10585 = vperm.xlu0 %10584, %v9860
    %v10586 = vpop.permute.xlu0 %10585
    %10587 = vset.pattern.permute.xlu0 0
    %10588 = vperm.xlu0 %10587, %v9861
    %v10589 = vpop.permute.xlu0 %10588
    %10590 = vset.pattern.permute.xlu0 0
    %10591 = vperm.xlu0 %10590, %v9862
    %v10592 = vpop.permute.xlu0 %10591
    %10593 = vset.pattern.permute.xlu0 0
    %10594 = vperm.xlu0 %10593, %v9863
    %v10595 = vpop.permute.xlu0 %10594
    %10596 = vset.pattern.permute.xlu0 0
    %10597 = vperm.xlu0 %10596, %v9864
    %v10598 = vpop.permute.xlu0 %10597
    %10599 = vset.pattern.permute.xlu0 0
    %10600 = vperm.xlu0 %10599, %v9865
    %v10601 = vpop.permute.xlu0 %10600
    %10602 = vset.pattern.permute.xlu0 0
    %10603 = vperm.xlu0 %10602, %v9866
    %v10604 = vpop.permute.xlu0 %10603
    %10605 = vset.pattern.permute.xlu0 0
    %10606 = vperm.xlu0 %10605, %v9867
    %v10607 = vpop.permute.xlu0 %10606
    %10608 = vset.pattern.permute.xlu0 0
    %10609 = vperm.xlu0 %10608, %v9868
    %v10610 = vpop.permute.xlu0 %10609
    %10611 = vset.pattern.permute.xlu0 0
    %10612 = vperm.xlu0 %10611, %v9869
    %v10613 = vpop.permute.xlu0 %10612
    %10614 = vset.pattern.permute.xlu0 0
    %10615 = vperm.xlu0 %10614, %v9870
    %v10616 = vpop.permute.xlu0 %10615
    %10617 = vset.pattern.permute.xlu0 0
    %10618 = vperm.xlu0 %10617, %v9871
    %v10619 = vpop.permute.xlu0 %10618
    %10620 = vset.pattern.permute.xlu0 0
    %10621 = vperm.xlu0 %10620, %v9872
    %v10622 = vpop.permute.xlu0 %10621
    %10623 = vset.pattern.permute.xlu0 0
    %10624 = vperm.xlu0 %10623, %v9873
    %v10625 = vpop.permute.xlu0 %10624
    %10626 = vset.pattern.permute.xlu0 0
    %10627 = vperm.xlu0 %10626, %v9874
    %v10628 = vpop.permute.xlu0 %10627
    %10629 = vset.pattern.permute.xlu0 0
    %10630 = vperm.xlu0 %10629, %v9875
    %v10631 = vpop.permute.xlu0 %10630
    %10632 = vset.pattern.permute.xlu0 0
    %10633 = vperm.xlu0 %10632, %v9876
    %v10634 = vpop.permute.xlu0 %10633
    %10635 = vset.pattern.permute.xlu0 0
    %10636 = vperm.xlu0 %10635, %v9877
    %v10637 = vpop.permute.xlu0 %10636
    %10638 = vset.pattern.permute.xlu0 0
    %10639 = vperm.xlu0 %10638, %v9878
    %v10640 = vpop.permute.xlu0 %10639
    %10641 = vset.pattern.permute.xlu0 0
    %10642 = vperm.xlu0 %10641, %v9879
    %v10643 = vpop.permute.xlu0 %10642
    %10644 = vset.pattern.permute.xlu0 0
    %10645 = vperm.xlu0 %10644, %v9880
    %v10646 = vpop.permute.xlu0 %10645
    %10647 = vset.pattern.permute.xlu0 0
    %10648 = vperm.xlu0 %10647, %v9881
    %v10649 = vpop.permute.xlu0 %10648
    %10650 = vset.pattern.permute.xlu0 0
    %10651 = vperm.xlu0 %10650, %v9882
    %v10652 = vpop.permute.xlu0 %10651
    %10653 = vset.pattern.permute.xlu0 0
    %10654 = vperm.xlu0 %10653, %v9883
    %v10655 = vpop.permute.xlu0 %10654
    %10656 = vset.pattern.permute.xlu0 0
    %10657 = vperm.xlu0 %10656, %v9884
    %v10658 = vpop.permute.xlu0 %10657
    %10659 = vset.pattern.permute.xlu0 0
    %10660 = vperm.xlu0 %10659, %v9885
    %v10661 = vpop.permute.xlu0 %10660
    %10662 = vset.pattern.permute.xlu0 0
    %10663 = vperm.xlu0 %10662, %v9886
    %v10664 = vpop.permute.xlu0 %10663
    %10665 = vset.pattern.permute.xlu0 0
    %10666 = vperm.xlu0 %10665, %v9887
    %v10667 = vpop.permute.xlu0 %10666
    %10668 = vset.pattern.permute.xlu0 0
    %10669 = vperm.xlu0 %10668, %v9888
    %v10670 = vpop.permute.xlu0 %10669
    %10671 = vset.pattern.permute.xlu0 0
    %10672 = vperm.xlu0 %10671, %v9889
    %v10673 = vpop.permute.xlu0 %10672
    %10674 = vset.pattern.permute.xlu0 0
    %10675 = vperm.xlu0 %10674, %v9890
    %v10676 = vpop.permute.xlu0 %10675
    %10677 = vset.pattern.permute.xlu0 0
    %10678 = vperm.xlu0 %10677, %v9891
    %v10679 = vpop.permute.xlu0 %10678
    %10680 = vset.pattern.permute.xlu0 0
    %10681 = vperm.xlu0 %10680, %v9892
    %v10682 = vpop.permute.xlu0 %10681
    %10683 = vset.pattern.permute.xlu0 0
    %10684 = vperm.xlu0 %10683, %v9893
    %v10685 = vpop.permute.xlu0 %10684
    %10686 = vset.pattern.permute.xlu0 0
    %10687 = vperm.xlu0 %10686, %v9894
    %v10688 = vpop.permute.xlu0 %10687
    %10689 = vset.pattern.permute.xlu0 0
    %10690 = vperm.xlu0 %10689, %v9895
    %v10691 = vpop.permute.xlu0 %10690
    %10692 = vset.pattern.permute.xlu0 0
    %10693 = vperm.xlu0 %10692, %v9896
    %v10694 = vpop.permute.xlu0 %10693
    %10695 = vset.pattern.permute.xlu0 0
    %10696 = vperm.xlu0 %10695, %v9897
    %v10697 = vpop.permute.xlu0 %10696
    %10698 = vset.pattern.permute.xlu0 0
    %10699 = vperm.xlu0 %10698, %v9898
    %v10700 = vpop.permute.xlu0 %10699
    %10701 = vset.pattern.permute.xlu0 0
    %10702 = vperm.xlu0 %10701, %v9899
    %v10703 = vpop.permute.xlu0 %10702
    %10704 = vset.pattern.permute.xlu0 0
    %10705 = vperm.xlu0 %10704, %v9900
    %v10706 = vpop.permute.xlu0 %10705
    %10707 = vset.pattern.permute.xlu0 0
    %10708 = vperm.xlu0 %10707, %v9901
    %v10709 = vpop.permute.xlu0 %10708
    %10710 = vset.pattern.permute.xlu0 0
    %10711 = vperm.xlu0 %10710, %v9902
    %v10712 = vpop.permute.xlu0 %10711
    %10713 = vset.pattern.permute.xlu0 0
    %10714 = vperm.xlu0 %10713, %v9903
    %v10715 = vpop.permute.xlu0 %10714
    %10716 = vset.pattern.permute.xlu0 0
    %10717 = vperm.xlu0 %10716, %v9904
    %v10718 = vpop.permute.xlu0 %10717
    %10719 = vset.pattern.permute.xlu0 0
    %10720 = vperm.xlu0 %10719, %v9905
    %v10721 = vpop.permute.xlu0 %10720
    %10722 = vset.pattern.permute.xlu0 0
    %10723 = vperm.xlu0 %10722, %v9906
    %v10724 = vpop.permute.xlu0 %10723
    %10725 = vset.pattern.permute.xlu0 0
    %10726 = vperm.xlu0 %10725, %v9907
    %v10727 = vpop.permute.xlu0 %10726
    %10728 = vset.pattern.permute.xlu0 0
    %10729 = vperm.xlu0 %10728, %v9908
    %v10730 = vpop.permute.xlu0 %10729
    %10731 = vset.pattern.permute.xlu0 0
    %10732 = vperm.xlu0 %10731, %v9909
    %v10733 = vpop.permute.xlu0 %10732
    %10734 = vset.pattern.permute.xlu0 0
    %10735 = vperm.xlu0 %10734, %v9910
    %v10736 = vpop.permute.xlu0 %10735
    %10737 = vset.pattern.permute.xlu0 0
    %10738 = vperm.xlu0 %10737, %v9911
    %v10739 = vpop.permute.xlu0 %10738
    %10740 = vset.pattern.permute.xlu0 0
    %10741 = vperm.xlu0 %10740, %v9912
    %v10742 = vpop.permute.xlu0 %10741
    %10743 = vset.pattern.permute.xlu0 0
    %10744 = vperm.xlu0 %10743, %v9913
    %v10745 = vpop.permute.xlu0 %10744
    %10746 = vset.pattern.permute.xlu0 0
    %10747 = vperm.xlu0 %10746, %v9914
    %v10748 = vpop.permute.xlu0 %10747
    %10749 = vset.pattern.permute.xlu0 0
    %10750 = vperm.xlu0 %10749, %v9915
    %v10751 = vpop.permute.xlu0 %10750
    %10752 = vset.pattern.permute.xlu0 0
    %10753 = vperm.xlu0 %10752, %v9916
    %v10754 = vpop.permute.xlu0 %10753
    %10755 = vset.pattern.permute.xlu0 0
    %10756 = vperm.xlu0 %10755, %v9917
    %v10757 = vpop.permute.xlu0 %10756
    %10758 = vset.pattern.permute.xlu0 0
    %10759 = vperm.xlu0 %10758, %v9918
    %v10760 = vpop.permute.xlu0 %10759
    %10761 = vset.pattern.permute.xlu0 0
    %10762 = vperm.xlu0 %10761, %v9919
    %v10763 = vpop.permute.xlu0 %10762
    %10764 = vset.pattern.permute.xlu0 0
    %10765 = vperm.xlu0 %10764, %v9920
    %v10766 = vpop.permute.xlu0 %10765
    %10767 = vset.pattern.permute.xlu0 0
    %10768 = vperm.xlu0 %10767, %v9921
    %v10769 = vpop.permute.xlu0 %10768
    %10770 = vset.pattern.permute.xlu0 0
    %10771 = vperm.xlu0 %10770, %v9922
    %v10772 = vpop.permute.xlu0 %10771
    %10773 = vset.pattern.permute.xlu0 0
    %10774 = vperm.xlu0 %10773, %v9923
    %v10775 = vpop.permute.xlu0 %10774
    %10776 = vset.pattern.permute.xlu0 0
    %10777 = vperm.xlu0 %10776, %v9924
    %v10778 = vpop.permute.xlu0 %10777
    %10779 = vset.pattern.permute.xlu0 0
    %10780 = vperm.xlu0 %10779, %v9925
    %v10781 = vpop.permute.xlu0 %10780
    %10782 = vset.pattern.permute.xlu0 0
    %10783 = vperm.xlu0 %10782, %v9926
    %v10784 = vpop.permute.xlu0 %10783
    %10785 = vset.pattern.permute.xlu0 0
    %10786 = vperm.xlu0 %10785, %v9927
    %v10787 = vpop.permute.xlu0 %10786
    %10788 = vset.pattern.permute.xlu0 0
    %10789 = vperm.xlu0 %10788, %v9928
    %v10790 = vpop.permute.xlu0 %10789
    %10791 = vset.pattern.permute.xlu0 0
    %10792 = vperm.xlu0 %10791, %v9929
    %v10793 = vpop.permute.xlu0 %10792
    %10794 = vset.pattern.permute.xlu0 0
    %10795 = vperm.xlu0 %10794, %v9930
    %v10796 = vpop.permute.xlu0 %10795
    %10797 = vset.pattern.permute.xlu0 0
    %10798 = vperm.xlu0 %10797, %v9931
    %v10799 = vpop.permute.xlu0 %10798
    %10800 = vset.pattern.permute.xlu0 0
    %10801 = vperm.xlu0 %10800, %v9932
    %v10802 = vpop.permute.xlu0 %10801
    %10803 = vset.pattern.permute.xlu0 0
    %10804 = vperm.xlu0 %10803, %v9933
    %v10805 = vpop.permute.xlu0 %10804
    %10806 = vset.pattern.permute.xlu0 0
    %10807 = vperm.xlu0 %10806, %v9934
    %v10808 = vpop.permute.xlu0 %10807
    %10809 = vset.pattern.permute.xlu0 0
    %10810 = vperm.xlu0 %10809, %v9935
    %v10811 = vpop.permute.xlu0 %10810
    %10812 = vset.pattern.permute.xlu0 0
    %10813 = vperm.xlu0 %10812, %v9936
    %v10814 = vpop.permute.xlu0 %10813
    %10815 = vset.pattern.permute.xlu0 0
    %10816 = vperm.xlu0 %10815, %v9937
    %v10817 = vpop.permute.xlu0 %10816
    %10818 = vset.pattern.permute.xlu0 0
    %10819 = vperm.xlu0 %10818, %v9938
    %v10820 = vpop.permute.xlu0 %10819
    %10821 = vset.pattern.permute.xlu0 0
    %10822 = vperm.xlu0 %10821, %v9939
    %v10823 = vpop.permute.xlu0 %10822
    %10824 = vset.pattern.permute.xlu0 0
    %10825 = vperm.xlu0 %10824, %v9940
    %v10826 = vpop.permute.xlu0 %10825
    %10827 = vset.pattern.permute.xlu0 0
    %10828 = vperm.xlu0 %10827, %v9941
    %v10829 = vpop.permute.xlu0 %10828
    %10830 = vset.pattern.permute.xlu0 0
    %10831 = vperm.xlu0 %10830, %v9942
    %v10832 = vpop.permute.xlu0 %10831
    %10833 = vset.pattern.permute.xlu0 0
    %10834 = vperm.xlu0 %10833, %v9943
    %v10835 = vpop.permute.xlu0 %10834
    %10836 = vset.pattern.permute.xlu0 0
    %10837 = vperm.xlu0 %10836, %v9944
    %v10838 = vpop.permute.xlu0 %10837
    %10839 = vset.pattern.permute.xlu0 0
    %10840 = vperm.xlu0 %10839, %v9945
    %v10841 = vpop.permute.xlu0 %10840
    %10842 = vset.pattern.permute.xlu0 0
    %10843 = vperm.xlu0 %10842, %v9946
    %v10844 = vpop.permute.xlu0 %10843
    %10845 = vset.pattern.permute.xlu0 0
    %10846 = vperm.xlu0 %10845, %v9947
    %v10847 = vpop.permute.xlu0 %10846
    %10848 = vset.pattern.permute.xlu0 0
    %10849 = vperm.xlu0 %10848, %v9948
    %v10850 = vpop.permute.xlu0 %10849
    %10851 = vset.pattern.permute.xlu0 0
    %10852 = vperm.xlu0 %10851, %v9949
    %v10853 = vpop.permute.xlu0 %10852
    %10854 = vset.pattern.permute.xlu0 0
    %10855 = vperm.xlu0 %10854, %v9950
    %v10856 = vpop.permute.xlu0 %10855
    %10857 = vset.pattern.permute.xlu0 0
    %10858 = vperm.xlu0 %10857, %v9951
    %v10859 = vpop.permute.xlu0 %10858
    %10860 = vset.pattern.permute.xlu0 0
    %10861 = vperm.xlu0 %10860, %v9952
    %v10862 = vpop.permute.xlu0 %10861
    %10863 = vset.pattern.permute.xlu0 0
    %10864 = vperm.xlu0 %10863, %v9953
    %v10865 = vpop.permute.xlu0 %10864
    %10866 = vset.pattern.permute.xlu0 0
    %10867 = vperm.xlu0 %10866, %v9954
    %v10868 = vpop.permute.xlu0 %10867
    %10869 = vset.pattern.permute.xlu0 0
    %10870 = vperm.xlu0 %10869, %v9955
    %v10871 = vpop.permute.xlu0 %10870
    %10872 = vset.pattern.permute.xlu0 0
    %10873 = vperm.xlu0 %10872, %v9956
    %v10874 = vpop.permute.xlu0 %10873
    %10875 = vset.pattern.permute.xlu0 0
    %10876 = vperm.xlu0 %10875, %v9957
    %v10877 = vpop.permute.xlu0 %10876
    %10878 = vset.pattern.permute.xlu0 0
    %10879 = vperm.xlu0 %10878, %v9958
    %v10880 = vpop.permute.xlu0 %10879
    %10881 = vset.pattern.permute.xlu0 0
    %10882 = vperm.xlu0 %10881, %v9959
    %v10883 = vpop.permute.xlu0 %10882
    %10884 = vset.pattern.permute.xlu0 0
    %10885 = vperm.xlu0 %10884, %v9960
    %v10886 = vpop.permute.xlu0 %10885
    %10887 = vset.pattern.permute.xlu0 0
    %10888 = vperm.xlu0 %10887, %v9961
    %v10889 = vpop.permute.xlu0 %10888
    %10890 = vset.pattern.permute.xlu0 0
    %10891 = vperm.xlu0 %10890, %v9962
    %v10892 = vpop.permute.xlu0 %10891
    %10893 = vset.pattern.permute.xlu0 0
    %10894 = vperm.xlu0 %10893, %v9963
    %v10895 = vpop.permute.xlu0 %10894
    %10896 = vset.pattern.permute.xlu0 0
    %10897 = vperm.xlu0 %10896, %v9964
    %v10898 = vpop.permute.xlu0 %10897
    %10899 = vset.pattern.permute.xlu0 0
    %10900 = vperm.xlu0 %10899, %v9965
    %v10901 = vpop.permute.xlu0 %10900
    %10902 = vset.pattern.permute.xlu0 0
    %10903 = vperm.xlu0 %10902, %v9966
    %v10904 = vpop.permute.xlu0 %10903
    %10905 = vset.pattern.permute.xlu0 0
    %10906 = vperm.xlu0 %10905, %v9967
    %v10907 = vpop.permute.xlu0 %10906
    %10908 = vset.pattern.permute.xlu0 0
    %10909 = vperm.xlu0 %10908, %v9968
    %v10910 = vpop.permute.xlu0 %10909
    %10911 = vset.pattern.permute.xlu0 0
    %10912 = vperm.xlu0 %10911, %v9969
    %v10913 = vpop.permute.xlu0 %10912
    %10914 = vset.pattern.permute.xlu0 0
    %10915 = vperm.xlu0 %10914, %v9970
    %v10916 = vpop.permute.xlu0 %10915
    %10917 = vset.pattern.permute.xlu0 0
    %10918 = vperm.xlu0 %10917, %v9971
    %v10919 = vpop.permute.xlu0 %10918
    %10920 = vset.pattern.permute.xlu0 0
    %10921 = vperm.xlu0 %10920, %v9972
    %v10922 = vpop.permute.xlu0 %10921
    %10923 = vset.pattern.permute.xlu0 0
    %10924 = vperm.xlu0 %10923, %v9973
    %v10925 = vpop.permute.xlu0 %10924
    %10926 = vset.pattern.permute.xlu0 0
    %10927 = vperm.xlu0 %10926, %v9974
    %v10928 = vpop.permute.xlu0 %10927
    %10929 = vset.pattern.permute.xlu0 0
    %10930 = vperm.xlu0 %10929, %v9975
    %v10931 = vpop.permute.xlu0 %10930
    %10932 = vset.pattern.permute.xlu0 0
    %10933 = vperm.xlu0 %10932, %v9976
    %v10934 = vpop.permute.xlu0 %10933
    %10935 = vset.pattern.permute.xlu0 0
    %10936 = vperm.xlu0 %10935, %v9977
    %v10937 = vpop.permute.xlu0 %10936
    %10938 = vset.pattern.permute.xlu0 0
    %10939 = vperm.xlu0 %10938, %v9978
    %v10940 = vpop.permute.xlu0 %10939
    %10941 = vset.pattern.permute.xlu0 0
    %10942 = vperm.xlu0 %10941, %v9979
    %v10943 = vpop.permute.xlu0 %10942
    %10944 = vset.pattern.permute.xlu0 0
    %10945 = vperm.xlu0 %10944, %v9980
    %v10946 = vpop.permute.xlu0 %10945
    %10947 = vset.pattern.permute.xlu0 0
    %10948 = vperm.xlu0 %10947, %v9981
    %v10949 = vpop.permute.xlu0 %10948
    %10950 = vset.pattern.permute.xlu0 0
    %10951 = vperm.xlu0 %10950, %v9982
    %v10952 = vpop.permute.xlu0 %10951
    %10953 = vset.pattern.permute.xlu0 0
    %10954 = vperm.xlu0 %10953, %v9983
    %v10955 = vpop.permute.xlu0 %10954
    %10956 = vset.pattern.permute.xlu0 0
    %10957 = vperm.xlu0 %10956, %v9984
    %v10958 = vpop.permute.xlu0 %10957
    %10959 = vset.pattern.permute.xlu0 0
    %10960 = vperm.xlu0 %10959, %v9985
    %v10961 = vpop.permute.xlu0 %10960
    %10962 = vset.pattern.permute.xlu0 0
    %10963 = vperm.xlu0 %10962, %v9986
    %v10964 = vpop.permute.xlu0 %10963
    %10965 = vset.pattern.permute.xlu0 0
    %10966 = vperm.xlu0 %10965, %v9987
    %v10967 = vpop.permute.xlu0 %10966
    %10968 = vset.pattern.permute.xlu0 0
    %10969 = vperm.xlu0 %10968, %v9988
    %v10970 = vpop.permute.xlu0 %10969
    %10971 = vset.pattern.permute.xlu0 0
    %10972 = vperm.xlu0 %10971, %v9989
    %v10973 = vpop.permute.xlu0 %10972
    %10974 = vset.pattern.permute.xlu0 0
    %10975 = vperm.xlu0 %10974, %v9990
    %v10976 = vpop.permute.xlu0 %10975
    %10977 = vset.pattern.permute.xlu0 0
    %10978 = vperm.xlu0 %10977, %v9991
    %v10979 = vpop.permute.xlu0 %10978
    %10980 = vset.pattern.permute.xlu0 0
    %10981 = vperm.xlu0 %10980, %v9992
    %v10982 = vpop.permute.xlu0 %10981
    %10983 = vset.pattern.permute.xlu0 0
    %10984 = vperm.xlu0 %10983, %v9993
    %v10985 = vpop.permute.xlu0 %10984
    %10986 = vset.pattern.permute.xlu0 0
    %10987 = vperm.xlu0 %10986, %v9994
    %v10988 = vpop.permute.xlu0 %10987
    %10989 = vset.pattern.permute.xlu0 0
    %10990 = vperm.xlu0 %10989, %v9995
    %v10991 = vpop.permute.xlu0 %10990
    %10992 = vset.pattern.permute.xlu0 0
    %10993 = vperm.xlu0 %10992, %v9996
    %v10994 = vpop.permute.xlu0 %10993
    %10995 = vset.pattern.permute.xlu0 0
    %10996 = vperm.xlu0 %10995, %v9997
    %v10997 = vpop.permute.xlu0 %10996
    %10998 = vset.pattern.permute.xlu0 0
    %10999 = vperm.xlu0 %10998, %v9998
    %v11000 = vpop.permute.xlu0 %10999
    %11001 = vset.pattern.permute.xlu0 0
    %11002 = vperm.xlu0 %11001, %v9999
    %v11003 = vpop.permute.xlu0 %11002
    %11004 = vset.pattern.permute.xlu0 0
    %11005 = vperm.xlu0 %11004, %v10000
    %v11006 = vpop.permute.xlu0 %11005
    %11007 = vset.pattern.permute.xlu0 0
    %11008 = vperm.xlu0 %11007, %v10001
    %v11009 = vpop.permute.xlu0 %11008
    %11010 = vset.pattern.permute.xlu0 0
    %11011 = vperm.xlu0 %11010, %v10002
    %v11012 = vpop.permute.xlu0 %11011
    %11013 = vset.pattern.permute.xlu0 0
    %11014 = vperm.xlu0 %11013, %v10003
    %v11015 = vpop.permute.xlu0 %11014
    %11016 = vset.pattern.permute.xlu0 0
    %11017 = vperm.xlu0 %11016, %v10004
    %v11018 = vpop.permute.xlu0 %11017
    %11019 = vset.pattern.permute.xlu0 0
    %11020 = vperm.xlu0 %11019, %v10005
    %v11021 = vpop.permute.xlu0 %11020
    %11022 = vset.pattern.permute.xlu0 0
    %11023 = vperm.xlu0 %11022, %v10006
    %v11024 = vpop.permute.xlu0 %11023
    %11025 = vset.pattern.permute.xlu0 0
    %11026 = vperm.xlu0 %11025, %v10007
    %v11027 = vpop.permute.xlu0 %11026
    %11028 = vset.pattern.permute.xlu0 0
    %11029 = vperm.xlu0 %11028, %v10008
    %v11030 = vpop.permute.xlu0 %11029
    %11031 = vset.pattern.permute.xlu0 0
    %11032 = vperm.xlu0 %11031, %v10009
    %v11033 = vpop.permute.xlu0 %11032
    %11034 = vset.pattern.permute.xlu0 0
    %11035 = vperm.xlu0 %11034, %v10010
    %v11036 = vpop.permute.xlu0 %11035
    %11037 = vset.pattern.permute.xlu0 0
    %11038 = vperm.xlu0 %11037, %v10011
    %v11039 = vpop.permute.xlu0 %11038
    %11040 = vset.pattern.permute.xlu0 0
    %11041 = vperm.xlu0 %11040, %v10012
    %v11042 = vpop.permute.xlu0 %11041
    %11043 = vset.pattern.permute.xlu0 0
    %11044 = vperm.xlu0 %11043, %v10013
    %v11045 = vpop.permute.xlu0 %11044
    %11046 = vset.pattern.permute.xlu0 0
    %11047 = vperm.xlu0 %11046, %v10014
    %v11048 = vpop.permute.xlu0 %11047
    %11049 = vset.pattern.permute.xlu0 0
    %11050 = vperm.xlu0 %11049, %v10015
    %v11051 = vpop.permute.xlu0 %11050
    %11052 = vset.pattern.permute.xlu0 0
    %11053 = vperm.xlu0 %11052, %v10016
    %v11054 = vpop.permute.xlu0 %11053
    %11055 = vset.pattern.permute.xlu0 0
    %11056 = vperm.xlu0 %11055, %v10017
    %v11057 = vpop.permute.xlu0 %11056
    %11058 = vset.pattern.permute.xlu0 0
    %11059 = vperm.xlu0 %11058, %v10018
    %v11060 = vpop.permute.xlu0 %11059
    %11061 = vset.pattern.permute.xlu0 0
    %11062 = vperm.xlu0 %11061, %v10019
    %v11063 = vpop.permute.xlu0 %11062
    %v11064 = vperm.slane %v10298, %v434
    %v11065 = vadd.s32 %v434, 4294967288
    %v11066 = vperm.slane %v10301, %v11065
    %vm11067 = vcmask 130112
    %v11068 = vsel %vm11067, %v11066, %v11064
    %v11069 = vadd.s32 %v434, 4294967280
    %v11070 = vperm.slane %v10304, %v11069
    %vm11071 = vcmask 195712
    %v11072 = vsel %vm11071, %v11070, %v11068
    %v11073 = vadd.s32 %v434, 4294967272
    %v11074 = vperm.slane %v10307, %v11073
    %vm11075 = vcmask 261312
    %v11076 = vsel %vm11075, %v11074, %v11072
    %v11077 = vadd.s32 %v434, 4294967264
    %v11078 = vperm.slane %v10310, %v11077
    %vm11079 = vcmask 326912
    %v11080 = vsel %vm11079, %v11078, %v11076
    %v11081 = vadd.s32 %v434, 4294967256
    %v11082 = vperm.slane %v10313, %v11081
    %vm11083 = vcmask 392512
    %v11084 = vsel %vm11083, %v11082, %v11080
    %v11085 = vadd.s32 %v434, 4294967248
    %v11086 = vperm.slane %v10316, %v11085
    %vm11087 = vcmask 458112
    %v11088 = vsel %vm11087, %v11086, %v11084
    %v11089 = vadd.s32 %v434, 4294967240
    %v11090 = vperm.slane %v10319, %v11089
    %vm11091 = vcmask 523712
    %v11092 = vsel %vm11091, %v11090, %v11088
    %v11093 = vadd.s32 %v434, 4294967232
    %v11094 = vperm.slane %v10322, %v11093
    %vm11095 = vcmask 589312
    %v11096 = vsel %vm11095, %v11094, %v11092
    %v11097 = vadd.s32 %v434, 4294967224
    %v11098 = vperm.slane %v10325, %v11097
    %vm11099 = vcmask 654912
    %v11100 = vsel %vm11099, %v11098, %v11096
    %v11101 = vadd.s32 %v434, 4294967216
    %v11102 = vperm.slane %v10328, %v11101
    %vm11103 = vcmask 720512
    %v11104 = vsel %vm11103, %v11102, %v11100
    %v11105 = vadd.s32 %v434, 4294967208
    %v11106 = vperm.slane %v10331, %v11105
    %vm11107 = vcmask 786112
    %v11108 = vsel %vm11107, %v11106, %v11104
    %v11109 = vadd.s32 %v434, 4294967200
    %v11110 = vperm.slane %v10334, %v11109
    %vm11111 = vcmask 851712
    %v11112 = vsel %vm11111, %v11110, %v11108
    %v11113 = vadd.s32 %v434, 4294967192
    %v11114 = vperm.slane %v10337, %v11113
    %vm11115 = vcmask 917312
    %v11116 = vsel %vm11115, %v11114, %v11112
    %v11117 = vadd.s32 %v434, 4294967184
    %v11118 = vperm.slane %v10340, %v11117
    %vm11119 = vcmask 982912
    %v11120 = vsel %vm11119, %v11118, %v11116
    %v11121 = vadd.s32 %v434, 4294967176
    %v11122 = vperm.slane %v10343, %v11121
    %vm11123 = vcmask 1048512
    %v11124 = vsel %vm11123, %v11122, %v11120
    %v11125 = vperm.slane %v10346, %v434
    %v11126 = vperm.slane %v10349, %v11065
    %v11127 = vsel %vm11067, %v11126, %v11125
    %v11128 = vperm.slane %v10352, %v11069
    %v11129 = vsel %vm11071, %v11128, %v11127
    %v11130 = vperm.slane %v10355, %v11073
    %v11131 = vsel %vm11075, %v11130, %v11129
    %v11132 = vperm.slane %v10358, %v11077
    %v11133 = vsel %vm11079, %v11132, %v11131
    %v11134 = vperm.slane %v10361, %v11081
    %v11135 = vsel %vm11083, %v11134, %v11133
    %v11136 = vperm.slane %v10364, %v11085
    %v11137 = vsel %vm11087, %v11136, %v11135
    %v11138 = vperm.slane %v10367, %v11089
    %v11139 = vsel %vm11091, %v11138, %v11137
    %v11140 = vperm.slane %v10370, %v11093
    %v11141 = vsel %vm11095, %v11140, %v11139
    %v11142 = vperm.slane %v10373, %v11097
    %v11143 = vsel %vm11099, %v11142, %v11141
    %v11144 = vperm.slane %v10376, %v11101
    %v11145 = vsel %vm11103, %v11144, %v11143
    %v11146 = vperm.slane %v10379, %v11105
    %v11147 = vsel %vm11107, %v11146, %v11145
    %v11148 = vperm.slane %v10382, %v11109
    %v11149 = vsel %vm11111, %v11148, %v11147
    %v11150 = vperm.slane %v10385, %v11113
    %v11151 = vsel %vm11115, %v11150, %v11149
    %v11152 = vperm.slane %v10388, %v11117
    %v11153 = vsel %vm11119, %v11152, %v11151
    %v11154 = vperm.slane %v10391, %v11121
    %v11155 = vsel %vm11123, %v11154, %v11153
    %v11156 = vperm.slane %v10394, %v434
    %v11157 = vperm.slane %v10397, %v11065
    %v11158 = vsel %vm11067, %v11157, %v11156
    %v11159 = vperm.slane %v10400, %v11069
    %v11160 = vsel %vm11071, %v11159, %v11158
    %v11161 = vperm.slane %v10403, %v11073
    %v11162 = vsel %vm11075, %v11161, %v11160
    %v11163 = vperm.slane %v10406, %v11077
    %v11164 = vsel %vm11079, %v11163, %v11162
    %v11165 = vperm.slane %v10409, %v11081
    %v11166 = vsel %vm11083, %v11165, %v11164
    %v11167 = vperm.slane %v10412, %v11085
    %v11168 = vsel %vm11087, %v11167, %v11166
    %v11169 = vperm.slane %v10415, %v11089
    %v11170 = vsel %vm11091, %v11169, %v11168
    %v11171 = vperm.slane %v10418, %v11093
    %v11172 = vsel %vm11095, %v11171, %v11170
    %v11173 = vperm.slane %v10421, %v11097
    %v11174 = vsel %vm11099, %v11173, %v11172
    %v11175 = vperm.slane %v10424, %v11101
    %v11176 = vsel %vm11103, %v11175, %v11174
    %v11177 = vperm.slane %v10427, %v11105
    %v11178 = vsel %vm11107, %v11177, %v11176
    %v11179 = vperm.slane %v10430, %v11109
    %v11180 = vsel %vm11111, %v11179, %v11178
    %v11181 = vperm.slane %v10433, %v11113
    %v11182 = vsel %vm11115, %v11181, %v11180
    %v11183 = vperm.slane %v10436, %v11117
    %v11184 = vsel %vm11119, %v11183, %v11182
    %v11185 = vperm.slane %v10439, %v11121
    %v11186 = vsel %vm11123, %v11185, %v11184
    %v11187 = vperm.slane %v10442, %v434
    %v11188 = vperm.slane %v10445, %v11065
    %v11189 = vsel %vm11067, %v11188, %v11187
    %v11190 = vperm.slane %v10448, %v11069
    %v11191 = vsel %vm11071, %v11190, %v11189
    %v11192 = vperm.slane %v10451, %v11073
    %v11193 = vsel %vm11075, %v11192, %v11191
    %v11194 = vperm.slane %v10454, %v11077
    %v11195 = vsel %vm11079, %v11194, %v11193
    %v11196 = vperm.slane %v10457, %v11081
    %v11197 = vsel %vm11083, %v11196, %v11195
    %v11198 = vperm.slane %v10460, %v11085
    %v11199 = vsel %vm11087, %v11198, %v11197
    %v11200 = vperm.slane %v10463, %v11089
    %v11201 = vsel %vm11091, %v11200, %v11199
    %v11202 = vperm.slane %v10466, %v11093
    %v11203 = vsel %vm11095, %v11202, %v11201
    %v11204 = vperm.slane %v10469, %v11097
    %v11205 = vsel %vm11099, %v11204, %v11203
    %v11206 = vperm.slane %v10472, %v11101
    %v11207 = vsel %vm11103, %v11206, %v11205
    %v11208 = vperm.slane %v10475, %v11105
    %v11209 = vsel %vm11107, %v11208, %v11207
    %v11210 = vperm.slane %v10478, %v11109
    %v11211 = vsel %vm11111, %v11210, %v11209
    %v11212 = vperm.slane %v10481, %v11113
    %v11213 = vsel %vm11115, %v11212, %v11211
    %v11214 = vperm.slane %v10484, %v11117
    %v11215 = vsel %vm11119, %v11214, %v11213
    %v11216 = vperm.slane %v10487, %v11121
    %v11217 = vsel %vm11123, %v11216, %v11215
    %v11218 = vperm.slane %v10490, %v434
    %v11219 = vperm.slane %v10493, %v11065
    %v11220 = vsel %vm11067, %v11219, %v11218
    %v11221 = vperm.slane %v10496, %v11069
    %v11222 = vsel %vm11071, %v11221, %v11220
    %v11223 = vperm.slane %v10499, %v11073
    %v11224 = vsel %vm11075, %v11223, %v11222
    %v11225 = vperm.slane %v10502, %v11077
    %v11226 = vsel %vm11079, %v11225, %v11224
    %v11227 = vperm.slane %v10505, %v11081
    %v11228 = vsel %vm11083, %v11227, %v11226
    %v11229 = vperm.slane %v10508, %v11085
    %v11230 = vsel %vm11087, %v11229, %v11228
    %v11231 = vperm.slane %v10511, %v11089
    %v11232 = vsel %vm11091, %v11231, %v11230
    %v11233 = vperm.slane %v10514, %v11093
    %v11234 = vsel %vm11095, %v11233, %v11232
    %v11235 = vperm.slane %v10517, %v11097
    %v11236 = vsel %vm11099, %v11235, %v11234
    %v11237 = vperm.slane %v10520, %v11101
    %v11238 = vsel %vm11103, %v11237, %v11236
    %v11239 = vperm.slane %v10523, %v11105
    %v11240 = vsel %vm11107, %v11239, %v11238
    %v11241 = vperm.slane %v10526, %v11109
    %v11242 = vsel %vm11111, %v11241, %v11240
    %v11243 = vperm.slane %v10529, %v11113
    %v11244 = vsel %vm11115, %v11243, %v11242
    %v11245 = vperm.slane %v10532, %v11117
    %v11246 = vsel %vm11119, %v11245, %v11244
    %v11247 = vperm.slane %v10535, %v11121
    %v11248 = vsel %vm11123, %v11247, %v11246
    %v11249 = vperm.slane %v10538, %v434
    %v11250 = vperm.slane %v10541, %v11065
    %v11251 = vsel %vm11067, %v11250, %v11249
    %v11252 = vperm.slane %v10544, %v11069
    %v11253 = vsel %vm11071, %v11252, %v11251
    %v11254 = vperm.slane %v10547, %v11073
    %v11255 = vsel %vm11075, %v11254, %v11253
    %v11256 = vperm.slane %v10550, %v11077
    %v11257 = vsel %vm11079, %v11256, %v11255
    %v11258 = vperm.slane %v10553, %v11081
    %v11259 = vsel %vm11083, %v11258, %v11257
    %v11260 = vperm.slane %v10556, %v11085
    %v11261 = vsel %vm11087, %v11260, %v11259
    %v11262 = vperm.slane %v10559, %v11089
    %v11263 = vsel %vm11091, %v11262, %v11261
    %v11264 = vperm.slane %v10562, %v11093
    %v11265 = vsel %vm11095, %v11264, %v11263
    %v11266 = vperm.slane %v10565, %v11097
    %v11267 = vsel %vm11099, %v11266, %v11265
    %v11268 = vperm.slane %v10568, %v11101
    %v11269 = vsel %vm11103, %v11268, %v11267
    %v11270 = vperm.slane %v10571, %v11105
    %v11271 = vsel %vm11107, %v11270, %v11269
    %v11272 = vperm.slane %v10574, %v11109
    %v11273 = vsel %vm11111, %v11272, %v11271
    %v11274 = vperm.slane %v10577, %v11113
    %v11275 = vsel %vm11115, %v11274, %v11273
    %v11276 = vperm.slane %v10580, %v11117
    %v11277 = vsel %vm11119, %v11276, %v11275
    %v11278 = vperm.slane %v10583, %v11121
    %v11279 = vsel %vm11123, %v11278, %v11277
    %v11280 = vperm.slane %v10586, %v434
    %v11281 = vperm.slane %v10589, %v11065
    %v11282 = vsel %vm11067, %v11281, %v11280
    %v11283 = vperm.slane %v10592, %v11069
    %v11284 = vsel %vm11071, %v11283, %v11282
    %v11285 = vperm.slane %v10595, %v11073
    %v11286 = vsel %vm11075, %v11285, %v11284
    %v11287 = vperm.slane %v10598, %v11077
    %v11288 = vsel %vm11079, %v11287, %v11286
    %v11289 = vperm.slane %v10601, %v11081
    %v11290 = vsel %vm11083, %v11289, %v11288
    %v11291 = vperm.slane %v10604, %v11085
    %v11292 = vsel %vm11087, %v11291, %v11290
    %v11293 = vperm.slane %v10607, %v11089
    %v11294 = vsel %vm11091, %v11293, %v11292
    %v11295 = vperm.slane %v10610, %v11093
    %v11296 = vsel %vm11095, %v11295, %v11294
    %v11297 = vperm.slane %v10613, %v11097
    %v11298 = vsel %vm11099, %v11297, %v11296
    %v11299 = vperm.slane %v10616, %v11101
    %v11300 = vsel %vm11103, %v11299, %v11298
    %v11301 = vperm.slane %v10619, %v11105
    %v11302 = vsel %vm11107, %v11301, %v11300
    %v11303 = vperm.slane %v10622, %v11109
    %v11304 = vsel %vm11111, %v11303, %v11302
    %v11305 = vperm.slane %v10625, %v11113
    %v11306 = vsel %vm11115, %v11305, %v11304
    %v11307 = vperm.slane %v10628, %v11117
    %v11308 = vsel %vm11119, %v11307, %v11306
    %v11309 = vperm.slane %v10631, %v11121
    %v11310 = vsel %vm11123, %v11309, %v11308
    %v11311 = vperm.slane %v10634, %v434
    %v11312 = vperm.slane %v10637, %v11065
    %v11313 = vsel %vm11067, %v11312, %v11311
    %v11314 = vperm.slane %v10640, %v11069
    %v11315 = vsel %vm11071, %v11314, %v11313
    %v11316 = vperm.slane %v10643, %v11073
    %v11317 = vsel %vm11075, %v11316, %v11315
    %v11318 = vperm.slane %v10646, %v11077
    %v11319 = vsel %vm11079, %v11318, %v11317
    %v11320 = vperm.slane %v10649, %v11081
    %v11321 = vsel %vm11083, %v11320, %v11319
    %v11322 = vperm.slane %v10652, %v11085
    %v11323 = vsel %vm11087, %v11322, %v11321
    %v11324 = vperm.slane %v10655, %v11089
    %v11325 = vsel %vm11091, %v11324, %v11323
    %v11326 = vperm.slane %v10658, %v11093
    %v11327 = vsel %vm11095, %v11326, %v11325
    %v11328 = vperm.slane %v10661, %v11097
    %v11329 = vsel %vm11099, %v11328, %v11327
    %v11330 = vperm.slane %v10664, %v11101
    %v11331 = vsel %vm11103, %v11330, %v11329
    %v11332 = vperm.slane %v10667, %v11105
    %v11333 = vsel %vm11107, %v11332, %v11331
    %v11334 = vperm.slane %v10670, %v11109
    %v11335 = vsel %vm11111, %v11334, %v11333
    %v11336 = vperm.slane %v10673, %v11113
    %v11337 = vsel %vm11115, %v11336, %v11335
    %v11338 = vperm.slane %v10676, %v11117
    %v11339 = vsel %vm11119, %v11338, %v11337
    %v11340 = vperm.slane %v10679, %v11121
    %v11341 = vsel %vm11123, %v11340, %v11339
    %v11342 = vperm.slane %v10682, %v434
    %v11343 = vperm.slane %v10685, %v11065
    %v11344 = vsel %vm11067, %v11343, %v11342
    %v11345 = vperm.slane %v10688, %v11069
    %v11346 = vsel %vm11071, %v11345, %v11344
    %v11347 = vperm.slane %v10691, %v11073
    %v11348 = vsel %vm11075, %v11347, %v11346
    %v11349 = vperm.slane %v10694, %v11077
    %v11350 = vsel %vm11079, %v11349, %v11348
    %v11351 = vperm.slane %v10697, %v11081
    %v11352 = vsel %vm11083, %v11351, %v11350
    %v11353 = vperm.slane %v10700, %v11085
    %v11354 = vsel %vm11087, %v11353, %v11352
    %v11355 = vperm.slane %v10703, %v11089
    %v11356 = vsel %vm11091, %v11355, %v11354
    %v11357 = vperm.slane %v10706, %v11093
    %v11358 = vsel %vm11095, %v11357, %v11356
    %v11359 = vperm.slane %v10709, %v11097
    %v11360 = vsel %vm11099, %v11359, %v11358
    %v11361 = vperm.slane %v10712, %v11101
    %v11362 = vsel %vm11103, %v11361, %v11360
    %v11363 = vperm.slane %v10715, %v11105
    %v11364 = vsel %vm11107, %v11363, %v11362
    %v11365 = vperm.slane %v10718, %v11109
    %v11366 = vsel %vm11111, %v11365, %v11364
    %v11367 = vperm.slane %v10721, %v11113
    %v11368 = vsel %vm11115, %v11367, %v11366
    %v11369 = vperm.slane %v10724, %v11117
    %v11370 = vsel %vm11119, %v11369, %v11368
    %v11371 = vperm.slane %v10727, %v11121
    %v11372 = vsel %vm11123, %v11371, %v11370
    %v11373 = vperm.slane %v10730, %v434
    %v11374 = vperm.slane %v10733, %v11065
    %v11375 = vsel %vm11067, %v11374, %v11373
    %v11376 = vperm.slane %v10736, %v11069
    %v11377 = vsel %vm11071, %v11376, %v11375
    %v11378 = vperm.slane %v10739, %v11073
    %v11379 = vsel %vm11075, %v11378, %v11377
    %v11380 = vperm.slane %v10742, %v11077
    %v11381 = vsel %vm11079, %v11380, %v11379
    %v11382 = vperm.slane %v10745, %v11081
    %v11383 = vsel %vm11083, %v11382, %v11381
    %v11384 = vperm.slane %v10748, %v11085
    %v11385 = vsel %vm11087, %v11384, %v11383
    %v11386 = vperm.slane %v10751, %v11089
    %v11387 = vsel %vm11091, %v11386, %v11385
    %v11388 = vperm.slane %v10754, %v11093
    %v11389 = vsel %vm11095, %v11388, %v11387
    %v11390 = vperm.slane %v10757, %v11097
    %v11391 = vsel %vm11099, %v11390, %v11389
    %v11392 = vperm.slane %v10760, %v11101
    %v11393 = vsel %vm11103, %v11392, %v11391
    %v11394 = vperm.slane %v10763, %v11105
    %v11395 = vsel %vm11107, %v11394, %v11393
    %v11396 = vperm.slane %v10766, %v11109
    %v11397 = vsel %vm11111, %v11396, %v11395
    %v11398 = vperm.slane %v10769, %v11113
    %v11399 = vsel %vm11115, %v11398, %v11397
    %v11400 = vperm.slane %v10772, %v11117
    %v11401 = vsel %vm11119, %v11400, %v11399
    %v11402 = vperm.slane %v10775, %v11121
    %v11403 = vsel %vm11123, %v11402, %v11401
    %v11404 = vperm.slane %v10778, %v434
    %v11405 = vperm.slane %v10781, %v11065
    %v11406 = vsel %vm11067, %v11405, %v11404
    %v11407 = vperm.slane %v10784, %v11069
    %v11408 = vsel %vm11071, %v11407, %v11406
    %v11409 = vperm.slane %v10787, %v11073
    %v11410 = vsel %vm11075, %v11409, %v11408
    %v11411 = vperm.slane %v10790, %v11077
    %v11412 = vsel %vm11079, %v11411, %v11410
    %v11413 = vperm.slane %v10793, %v11081
    %v11414 = vsel %vm11083, %v11413, %v11412
    %v11415 = vperm.slane %v10796, %v11085
    %v11416 = vsel %vm11087, %v11415, %v11414
    %v11417 = vperm.slane %v10799, %v11089
    %v11418 = vsel %vm11091, %v11417, %v11416
    %v11419 = vperm.slane %v10802, %v11093
    %v11420 = vsel %vm11095, %v11419, %v11418
    %v11421 = vperm.slane %v10805, %v11097
    %v11422 = vsel %vm11099, %v11421, %v11420
    %v11423 = vperm.slane %v10808, %v11101
    %v11424 = vsel %vm11103, %v11423, %v11422
    %v11425 = vperm.slane %v10811, %v11105
    %v11426 = vsel %vm11107, %v11425, %v11424
    %v11427 = vperm.slane %v10814, %v11109
    %v11428 = vsel %vm11111, %v11427, %v11426
    %v11429 = vperm.slane %v10817, %v11113
    %v11430 = vsel %vm11115, %v11429, %v11428
    %v11431 = vperm.slane %v10820, %v11117
    %v11432 = vsel %vm11119, %v11431, %v11430
    %v11433 = vperm.slane %v10823, %v11121
    %v11434 = vsel %vm11123, %v11433, %v11432
    %v11435 = vperm.slane %v10826, %v434
    %v11436 = vperm.slane %v10829, %v11065
    %v11437 = vsel %vm11067, %v11436, %v11435
    %v11438 = vperm.slane %v10832, %v11069
    %v11439 = vsel %vm11071, %v11438, %v11437
    %v11440 = vperm.slane %v10835, %v11073
    %v11441 = vsel %vm11075, %v11440, %v11439
    %v11442 = vperm.slane %v10838, %v11077
    %v11443 = vsel %vm11079, %v11442, %v11441
    %v11444 = vperm.slane %v10841, %v11081
    %v11445 = vsel %vm11083, %v11444, %v11443
    %v11446 = vperm.slane %v10844, %v11085
    %v11447 = vsel %vm11087, %v11446, %v11445
    %v11448 = vperm.slane %v10847, %v11089
    %v11449 = vsel %vm11091, %v11448, %v11447
    %v11450 = vperm.slane %v10850, %v11093
    %v11451 = vsel %vm11095, %v11450, %v11449
    %v11452 = vperm.slane %v10853, %v11097
    %v11453 = vsel %vm11099, %v11452, %v11451
    %v11454 = vperm.slane %v10856, %v11101
    %v11455 = vsel %vm11103, %v11454, %v11453
    %v11456 = vperm.slane %v10859, %v11105
    %v11457 = vsel %vm11107, %v11456, %v11455
    %v11458 = vperm.slane %v10862, %v11109
    %v11459 = vsel %vm11111, %v11458, %v11457
    %v11460 = vperm.slane %v10865, %v11113
    %v11461 = vsel %vm11115, %v11460, %v11459
    %v11462 = vperm.slane %v10868, %v11117
    %v11463 = vsel %vm11119, %v11462, %v11461
    %v11464 = vperm.slane %v10871, %v11121
    %v11465 = vsel %vm11123, %v11464, %v11463
    %v11466 = vperm.slane %v10874, %v434
    %v11467 = vperm.slane %v10877, %v11065
    %v11468 = vsel %vm11067, %v11467, %v11466
    %v11469 = vperm.slane %v10880, %v11069
    %v11470 = vsel %vm11071, %v11469, %v11468
    %v11471 = vperm.slane %v10883, %v11073
    %v11472 = vsel %vm11075, %v11471, %v11470
    %v11473 = vperm.slane %v10886, %v11077
    %v11474 = vsel %vm11079, %v11473, %v11472
    %v11475 = vperm.slane %v10889, %v11081
    %v11476 = vsel %vm11083, %v11475, %v11474
    %v11477 = vperm.slane %v10892, %v11085
    %v11478 = vsel %vm11087, %v11477, %v11476
    %v11479 = vperm.slane %v10895, %v11089
    %v11480 = vsel %vm11091, %v11479, %v11478
    %v11481 = vperm.slane %v10898, %v11093
    %v11482 = vsel %vm11095, %v11481, %v11480
    %v11483 = vperm.slane %v10901, %v11097
    %v11484 = vsel %vm11099, %v11483, %v11482
    %v11485 = vperm.slane %v10904, %v11101
    %v11486 = vsel %vm11103, %v11485, %v11484
    %v11487 = vperm.slane %v10907, %v11105
    %v11488 = vsel %vm11107, %v11487, %v11486
    %v11489 = vperm.slane %v10910, %v11109
    %v11490 = vsel %vm11111, %v11489, %v11488
    %v11491 = vperm.slane %v10913, %v11113
    %v11492 = vsel %vm11115, %v11491, %v11490
    %v11493 = vperm.slane %v10916, %v11117
    %v11494 = vsel %vm11119, %v11493, %v11492
    %v11495 = vperm.slane %v10919, %v11121
    %v11496 = vsel %vm11123, %v11495, %v11494
    %v11497 = vperm.slane %v10922, %v434
    %v11498 = vperm.slane %v10925, %v11065
    %v11499 = vsel %vm11067, %v11498, %v11497
    %v11500 = vperm.slane %v10928, %v11069
    %v11501 = vsel %vm11071, %v11500, %v11499
    %v11502 = vperm.slane %v10931, %v11073
    %v11503 = vsel %vm11075, %v11502, %v11501
    %v11504 = vperm.slane %v10934, %v11077
    %v11505 = vsel %vm11079, %v11504, %v11503
    %v11506 = vperm.slane %v10937, %v11081
    %v11507 = vsel %vm11083, %v11506, %v11505
    %v11508 = vperm.slane %v10940, %v11085
    %v11509 = vsel %vm11087, %v11508, %v11507
    %v11510 = vperm.slane %v10943, %v11089
    %v11511 = vsel %vm11091, %v11510, %v11509
    %v11512 = vperm.slane %v10946, %v11093
    %v11513 = vsel %vm11095, %v11512, %v11511
    %v11514 = vperm.slane %v10949, %v11097
    %v11515 = vsel %vm11099, %v11514, %v11513
    %v11516 = vperm.slane %v10952, %v11101
    %v11517 = vsel %vm11103, %v11516, %v11515
    %v11518 = vperm.slane %v10955, %v11105
    %v11519 = vsel %vm11107, %v11518, %v11517
    %v11520 = vperm.slane %v10958, %v11109
    %v11521 = vsel %vm11111, %v11520, %v11519
    %v11522 = vperm.slane %v10961, %v11113
    %v11523 = vsel %vm11115, %v11522, %v11521
    %v11524 = vperm.slane %v10964, %v11117
    %v11525 = vsel %vm11119, %v11524, %v11523
    %v11526 = vperm.slane %v10967, %v11121
    %v11527 = vsel %vm11123, %v11526, %v11525
    %v11528 = vperm.slane %v10970, %v434
    %v11529 = vperm.slane %v10973, %v11065
    %v11530 = vsel %vm11067, %v11529, %v11528
    %v11531 = vperm.slane %v10976, %v11069
    %v11532 = vsel %vm11071, %v11531, %v11530
    %v11533 = vperm.slane %v10979, %v11073
    %v11534 = vsel %vm11075, %v11533, %v11532
    %v11535 = vperm.slane %v10982, %v11077
    %v11536 = vsel %vm11079, %v11535, %v11534
    %v11537 = vperm.slane %v10985, %v11081
    %v11538 = vsel %vm11083, %v11537, %v11536
    %v11539 = vperm.slane %v10988, %v11085
    %v11540 = vsel %vm11087, %v11539, %v11538
    %v11541 = vperm.slane %v10991, %v11089
    %v11542 = vsel %vm11091, %v11541, %v11540
    %v11543 = vperm.slane %v10994, %v11093
    %v11544 = vsel %vm11095, %v11543, %v11542
    %v11545 = vperm.slane %v10997, %v11097
    %v11546 = vsel %vm11099, %v11545, %v11544
    %v11547 = vperm.slane %v11000, %v11101
    %v11548 = vsel %vm11103, %v11547, %v11546
    %v11549 = vperm.slane %v11003, %v11105
    %v11550 = vsel %vm11107, %v11549, %v11548
    %v11551 = vperm.slane %v11006, %v11109
    %v11552 = vsel %vm11111, %v11551, %v11550
    %v11553 = vperm.slane %v11009, %v11113
    %v11554 = vsel %vm11115, %v11553, %v11552
    %v11555 = vperm.slane %v11012, %v11117
    %v11556 = vsel %vm11119, %v11555, %v11554
    %v11557 = vperm.slane %v11015, %v11121
    %v11558 = vsel %vm11123, %v11557, %v11556
    %v11559 = vperm.slane %v11018, %v434
    %v11560 = vperm.slane %v11021, %v11065
    %v11561 = vsel %vm11067, %v11560, %v11559
    %v11562 = vperm.slane %v11024, %v11069
    %v11563 = vsel %vm11071, %v11562, %v11561
    %v11564 = vperm.slane %v11027, %v11073
    %v11565 = vsel %vm11075, %v11564, %v11563
    %v11566 = vperm.slane %v11030, %v11077
    %v11567 = vsel %vm11079, %v11566, %v11565
    %v11568 = vperm.slane %v11033, %v11081
    %v11569 = vsel %vm11083, %v11568, %v11567
    %v11570 = vperm.slane %v11036, %v11085
    %v11571 = vsel %vm11087, %v11570, %v11569
    %v11572 = vperm.slane %v11039, %v11089
    %v11573 = vsel %vm11091, %v11572, %v11571
    %v11574 = vperm.slane %v11042, %v11093
    %v11575 = vsel %vm11095, %v11574, %v11573
    %v11576 = vperm.slane %v11045, %v11097
    %v11577 = vsel %vm11099, %v11576, %v11575
    %v11578 = vperm.slane %v11048, %v11101
    %v11579 = vsel %vm11103, %v11578, %v11577
    %v11580 = vperm.slane %v11051, %v11105
    %v11581 = vsel %vm11107, %v11580, %v11579
    %v11582 = vperm.slane %v11054, %v11109
    %v11583 = vsel %vm11111, %v11582, %v11581
    %v11584 = vperm.slane %v11057, %v11113
    %v11585 = vsel %vm11115, %v11584, %v11583
    %v11586 = vperm.slane %v11060, %v11117
    %v11587 = vsel %vm11119, %v11586, %v11585
    %v11588 = vperm.slane %v11063, %v11121
    %v11589 = vsel %vm11123, %v11588, %v11587
    %v11590 = vsel %vm217, %v11155, %v11124
    %v11591 = vsel %vm220, %v11186, %v11590
    %v11592 = vsel %vm222, %v11217, %v11591
    %v11593 = vsel %vm225, %v11248, %v11592
    %v11594 = vsel %vm228, %v11279, %v11593
    %v11595 = vsel %vm231, %v11310, %v11594
    %v11596 = vsel %vm234, %v11341, %v11595
    %v11597 = vsel %vm217, %v11403, %v11372
    %v11598 = vsel %vm220, %v11434, %v11597
    %v11599 = vsel %vm222, %v11465, %v11598
    %v11600 = vsel %vm225, %v11496, %v11599
    %v11601 = vsel %vm228, %v11527, %v11600
    %v11602 = vsel %vm231, %v11558, %v11601
    %v11603 = vsel %vm234, %v11589, %v11602
    %11606 = vmatpush.msra.mxu0 %v10035
    %11607 = vmatpush.msra.mxu0 %v10034
    %11608 = vmatpush.msra.mxu0 %v10033
    %11609 = vmatpush.msra.mxu0 %v10032
    %11610 = vmatpush.msra.mxu0 %v10031
    %11611 = vmatpush.msra.mxu0 %v10030
    %11612 = vmatpush.msra.mxu0 %v10029
    %11613 = vmatpush.msra.mxu0 %v10028
    %11614 = vmatpush.msra.mxu0 %v10027
    %11615 = vmatpush.msra.mxu0 %v10026
    %11616 = vmatpush.msra.mxu0 %v10025
    %11617 = vmatpush.msra.mxu0 %v10024
    %11618 = vmatpush.msra.mxu0 %v10023
    %11619 = vmatpush.msra.mxu0 %v10022
    %11620 = vmatpush.msra.mxu0 %v10021
    %11621 = vmatpush.msra.mxu0 %v10020
    %11622 = vmatmul.f32.gmra.mxu0 %v11596
    %v11623 = vpop.f32.mrf.mxu0
    %v11624 = vadd.f32 %v10038, %v11623
    %11625 = vmatmul.f32.gmra.mxu0 %v11603
    %v11626 = vpop.f32.mrf.mxu0
    %v11627 = vadd.f32 %v10038, %v11626
    %11628 = vdwg.mxu0
    %v11629 = vadd.f32 %v11624, %v293
    %v11630 = vadd.f32 %v11627, %v296
    %v11631 = vld [vmem:[%s8] sm:$0x1]
    %v11633 = vperm.slane %v11631, 0
    %v11635 = vmul.f32 %v163, %v11633
    %v11636 = vmul.f32 %v164, %v11633
    %11637 = vadd.xlane.f32.xlu0 %v11635
    %v11638 = vpop.xlane.xlu0 %11637
    %11639 = vadd.xlane.f32.xlu0 %v11636
    %v11640 = vpop.xlane.xlu0 %11639
    %s11641 = sld [smem:[#allocation2]]
    %v11642 = vstv %s11641
    %v11643 = vadd.f32 %v11638, %v11642
    %v11644 = vadd.f32 %v11640, %v11642
    %v11645 = vxor.u32 %v11643, 2147483648
    %v11646 = vxor.u32 %v11644, 2147483648
    %v11647 = vmul.f32 %v11645, 1.442695
    %v11648 = vpow.pop %v11647
    %v11649 = vmul.f32 %v11646, 1.442695
    %v11650 = vpow.pop %v11649
    %v11651 = vadd.f32 %v11648, 1.0
    %v11652 = vadd.f32 %v11650, 1.0
    %v11653 = vrcp.pop %v11651
    %v11654 = vmul.f32 %v11651, %v11653
    %v11655 = vsub.f32 1.0, %v11654
    %v11656 = vmul.f32 %v11653, %v11655
    %v11657 = vadd.f32 %v11653, %v11656
    %vm11658 = vweird.f32 %v11651
    %vm11659 = vweird.f32 %v11653
    %vm11660 = vmor %vm11658, %vm11659
    %v11661 = vsel %vm11660, %v11653, %v11657
    %v11662 = vand.u32 2147483647, %v11651
    %vm11663 = vcmp.eq.f32.partialorder %v11662, 8.507059e+37
    %v11664 = vand.u32 %v11651, 2147483648
    %v11665 = vor.u32 1.1754944e-38, %v11664
    %v11666 = vsel %vm11663, %v11665, %v11661
    %v11667 = vmul.f32 1.0, %v11666
    %v11668 = vrcp.pop %v11652
    %v11669 = vmul.f32 %v11652, %v11668
    %v11670 = vsub.f32 1.0, %v11669
    %v11671 = vmul.f32 %v11668, %v11670
    %v11672 = vadd.f32 %v11668, %v11671
    %vm11673 = vweird.f32 %v11652
    %vm11674 = vweird.f32 %v11668
    %vm11675 = vmor %vm11673, %vm11674
    %v11676 = vsel %vm11675, %v11668, %v11672
    %v11677 = vand.u32 2147483647, %v11652
    %vm11678 = vcmp.eq.f32.partialorder %v11677, 8.507059e+37
    %v11679 = vand.u32 %v11652, 2147483648
    %v11680 = vor.u32 1.1754944e-38, %v11679
    %v11681 = vsel %vm11678, %v11680, %v11676
    %v11682 = vmul.f32 1.0, %v11681
    %v11683 = vmul.f32 %v11667, %v235
    %v11684 = vmul.f32 %v11682, %v249
    %v11685 = vsub.f32 1.0, %v11667
    %v11686 = vsub.f32 1.0, %v11682
    %v11687 = vmul.f32 %v11685, %v11629
    %v11688 = vmul.f32 %v11686, %v11630
    %v11689 = vadd.f32 %v11683, %v11687
    %v11690 = vadd.f32 %v11684, %v11688
    %11691 = vst [vmem:[#allocation14] sm:$0xff] %v11689
    %11692 = vst [vmem:[#allocation14 + $0x8] sm:$0xff] %v11690
    // Predicated region
    $region66: #{tpu_custom_call.1} parent=1 // pred_check
      _
    $region67: #{tpu_custom_call.1} parent=1 // pred_check_branch
      %11694 = sbr.rel (0) target = $region69
    $region68: #{tpu_custom_call.1} parent=1 // pred_region
      %11696 = vsyncadd [#allocation5], 0
      %s11697 = sshll.u32 [#allocation14], 4
      %s11698 = int_to_ptr.vmem [resolvable:$true] %s11697
      %s11699 = sshll.u32 %s10, 4
      %s11700 = int_to_ptr.hbm [resolvable:$true] %s11699
      %11705 = dma.vmem_to_hbm [thread:$0]  %s11698, 256, %s11700, [#allocation5], 128, 128, 8
    $region69: #{tpu_custom_call.1} parent=1 // pred_fallthru
      _
    // Predicated region
    $region70: #{tpu_custom_call.1} parent=1 // pred_check
      _
    $region71: #{tpu_custom_call.1} parent=1 // pred_check_branch
      %11707 = sbr.rel (0) target = $region73
    $region72: #{tpu_custom_call.1} parent=1 // pred_region
      %11709 = dma.done [#allocation5], 256
    $region73: #{tpu_custom_call.1} parent=1 // pred_fallthru
      _
    %11710 = vsyncpa [#allocation4], 1
    %11711 = vsyncpa [#allocation7], 1
    %11712 = vsyncpa [#allocation10], 1
    %11713 = vsyncpa [#allocation13], 1
    %11714 = vsyncpa [#allocation5], 1

</llo_original>
